<compile_context>
chip_gen: v5e
topology: v5e:2x2
jax: 0.10.0
libtpu: 0.0.40
codegen_flags: <defaults>
</compile_context>

<pallas_src>
import functools
import math

import jax
import jax.numpy as jnp
from jax.experimental import pallas as pl
from jax.experimental.pallas import tpu as pltpu

LOG2PI = math.log(2.0 * math.pi)
_LANE = 128
_SUBLANE = 8
_VMEM_LIMIT = 32 << 20          # scoped-VMEM budget; safe on v5e/v6e/v7x


def _round_up(x, m):
    return ((x + m - 1) // m) * m


def _pick_tile(dim, cap, align):
    """Largest tile <= cap that divides `dim` (dim is a multiple of `align`)."""
    if dim <= cap:
        return dim
    t = (cap // align) * align
    while dim % t:
        t -= align
    return t


# ----------------------------------------------------------------------------
# Pallas kernels
# ----------------------------------------------------------------------------
def _mm_kernel(a_ref, w_ref, b_ref, o_ref, *, act):
    acc = jnp.dot(a_ref[...], w_ref[...], preferred_element_type=jnp.float32)
    acc = acc + b_ref[...]
    if act == "relu":
        acc = jnp.maximum(acc, 0.0)
    elif act == "tanh":
        acc = jnp.tanh(acc)
    o_ref[...] = acc


def matmul_bias_act(a, w, b, n_out, act="none"):
    """Fused (M,K)@(K,Np) + bias + activation.

    `w`/`b` come pre-padded so Np is a multiple of 128 (lane-dense stores);
    only the first `n_out` columns are returned.  Operands are fed to the MXU
    in bf16, accumulation and the bias/activation epilogue stay in f32.
    Tiled over (M, N), both axes marked parallel (megacore / 2-TC v7x).
    """
    M, K = a.shape
    Np = w.shape[1]
    Mp = _round_up(M, _SUBLANE)
    if Mp != M:                       # only the tiny (M=B) paths hit this
        a = jnp.pad(a, ((0, Mp - M), (0, 0)))
    a = a.astype(jnp.bfloat16)
    w = w.astype(jnp.bfloat16)
    tm = _pick_tile(Mp, 256, _SUBLANE)
    tn = _pick_tile(Np, 256, _LANE)
    out = pl.pallas_call(
        functools.partial(_mm_kernel, act=act),
        out_shape=jax.ShapeDtypeStruct((Mp, Np), jnp.float32),
        grid=(Mp // tm, Np // tn),
        in_specs=[
            pl.BlockSpec((tm, K), lambda i, j: (i, 0)),
            pl.BlockSpec((K, tn), lambda i, j: (0, j)),
            pl.BlockSpec((1, tn), lambda i, j: (0, j)),
        ],
        out_specs=pl.BlockSpec((tm, tn), lambda i, j: (i, j)),
        compiler_params=pltpu.CompilerParams(
            dimension_semantics=("parallel", "parallel"),
            vmem_limit_bytes=_VMEM_LIMIT,
        ),
    )(a, w, b)
    return out[:M, :n_out]


def _mlp3_kernel(h_ref, w1_ref, b1_ref, w2_ref, b2_ref, w3_ref, b3_ref, o_ref):
    h = jnp.dot(h_ref[...], w1_ref[...], preferred_element_type=jnp.float32) + b1_ref[...]
    h = jnp.maximum(h, 0.0).astype(jnp.bfloat16)
    h = jnp.dot(h, w2_ref[...], preferred_element_type=jnp.float32) + b2_ref[...]
    h = jnp.maximum(h, 0.0).astype(jnp.bfloat16)
    h = jnp.dot(h, w3_ref[...], preferred_element_type=jnp.float32) + b3_ref[...]
    o_ref[...] = jnp.tanh(h)


def mlp3(h, p):
    """Fused Linear/ReLU/Linear/ReLU/Linear/Tanh conditioner head — one pallas_call."""
    B, Din = h.shape
    Bp = _round_up(B, _SUBLANE)
    if Bp != B:
        h = jnp.pad(h, ((0, Bp - B), (0, 0)))
    h = h.astype(jnp.bfloat16)
    Dp = p["W3"].shape[1]
    full = lambda s: pl.BlockSpec(s, lambda i, _s=s: (0,) * len(_s))
    out = pl.pallas_call(
        _mlp3_kernel,
        out_shape=jax.ShapeDtypeStruct((Bp, Dp), jnp.float32),
        grid=(1,),
        in_specs=[full((Bp, Din)),
                  full(p["W1"].shape), full(p["b1"].shape),
                  full(p["W2"].shape), full(p["b2"].shape),
                  full(p["W3"].shape), full(p["b3"].shape)],
        out_specs=full((Bp, Dp)),
        compiler_params=pltpu.CompilerParams(vmem_limit_bytes=_VMEM_LIMIT),
    )(h, p["W1"], p["b1"], p["W2"], p["b2"], p["W3"], p["b3"])
    return out[:B, : p["dout"]]


def _an_inv_kernel(y_ref, s_ref, b_ref, m_ref, o_ref):
    # actnorm (per-sample per-channel affine) fused with the per-sample CxC
    # invertible 1x1 conv: out[b,p,i] = sum_j M[b,i,j]*(y[b,p,j]*exp(s[b,j])+b[b,j])
    v = y_ref[...] * jnp.exp(s_ref[...]) + b_ref[...]
    o_ref[...] = jnp.einsum("bpj,bij->bpi", v, m_ref[...],
                            preferred_element_type=jnp.float32)


def actnorm_invconv(y, s, b, matrix):
    B, H, W, C = y.shape
    HW = H * W
    full = lambda sh: pl.BlockSpec(sh, lambda i, _sh=sh: (0,) * len(_sh))
    out = pl.pallas_call(
        _an_inv_kernel,
        out_shape=jax.ShapeDtypeStruct((B, HW, C), jnp.float32),
        grid=(1,),
        in_specs=[full((B, HW, C)), full((B, 1, C)), full((B, 1, C)), full((B, C, C))],
        out_specs=full((B, HW, C)),
        compiler_params=pltpu.CompilerParams(vmem_limit_bytes=_VMEM_LIMIT),
    )(y.reshape(B, HW, C), s.reshape(B, 1, C), b.reshape(B, 1, C), matrix)
    return out.reshape(B, H, W, C)


def _affine_kernel(ym_ref, ls_ref, b_ref, o_ref, ld_ref):
    sigma = 1.0 / (1.0 + jnp.exp(-(ls_ref[...] + 2.0)))
    o_ref[...] = sigma * ym_ref[...] + b_ref[...]
    ld_ref[...] = jnp.sum(jnp.log(sigma), axis=-1, keepdims=True)


def affine_apply(y_mod, log_s, b):
    B = y_mod.shape[0]
    D = math.prod(y_mod.shape[1:])
    full = lambda s: pl.BlockSpec(s, lambda i, _s=s: (0,) * len(_s))
    out, ld = pl.pallas_call(
        _affine_kernel,
        out_shape=(jax.ShapeDtypeStruct((B, D), jnp.float32),
                   jax.ShapeDtypeStruct((B, 1), jnp.float32)),
        grid=(1,),
        in_specs=[full((B, D))] * 3,
        out_specs=(full((B, D)), full((B, 1))),
        compiler_params=pltpu.CompilerParams(vmem_limit_bytes=_VMEM_LIMIT),
    )(y_mod.reshape(B, D), log_s.reshape(B, D), b.reshape(B, D))
    return out.reshape(y_mod.shape), ld[:, 0]


def _logp_kernel(x_ref, m_ref, ls_ref, o_ref):
    ls = ls_ref[...]
    diff = x_ref[...] - m_ref[...]          # mean/logs broadcast in-kernel (rows 1 or B)
    ll = -0.5 * (2.0 * ls + diff * diff * jnp.exp(-2.0 * ls) + LOG2PI)
    o_ref[...] = jnp.sum(ll, axis=-1, keepdims=True)


def gaussian_logp(x, mean, logs):
    B = x.shape[0]
    D = math.prod(x.shape[1:])
    R = mean.shape[0]                       # 1 (shared prior) or B (split2d)
    full = lambda s: pl.BlockSpec(s, lambda i: (0, 0))
    out = pl.pallas_call(
        _logp_kernel,
        out_shape=jax.ShapeDtypeStruct((B, 1), jnp.float32),
        grid=(1,),
        in_specs=[full((B, D)), full((R, D)), full((R, D))],
        out_specs=full((B, 1)),
        compiler_params=pltpu.CompilerParams(vmem_limit_bytes=_VMEM_LIMIT),
    )(x.reshape(B, D), mean.reshape(R, D), logs.reshape(R, D))
    return out[:, 0]


# ----------------------------------------------------------------------------
# Conv glue (NHWC im2col around the fused Pallas GEMM)
# ----------------------------------------------------------------------------
def _im2col(x, k, stride, pad):
    """NHWC im2col -> (B*Ho*Wo, k*k*C) with (ky, kx, c) minor ordering."""
    B, H, W, C = x.shape
    if pad > 0:
        x = jnp.pad(x, ((0, 0), (pad, pad), (pad, pad), (0, 0)))
    Ho = (H + 2 * pad - k) // stride + 1
    Wo = (W + 2 * pad - k) // stride + 1
    cols = []
    for i in range(k):
        for j in range(k):
            cols.append(x[:, i: i + stride * (Ho - 1) + 1: stride,
                             j: j + stride * (Wo - 1) + 1: stride, :])
    col = jnp.concatenate(cols, axis=-1)                  # (B, Ho, Wo, k*k*C)
    return col.reshape(B * Ho * Wo, k * k * C), Ho, Wo


def conv_cols(cols, Ho, Wo, B, p, act="none"):
    out = matmul_bias_act(cols, p["W"], p["b"], p["n"], act)
    return out.reshape(B, Ho, Wo, p["n"])


def conv2d(x, p, stride=1, pad=1, act="none"):
    B = x.shape[0]
    cols, Ho, Wo = _im2col(x, p["k"], stride, pad)
    return conv_cols(cols, Ho, Wo, B, p, act)


def squeeze2d(x, factor=2):
    # channel ordering identical to the NCHW glow SqueezeLayer: c*4 + i*2 + j
    B, H, W, C = x.shape
    x = x.reshape(B, H // factor, factor, W // factor, factor, C)
    x = x.transpose(0, 1, 3, 5, 2, 4)
    return x.reshape(B, H // factor, W // factor, C * factor * factor)


# ----------------------------------------------------------------------------
# Flow modules (forward / encode direction, reverse=False), NHWC activations
# ----------------------------------------------------------------------------
def cond_tail(p, h, stride):
    """Rconv/ReLU x2 + flatten (NCHW order) + fused 3-layer MLP head."""
    h = conv2d(h, p["c2"], stride=stride, pad=1, act="relu")
    h = conv2d(h, p["c3"], stride=stride, pad=1, act="relu")
    B = h.shape[0]
    h = jnp.transpose(h, (0, 3, 1, 2)).reshape(B, -1)   # nn.Flatten parity (tiny)
    return mlp3(h, p["mlp"])


def caffine_fwd(p, xcols1, xhw1, y, logdet):
    B, Hy, Wy, C = y.shape
    d = C // 2
    y_in, y_mod = y[..., :d], y[..., d:]
    Ho1, Wo1 = xhw1
    xr = conv_cols(xcols1, Ho1, Wo1, B, p["c1"], act="relu")
    xr = conv2d(xr, p["c2"], stride=p["stride"], pad=1, act="relu")
    xr = conv2d(xr, p["c3"], stride=1, pad=1, act="relu")
    h = jnp.concatenate([xr, y_in], axis=-1)
    h = conv2d(h, p["c4"], stride=1, pad=1, act="relu")
    h = conv2d(h, p["c5"], stride=1, pad=0, act="relu")
    out = conv2d(h, p["c6"], stride=1, pad=1, act="tanh")   # channels pre-permuted:
    log_s, b = out[..., :d], out[..., d:]                   # contiguous "cross" split
    tmp, ld = affine_apply(y_mod, log_s, b)
    return jnp.concatenate([y_in, tmp], axis=-1), logdet + ld


def glowstep_fwd(p, xcols2, xhw2, xcols1, xhw1, y, logdet):
    B, Hy, Wy, C = y.shape
    HW = Hy * Wy
    # --- conditioners: actnorm + invconv share one im2col(x) and one concat conv
    Ho2, Wo2 = xhw2
    h = conv_cols(xcols2, Ho2, Wo2, B, p["c1_shared"], act="relu")
    hc = p["hidden"]
    out_a = cond_tail(p["act_tail"], h[..., :hc], p["stride"])      # (B, 2C)
    out_i = cond_tail(p["inv_tail"], h[..., hc:], p["stride"])      # (B, C*C)
    s, bias = out_a[:, :C], out_a[:, C:]
    matrix = out_i.reshape(B, C, C)
    # --- log-determinants -----------------------------------------------------
    logdet = logdet + float(HW) * jnp.sum(s, axis=1)
    # TODO(synk): slogdet (LU of the small per-sample CxC conditioner) stays in
    # plain JAX; no clean Pallas equivalent.
    _, logabs = jnp.linalg.slogdet(matrix)
    logdet = logdet + logabs * float(HW)
    # --- fused actnorm + invertible 1x1 conv (single Pallas call) --------------
    y = actnorm_invconv(y, s, bias, matrix)
    # --- conditional affine coupling -------------------------------------------
    return caffine_fwd(p["aff"], xcols1, xhw1, y, logdet)


def split2d_fwd(p, y, logdet):
    C = y.shape[-1]
    z1, z2 = y[..., : C // 2], y[..., C // 2:]
    h = conv2d(z1, p["conv"], stride=1, pad=1, act="none")  # channels pre-permuted
    mean, logs = h[..., : C // 2], h[..., C // 2:]
    return z1, logdet + gaussian_logp(z2, mean, logs)


def cglow_forward(params, x, y, y_bits=8):
    """cGlowModel.forward(x, y, reverse=False) -> (z, nll).  x/y enter as NCHW."""
    B, Cy, Hy, Wy = y.shape
    dims = Cy * Hy * Wy
    n_bins = 2.0 ** y_bits
    logdet = jnp.full((B,), -math.log(n_bins) * dims, jnp.float32)
    # one-time NCHW -> NHWC: everything downstream stays channels-last.
    x = jnp.transpose(x, (0, 2, 3, 1))
    z = jnp.transpose(y, (0, 2, 3, 1))
    # x never changes inside the flow: hoist both of its im2col expansions.
    xcols2, Ho2, Wo2 = _im2col(x, 3, params["stride"], 1)   # conditioner Rconv (stride s)
    xcols1, Ho1, Wo1 = _im2col(x, 3, 1, 1)                  # affine first Conv2d (stride 1)
    xcols2 = xcols2.astype(jnp.bfloat16)
    xcols1 = xcols1.astype(jnp.bfloat16)
    for level in params["levels"]:
        z = squeeze2d(z, 2)
        for step in level["steps"]:
            z, logdet = glowstep_fwd(step, xcols2, (Ho2, Wo2),
                                     xcols1, (Ho1, Wo1), z, logdet)
        if "split" in level:
            z, logdet = split2d_fwd(level["split"], z, logdet)
    objective = logdet + gaussian_logp(z, params["new_mean"], params["new_logs"])
    nll = -objective / float(math.log(2.0) * dims)
    return jnp.transpose(z, (0, 3, 1, 2)), nll              # z back to NCHW


# ----------------------------------------------------------------------------
# Deterministic synthetic parameter init (shapes follow the PyTorch __init__)
# ----------------------------------------------------------------------------
def _init_conv(key, cin, cout, k=3, scale=0.05):
    kw, kb = jax.random.split(key)
    return {
        "W": scale * jax.random.normal(kw, (cout, cin, k, k), jnp.float32),
        "b": scale * jax.random.normal(kb, (cout,), jnp.float32),
    }


def _init_zero_conv(key, cin, cout, k=3, scale=0.02):
    p = _init_conv(key, cin, cout, k, scale)   # nominally zero-init; small synth values
    p["logs"] = jnp.zeros((cout,), jnp.float32)
    return p


def _init_linear(key, din, dout, scale=0.05):
    kw, kb = jax.random.split(key)
    return {
        "W": scale * jax.random.normal(kw, (dout, din), jnp.float32),
        "b": scale * jax.random.normal(kb, (dout,), jnp.float32),
    }


def init_params(key, x_size=(3, 16, 16), y_size=(3, 16, 16), hidden_channels=8,
                hidden_size=32, stride=2, K=1, L=2):
    Cx, Hx, Wx = x_size
    flat = int(hidden_channels * (Hx * Wx) // stride ** 6)
    keys = list(jax.random.split(key, 1024))
    it = iter(keys)
    nk = lambda: next(it)

    def cond_net(out_dim):
        return {
            "stride": stride,
            "c1": _init_conv(nk(), Cx, hidden_channels),
            "c2": _init_conv(nk(), hidden_channels, hidden_channels),
            "c3": _init_conv(nk(), hidden_channels, hidden_channels),
            "f1": _init_linear(nk(), flat, hidden_size),
            "f2": _init_linear(nk(), hidden_size, hidden_size),
            "f3": _init_linear(nk(), hidden_size, out_dim),
        }

    params = {"levels": []}
    C, H, W = y_size
    for l in range(L):
        C, H, W = C * 4, H // 2, W // 2
        level = {"steps": []}
        for _ in range(K):
            d = C // 2
            stride_a = Hx // H
            step = {
                "actnorm": cond_net(2 * C),
                "invconv": cond_net(C * C),
                "affine": {
                    "stride": stride_a,
                    "c1": _init_conv(nk(), Cx, 16),
                    "c2": _init_conv(nk(), 16, d),
                    "c3": _init_conv(nk(), d, d),
                    "c4": _init_conv(nk(), 2 * d, 256),
                    "c5": _init_conv(nk(), 256, 256, k=1),
                    "c6": _init_zero_conv(nk(), 256, 2 * d),
                },
            }
            level["steps"].append(step)
        if l < L - 1:
            level["split"] = {"conv": _init_zero_conv(nk(), C // 2, C)}
            C = C // 2
        params["levels"].append(level)

    # prior (learn_top): zero-initialised parameters of shape [1, C_last, H_last, W_last]
    params["new_mean"] = jnp.zeros((1, C, H, W), jnp.float32)
    params["new_logs"] = jnp.zeros((1, C, H, W), jnp.float32)
    params["final_shape"] = (C, H, W)
    return params


# ----------------------------------------------------------------------------
# TPU-friendly parameter layout (done once, outside the forward)
# ----------------------------------------------------------------------------
def _prep_conv(p, perm=None, scale=None):
    W, b = p["W"], p["b"]
    if scale is not None:                      # fold zero-conv exp(logs*3) scaling
        W = W * scale[:, None, None, None]
        b = b * scale
    Cout, Cin, kh, kw = W.shape
    Wm = jnp.transpose(W, (2, 3, 1, 0)).reshape(kh * kw * Cin, Cout)
    if perm is not None:                       # pre-permute output channels ("cross")
        Wm = Wm[:, perm]
        b = b[perm]
    Np = _round_up(Cout, _LANE)                # lane-dense output columns
    if Np != Cout:
        Wm = jnp.pad(Wm, ((0, 0), (0, Np - Cout)))
        b = jnp.pad(b, (0, Np - Cout))
    return {"W": Wm.astype(jnp.bfloat16),
            "b": b.astype(jnp.float32).reshape(1, Np),
            "k": kh, "n": Cout}


def _prep_zero_conv(p):
    scale = jnp.exp(p["logs"] * 3.0)
    cout = p["W"].shape[0]
    perm = jnp.concatenate([jnp.arange(0, cout, 2), jnp.arange(1, cout, 2)])
    return _prep_conv(p, perm=perm, scale=scale)


def _prep_shared_c1(ca, ci):
    # actnorm.c1 and invconv.c1 both read the same im2col(x): concat along Cout.
    W = jnp.concatenate([ca["W"], ci["W"]], axis=0)
    b = jnp.concatenate([ca["b"], ci["b"]], axis=0)
    return _prep_conv({"W": W, "b": b})


def _prep_mlp(f1, f2, f3):
    W1, b1 = f1["W"].T, f1["b"]
    W2, b2 = f2["W"].T, f2["b"]
    W3, b3 = f3["W"].T, f3["b"]
    dout = W3.shape[1]
    Dp = _round_up(dout, _LANE)
    if Dp != dout:
        W3 = jnp.pad(W3, ((0, 0), (0, Dp - dout)))
        b3 = jnp.pad(b3, (0, Dp - dout))
    return {"W1": W1.astype(jnp.bfloat16), "b1": b1.astype(jnp.float32).reshape(1, -1),
            "W2": W2.astype(jnp.bfloat16), "b2": b2.astype(jnp.float32).reshape(1, -1),
            "W3": W3.astype(jnp.bfloat16), "b3": b3.astype(jnp.float32).reshape(1, -1),
            "dout": dout}


def prepare_params(raw):
    out = {"levels": [], "stride": None}
    for level in raw["levels"]:
        lev = {"steps": []}
        for step in level["steps"]:
            act, inv, aff = step["actnorm"], step["invconv"], step["affine"]
            out["stride"] = act["stride"]
            lev["steps"].append({
                "stride": act["stride"],
                "hidden": act["c1"]["W"].shape[0],
                "c1_shared": _prep_shared_c1(act["c1"], inv["c1"]),
                "act_tail": {"c2": _prep_conv(act["c2"]), "c3": _prep_conv(act["c3"]),
                             "mlp": _prep_mlp(act["f1"], act["f2"], act["f3"])},
                "inv_tail": {"c2": _prep_conv(inv["c2"]), "c3": _prep_conv(inv["c3"]),
                             "mlp": _prep_mlp(inv["f1"], inv["f2"], inv["f3"])},
                "aff": {
                    "stride": aff["stride"],
                    "c1": _prep_conv(aff["c1"]), "c2": _prep_conv(aff["c2"]),
                    "c3": _prep_conv(aff["c3"]), "c4": _prep_conv(aff["c4"]),
                    "c5": _prep_conv(aff["c5"]), "c6": _prep_zero_conv(aff["c6"]),
                },
            })
        if "split" in level:
            lev["split"] = {"conv": _prep_zero_conv(level["split"]["conv"])}
        out["levels"].append(lev)
    out["new_mean"] = jnp.transpose(raw["new_mean"], (0, 2, 3, 1))   # NHWC prior
    out["new_logs"] = jnp.transpose(raw["new_logs"], (0, 2, 3, 1))
    out["final_shape"] = raw["final_shape"]
    return out


# ----------------------------------------------------------------------------
if __name__ == "__main__":
    key = jax.random.PRNGKey(0)
    kp, kx, ky = jax.random.split(key, 3)

    # args: x_size=(3,16,16), y_size=(3,16,16), hidden_channels=8, hidden_size=32,
    #       stride=2, flow_depth K=1, num_levels L=2, learn_top=True, y_bits=8
    raw_params = init_params(kp, x_size=(3, 16, 16), y_size=(3, 16, 16),
                             hidden_channels=8, hidden_size=32, stride=2, K=1, L=2)
    params = prepare_params(raw_params)

    x = jax.random.normal(kx, (2, 3, 16, 16), jnp.float32)
    y = jax.random.normal(ky, (2, 3, 16, 16), jnp.float32)

    # params are closed over so their Python-int metadata stays static under jit.
    fwd = jax.jit(lambda xx, yy: cglow_forward(params, xx, yy, y_bits=8))
    z, nll = fwd(x, y)
    jax.block_until_ready((z, nll))

    assert z.shape == (2,) + params["final_shape"]   # (2, 24, 4, 4)
    assert nll.shape == (2,)
    print("KERNEL_OK")
</pallas_src>

<mosaic_0001>
module attributes {stable_mosaic.version = 11 : i64} {
  func.func @_mm_kernel(%arg0: i32, %arg1: i32, %arg2: memref<128x27xbf16, #tpu.memory_space<vmem>>, %arg3: memref<27x128xbf16, #tpu.memory_space<vmem>>, %arg4: memref<1x128xf32, #tpu.memory_space<vmem>>, %arg5: memref<128x128xf32, #tpu.memory_space<vmem>>) attributes {dimension_semantics = [#tpu.dimension_semantics<parallel>, #tpu.dimension_semantics<parallel>], iteration_bounds = array<i64: 1, 1>, scalar_prefetch = 0 : i64, scratch_operands = 0 : i64, tpu.core_type = #tpu.core_type<tc>, window_params = [{transform_indices = @transform_0, window_bounds = array<i64: 128, 27>}, {transform_indices = @transform_1, window_bounds = array<i64: 27, 128>}, {transform_indices = @transform_2, window_bounds = array<i64: 1, 128>}, {transform_indices = @transform_3, window_bounds = array<i64: 128, 128>}]} {
    %c0 = arith.constant 0 : index
    %c0_0 = arith.constant 0 : index
    %0 = vector.load %arg2[%c0, %c0_0] : memref<128x27xbf16, #tpu.memory_space<vmem>>, vector<128x27xbf16>
    %c0_1 = arith.constant 0 : index
    %c0_2 = arith.constant 0 : index
    %1 = vector.load %arg3[%c0_1, %c0_2] : memref<27x128xbf16, #tpu.memory_space<vmem>>, vector<27x128xbf16>
    %cst = arith.constant dense<0.000000e+00> : vector<128x128xf32>
    %2 = tpu.matmul %0, %1, %cst {dimension_numbers = #tpu.dot_dimension_numbers<[1], [0], [0], [1], [0, 0, 1, 1], [], []>} : vector<128x27xbf16>, vector<27x128xbf16>, vector<128x128xf32> -> vector<128x128xf32>
    %c0_3 = arith.constant 0 : index
    %c0_4 = arith.constant 0 : index
    %3 = vector.load %arg4[%c0_3, %c0_4] : memref<1x128xf32, #tpu.memory_space<vmem>>, vector<1x128xf32>
    %4 = vector.broadcast %3 : vector<1x128xf32> to vector<128x128xf32>
    %5 = arith.addf %2, %4 : vector<128x128xf32>
    %cst_5 = arith.constant 0.000000e+00 : f32
    %6 = vector.broadcast %cst_5 : f32 to vector<128x128xf32>
    %7 = arith.maximumf %5, %6 : vector<128x128xf32>
    %c0_6 = arith.constant 0 : index
    %c0_7 = arith.constant 0 : index
    %8 = vector.load %arg5[%c0_6, %c0_7] : memref<128x128xf32, #tpu.memory_space<vmem>>, vector<128x128xf32>
    tpu.vector_store %arg5[%c0_6, %c0_7], %7 {strides = array<i32>} : memref<128x128xf32, #tpu.memory_space<vmem>>, vector<128x128xf32>,
    return
  }
  func.func @transform_0(%arg0: i32, %arg1: i32) -> (i32, i32) {
    %c0_i32 = arith.constant 0 : i32
    %c0_i32_0 = arith.constant 0 : i32
    return %arg0, %c0_i32 : i32, i32
  }
  func.func @transform_1(%arg0: i32, %arg1: i32) -> (i32, i32) {
    %c0_i32 = arith.constant 0 : i32
    %c0_i32_0 = arith.constant 0 : i32
    return %c0_i32, %arg1 : i32, i32
  }
  func.func @transform_2(%arg0: i32, %arg1: i32) -> (i32, i32) {
    %c0_i32 = arith.constant 0 : i32
    %c0_i32_0 = arith.constant 0 : i32
    return %c0_i32, %arg1 : i32, i32
  }
  func.func @transform_3(%arg0: i32, %arg1: i32) -> (i32, i32) {
    %c0_i32 = arith.constant 0 : i32
    return %arg0, %arg1 : i32, i32
  }
}

module attributes {stable_mosaic.version = 11 : i64} {
  func.func @_mm_kernel(%arg0: i32, %arg1: i32, %arg2: memref<32x72xbf16, #tpu.memory_space<vmem>>, %arg3: memref<72x128xbf16, #tpu.memory_space<vmem>>, %arg4: memref<1x128xf32, #tpu.memory_space<vmem>>, %arg5: memref<32x128xf32, #tpu.memory_space<vmem>>) attributes {dimension_semantics = [#tpu.dimension_semantics<parallel>, #tpu.dimension_semantics<parallel>], iteration_bounds = array<i64: 1, 1>, scalar_prefetch = 0 : i64, scratch_operands = 0 : i64, tpu.core_type = #tpu.core_type<tc>, window_params = [{transform_indices = @transform_0, window_bounds = array<i64: 32, 72>}, {transform_indices = @transform_1, window_bounds = array<i64: 72, 128>}, {transform_indices = @transform_2, window_bounds = array<i64: 1, 128>}, {transform_indices = @transform_3, window_bounds = array<i64: 32, 128>}]} {
    %c0 = arith.constant 0 : index
    %c0_0 = arith.constant 0 : index
    %0 = vector.load %arg2[%c0, %c0_0] : memref<32x72xbf16, #tpu.memory_space<vmem>>, vector<32x72xbf16>
    %c0_1 = arith.constant 0 : index
    %c0_2 = arith.constant 0 : index
    %1 = vector.load %arg3[%c0_1, %c0_2] : memref<72x128xbf16, #tpu.memory_space<vmem>>, vector<72x128xbf16>
    %cst = arith.constant dense<0.000000e+00> : vector<32x128xf32>
    %2 = tpu.matmul %0, %1, %cst {dimension_numbers = #tpu.dot_dimension_numbers<[1], [0], [0], [1], [0, 0, 1, 1], [], []>} : vector<32x72xbf16>, vector<72x128xbf16>, vector<32x128xf32> -> vector<32x128xf32>
    %c0_3 = arith.constant 0 : index
    %c0_4 = arith.constant 0 : index
    %3 = vector.load %arg4[%c0_3, %c0_4] : memref<1x128xf32, #tpu.memory_space<vmem>>, vector<1x128xf32>
    %4 = vector.broadcast %3 : vector<1x128xf32> to vector<32x128xf32>
    %5 = arith.addf %2, %4 : vector<32x128xf32>
    %cst_5 = arith.constant 0.000000e+00 : f32
    %6 = vector.broadcast %cst_5 : f32 to vector<32x128xf32>
    %7 = arith.maximumf %5, %6 : vector<32x128xf32>
    %c0_6 = arith.constant 0 : index
    %c0_7 = arith.constant 0 : index
    %8 = vector.load %arg5[%c0_6, %c0_7] : memref<32x128xf32, #tpu.memory_space<vmem>>, vector<32x128xf32>
    tpu.vector_store %arg5[%c0_6, %c0_7], %7 {strides = array<i32>} : memref<32x128xf32, #tpu.memory_space<vmem>>, vector<32x128xf32>,
    return
  }
  func.func @transform_0(%arg0: i32, %arg1: i32) -> (i32, i32) {
    %c0_i32 = arith.constant 0 : i32
    %c0_i32_0 = arith.constant 0 : i32
    return %arg0, %c0_i32 : i32, i32
  }
  func.func @transform_1(%arg0: i32, %arg1: i32) -> (i32, i32) {
    %c0_i32 = arith.constant 0 : i32
    %c0_i32_0 = arith.constant 0 : i32
    return %c0_i32, %arg1 : i32, i32
  }
  func.func @transform_2(%arg0: i32, %arg1: i32) -> (i32, i32) {
    %c0_i32 = arith.constant 0 : i32
    %c0_i32_0 = arith.constant 0 : i32
    return %c0_i32, %arg1 : i32, i32
  }
  func.func @transform_3(%arg0: i32, %arg1: i32) -> (i32, i32) {
    %c0_i32 = arith.constant 0 : i32
    return %arg0, %arg1 : i32, i32
  }
}

module attributes {stable_mosaic.version = 11 : i64} {
  func.func @_mm_kernel(%arg0: i32, %arg1: i32, %arg2: memref<8x72xbf16, #tpu.memory_space<vmem>>, %arg3: memref<72x128xbf16, #tpu.memory_space<vmem>>, %arg4: memref<1x128xf32, #tpu.memory_space<vmem>>, %arg5: memref<8x128xf32, #tpu.memory_space<vmem>>) attributes {dimension_semantics = [#tpu.dimension_semantics<parallel>, #tpu.dimension_semantics<parallel>], iteration_bounds = array<i64: 1, 1>, scalar_prefetch = 0 : i64, scratch_operands = 0 : i64, tpu.core_type = #tpu.core_type<tc>, window_params = [{transform_indices = @transform_0, window_bounds = array<i64: 8, 72>}, {transform_indices = @transform_1, window_bounds = array<i64: 72, 128>}, {transform_indices = @transform_2, window_bounds = array<i64: 1, 128>}, {transform_indices = @transform_3, window_bounds = array<i64: 8, 128>}]} {
    %c0 = arith.constant 0 : index
    %c0_0 = arith.constant 0 : index
    %0 = vector.load %arg2[%c0, %c0_0] : memref<8x72xbf16, #tpu.memory_space<vmem>>, vector<8x72xbf16>
    %c0_1 = arith.constant 0 : index
    %c0_2 = arith.constant 0 : index
    %1 = vector.load %arg3[%c0_1, %c0_2] : memref<72x128xbf16, #tpu.memory_space<vmem>>, vector<72x128xbf16>
    %cst = arith.constant dense<0.000000e+00> : vector<8x128xf32>
    %2 = tpu.matmul %0, %1, %cst {dimension_numbers = #tpu.dot_dimension_numbers<[1], [0], [0], [1], [0, 0, 1, 1], [], []>} : vector<8x72xbf16>, vector<72x128xbf16>, vector<8x128xf32> -> vector<8x128xf32>
    %c0_3 = arith.constant 0 : index
    %c0_4 = arith.constant 0 : index
    %3 = vector.load %arg4[%c0_3, %c0_4] : memref<1x128xf32, #tpu.memory_space<vmem>>, vector<1x128xf32>
    %4 = vector.broadcast %3 : vector<1x128xf32> to vector<8x128xf32>
    %5 = arith.addf %2, %4 : vector<8x128xf32>
    %cst_5 = arith.constant 0.000000e+00 : f32
    %6 = vector.broadcast %cst_5 : f32 to vector<8x128xf32>
    %7 = arith.maximumf %5, %6 : vector<8x128xf32>
    %c0_6 = arith.constant 0 : index
    %c0_7 = arith.constant 0 : index
    %8 = vector.load %arg5[%c0_6, %c0_7] : memref<8x128xf32, #tpu.memory_space<vmem>>, vector<8x128xf32>
    tpu.vector_store %arg5[%c0_6, %c0_7], %7 {strides = array<i32>} : memref<8x128xf32, #tpu.memory_space<vmem>>, vector<8x128xf32>,
    return
  }
  func.func @transform_0(%arg0: i32, %arg1: i32) -> (i32, i32) {
    %c0_i32 = arith.constant 0 : i32
    %c0_i32_0 = arith.constant 0 : i32
    return %arg0, %c0_i32 : i32, i32
  }
  func.func @transform_1(%arg0: i32, %arg1: i32) -> (i32, i32) {
    %c0_i32 = arith.constant 0 : i32
    %c0_i32_0 = arith.constant 0 : i32
    return %c0_i32, %arg1 : i32, i32
  }
  func.func @transform_2(%arg0: i32, %arg1: i32) -> (i32, i32) {
    %c0_i32 = arith.constant 0 : i32
    %c0_i32_0 = arith.constant 0 : i32
    return %c0_i32, %arg1 : i32, i32
  }
  func.func @transform_3(%arg0: i32, %arg1: i32) -> (i32, i32) {
    %c0_i32 = arith.constant 0 : i32
    return %arg0, %arg1 : i32, i32
  }
}

module attributes {stable_mosaic.version = 11 : i64} {
  func.func @_mlp3_kernel(%arg0: i32, %arg1: memref<8x32xbf16, #tpu.memory_space<vmem>>, %arg2: memref<32x32xbf16, #tpu.memory_space<vmem>>, %arg3: memref<1x32xf32, #tpu.memory_space<vmem>>, %arg4: memref<32x32xbf16, #tpu.memory_space<vmem>>, %arg5: memref<1x32xf32, #tpu.memory_space<vmem>>, %arg6: memref<32x640xbf16, #tpu.memory_space<vmem>>, %arg7: memref<1x640xf32, #tpu.memory_space<vmem>>, %arg8: memref<8x640xf32, #tpu.memory_space<vmem>>) attributes {dimension_semantics = [#tpu.dimension_semantics<arbitrary>], iteration_bounds = array<i64: 1>, scalar_prefetch = 0 : i64, scratch_operands = 0 : i64, tpu.core_type = #tpu.core_type<tc>, window_params = [{pipeline_mode = #tpu.pipeline_mode<synchronous>, transform_indices = @transform_0, window_bounds = array<i64: 8, 32>}, {pipeline_mode = #tpu.pipeline_mode<synchronous>, transform_indices = @transform_1, window_bounds = array<i64: 32, 32>}, {pipeline_mode = #tpu.pipeline_mode<synchronous>, transform_indices = @transform_2, window_bounds = array<i64: 1, 32>}, {pipeline_mode = #tpu.pipeline_mode<synchronous>, transform_indices = @transform_3, window_bounds = array<i64: 32, 32>}, {pipeline_mode = #tpu.pipeline_mode<synchronous>, transform_indices = @transform_4, window_bounds = array<i64: 1, 32>}, {pipeline_mode = #tpu.pipeline_mode<synchronous>, transform_indices = @transform_5, window_bounds = array<i64: 32, 640>}, {pipeline_mode = #tpu.pipeline_mode<synchronous>, transform_indices = @transform_6, window_bounds = array<i64: 1, 640>}, {pipeline_mode = #tpu.pipeline_mode<synchronous>, transform_indices = @transform_7, window_bounds = array<i64: 8, 640>}]} {
    %c0 = arith.constant 0 : index
    %c0_0 = arith.constant 0 : index
    %0 = vector.load %arg1[%c0, %c0_0] : memref<8x32xbf16, #tpu.memory_space<vmem>>, vector<8x32xbf16>
    %c0_1 = arith.constant 0 : index
    %c0_2 = arith.constant 0 : index
    %1 = vector.load %arg2[%c0_1, %c0_2] : memref<32x32xbf16, #tpu.memory_space<vmem>>, vector<32x32xbf16>
    %cst = arith.constant dense<0.000000e+00> : vector<8x32xf32>
    %2 = tpu.matmul %0, %1, %cst {dimension_numbers = #tpu.dot_dimension_numbers<[1], [0], [0], [1], [0, 0, 1, 1], [], []>} : vector<8x32xbf16>, vector<32x32xbf16>, vector<8x32xf32> -> vector<8x32xf32>
    %c0_3 = arith.constant 0 : index
    %c0_4 = arith.constant 0 : index
    %3 = vector.load %arg3[%c0_3, %c0_4] : memref<1x32xf32, #tpu.memory_space<vmem>>, vector<1x32xf32>
    %4 = vector.broadcast %3 : vector<1x32xf32> to vector<8x32xf32>
    %5 = arith.addf %2, %4 : vector<8x32xf32>
    %cst_5 = arith.constant 0.000000e+00 : f32
    %6 = vector.broadcast %cst_5 : f32 to vector<8x32xf32>
    %7 = arith.maximumf %5, %6 : vector<8x32xf32>
    %8 = arith.truncf %7 : vector<8x32xf32> to vector<8x32xbf16>
    %c0_6 = arith.constant 0 : index
    %c0_7 = arith.constant 0 : index
    %9 = vector.load %arg4[%c0_6, %c0_7] : memref<32x32xbf16, #tpu.memory_space<vmem>>, vector<32x32xbf16>
    %cst_8 = arith.constant dense<0.000000e+00> : vector<8x32xf32>
    %10 = tpu.matmul %8, %9, %cst_8 {dimension_numbers = #tpu.dot_dimension_numbers<[1], [0], [0], [1], [0, 0, 1, 1], [], []>} : vector<8x32xbf16>, vector<32x32xbf16>, vector<8x32xf32> -> vector<8x32xf32>
    %c0_9 = arith.constant 0 : index
    %c0_10 = arith.constant 0 : index
    %11 = vector.load %arg5[%c0_9, %c0_10] : memref<1x32xf32, #tpu.memory_space<vmem>>, vector<1x32xf32>
    %12 = vector.broadcast %11 : vector<1x32xf32> to vector<8x32xf32>
    %13 = arith.addf %10, %12 : vector<8x32xf32>
    %cst_11 = arith.constant 0.000000e+00 : f32
    %14 = vector.broadcast %cst_11 : f32 to vector<8x32xf32>
    %15 = arith.maximumf %13, %14 : vector<8x32xf32>
    %16 = arith.truncf %15 : vector<8x32xf32> to vector<8x32xbf16>
    %c0_12 = arith.constant 0 : index
    %c0_13 = arith.constant 0 : index
    %17 = vector.load %arg6[%c0_12, %c0_13] : memref<32x640xbf16, #tpu.memory_space<vmem>>, vector<32x640xbf16>
    %cst_14 = arith.constant dense<0.000000e+00> : vector<8x640xf32>
    %18 = tpu.matmul %16, %17, %cst_14 {dimension_numbers = #tpu.dot_dimension_numbers<[1], [0], [0], [1], [0, 0, 1, 1], [], []>} : vector<8x32xbf16>, vector<32x640xbf16>, vector<8x640xf32> -> vector<8x640xf32>
    %c0_15 = arith.constant 0 : index
    %c0_16 = arith.constant 0 : index
    %19 = vector.load %arg7[%c0_15, %c0_16] : memref<1x640xf32, #tpu.memory_space<vmem>>, vector<1x640xf32>
    %20 = vector.broadcast %19 : vector<1x640xf32> to vector<8x640xf32>
    %21 = arith.addf %18, %20 : vector<8x640xf32>
    %22 = math.tanh %21 : vector<8x640xf32>
    %c0_17 = arith.constant 0 : index
    %c0_18 = arith.constant 0 : index
    %23 = vector.load %arg8[%c0_17, %c0_18] : memref<8x640xf32, #tpu.memory_space<vmem>>, vector<8x640xf32>
    tpu.vector_store %arg8[%c0_17, %c0_18], %22 {strides = array<i32>} : memref<8x640xf32, #tpu.memory_space<vmem>>, vector<8x640xf32>,
    return
  }
  func.func @transform_0(%arg0: i32) -> (i32, i32) {
    %c0_i32 = arith.constant 0 : i32
    %c0_i32_0 = arith.constant 0 : i32
    %c0_i32_1 = arith.constant 0 : i32
    return %c0_i32, %c0_i32_0 : i32, i32
  }
  func.func @transform_1(%arg0: i32) -> (i32, i32) {
    %c0_i32 = arith.constant 0 : i32
    %c0_i32_0 = arith.constant 0 : i32
    %c0_i32_1 = arith.constant 0 : i32
    return %c0_i32, %c0_i32_0 : i32, i32
  }
  func.func @transform_2(%arg0: i32) -> (i32, i32) {
    %c0_i32 = arith.constant 0 : i32
    %c0_i32_0 = arith.constant 0 : i32
    %c0_i32_1 = arith.constant 0 : i32
    return %c0_i32, %c0_i32_0 : i32, i32
  }
  func.func @transform_3(%arg0: i32) -> (i32, i32) {
    %c0_i32 = arith.constant 0 : i32
    %c0_i32_0 = arith.constant 0 : i32
    %c0_i32_1 = arith.constant 0 : i32
    return %c0_i32, %c0_i32_0 : i32, i32
  }
  func.func @transform_4(%arg0: i32) -> (i32, i32) {
    %c0_i32 = arith.constant 0 : i32
    %c0_i32_0 = arith.constant 0 : i32
    %c0_i32_1 = arith.constant 0 : i32
    return %c0_i32, %c0_i32_0 : i32, i32
  }
  func.func @transform_5(%arg0: i32) -> (i32, i32) {
    %c0_i32 = arith.constant 0 : i32
    %c0_i32_0 = arith.constant 0 : i32
    %c0_i32_1 = arith.constant 0 : i32
    return %c0_i32, %c0_i32_0 : i32, i32
  }
  func.func @transform_6(%arg0: i32) -> (i32, i32) {
    %c0_i32 = arith.constant 0 : i32
    %c0_i32_0 = arith.constant 0 : i32
    %c0_i32_1 = arith.constant 0 : i32
    return %c0_i32, %c0_i32_0 : i32, i32
  }
  func.func @transform_7(%arg0: i32) -> (i32, i32) {
    %c0_i32 = arith.constant 0 : i32
    %c0_i32_0 = arith.constant 0 : i32
    %c0_i32_1 = arith.constant 0 : i32
    return %c0_i32, %c0_i32_0 : i32, i32
  }
}

module attributes {stable_mosaic.version = 11 : i64} {
  func.func @_mlp3_kernel(%arg0: i32, %arg1: memref<8x32xbf16, #tpu.memory_space<vmem>>, %arg2: memref<32x32xbf16, #tpu.memory_space<vmem>>, %arg3: memref<1x32xf32, #tpu.memory_space<vmem>>, %arg4: memref<32x32xbf16, #tpu.memory_space<vmem>>, %arg5: memref<1x32xf32, #tpu.memory_space<vmem>>, %arg6: memref<32x256xbf16, #tpu.memory_space<vmem>>, %arg7: memref<1x256xf32, #tpu.memory_space<vmem>>, %arg8: memref<8x256xf32, #tpu.memory_space<vmem>>) attributes {dimension_semantics = [#tpu.dimension_semantics<arbitrary>], iteration_bounds = array<i64: 1>, scalar_prefetch = 0 : i64, scratch_operands = 0 : i64, tpu.core_type = #tpu.core_type<tc>, window_params = [{pipeline_mode = #tpu.pipeline_mode<synchronous>, transform_indices = @transform_0, window_bounds = array<i64: 8, 32>}, {pipeline_mode = #tpu.pipeline_mode<synchronous>, transform_indices = @transform_1, window_bounds = array<i64: 32, 32>}, {pipeline_mode = #tpu.pipeline_mode<synchronous>, transform_indices = @transform_2, window_bounds = array<i64: 1, 32>}, {pipeline_mode = #tpu.pipeline_mode<synchronous>, transform_indices = @transform_3, window_bounds = array<i64: 32, 32>}, {pipeline_mode = #tpu.pipeline_mode<synchronous>, transform_indices = @transform_4, window_bounds = array<i64: 1, 32>}, {pipeline_mode = #tpu.pipeline_mode<synchronous>, transform_indices = @transform_5, window_bounds = array<i64: 32, 256>}, {pipeline_mode = #tpu.pipeline_mode<synchronous>, transform_indices = @transform_6, window_bounds = array<i64: 1, 256>}, {pipeline_mode = #tpu.pipeline_mode<synchronous>, transform_indices = @transform_7, window_bounds = array<i64: 8, 256>}]} {
    %c0 = arith.constant 0 : index
    %c0_0 = arith.constant 0 : index
    %0 = vector.load %arg1[%c0, %c0_0] : memref<8x32xbf16, #tpu.memory_space<vmem>>, vector<8x32xbf16>
    %c0_1 = arith.constant 0 : index
    %c0_2 = arith.constant 0 : index
    %1 = vector.load %arg2[%c0_1, %c0_2] : memref<32x32xbf16, #tpu.memory_space<vmem>>, vector<32x32xbf16>
    %cst = arith.constant dense<0.000000e+00> : vector<8x32xf32>
    %2 = tpu.matmul %0, %1, %cst {dimension_numbers = #tpu.dot_dimension_numbers<[1], [0], [0], [1], [0, 0, 1, 1], [], []>} : vector<8x32xbf16>, vector<32x32xbf16>, vector<8x32xf32> -> vector<8x32xf32>
    %c0_3 = arith.constant 0 : index
    %c0_4 = arith.constant 0 : index
    %3 = vector.load %arg3[%c0_3, %c0_4] : memref<1x32xf32, #tpu.memory_space<vmem>>, vector<1x32xf32>
    %4 = vector.broadcast %3 : vector<1x32xf32> to vector<8x32xf32>
    %5 = arith.addf %2, %4 : vector<8x32xf32>
    %cst_5 = arith.constant 0.000000e+00 : f32
    %6 = vector.broadcast %cst_5 : f32 to vector<8x32xf32>
    %7 = arith.maximumf %5, %6 : vector<8x32xf32>
    %8 = arith.truncf %7 : vector<8x32xf32> to vector<8x32xbf16>
    %c0_6 = arith.constant 0 : index
    %c0_7 = arith.constant 0 : index
    %9 = vector.load %arg4[%c0_6, %c0_7] : memref<32x32xbf16, #tpu.memory_space<vmem>>, vector<32x32xbf16>
    %cst_8 = arith.constant dense<0.000000e+00> : vector<8x32xf32>
    %10 = tpu.matmul %8, %9, %cst_8 {dimension_numbers = #tpu.dot_dimension_numbers<[1], [0], [0], [1], [0, 0, 1, 1], [], []>} : vector<8x32xbf16>, vector<32x32xbf16>, vector<8x32xf32> -> vector<8x32xf32>
    %c0_9 = arith.constant 0 : index
    %c0_10 = arith.constant 0 : index
    %11 = vector.load %arg5[%c0_9, %c0_10] : memref<1x32xf32, #tpu.memory_space<vmem>>, vector<1x32xf32>
    %12 = vector.broadcast %11 : vector<1x32xf32> to vector<8x32xf32>
    %13 = arith.addf %10, %12 : vector<8x32xf32>
    %cst_11 = arith.constant 0.000000e+00 : f32
    %14 = vector.broadcast %cst_11 : f32 to vector<8x32xf32>
    %15 = arith.maximumf %13, %14 : vector<8x32xf32>
    %16 = arith.truncf %15 : vector<8x32xf32> to vector<8x32xbf16>
    %c0_12 = arith.constant 0 : index
    %c0_13 = arith.constant 0 : index
    %17 = vector.load %arg6[%c0_12, %c0_13] : memref<32x256xbf16, #tpu.memory_space<vmem>>, vector<32x256xbf16>
    %cst_14 = arith.constant dense<0.000000e+00> : vector<8x256xf32>
    %18 = tpu.matmul %16, %17, %cst_14 {dimension_numbers = #tpu.dot_dimension_numbers<[1], [0], [0], [1], [0, 0, 1, 1], [], []>} : vector<8x32xbf16>, vector<32x256xbf16>, vector<8x256xf32> -> vector<8x256xf32>
    %c0_15 = arith.constant 0 : index
    %c0_16 = arith.constant 0 : index
    %19 = vector.load %arg7[%c0_15, %c0_16] : memref<1x256xf32, #tpu.memory_space<vmem>>, vector<1x256xf32>
    %20 = vector.broadcast %19 : vector<1x256xf32> to vector<8x256xf32>
    %21 = arith.addf %18, %20 : vector<8x256xf32>
    %22 = math.tanh %21 : vector<8x256xf32>
    %c0_17 = arith.constant 0 : index
    %c0_18 = arith.constant 0 : index
    %23 = vector.load %arg8[%c0_17, %c0_18] : memref<8x256xf32, #tpu.memory_space<vmem>>, vector<8x256xf32>
    tpu.vector_store %arg8[%c0_17, %c0_18], %22 {strides = array<i32>} : memref<8x256xf32, #tpu.memory_space<vmem>>, vector<8x256xf32>,
    return
  }
  func.func @transform_0(%arg0: i32) -> (i32, i32) {
    %c0_i32 = arith.constant 0 : i32
    %c0_i32_0 = arith.constant 0 : i32
    %c0_i32_1 = arith.constant 0 : i32
    return %c0_i32, %c0_i32_0 : i32, i32
  }
  func.func @transform_1(%arg0: i32) -> (i32, i32) {
    %c0_i32 = arith.constant 0 : i32
    %c0_i32_0 = arith.constant 0 : i32
    %c0_i32_1 = arith.constant 0 : i32
    return %c0_i32, %c0_i32_0 : i32, i32
  }
  func.func @transform_2(%arg0: i32) -> (i32, i32) {
    %c0_i32 = arith.constant 0 : i32
    %c0_i32_0 = arith.constant 0 : i32
    %c0_i32_1 = arith.constant 0 : i32
    return %c0_i32, %c0_i32_0 : i32, i32
  }
  func.func @transform_3(%arg0: i32) -> (i32, i32) {
    %c0_i32 = arith.constant 0 : i32
    %c0_i32_0 = arith.constant 0 : i32
    %c0_i32_1 = arith.constant 0 : i32
    return %c0_i32, %c0_i32_0 : i32, i32
  }
  func.func @transform_4(%arg0: i32) -> (i32, i32) {
    %c0_i32 = arith.constant 0 : i32
    %c0_i32_0 = arith.constant 0 : i32
    %c0_i32_1 = arith.constant 0 : i32
    return %c0_i32, %c0_i32_0 : i32, i32
  }
  func.func @transform_5(%arg0: i32) -> (i32, i32) {
    %c0_i32 = arith.constant 0 : i32
    %c0_i32_0 = arith.constant 0 : i32
    %c0_i32_1 = arith.constant 0 : i32
    return %c0_i32, %c0_i32_0 : i32, i32
  }
  func.func @transform_6(%arg0: i32) -> (i32, i32) {
    %c0_i32 = arith.constant 0 : i32
    %c0_i32_0 = arith.constant 0 : i32
    %c0_i32_1 = arith.constant 0 : i32
    return %c0_i32, %c0_i32_0 : i32, i32
  }
  func.func @transform_7(%arg0: i32) -> (i32, i32) {
    %c0_i32 = arith.constant 0 : i32
    %c0_i32_0 = arith.constant 0 : i32
    %c0_i32_1 = arith.constant 0 : i32
    return %c0_i32, %c0_i32_0 : i32, i32
  }
}

module attributes {stable_mosaic.version = 11 : i64} {
  func.func @_mlp3_kernel(%arg0: i32, %arg1: memref<8x32xbf16, #tpu.memory_space<vmem>>, %arg2: memref<32x32xbf16, #tpu.memory_space<vmem>>, %arg3: memref<1x32xf32, #tpu.memory_space<vmem>>, %arg4: memref<32x32xbf16, #tpu.memory_space<vmem>>, %arg5: memref<1x32xf32, #tpu.memory_space<vmem>>, %arg6: memref<32x128xbf16, #tpu.memory_space<vmem>>, %arg7: memref<1x128xf32, #tpu.memory_space<vmem>>, %arg8: memref<8x128xf32, #tpu.memory_space<vmem>>) attributes {dimension_semantics = [#tpu.dimension_semantics<arbitrary>], iteration_bounds = array<i64: 1>, scalar_prefetch = 0 : i64, scratch_operands = 0 : i64, tpu.core_type = #tpu.core_type<tc>, window_params = [{pipeline_mode = #tpu.pipeline_mode<synchronous>, transform_indices = @transform_0, window_bounds = array<i64: 8, 32>}, {pipeline_mode = #tpu.pipeline_mode<synchronous>, transform_indices = @transform_1, window_bounds = array<i64: 32, 32>}, {pipeline_mode = #tpu.pipeline_mode<synchronous>, transform_indices = @transform_2, window_bounds = array<i64: 1, 32>}, {pipeline_mode = #tpu.pipeline_mode<synchronous>, transform_indices = @transform_3, window_bounds = array<i64: 32, 32>}, {pipeline_mode = #tpu.pipeline_mode<synchronous>, transform_indices = @transform_4, window_bounds = array<i64: 1, 32>}, {pipeline_mode = #tpu.pipeline_mode<synchronous>, transform_indices = @transform_5, window_bounds = array<i64: 32, 128>}, {pipeline_mode = #tpu.pipeline_mode<synchronous>, transform_indices = @transform_6, window_bounds = array<i64: 1, 128>}, {pipeline_mode = #tpu.pipeline_mode<synchronous>, transform_indices = @transform_7, window_bounds = array<i64: 8, 128>}]} {
    %c0 = arith.constant 0 : index
    %c0_0 = arith.constant 0 : index
    %0 = vector.load %arg1[%c0, %c0_0] : memref<8x32xbf16, #tpu.memory_space<vmem>>, vector<8x32xbf16>
    %c0_1 = arith.constant 0 : index
    %c0_2 = arith.constant 0 : index
    %1 = vector.load %arg2[%c0_1, %c0_2] : memref<32x32xbf16, #tpu.memory_space<vmem>>, vector<32x32xbf16>
    %cst = arith.constant dense<0.000000e+00> : vector<8x32xf32>
    %2 = tpu.matmul %0, %1, %cst {dimension_numbers = #tpu.dot_dimension_numbers<[1], [0], [0], [1], [0, 0, 1, 1], [], []>} : vector<8x32xbf16>, vector<32x32xbf16>, vector<8x32xf32> -> vector<8x32xf32>
    %c0_3 = arith.constant 0 : index
    %c0_4 = arith.constant 0 : index
    %3 = vector.load %arg3[%c0_3, %c0_4] : memref<1x32xf32, #tpu.memory_space<vmem>>, vector<1x32xf32>
    %4 = vector.broadcast %3 : vector<1x32xf32> to vector<8x32xf32>
    %5 = arith.addf %2, %4 : vector<8x32xf32>
    %cst_5 = arith.constant 0.000000e+00 : f32
    %6 = vector.broadcast %cst_5 : f32 to vector<8x32xf32>
    %7 = arith.maximumf %5, %6 : vector<8x32xf32>
    %8 = arith.truncf %7 : vector<8x32xf32> to vector<8x32xbf16>
    %c0_6 = arith.constant 0 : index
    %c0_7 = arith.constant 0 : index
    %9 = vector.load %arg4[%c0_6, %c0_7] : memref<32x32xbf16, #tpu.memory_space<vmem>>, vector<32x32xbf16>
    %cst_8 = arith.constant dense<0.000000e+00> : vector<8x32xf32>
    %10 = tpu.matmul %8, %9, %cst_8 {dimension_numbers = #tpu.dot_dimension_numbers<[1], [0], [0], [1], [0, 0, 1, 1], [], []>} : vector<8x32xbf16>, vector<32x32xbf16>, vector<8x32xf32> -> vector<8x32xf32>
    %c0_9 = arith.constant 0 : index
    %c0_10 = arith.constant 0 : index
    %11 = vector.load %arg5[%c0_9, %c0_10] : memref<1x32xf32, #tpu.memory_space<vmem>>, vector<1x32xf32>
    %12 = vector.broadcast %11 : vector<1x32xf32> to vector<8x32xf32>
    %13 = arith.addf %10, %12 : vector<8x32xf32>
    %cst_11 = arith.constant 0.000000e+00 : f32
    %14 = vector.broadcast %cst_11 : f32 to vector<8x32xf32>
    %15 = arith.maximumf %13, %14 : vector<8x32xf32>
    %16 = arith.truncf %15 : vector<8x32xf32> to vector<8x32xbf16>
    %c0_12 = arith.constant 0 : index
    %c0_13 = arith.constant 0 : index
    %17 = vector.load %arg6[%c0_12, %c0_13] : memref<32x128xbf16, #tpu.memory_space<vmem>>, vector<32x128xbf16>
    %cst_14 = arith.constant dense<0.000000e+00> : vector<8x128xf32>
    %18 = tpu.matmul %16, %17, %cst_14 {dimension_numbers = #tpu.dot_dimension_numbers<[1], [0], [0], [1], [0, 0, 1, 1], [], []>} : vector<8x32xbf16>, vector<32x128xbf16>, vector<8x128xf32> -> vector<8x128xf32>
    %c0_15 = arith.constant 0 : index
    %c0_16 = arith.constant 0 : index
    %19 = vector.load %arg7[%c0_15, %c0_16] : memref<1x128xf32, #tpu.memory_space<vmem>>, vector<1x128xf32>
    %20 = vector.broadcast %19 : vector<1x128xf32> to vector<8x128xf32>
    %21 = arith.addf %18, %20 : vector<8x128xf32>
    %22 = math.tanh %21 : vector<8x128xf32>
    %c0_17 = arith.constant 0 : index
    %c0_18 = arith.constant 0 : index
    %23 = vector.load %arg8[%c0_17, %c0_18] : memref<8x128xf32, #tpu.memory_space<vmem>>, vector<8x128xf32>
    tpu.vector_store %arg8[%c0_17, %c0_18], %22 {strides = array<i32>} : memref<8x128xf32, #tpu.memory_space<vmem>>, vector<8x128xf32>,
    return
  }
  func.func @transform_0(%arg0: i32) -> (i32, i32) {
    %c0_i32 = arith.constant 0 : i32
    %c0_i32_0 = arith.constant 0 : i32
    %c0_i32_1 = arith.constant 0 : i32
    return %c0_i32, %c0_i32_0 : i32, i32
  }
  func.func @transform_1(%arg0: i32) -> (i32, i32) {
    %c0_i32 = arith.constant 0 : i32
    %c0_i32_0 = arith.constant 0 : i32
    %c0_i32_1 = arith.constant 0 : i32
    return %c0_i32, %c0_i32_0 : i32, i32
  }
  func.func @transform_2(%arg0: i32) -> (i32, i32) {
    %c0_i32 = arith.constant 0 : i32
    %c0_i32_0 = arith.constant 0 : i32
    %c0_i32_1 = arith.constant 0 : i32
    return %c0_i32, %c0_i32_0 : i32, i32
  }
  func.func @transform_3(%arg0: i32) -> (i32, i32) {
    %c0_i32 = arith.constant 0 : i32
    %c0_i32_0 = arith.constant 0 : i32
    %c0_i32_1 = arith.constant 0 : i32
    return %c0_i32, %c0_i32_0 : i32, i32
  }
  func.func @transform_4(%arg0: i32) -> (i32, i32) {
    %c0_i32 = arith.constant 0 : i32
    %c0_i32_0 = arith.constant 0 : i32
    %c0_i32_1 = arith.constant 0 : i32
    return %c0_i32, %c0_i32_0 : i32, i32
  }
  func.func @transform_5(%arg0: i32) -> (i32, i32) {
    %c0_i32 = arith.constant 0 : i32
    %c0_i32_0 = arith.constant 0 : i32
    %c0_i32_1 = arith.constant 0 : i32
    return %c0_i32, %c0_i32_0 : i32, i32
  }
  func.func @transform_6(%arg0: i32) -> (i32, i32) {
    %c0_i32 = arith.constant 0 : i32
    %c0_i32_0 = arith.constant 0 : i32
    %c0_i32_1 = arith.constant 0 : i32
    return %c0_i32, %c0_i32_0 : i32, i32
  }
  func.func @transform_7(%arg0: i32) -> (i32, i32) {
    %c0_i32 = arith.constant 0 : i32
    %c0_i32_0 = arith.constant 0 : i32
    %c0_i32_1 = arith.constant 0 : i32
    return %c0_i32, %c0_i32_0 : i32, i32
  }
}

module attributes {stable_mosaic.version = 11 : i64} {
  func.func @_an_inv_kernel(%arg0: i32, %arg1: memref<2x64x12xf32, #tpu.memory_space<vmem>>, %arg2: memref<2x1x12xf32, #tpu.memory_space<vmem>>, %arg3: memref<2x1x12xf32, #tpu.memory_space<vmem>>, %arg4: memref<2x12x12xf32, #tpu.memory_space<vmem>>, %arg5: memref<2x64x12xf32, #tpu.memory_space<vmem>>) attributes {dimension_semantics = [#tpu.dimension_semantics<arbitrary>], iteration_bounds = array<i64: 1>, scalar_prefetch = 0 : i64, scratch_operands = 0 : i64, tpu.core_type = #tpu.core_type<tc>, window_params = [{pipeline_mode = #tpu.pipeline_mode<synchronous>, transform_indices = @transform_0, window_bounds = array<i64: 2, 64, 12>}, {pipeline_mode = #tpu.pipeline_mode<synchronous>, transform_indices = @transform_1, window_bounds = array<i64: 2, 1, 12>}, {pipeline_mode = #tpu.pipeline_mode<synchronous>, transform_indices = @transform_2, window_bounds = array<i64: 2, 1, 12>}, {pipeline_mode = #tpu.pipeline_mode<synchronous>, transform_indices = @transform_3, window_bounds = array<i64: 2, 12, 12>}, {pipeline_mode = #tpu.pipeline_mode<synchronous>, transform_indices = @transform_4, window_bounds = array<i64: 2, 64, 12>}]} {
    %c0 = arith.constant 0 : index
    %c0_0 = arith.constant 0 : index
    %c0_1 = arith.constant 0 : index
    %0 = vector.load %arg1[%c0, %c0_0, %c0_1] : memref<2x64x12xf32, #tpu.memory_space<vmem>>, vector<2x64x12xf32>
    %c0_2 = arith.constant 0 : index
    %c0_3 = arith.constant 0 : index
    %c0_4 = arith.constant 0 : index
    %1 = vector.load %arg2[%c0_2, %c0_3, %c0_4] : memref<2x1x12xf32, #tpu.memory_space<vmem>>, vector<2x1x12xf32>
    %2 = math.exp %1 : vector<2x1x12xf32>
    %3 = vector.broadcast %2 : vector<2x1x12xf32> to vector<2x64x12xf32>
    %4 = arith.mulf %0, %3 : vector<2x64x12xf32>
    %c0_5 = arith.constant 0 : index
    %c0_6 = arith.constant 0 : index
    %c0_7 = arith.constant 0 : index
    %5 = vector.load %arg3[%c0_5, %c0_6, %c0_7] : memref<2x1x12xf32, #tpu.memory_space<vmem>>, vector<2x1x12xf32>
    %6 = vector.broadcast %5 : vector<2x1x12xf32> to vector<2x64x12xf32>
    %7 = arith.addf %4, %6 : vector<2x64x12xf32>
    %c0_8 = arith.constant 0 : index
    %c0_9 = arith.constant 0 : index
    %c0_10 = arith.constant 0 : index
    %8 = vector.load %arg4[%c0_8, %c0_9, %c0_10] : memref<2x12x12xf32, #tpu.memory_space<vmem>>, vector<2x12x12xf32>
    "tpu.trace_start"() <{level = 10 : i32, message = "bpj,bij->bpi"}> : () -> ()
    %cst = arith.constant dense<0.000000e+00> : vector<2x64x12xf32>
    %9 = tpu.matmul %7, %8, %cst {dimension_numbers = #tpu.dot_dimension_numbers<[2], [2], [1], [1], [0, 0, 0, 1, 1, 1], [0], [0]>} : vector<2x64x12xf32>, vector<2x12x12xf32>, vector<2x64x12xf32> -> vector<2x64x12xf32>
    "tpu.trace_stop"() : () -> ()
    %c0_11 = arith.constant 0 : index
    %c0_12 = arith.constant 0 : index
    %c0_13 = arith.constant 0 : index
    %10 = vector.load %arg5[%c0_11, %c0_12, %c0_13] : memref<2x64x12xf32, #tpu.memory_space<vmem>>, vector<2x64x12xf32>
    tpu.vector_store %arg5[%c0_11, %c0_12, %c0_13], %9 {strides = array<i32>} : memref<2x64x12xf32, #tpu.memory_space<vmem>>, vector<2x64x12xf32>,
    return
  }
  func.func @transform_0(%arg0: i32) -> (i32, i32, i32) {
    %c0_i32 = arith.constant 0 : i32
    %c0_i32_0 = arith.constant 0 : i32
    %c0_i32_1 = arith.constant 0 : i32
    %c0_i32_2 = arith.constant 0 : i32
    return %c0_i32, %c0_i32_0, %c0_i32_1 : i32, i32, i32
  }
  func.func @transform_1(%arg0: i32) -> (i32, i32, i32) {
    %c0_i32 = arith.constant 0 : i32
    %c0_i32_0 = arith.constant 0 : i32
    %c0_i32_1 = arith.constant 0 : i32
    %c0_i32_2 = arith.constant 0 : i32
    return %c0_i32, %c0_i32_0, %c0_i32_1 : i32, i32, i32
  }
  func.func @transform_2(%arg0: i32) -> (i32, i32, i32) {
    %c0_i32 = arith.constant 0 : i32
    %c0_i32_0 = arith.constant 0 : i32
    %c0_i32_1 = arith.constant 0 : i32
    %c0_i32_2 = arith.constant 0 : i32
    return %c0_i32, %c0_i32_0, %c0_i32_1 : i32, i32, i32
  }
  func.func @transform_3(%arg0: i32) -> (i32, i32, i32) {
    %c0_i32 = arith.constant 0 : i32
    %c0_i32_0 = arith.constant 0 : i32
    %c0_i32_1 = arith.constant 0 : i32
    %c0_i32_2 = arith.constant 0 : i32
    return %c0_i32, %c0_i32_0, %c0_i32_1 : i32, i32, i32
  }
  func.func @transform_4(%arg0: i32) -> (i32, i32, i32) {
    %c0_i32 = arith.constant 0 : i32
    %c0_i32_0 = arith.constant 0 : i32
    %c0_i32_1 = arith.constant 0 : i32
    %c0_i32_2 = arith.constant 0 : i32
    return %c0_i32, %c0_i32_0, %c0_i32_1 : i32, i32, i32
  }
}

module attributes {stable_mosaic.version = 11 : i64} {
  func.func @_an_inv_kernel(%arg0: i32, %arg1: memref<2x16x24xf32, #tpu.memory_space<vmem>>, %arg2: memref<2x1x24xf32, #tpu.memory_space<vmem>>, %arg3: memref<2x1x24xf32, #tpu.memory_space<vmem>>, %arg4: memref<2x24x24xf32, #tpu.memory_space<vmem>>, %arg5: memref<2x16x24xf32, #tpu.memory_space<vmem>>) attributes {dimension_semantics = [#tpu.dimension_semantics<arbitrary>], iteration_bounds = array<i64: 1>, scalar_prefetch = 0 : i64, scratch_operands = 0 : i64, tpu.core_type = #tpu.core_type<tc>, window_params = [{pipeline_mode = #tpu.pipeline_mode<synchronous>, transform_indices = @transform_0, window_bounds = array<i64: 2, 16, 24>}, {pipeline_mode = #tpu.pipeline_mode<synchronous>, transform_indices = @transform_1, window_bounds = array<i64: 2, 1, 24>}, {pipeline_mode = #tpu.pipeline_mode<synchronous>, transform_indices = @transform_2, window_bounds = array<i64: 2, 1, 24>}, {pipeline_mode = #tpu.pipeline_mode<synchronous>, transform_indices = @transform_3, window_bounds = array<i64: 2, 24, 24>}, {pipeline_mode = #tpu.pipeline_mode<synchronous>, transform_indices = @transform_4, window_bounds = array<i64: 2, 16, 24>}]} {
    %c0 = arith.constant 0 : index
    %c0_0 = arith.constant 0 : index
    %c0_1 = arith.constant 0 : index
    %0 = vector.load %arg1[%c0, %c0_0, %c0_1] : memref<2x16x24xf32, #tpu.memory_space<vmem>>, vector<2x16x24xf32>
    %c0_2 = arith.constant 0 : index
    %c0_3 = arith.constant 0 : index
    %c0_4 = arith.constant 0 : index
    %1 = vector.load %arg2[%c0_2, %c0_3, %c0_4] : memref<2x1x24xf32, #tpu.memory_space<vmem>>, vector<2x1x24xf32>
    %2 = math.exp %1 : vector<2x1x24xf32>
    %3 = vector.broadcast %2 : vector<2x1x24xf32> to vector<2x16x24xf32>
    %4 = arith.mulf %0, %3 : vector<2x16x24xf32>
    %c0_5 = arith.constant 0 : index
    %c0_6 = arith.constant 0 : index
    %c0_7 = arith.constant 0 : index
    %5 = vector.load %arg3[%c0_5, %c0_6, %c0_7] : memref<2x1x24xf32, #tpu.memory_space<vmem>>, vector<2x1x24xf32>
    %6 = vector.broadcast %5 : vector<2x1x24xf32> to vector<2x16x24xf32>
    %7 = arith.addf %4, %6 : vector<2x16x24xf32>
    %c0_8 = arith.constant 0 : index
    %c0_9 = arith.constant 0 : index
    %c0_10 = arith.constant 0 : index
    %8 = vector.load %arg4[%c0_8, %c0_9, %c0_10] : memref<2x24x24xf32, #tpu.memory_space<vmem>>, vector<2x24x24xf32>
    "tpu.trace_start"() <{level = 10 : i32, message = "bpj,bij->bpi"}> : () -> ()
    %cst = arith.constant dense<0.000000e+00> : vector<2x16x24xf32>
    %9 = tpu.matmul %7, %8, %cst {dimension_numbers = #tpu.dot_dimension_numbers<[2], [2], [1], [1], [0, 0, 0, 1, 1, 1], [0], [0]>} : vector<2x16x24xf32>, vector<2x24x24xf32>, vector<2x16x24xf32> -> vector<2x16x24xf32>
    "tpu.trace_stop"() : () -> ()
    %c0_11 = arith.constant 0 : index
    %c0_12 = arith.constant 0 : index
    %c0_13 = arith.constant 0 : index
    %10 = vector.load %arg5[%c0_11, %c0_12, %c0_13] : memref<2x16x24xf32, #tpu.memory_space<vmem>>, vector<2x16x24xf32>
    tpu.vector_store %arg5[%c0_11, %c0_12, %c0_13], %9 {strides = array<i32>} : memref<2x16x24xf32, #tpu.memory_space<vmem>>, vector<2x16x24xf32>,
    return
  }
  func.func @transform_0(%arg0: i32) -> (i32, i32, i32) {
    %c0_i32 = arith.constant 0 : i32
    %c0_i32_0 = arith.constant 0 : i32
    %c0_i32_1 = arith.constant 0 : i32
    %c0_i32_2 = arith.constant 0 : i32
    return %c0_i32, %c0_i32_0, %c0_i32_1 : i32, i32, i32
  }
  func.func @transform_1(%arg0: i32) -> (i32, i32, i32) {
    %c0_i32 = arith.constant 0 : i32
    %c0_i32_0 = arith.constant 0 : i32
    %c0_i32_1 = arith.constant 0 : i32
    %c0_i32_2 = arith.constant 0 : i32
    return %c0_i32, %c0_i32_0, %c0_i32_1 : i32, i32, i32
  }
  func.func @transform_2(%arg0: i32) -> (i32, i32, i32) {
    %c0_i32 = arith.constant 0 : i32
    %c0_i32_0 = arith.constant 0 : i32
    %c0_i32_1 = arith.constant 0 : i32
    %c0_i32_2 = arith.constant 0 : i32
    return %c0_i32, %c0_i32_0, %c0_i32_1 : i32, i32, i32
  }
  func.func @transform_3(%arg0: i32) -> (i32, i32, i32) {
    %c0_i32 = arith.constant 0 : i32
    %c0_i32_0 = arith.constant 0 : i32
    %c0_i32_1 = arith.constant 0 : i32
    %c0_i32_2 = arith.constant 0 : i32
    return %c0_i32, %c0_i32_0, %c0_i32_1 : i32, i32, i32
  }
  func.func @transform_4(%arg0: i32) -> (i32, i32, i32) {
    %c0_i32 = arith.constant 0 : i32
    %c0_i32_0 = arith.constant 0 : i32
    %c0_i32_1 = arith.constant 0 : i32
    %c0_i32_2 = arith.constant 0 : i32
    return %c0_i32, %c0_i32_0, %c0_i32_1 : i32, i32, i32
  }
}

module attributes {stable_mosaic.version = 11 : i64} {
  func.func @_mm_kernel(%arg0: i32, %arg1: i32, %arg2: memref<128x54xbf16, #tpu.memory_space<vmem>>, %arg3: memref<54x128xbf16, #tpu.memory_space<vmem>>, %arg4: memref<1x128xf32, #tpu.memory_space<vmem>>, %arg5: memref<128x128xf32, #tpu.memory_space<vmem>>) attributes {dimension_semantics = [#tpu.dimension_semantics<parallel>, #tpu.dimension_semantics<parallel>], iteration_bounds = array<i64: 1, 1>, scalar_prefetch = 0 : i64, scratch_operands = 0 : i64, tpu.core_type = #tpu.core_type<tc>, window_params = [{transform_indices = @transform_0, window_bounds = array<i64: 128, 54>}, {transform_indices = @transform_1, window_bounds = array<i64: 54, 128>}, {transform_indices = @transform_2, window_bounds = array<i64: 1, 128>}, {transform_indices = @transform_3, window_bounds = array<i64: 128, 128>}]} {
    %c0 = arith.constant 0 : index
    %c0_0 = arith.constant 0 : index
    %0 = vector.load %arg2[%c0, %c0_0] : memref<128x54xbf16, #tpu.memory_space<vmem>>, vector<128x54xbf16>
    %c0_1 = arith.constant 0 : index
    %c0_2 = arith.constant 0 : index
    %1 = vector.load %arg3[%c0_1, %c0_2] : memref<54x128xbf16, #tpu.memory_space<vmem>>, vector<54x128xbf16>
    %cst = arith.constant dense<0.000000e+00> : vector<128x128xf32>
    %2 = tpu.matmul %0, %1, %cst {dimension_numbers = #tpu.dot_dimension_numbers<[1], [0], [0], [1], [0, 0, 1, 1], [], []>} : vector<128x54xbf16>, vector<54x128xbf16>, vector<128x128xf32> -> vector<128x128xf32>
    %c0_3 = arith.constant 0 : index
    %c0_4 = arith.constant 0 : index
    %3 = vector.load %arg4[%c0_3, %c0_4] : memref<1x128xf32, #tpu.memory_space<vmem>>, vector<1x128xf32>
    %4 = vector.broadcast %3 : vector<1x128xf32> to vector<128x128xf32>
    %5 = arith.addf %2, %4 : vector<128x128xf32>
    %c0_5 = arith.constant 0 : index
    %c0_6 = arith.constant 0 : index
    %6 = vector.load %arg5[%c0_5, %c0_6] : memref<128x128xf32, #tpu.memory_space<vmem>>, vector<128x128xf32>
    tpu.vector_store %arg5[%c0_5, %c0_6], %5 {strides = array<i32>} : memref<128x128xf32, #tpu.memory_space<vmem>>, vector<128x128xf32>,
    return
  }
  func.func @transform_0(%arg0: i32, %arg1: i32) -> (i32, i32) {
    %c0_i32 = arith.constant 0 : i32
    %c0_i32_0 = arith.constant 0 : i32
    return %arg0, %c0_i32 : i32, i32
  }
  func.func @transform_1(%arg0: i32, %arg1: i32) -> (i32, i32) {
    %c0_i32 = arith.constant 0 : i32
    %c0_i32_0 = arith.constant 0 : i32
    return %c0_i32, %arg1 : i32, i32
  }
  func.func @transform_2(%arg0: i32, %arg1: i32) -> (i32, i32) {
    %c0_i32 = arith.constant 0 : i32
    %c0_i32_0 = arith.constant 0 : i32
    return %c0_i32, %arg1 : i32, i32
  }
  func.func @transform_3(%arg0: i32, %arg1: i32) -> (i32, i32) {
    %c0_i32 = arith.constant 0 : i32
    return %arg0, %arg1 : i32, i32
  }
}

module attributes {stable_mosaic.version = 11 : i64} {
  func.func @_mm_kernel(%arg0: i32, %arg1: i32, %arg2: memref<256x27xbf16, #tpu.memory_space<vmem>>, %arg3: memref<27x128xbf16, #tpu.memory_space<vmem>>, %arg4: memref<1x128xf32, #tpu.memory_space<vmem>>, %arg5: memref<256x128xf32, #tpu.memory_space<vmem>>) attributes {dimension_semantics = [#tpu.dimension_semantics<parallel>, #tpu.dimension_semantics<parallel>], iteration_bounds = array<i64: 2, 1>, scalar_prefetch = 0 : i64, scratch_operands = 0 : i64, tpu.core_type = #tpu.core_type<tc>, window_params = [{transform_indices = @transform_0, window_bounds = array<i64: 256, 27>}, {transform_indices = @transform_1, window_bounds = array<i64: 27, 128>}, {transform_indices = @transform_2, window_bounds = array<i64: 1, 128>}, {transform_indices = @transform_3, window_bounds = array<i64: 256, 128>}]} {
    %c0 = arith.constant 0 : index
    %c0_0 = arith.constant 0 : index
    %0 = vector.load %arg2[%c0, %c0_0] : memref<256x27xbf16, #tpu.memory_space<vmem>>, vector<256x27xbf16>
    %c0_1 = arith.constant 0 : index
    %c0_2 = arith.constant 0 : index
    %1 = vector.load %arg3[%c0_1, %c0_2] : memref<27x128xbf16, #tpu.memory_space<vmem>>, vector<27x128xbf16>
    %cst = arith.constant dense<0.000000e+00> : vector<256x128xf32>
    %2 = tpu.matmul %0, %1, %cst {dimension_numbers = #tpu.dot_dimension_numbers<[1], [0], [0], [1], [0, 0, 1, 1], [], []>} : vector<256x27xbf16>, vector<27x128xbf16>, vector<256x128xf32> -> vector<256x128xf32>
    %c0_3 = arith.constant 0 : index
    %c0_4 = arith.constant 0 : index
    %3 = vector.load %arg4[%c0_3, %c0_4] : memref<1x128xf32, #tpu.memory_space<vmem>>, vector<1x128xf32>
    %4 = vector.broadcast %3 : vector<1x128xf32> to vector<256x128xf32>
    %5 = arith.addf %2, %4 : vector<256x128xf32>
    %cst_5 = arith.constant 0.000000e+00 : f32
    %6 = vector.broadcast %cst_5 : f32 to vector<256x128xf32>
    %7 = arith.maximumf %5, %6 : vector<256x128xf32>
    %c0_6 = arith.constant 0 : index
    %c0_7 = arith.constant 0 : index
    %8 = vector.load %arg5[%c0_6, %c0_7] : memref<256x128xf32, #tpu.memory_space<vmem>>, vector<256x128xf32>
    tpu.vector_store %arg5[%c0_6, %c0_7], %7 {strides = array<i32>} : memref<256x128xf32, #tpu.memory_space<vmem>>, vector<256x128xf32>,
    return
  }
  func.func @transform_0(%arg0: i32, %arg1: i32) -> (i32, i32) {
    %c0_i32 = arith.constant 0 : i32
    %c0_i32_0 = arith.constant 0 : i32
    return %arg0, %c0_i32 : i32, i32
  }
  func.func @transform_1(%arg0: i32, %arg1: i32) -> (i32, i32) {
    %c0_i32 = arith.constant 0 : i32
    %c0_i32_0 = arith.constant 0 : i32
    return %c0_i32, %arg1 : i32, i32
  }
  func.func @transform_2(%arg0: i32, %arg1: i32) -> (i32, i32) {
    %c0_i32 = arith.constant 0 : i32
    %c0_i32_0 = arith.constant 0 : i32
    return %c0_i32, %arg1 : i32, i32
  }
  func.func @transform_3(%arg0: i32, %arg1: i32) -> (i32, i32) {
    %c0_i32 = arith.constant 0 : i32
    return %arg0, %arg1 : i32, i32
  }
}

module attributes {stable_mosaic.version = 11 : i64} {
  func.func @_mm_kernel(%arg0: i32, %arg1: i32, %arg2: memref<128x144xbf16, #tpu.memory_space<vmem>>, %arg3: memref<144x128xbf16, #tpu.memory_space<vmem>>, %arg4: memref<1x128xf32, #tpu.memory_space<vmem>>, %arg5: memref<128x128xf32, #tpu.memory_space<vmem>>) attributes {dimension_semantics = [#tpu.dimension_semantics<parallel>, #tpu.dimension_semantics<parallel>], iteration_bounds = array<i64: 1, 1>, scalar_prefetch = 0 : i64, scratch_operands = 0 : i64, tpu.core_type = #tpu.core_type<tc>, window_params = [{transform_indices = @transform_0, window_bounds = array<i64: 128, 144>}, {transform_indices = @transform_1, window_bounds = array<i64: 144, 128>}, {transform_indices = @transform_2, window_bounds = array<i64: 1, 128>}, {transform_indices = @transform_3, window_bounds = array<i64: 128, 128>}]} {
    %c0 = arith.constant 0 : index
    %c0_0 = arith.constant 0 : index
    %0 = vector.load %arg2[%c0, %c0_0] : memref<128x144xbf16, #tpu.memory_space<vmem>>, vector<128x144xbf16>
    %c0_1 = arith.constant 0 : index
    %c0_2 = arith.constant 0 : index
    %1 = vector.load %arg3[%c0_1, %c0_2] : memref<144x128xbf16, #tpu.memory_space<vmem>>, vector<144x128xbf16>
    %cst = arith.constant dense<0.000000e+00> : vector<128x128xf32>
    %2 = tpu.matmul %0, %1, %cst {dimension_numbers = #tpu.dot_dimension_numbers<[1], [0], [0], [1], [0, 0, 1, 1], [], []>} : vector<128x144xbf16>, vector<144x128xbf16>, vector<128x128xf32> -> vector<128x128xf32>
    %c0_3 = arith.constant 0 : index
    %c0_4 = arith.constant 0 : index
    %3 = vector.load %arg4[%c0_3, %c0_4] : memref<1x128xf32, #tpu.memory_space<vmem>>, vector<1x128xf32>
    %4 = vector.broadcast %3 : vector<1x128xf32> to vector<128x128xf32>
    %5 = arith.addf %2, %4 : vector<128x128xf32>
    %cst_5 = arith.constant 0.000000e+00 : f32
    %6 = vector.broadcast %cst_5 : f32 to vector<128x128xf32>
    %7 = arith.maximumf %5, %6 : vector<128x128xf32>
    %c0_6 = arith.constant 0 : index
    %c0_7 = arith.constant 0 : index
    %8 = vector.load %arg5[%c0_6, %c0_7] : memref<128x128xf32, #tpu.memory_space<vmem>>, vector<128x128xf32>
    tpu.vector_store %arg5[%c0_6, %c0_7], %7 {strides = array<i32>} : memref<128x128xf32, #tpu.memory_space<vmem>>, vector<128x128xf32>,
    return
  }
  func.func @transform_0(%arg0: i32, %arg1: i32) -> (i32, i32) {
    %c0_i32 = arith.constant 0 : i32
    %c0_i32_0 = arith.constant 0 : i32
    return %arg0, %c0_i32 : i32, i32
  }
  func.func @transform_1(%arg0: i32, %arg1: i32) -> (i32, i32) {
    %c0_i32 = arith.constant 0 : i32
    %c0_i32_0 = arith.constant 0 : i32
    return %c0_i32, %arg1 : i32, i32
  }
  func.func @transform_2(%arg0: i32, %arg1: i32) -> (i32, i32) {
    %c0_i32 = arith.constant 0 : i32
    %c0_i32_0 = arith.constant 0 : i32
    return %c0_i32, %arg1 : i32, i32
  }
  func.func @transform_3(%arg0: i32, %arg1: i32) -> (i32, i32) {
    %c0_i32 = arith.constant 0 : i32
    return %arg0, %arg1 : i32, i32
  }
}

module attributes {stable_mosaic.version = 11 : i64} {
  func.func @_mm_kernel(%arg0: i32, %arg1: i32, %arg2: memref<32x144xbf16, #tpu.memory_space<vmem>>, %arg3: memref<144x128xbf16, #tpu.memory_space<vmem>>, %arg4: memref<1x128xf32, #tpu.memory_space<vmem>>, %arg5: memref<32x128xf32, #tpu.memory_space<vmem>>) attributes {dimension_semantics = [#tpu.dimension_semantics<parallel>, #tpu.dimension_semantics<parallel>], iteration_bounds = array<i64: 1, 1>, scalar_prefetch = 0 : i64, scratch_operands = 0 : i64, tpu.core_type = #tpu.core_type<tc>, window_params = [{transform_indices = @transform_0, window_bounds = array<i64: 32, 144>}, {transform_indices = @transform_1, window_bounds = array<i64: 144, 128>}, {transform_indices = @transform_2, window_bounds = array<i64: 1, 128>}, {transform_indices = @transform_3, window_bounds = array<i64: 32, 128>}]} {
    %c0 = arith.constant 0 : index
    %c0_0 = arith.constant 0 : index
    %0 = vector.load %arg2[%c0, %c0_0] : memref<32x144xbf16, #tpu.memory_space<vmem>>, vector<32x144xbf16>
    %c0_1 = arith.constant 0 : index
    %c0_2 = arith.constant 0 : index
    %1 = vector.load %arg3[%c0_1, %c0_2] : memref<144x128xbf16, #tpu.memory_space<vmem>>, vector<144x128xbf16>
    %cst = arith.constant dense<0.000000e+00> : vector<32x128xf32>
    %2 = tpu.matmul %0, %1, %cst {dimension_numbers = #tpu.dot_dimension_numbers<[1], [0], [0], [1], [0, 0, 1, 1], [], []>} : vector<32x144xbf16>, vector<144x128xbf16>, vector<32x128xf32> -> vector<32x128xf32>
    %c0_3 = arith.constant 0 : index
    %c0_4 = arith.constant 0 : index
    %3 = vector.load %arg4[%c0_3, %c0_4] : memref<1x128xf32, #tpu.memory_space<vmem>>, vector<1x128xf32>
    %4 = vector.broadcast %3 : vector<1x128xf32> to vector<32x128xf32>
    %5 = arith.addf %2, %4 : vector<32x128xf32>
    %cst_5 = arith.constant 0.000000e+00 : f32
    %6 = vector.broadcast %cst_5 : f32 to vector<32x128xf32>
    %7 = arith.maximumf %5, %6 : vector<32x128xf32>
    %c0_6 = arith.constant 0 : index
    %c0_7 = arith.constant 0 : index
    %8 = vector.load %arg5[%c0_6, %c0_7] : memref<32x128xf32, #tpu.memory_space<vmem>>, vector<32x128xf32>
    tpu.vector_store %arg5[%c0_6, %c0_7], %7 {strides = array<i32>} : memref<32x128xf32, #tpu.memory_space<vmem>>, vector<32x128xf32>,
    return
  }
  func.func @transform_0(%arg0: i32, %arg1: i32) -> (i32, i32) {
    %c0_i32 = arith.constant 0 : i32
    %c0_i32_0 = arith.constant 0 : i32
    return %arg0, %c0_i32 : i32, i32
  }
  func.func @transform_1(%arg0: i32, %arg1: i32) -> (i32, i32) {
    %c0_i32 = arith.constant 0 : i32
    %c0_i32_0 = arith.constant 0 : i32
    return %c0_i32, %arg1 : i32, i32
  }
  func.func @transform_2(%arg0: i32, %arg1: i32) -> (i32, i32) {
    %c0_i32 = arith.constant 0 : i32
    %c0_i32_0 = arith.constant 0 : i32
    return %c0_i32, %arg1 : i32, i32
  }
  func.func @transform_3(%arg0: i32, %arg1: i32) -> (i32, i32) {
    %c0_i32 = arith.constant 0 : i32
    return %arg0, %arg1 : i32, i32
  }
}

module attributes {stable_mosaic.version = 11 : i64} {
  func.func @_mm_kernel(%arg0: i32, %arg1: i32, %arg2: memref<32x108xbf16, #tpu.memory_space<vmem>>, %arg3: memref<108x128xbf16, #tpu.memory_space<vmem>>, %arg4: memref<1x128xf32, #tpu.memory_space<vmem>>, %arg5: memref<32x128xf32, #tpu.memory_space<vmem>>) attributes {dimension_semantics = [#tpu.dimension_semantics<parallel>, #tpu.dimension_semantics<parallel>], iteration_bounds = array<i64: 1, 1>, scalar_prefetch = 0 : i64, scratch_operands = 0 : i64, tpu.core_type = #tpu.core_type<tc>, window_params = [{transform_indices = @transform_0, window_bounds = array<i64: 32, 108>}, {transform_indices = @transform_1, window_bounds = array<i64: 108, 128>}, {transform_indices = @transform_2, window_bounds = array<i64: 1, 128>}, {transform_indices = @transform_3, window_bounds = array<i64: 32, 128>}]} {
    %c0 = arith.constant 0 : index
    %c0_0 = arith.constant 0 : index
    %0 = vector.load %arg2[%c0, %c0_0] : memref<32x108xbf16, #tpu.memory_space<vmem>>, vector<32x108xbf16>
    %c0_1 = arith.constant 0 : index
    %c0_2 = arith.constant 0 : index
    %1 = vector.load %arg3[%c0_1, %c0_2] : memref<108x128xbf16, #tpu.memory_space<vmem>>, vector<108x128xbf16>
    %cst = arith.constant dense<0.000000e+00> : vector<32x128xf32>
    %2 = tpu.matmul %0, %1, %cst {dimension_numbers = #tpu.dot_dimension_numbers<[1], [0], [0], [1], [0, 0, 1, 1], [], []>} : vector<32x108xbf16>, vector<108x128xbf16>, vector<32x128xf32> -> vector<32x128xf32>
    %c0_3 = arith.constant 0 : index
    %c0_4 = arith.constant 0 : index
    %3 = vector.load %arg4[%c0_3, %c0_4] : memref<1x128xf32, #tpu.memory_space<vmem>>, vector<1x128xf32>
    %4 = vector.broadcast %3 : vector<1x128xf32> to vector<32x128xf32>
    %5 = arith.addf %2, %4 : vector<32x128xf32>
    %cst_5 = arith.constant 0.000000e+00 : f32
    %6 = vector.broadcast %cst_5 : f32 to vector<32x128xf32>
    %7 = arith.maximumf %5, %6 : vector<32x128xf32>
    %c0_6 = arith.constant 0 : index
    %c0_7 = arith.constant 0 : index
    %8 = vector.load %arg5[%c0_6, %c0_7] : memref<32x128xf32, #tpu.memory_space<vmem>>, vector<32x128xf32>
    tpu.vector_store %arg5[%c0_6, %c0_7], %7 {strides = array<i32>} : memref<32x128xf32, #tpu.memory_space<vmem>>, vector<32x128xf32>,
    return
  }
  func.func @transform_0(%arg0: i32, %arg1: i32) -> (i32, i32) {
    %c0_i32 = arith.constant 0 : i32
    %c0_i32_0 = arith.constant 0 : i32
    return %arg0, %c0_i32 : i32, i32
  }
  func.func @transform_1(%arg0: i32, %arg1: i32) -> (i32, i32) {
    %c0_i32 = arith.constant 0 : i32
    %c0_i32_0 = arith.constant 0 : i32
    return %c0_i32, %arg1 : i32, i32
  }
  func.func @transform_2(%arg0: i32, %arg1: i32) -> (i32, i32) {
    %c0_i32 = arith.constant 0 : i32
    %c0_i32_0 = arith.constant 0 : i32
    return %c0_i32, %arg1 : i32, i32
  }
  func.func @transform_3(%arg0: i32, %arg1: i32) -> (i32, i32) {
    %c0_i32 = arith.constant 0 : i32
    return %arg0, %arg1 : i32, i32
  }
}

module attributes {stable_mosaic.version = 11 : i64} {
  func.func @_mm_kernel(%arg0: i32, %arg1: i32, %arg2: memref<32x256xbf16, #tpu.memory_space<vmem>>, %arg3: memref<256x256xbf16, #tpu.memory_space<vmem>>, %arg4: memref<1x256xf32, #tpu.memory_space<vmem>>, %arg5: memref<32x256xf32, #tpu.memory_space<vmem>>) attributes {dimension_semantics = [#tpu.dimension_semantics<parallel>, #tpu.dimension_semantics<parallel>], iteration_bounds = array<i64: 1, 1>, scalar_prefetch = 0 : i64, scratch_operands = 0 : i64, tpu.core_type = #tpu.core_type<tc>, window_params = [{transform_indices = @transform_0, window_bounds = array<i64: 32, 256>}, {transform_indices = @transform_1, window_bounds = array<i64: 256, 256>}, {transform_indices = @transform_2, window_bounds = array<i64: 1, 256>}, {transform_indices = @transform_3, window_bounds = array<i64: 32, 256>}]} {
    %c0 = arith.constant 0 : index
    %c0_0 = arith.constant 0 : index
    %0 = vector.load %arg2[%c0, %c0_0] : memref<32x256xbf16, #tpu.memory_space<vmem>>, vector<32x256xbf16>
    %c0_1 = arith.constant 0 : index
    %c0_2 = arith.constant 0 : index
    %1 = vector.load %arg3[%c0_1, %c0_2] : memref<256x256xbf16, #tpu.memory_space<vmem>>, vector<256x256xbf16>
    %cst = arith.constant dense<0.000000e+00> : vector<32x256xf32>
    %2 = tpu.matmul %0, %1, %cst {dimension_numbers = #tpu.dot_dimension_numbers<[1], [0], [0], [1], [0, 0, 1, 1], [], []>} : vector<32x256xbf16>, vector<256x256xbf16>, vector<32x256xf32> -> vector<32x256xf32>
    %c0_3 = arith.constant 0 : index
    %c0_4 = arith.constant 0 : index
    %3 = vector.load %arg4[%c0_3, %c0_4] : memref<1x256xf32, #tpu.memory_space<vmem>>, vector<1x256xf32>
    %4 = vector.broadcast %3 : vector<1x256xf32> to vector<32x256xf32>
    %5 = arith.addf %2, %4 : vector<32x256xf32>
    %cst_5 = arith.constant 0.000000e+00 : f32
    %6 = vector.broadcast %cst_5 : f32 to vector<32x256xf32>
    %7 = arith.maximumf %5, %6 : vector<32x256xf32>
    %c0_6 = arith.constant 0 : index
    %c0_7 = arith.constant 0 : index
    %8 = vector.load %arg5[%c0_6, %c0_7] : memref<32x256xf32, #tpu.memory_space<vmem>>, vector<32x256xf32>
    tpu.vector_store %arg5[%c0_6, %c0_7], %7 {strides = array<i32>} : memref<32x256xf32, #tpu.memory_space<vmem>>, vector<32x256xf32>,
    return
  }
  func.func @transform_0(%arg0: i32, %arg1: i32) -> (i32, i32) {
    %c0_i32 = arith.constant 0 : i32
    %c0_i32_0 = arith.constant 0 : i32
    return %arg0, %c0_i32 : i32, i32
  }
  func.func @transform_1(%arg0: i32, %arg1: i32) -> (i32, i32) {
    %c0_i32 = arith.constant 0 : i32
    %c0_i32_0 = arith.constant 0 : i32
    return %c0_i32, %arg1 : i32, i32
  }
  func.func @transform_2(%arg0: i32, %arg1: i32) -> (i32, i32) {
    %c0_i32 = arith.constant 0 : i32
    %c0_i32_0 = arith.constant 0 : i32
    return %c0_i32, %arg1 : i32, i32
  }
  func.func @transform_3(%arg0: i32, %arg1: i32) -> (i32, i32) {
    %c0_i32 = arith.constant 0 : i32
    return %arg0, %arg1 : i32, i32
  }
}

module attributes {stable_mosaic.version = 11 : i64} {
  func.func @_mm_kernel(%arg0: i32, %arg1: i32, %arg2: memref<32x216xbf16, #tpu.memory_space<vmem>>, %arg3: memref<216x256xbf16, #tpu.memory_space<vmem>>, %arg4: memref<1x256xf32, #tpu.memory_space<vmem>>, %arg5: memref<32x256xf32, #tpu.memory_space<vmem>>) attributes {dimension_semantics = [#tpu.dimension_semantics<parallel>, #tpu.dimension_semantics<parallel>], iteration_bounds = array<i64: 1, 1>, scalar_prefetch = 0 : i64, scratch_operands = 0 : i64, tpu.core_type = #tpu.core_type<tc>, window_params = [{transform_indices = @transform_0, window_bounds = array<i64: 32, 216>}, {transform_indices = @transform_1, window_bounds = array<i64: 216, 256>}, {transform_indices = @transform_2, window_bounds = array<i64: 1, 256>}, {transform_indices = @transform_3, window_bounds = array<i64: 32, 256>}]} {
    %c0 = arith.constant 0 : index
    %c0_0 = arith.constant 0 : index
    %0 = vector.load %arg2[%c0, %c0_0] : memref<32x216xbf16, #tpu.memory_space<vmem>>, vector<32x216xbf16>
    %c0_1 = arith.constant 0 : index
    %c0_2 = arith.constant 0 : index
    %1 = vector.load %arg3[%c0_1, %c0_2] : memref<216x256xbf16, #tpu.memory_space<vmem>>, vector<216x256xbf16>
    %cst = arith.constant dense<0.000000e+00> : vector<32x256xf32>
    %2 = tpu.matmul %0, %1, %cst {dimension_numbers = #tpu.dot_dimension_numbers<[1], [0], [0], [1], [0, 0, 1, 1], [], []>} : vector<32x216xbf16>, vector<216x256xbf16>, vector<32x256xf32> -> vector<32x256xf32>
    %c0_3 = arith.constant 0 : index
    %c0_4 = arith.constant 0 : index
    %3 = vector.load %arg4[%c0_3, %c0_4] : memref<1x256xf32, #tpu.memory_space<vmem>>, vector<1x256xf32>
    %4 = vector.broadcast %3 : vector<1x256xf32> to vector<32x256xf32>
    %5 = arith.addf %2, %4 : vector<32x256xf32>
    %cst_5 = arith.constant 0.000000e+00 : f32
    %6 = vector.broadcast %cst_5 : f32 to vector<32x256xf32>
    %7 = arith.maximumf %5, %6 : vector<32x256xf32>
    %c0_6 = arith.constant 0 : index
    %c0_7 = arith.constant 0 : index
    %8 = vector.load %arg5[%c0_6, %c0_7] : memref<32x256xf32, #tpu.memory_space<vmem>>, vector<32x256xf32>
    tpu.vector_store %arg5[%c0_6, %c0_7], %7 {strides = array<i32>} : memref<32x256xf32, #tpu.memory_space<vmem>>, vector<32x256xf32>,
    return
  }
  func.func @transform_0(%arg0: i32, %arg1: i32) -> (i32, i32) {
    %c0_i32 = arith.constant 0 : i32
    %c0_i32_0 = arith.constant 0 : i32
    return %arg0, %c0_i32 : i32, i32
  }
  func.func @transform_1(%arg0: i32, %arg1: i32) -> (i32, i32) {
    %c0_i32 = arith.constant 0 : i32
    %c0_i32_0 = arith.constant 0 : i32
    return %c0_i32, %arg1 : i32, i32
  }
  func.func @transform_2(%arg0: i32, %arg1: i32) -> (i32, i32) {
    %c0_i32 = arith.constant 0 : i32
    %c0_i32_0 = arith.constant 0 : i32
    return %c0_i32, %arg1 : i32, i32
  }
  func.func @transform_3(%arg0: i32, %arg1: i32) -> (i32, i32) {
    %c0_i32 = arith.constant 0 : i32
    return %arg0, %arg1 : i32, i32
  }
}

module attributes {stable_mosaic.version = 11 : i64} {
  func.func @_mm_kernel(%arg0: i32, %arg1: i32, %arg2: memref<32x2304xbf16, #tpu.memory_space<vmem>>, %arg3: memref<2304x128xbf16, #tpu.memory_space<vmem>>, %arg4: memref<1x128xf32, #tpu.memory_space<vmem>>, %arg5: memref<32x128xf32, #tpu.memory_space<vmem>>) attributes {dimension_semantics = [#tpu.dimension_semantics<parallel>, #tpu.dimension_semantics<parallel>], iteration_bounds = array<i64: 1, 1>, scalar_prefetch = 0 : i64, scratch_operands = 0 : i64, tpu.core_type = #tpu.core_type<tc>, window_params = [{transform_indices = @transform_0, window_bounds = array<i64: 32, 2304>}, {transform_indices = @transform_1, window_bounds = array<i64: 2304, 128>}, {transform_indices = @transform_2, window_bounds = array<i64: 1, 128>}, {transform_indices = @transform_3, window_bounds = array<i64: 32, 128>}]} {
    %c0 = arith.constant 0 : index
    %c0_0 = arith.constant 0 : index
    %0 = vector.load %arg2[%c0, %c0_0] : memref<32x2304xbf16, #tpu.memory_space<vmem>>, vector<32x2304xbf16>
    %c0_1 = arith.constant 0 : index
    %c0_2 = arith.constant 0 : index
    %1 = vector.load %arg3[%c0_1, %c0_2] : memref<2304x128xbf16, #tpu.memory_space<vmem>>, vector<2304x128xbf16>
    %cst = arith.constant dense<0.000000e+00> : vector<32x128xf32>
    %2 = tpu.matmul %0, %1, %cst {dimension_numbers = #tpu.dot_dimension_numbers<[1], [0], [0], [1], [0, 0, 1, 1], [], []>} : vector<32x2304xbf16>, vector<2304x128xbf16>, vector<32x128xf32> -> vector<32x128xf32>
    %c0_3 = arith.constant 0 : index
    %c0_4 = arith.constant 0 : index
    %3 = vector.load %arg4[%c0_3, %c0_4] : memref<1x128xf32, #tpu.memory_space<vmem>>, vector<1x128xf32>
    %4 = vector.broadcast %3 : vector<1x128xf32> to vector<32x128xf32>
    %5 = arith.addf %2, %4 : vector<32x128xf32>
    %6 = math.tanh %5 : vector<32x128xf32>
    %c0_5 = arith.constant 0 : index
    %c0_6 = arith.constant 0 : index
    %7 = vector.load %arg5[%c0_5, %c0_6] : memref<32x128xf32, #tpu.memory_space<vmem>>, vector<32x128xf32>
    tpu.vector_store %arg5[%c0_5, %c0_6], %6 {strides = array<i32>} : memref<32x128xf32, #tpu.memory_space<vmem>>, vector<32x128xf32>,
    return
  }
  func.func @transform_0(%arg0: i32, %arg1: i32) -> (i32, i32) {
    %c0_i32 = arith.constant 0 : i32
    %c0_i32_0 = arith.constant 0 : i32
    return %arg0, %c0_i32 : i32, i32
  }
  func.func @transform_1(%arg0: i32, %arg1: i32) -> (i32, i32) {
    %c0_i32 = arith.constant 0 : i32
    %c0_i32_0 = arith.constant 0 : i32
    return %c0_i32, %arg1 : i32, i32
  }
  func.func @transform_2(%arg0: i32, %arg1: i32) -> (i32, i32) {
    %c0_i32 = arith.constant 0 : i32
    %c0_i32_0 = arith.constant 0 : i32
    return %c0_i32, %arg1 : i32, i32
  }
  func.func @transform_3(%arg0: i32, %arg1: i32) -> (i32, i32) {
    %c0_i32 = arith.constant 0 : i32
    return %arg0, %arg1 : i32, i32
  }
}

module attributes {stable_mosaic.version = 11 : i64} {
  func.func @_affine_kernel(%arg0: i32, %arg1: memref<2x192xf32, #tpu.memory_space<vmem>>, %arg2: memref<2x192xf32, #tpu.memory_space<vmem>>, %arg3: memref<2x192xf32, #tpu.memory_space<vmem>>, %arg4: memref<2x192xf32, #tpu.memory_space<vmem>>, %arg5: memref<2x1xf32, #tpu.memory_space<vmem>>) attributes {dimension_semantics = [#tpu.dimension_semantics<arbitrary>], iteration_bounds = array<i64: 1>, scalar_prefetch = 0 : i64, scratch_operands = 0 : i64, tpu.core_type = #tpu.core_type<tc>, window_params = [{pipeline_mode = #tpu.pipeline_mode<synchronous>, transform_indices = @transform_0, window_bounds = array<i64: 2, 192>}, {pipeline_mode = #tpu.pipeline_mode<synchronous>, transform_indices = @transform_1, window_bounds = array<i64: 2, 192>}, {pipeline_mode = #tpu.pipeline_mode<synchronous>, transform_indices = @transform_2, window_bounds = array<i64: 2, 192>}, {pipeline_mode = #tpu.pipeline_mode<synchronous>, transform_indices = @transform_3, window_bounds = array<i64: 2, 192>}, {pipeline_mode = #tpu.pipeline_mode<synchronous>, transform_indices = @transform_4, window_bounds = array<i64: 2, 1>}]} {
    %c0 = arith.constant 0 : index
    %c0_0 = arith.constant 0 : index
    %0 = vector.load %arg2[%c0, %c0_0] : memref<2x192xf32, #tpu.memory_space<vmem>>, vector<2x192xf32>
    %cst = arith.constant 2.000000e+00 : f32
    %1 = vector.broadcast %cst : f32 to vector<2x192xf32>
    %2 = arith.addf %0, %1 : vector<2x192xf32>
    %cst_1 = arith.constant 0.000000e+00 : f32
    %3 = vector.broadcast %cst_1 : f32 to vector<2x192xf32>
    %4 = arith.subf %3, %2 : vector<2x192xf32>
    %5 = math.exp %4 : vector<2x192xf32>
    %cst_2 = arith.constant 1.000000e+00 : f32
    %6 = vector.broadcast %cst_2 : f32 to vector<2x192xf32>
    %7 = arith.addf %6, %5 : vector<2x192xf32>
    %cst_3 = arith.constant 1.000000e+00 : f32
    %8 = vector.broadcast %cst_3 : f32 to vector<2x192xf32>
    %9 = arith.divf %8, %7 : vector<2x192xf32>
    %c0_4 = arith.constant 0 : index
    %c0_5 = arith.constant 0 : index
    %10 = vector.load %arg1[%c0_4, %c0_5] : memref<2x192xf32, #tpu.memory_space<vmem>>, vector<2x192xf32>
    %11 = arith.mulf %9, %10 : vector<2x192xf32>
    %c0_6 = arith.constant 0 : index
    %c0_7 = arith.constant 0 : index
    %12 = vector.load %arg3[%c0_6, %c0_7] : memref<2x192xf32, #tpu.memory_space<vmem>>, vector<2x192xf32>
    %13 = arith.addf %11, %12 : vector<2x192xf32>
    %c0_8 = arith.constant 0 : index
    %c0_9 = arith.constant 0 : index
    %14 = vector.load %arg4[%c0_8, %c0_9] : memref<2x192xf32, #tpu.memory_space<vmem>>, vector<2x192xf32>
    tpu.vector_store %arg4[%c0_8, %c0_9], %13 {strides = array<i32>} : memref<2x192xf32, #tpu.memory_space<vmem>>, vector<2x192xf32>,
    %15 = math.log %9 : vector<2x192xf32>
    %cst_10 = arith.constant dense<0.000000e+00> : vector<2xf32>
    %16 = vector.multi_reduction <add>, %15, %cst_10 [1] : vector<2x192xf32> to vector<2xf32>
    %17 = vector.shape_cast %16 : vector<2xf32> to vector<2x1xf32>
    %c0_11 = arith.constant 0 : index
    %c0_12 = arith.constant 0 : index
    %18 = vector.load %arg5[%c0_11, %c0_12] : memref<2x1xf32, #tpu.memory_space<vmem>>, vector<2x1xf32>
    tpu.vector_store %arg5[%c0_11, %c0_12], %17 {strides = array<i32>} : memref<2x1xf32, #tpu.memory_space<vmem>>, vector<2x1xf32>,
    return
  }
  func.func @transform_0(%arg0: i32) -> (i32, i32) {
    %c0_i32 = arith.constant 0 : i32
    %c0_i32_0 = arith.constant 0 : i32
    %c0_i32_1 = arith.constant 0 : i32
    return %c0_i32, %c0_i32_0 : i32, i32
  }
  func.func @transform_1(%arg0: i32) -> (i32, i32) {
    %c0_i32 = arith.constant 0 : i32
    %c0_i32_0 = arith.constant 0 : i32
    %c0_i32_1 = arith.constant 0 : i32
    return %c0_i32, %c0_i32_0 : i32, i32
  }
  func.func @transform_2(%arg0: i32) -> (i32, i32) {
    %c0_i32 = arith.constant 0 : i32
    %c0_i32_0 = arith.constant 0 : i32
    %c0_i32_1 = arith.constant 0 : i32
    return %c0_i32, %c0_i32_0 : i32, i32
  }
  func.func @transform_3(%arg0: i32) -> (i32, i32) {
    %c0_i32 = arith.constant 0 : i32
    %c0_i32_0 = arith.constant 0 : i32
    %c0_i32_1 = arith.constant 0 : i32
    return %c0_i32, %c0_i32_0 : i32, i32
  }
  func.func @transform_4(%arg0: i32) -> (i32, i32) {
    %c0_i32 = arith.constant 0 : i32
    %c0_i32_0 = arith.constant 0 : i32
    %c0_i32_1 = arith.constant 0 : i32
    return %c0_i32, %c0_i32_0 : i32, i32
  }
}

module attributes {stable_mosaic.version = 11 : i64} {
  func.func @_logp_kernel(%arg0: i32, %arg1: memref<2x384xf32, #tpu.memory_space<vmem>>, %arg2: memref<1x384xf32, #tpu.memory_space<vmem>>, %arg3: memref<1x384xf32, #tpu.memory_space<vmem>>, %arg4: memref<2x1xf32, #tpu.memory_space<vmem>>) attributes {dimension_semantics = [#tpu.dimension_semantics<arbitrary>], iteration_bounds = array<i64: 1>, scalar_prefetch = 0 : i64, scratch_operands = 0 : i64, tpu.core_type = #tpu.core_type<tc>, window_params = [{pipeline_mode = #tpu.pipeline_mode<synchronous>, transform_indices = @transform_0, window_bounds = array<i64: 2, 384>}, {pipeline_mode = #tpu.pipeline_mode<synchronous>, transform_indices = @transform_1, window_bounds = array<i64: 1, 384>}, {pipeline_mode = #tpu.pipeline_mode<synchronous>, transform_indices = @transform_2, window_bounds = array<i64: 1, 384>}, {pipeline_mode = #tpu.pipeline_mode<synchronous>, transform_indices = @transform_3, window_bounds = array<i64: 2, 1>}]} {
    %c0 = arith.constant 0 : index
    %c0_0 = arith.constant 0 : index
    %0 = vector.load %arg3[%c0, %c0_0] : memref<1x384xf32, #tpu.memory_space<vmem>>, vector<1x384xf32>
    %c0_1 = arith.constant 0 : index
    %c0_2 = arith.constant 0 : index
    %1 = vector.load %arg1[%c0_1, %c0_2] : memref<2x384xf32, #tpu.memory_space<vmem>>, vector<2x384xf32>
    %c0_3 = arith.constant 0 : index
    %c0_4 = arith.constant 0 : index
    %2 = vector.load %arg2[%c0_3, %c0_4] : memref<1x384xf32, #tpu.memory_space<vmem>>, vector<1x384xf32>
    %3 = vector.broadcast %2 : vector<1x384xf32> to vector<2x384xf32>
    %4 = arith.subf %1, %3 : vector<2x384xf32>
    %cst = arith.constant 2.000000e+00 : f32
    %5 = vector.broadcast %cst : f32 to vector<1x384xf32>
    %6 = arith.mulf %5, %0 : vector<1x384xf32>
    %7 = arith.mulf %4, %4 : vector<2x384xf32>
    %cst_5 = arith.constant -2.000000e+00 : f32
    %8 = vector.broadcast %cst_5 : f32 to vector<1x384xf32>
    %9 = arith.mulf %8, %0 : vector<1x384xf32>
    %10 = math.exp %9 : vector<1x384xf32>
    %11 = vector.broadcast %10 : vector<1x384xf32> to vector<2x384xf32>
    %12 = arith.mulf %7, %11 : vector<2x384xf32>
    %13 = vector.broadcast %6 : vector<1x384xf32> to vector<2x384xf32>
    %14 = arith.addf %13, %12 : vector<2x384xf32>
    %cst_6 = arith.constant 1.83787704 : f32
    %15 = vector.broadcast %cst_6 : f32 to vector<2x384xf32>
    %16 = arith.addf %14, %15 : vector<2x384xf32>
    %cst_7 = arith.constant -5.000000e-01 : f32
    %17 = vector.broadcast %cst_7 : f32 to vector<2x384xf32>
    %18 = arith.mulf %17, %16 : vector<2x384xf32>
    %cst_8 = arith.constant dense<0.000000e+00> : vector<2xf32>
    %19 = vector.multi_reduction <add>, %18, %cst_8 [1] : vector<2x384xf32> to vector<2xf32>
    %20 = vector.shape_cast %19 : vector<2xf32> to vector<2x1xf32>
    %c0_9 = arith.constant 0 : index
    %c0_10 = arith.constant 0 : index
    %21 = vector.load %arg4[%c0_9, %c0_10] : memref<2x1xf32, #tpu.memory_space<vmem>>, vector<2x1xf32>
    tpu.vector_store %arg4[%c0_9, %c0_10], %20 {strides = array<i32>} : memref<2x1xf32, #tpu.memory_space<vmem>>, vector<2x1xf32>,
    return
  }
  func.func @transform_0(%arg0: i32) -> (i32, i32) {
    %c0_i32 = arith.constant 0 : i32
    %c0_i32_0 = arith.constant 0 : i32
    %c0_i32_1 = arith.constant 0 : i32
    return %c0_i32, %c0_i32_0 : i32, i32
  }
  func.func @transform_1(%arg0: i32) -> (i32, i32) {
    %c0_i32 = arith.constant 0 : i32
    %c0_i32_0 = arith.constant 0 : i32
    %c0_i32_1 = arith.constant 0 : i32
    return %c0_i32, %c0_i32_0 : i32, i32
  }
  func.func @transform_2(%arg0: i32) -> (i32, i32) {
    %c0_i32 = arith.constant 0 : i32
    %c0_i32_0 = arith.constant 0 : i32
    %c0_i32_1 = arith.constant 0 : i32
    return %c0_i32, %c0_i32_0 : i32, i32
  }
  func.func @transform_3(%arg0: i32) -> (i32, i32) {
    %c0_i32 = arith.constant 0 : i32
    %c0_i32_0 = arith.constant 0 : i32
    %c0_i32_1 = arith.constant 0 : i32
    return %c0_i32, %c0_i32_0 : i32, i32
  }
}

module attributes {stable_mosaic.version = 11 : i64} {
  func.func @_mm_kernel(%arg0: i32, %arg1: i32, %arg2: memref<128x54xbf16, #tpu.memory_space<vmem>>, %arg3: memref<54x128xbf16, #tpu.memory_space<vmem>>, %arg4: memref<1x128xf32, #tpu.memory_space<vmem>>, %arg5: memref<128x128xf32, #tpu.memory_space<vmem>>) attributes {dimension_semantics = [#tpu.dimension_semantics<parallel>, #tpu.dimension_semantics<parallel>], iteration_bounds = array<i64: 1, 1>, scalar_prefetch = 0 : i64, scratch_operands = 0 : i64, tpu.core_type = #tpu.core_type<tc>, window_params = [{transform_indices = @transform_0, window_bounds = array<i64: 128, 54>}, {transform_indices = @transform_1, window_bounds = array<i64: 54, 128>}, {transform_indices = @transform_2, window_bounds = array<i64: 1, 128>}, {transform_indices = @transform_3, window_bounds = array<i64: 128, 128>}]} {
    %c0 = arith.constant 0 : index
    %c0_0 = arith.constant 0 : index
    %0 = vector.load %arg2[%c0, %c0_0] : memref<128x54xbf16, #tpu.memory_space<vmem>>, vector<128x54xbf16>
    %c0_1 = arith.constant 0 : index
    %c0_2 = arith.constant 0 : index
    %1 = vector.load %arg3[%c0_1, %c0_2] : memref<54x128xbf16, #tpu.memory_space<vmem>>, vector<54x128xbf16>
    %cst = arith.constant dense<0.000000e+00> : vector<128x128xf32>
    %2 = tpu.matmul %0, %1, %cst {dimension_numbers = #tpu.dot_dimension_numbers<[1], [0], [0], [1], [0, 0, 1, 1], [], []>} : vector<128x54xbf16>, vector<54x128xbf16>, vector<128x128xf32> -> vector<128x128xf32>
    %c0_3 = arith.constant 0 : index
    %c0_4 = arith.constant 0 : index
    %3 = vector.load %arg4[%c0_3, %c0_4] : memref<1x128xf32, #tpu.memory_space<vmem>>, vector<1x128xf32>
    %4 = vector.broadcast %3 : vector<1x128xf32> to vector<128x128xf32>
    %5 = arith.addf %2, %4 : vector<128x128xf32>
    %cst_5 = arith.constant 0.000000e+00 : f32
    %6 = vector.broadcast %cst_5 : f32 to vector<128x128xf32>
    %7 = arith.maximumf %5, %6 : vector<128x128xf32>
    %c0_6 = arith.constant 0 : index
    %c0_7 = arith.constant 0 : index
    %8 = vector.load %arg5[%c0_6, %c0_7] : memref<128x128xf32, #tpu.memory_space<vmem>>, vector<128x128xf32>
    tpu.vector_store %arg5[%c0_6, %c0_7], %7 {strides = array<i32>} : memref<128x128xf32, #tpu.memory_space<vmem>>, vector<128x128xf32>,
    return
  }
  func.func @transform_0(%arg0: i32, %arg1: i32) -> (i32, i32) {
    %c0_i32 = arith.constant 0 : i32
    %c0_i32_0 = arith.constant 0 : i32
    return %arg0, %c0_i32 : i32, i32
  }
  func.func @transform_1(%arg0: i32, %arg1: i32) -> (i32, i32) {
    %c0_i32 = arith.constant 0 : i32
    %c0_i32_0 = arith.constant 0 : i32
    return %c0_i32, %arg1 : i32, i32
  }
  func.func @transform_2(%arg0: i32, %arg1: i32) -> (i32, i32) {
    %c0_i32 = arith.constant 0 : i32
    %c0_i32_0 = arith.constant 0 : i32
    return %c0_i32, %arg1 : i32, i32
  }
  func.func @transform_3(%arg0: i32, %arg1: i32) -> (i32, i32) {
    %c0_i32 = arith.constant 0 : i32
    return %arg0, %arg1 : i32, i32
  }
}

module attributes {stable_mosaic.version = 11 : i64} {
  func.func @_mm_kernel(%arg0: i32, %arg1: i32, %arg2: memref<128x108xbf16, #tpu.memory_space<vmem>>, %arg3: memref<108x256xbf16, #tpu.memory_space<vmem>>, %arg4: memref<1x256xf32, #tpu.memory_space<vmem>>, %arg5: memref<128x256xf32, #tpu.memory_space<vmem>>) attributes {dimension_semantics = [#tpu.dimension_semantics<parallel>, #tpu.dimension_semantics<parallel>], iteration_bounds = array<i64: 1, 1>, scalar_prefetch = 0 : i64, scratch_operands = 0 : i64, tpu.core_type = #tpu.core_type<tc>, window_params = [{transform_indices = @transform_0, window_bounds = array<i64: 128, 108>}, {transform_indices = @transform_1, window_bounds = array<i64: 108, 256>}, {transform_indices = @transform_2, window_bounds = array<i64: 1, 256>}, {transform_indices = @transform_3, window_bounds = array<i64: 128, 256>}]} {
    %c0 = arith.constant 0 : index
    %c0_0 = arith.constant 0 : index
    %0 = vector.load %arg2[%c0, %c0_0] : memref<128x108xbf16, #tpu.memory_space<vmem>>, vector<128x108xbf16>
    %c0_1 = arith.constant 0 : index
    %c0_2 = arith.constant 0 : index
    %1 = vector.load %arg3[%c0_1, %c0_2] : memref<108x256xbf16, #tpu.memory_space<vmem>>, vector<108x256xbf16>
    %cst = arith.constant dense<0.000000e+00> : vector<128x256xf32>
    %2 = tpu.matmul %0, %1, %cst {dimension_numbers = #tpu.dot_dimension_numbers<[1], [0], [0], [1], [0, 0, 1, 1], [], []>} : vector<128x108xbf16>, vector<108x256xbf16>, vector<128x256xf32> -> vector<128x256xf32>
    %c0_3 = arith.constant 0 : index
    %c0_4 = arith.constant 0 : index
    %3 = vector.load %arg4[%c0_3, %c0_4] : memref<1x256xf32, #tpu.memory_space<vmem>>, vector<1x256xf32>
    %4 = vector.broadcast %3 : vector<1x256xf32> to vector<128x256xf32>
    %5 = arith.addf %2, %4 : vector<128x256xf32>
    %cst_5 = arith.constant 0.000000e+00 : f32
    %6 = vector.broadcast %cst_5 : f32 to vector<128x256xf32>
    %7 = arith.maximumf %5, %6 : vector<128x256xf32>
    %c0_6 = arith.constant 0 : index
    %c0_7 = arith.constant 0 : index
    %8 = vector.load %arg5[%c0_6, %c0_7] : memref<128x256xf32, #tpu.memory_space<vmem>>, vector<128x256xf32>
    tpu.vector_store %arg5[%c0_6, %c0_7], %7 {strides = array<i32>} : memref<128x256xf32, #tpu.memory_space<vmem>>, vector<128x256xf32>,
    return
  }
  func.func @transform_0(%arg0: i32, %arg1: i32) -> (i32, i32) {
    %c0_i32 = arith.constant 0 : i32
    %c0_i32_0 = arith.constant 0 : i32
    return %arg0, %c0_i32 : i32, i32
  }
  func.func @transform_1(%arg0: i32, %arg1: i32) -> (i32, i32) {
    %c0_i32 = arith.constant 0 : i32
    %c0_i32_0 = arith.constant 0 : i32
    return %c0_i32, %arg1 : i32, i32
  }
  func.func @transform_2(%arg0: i32, %arg1: i32) -> (i32, i32) {
    %c0_i32 = arith.constant 0 : i32
    %c0_i32_0 = arith.constant 0 : i32
    return %c0_i32, %arg1 : i32, i32
  }
  func.func @transform_3(%arg0: i32, %arg1: i32) -> (i32, i32) {
    %c0_i32 = arith.constant 0 : i32
    return %arg0, %arg1 : i32, i32
  }
}

module attributes {stable_mosaic.version = 11 : i64} {
  func.func @_mm_kernel(%arg0: i32, %arg1: i32, %arg2: memref<128x256xbf16, #tpu.memory_space<vmem>>, %arg3: memref<256x256xbf16, #tpu.memory_space<vmem>>, %arg4: memref<1x256xf32, #tpu.memory_space<vmem>>, %arg5: memref<128x256xf32, #tpu.memory_space<vmem>>) attributes {dimension_semantics = [#tpu.dimension_semantics<parallel>, #tpu.dimension_semantics<parallel>], iteration_bounds = array<i64: 1, 1>, scalar_prefetch = 0 : i64, scratch_operands = 0 : i64, tpu.core_type = #tpu.core_type<tc>, window_params = [{transform_indices = @transform_0, window_bounds = array<i64: 128, 256>}, {transform_indices = @transform_1, window_bounds = array<i64: 256, 256>}, {transform_indices = @transform_2, window_bounds = array<i64: 1, 256>}, {transform_indices = @transform_3, window_bounds = array<i64: 128, 256>}]} {
    %c0 = arith.constant 0 : index
    %c0_0 = arith.constant 0 : index
    %0 = vector.load %arg2[%c0, %c0_0] : memref<128x256xbf16, #tpu.memory_space<vmem>>, vector<128x256xbf16>
    %c0_1 = arith.constant 0 : index
    %c0_2 = arith.constant 0 : index
    %1 = vector.load %arg3[%c0_1, %c0_2] : memref<256x256xbf16, #tpu.memory_space<vmem>>, vector<256x256xbf16>
    %cst = arith.constant dense<0.000000e+00> : vector<128x256xf32>
    %2 = tpu.matmul %0, %1, %cst {dimension_numbers = #tpu.dot_dimension_numbers<[1], [0], [0], [1], [0, 0, 1, 1], [], []>} : vector<128x256xbf16>, vector<256x256xbf16>, vector<128x256xf32> -> vector<128x256xf32>
    %c0_3 = arith.constant 0 : index
    %c0_4 = arith.constant 0 : index
    %3 = vector.load %arg4[%c0_3, %c0_4] : memref<1x256xf32, #tpu.memory_space<vmem>>, vector<1x256xf32>
    %4 = vector.broadcast %3 : vector<1x256xf32> to vector<128x256xf32>
    %5 = arith.addf %2, %4 : vector<128x256xf32>
    %cst_5 = arith.constant 0.000000e+00 : f32
    %6 = vector.broadcast %cst_5 : f32 to vector<128x256xf32>
    %7 = arith.maximumf %5, %6 : vector<128x256xf32>
    %c0_6 = arith.constant 0 : index
    %c0_7 = arith.constant 0 : index
    %8 = vector.load %arg5[%c0_6, %c0_7] : memref<128x256xf32, #tpu.memory_space<vmem>>, vector<128x256xf32>
    tpu.vector_store %arg5[%c0_6, %c0_7], %7 {strides = array<i32>} : memref<128x256xf32, #tpu.memory_space<vmem>>, vector<128x256xf32>,
    return
  }
  func.func @transform_0(%arg0: i32, %arg1: i32) -> (i32, i32) {
    %c0_i32 = arith.constant 0 : i32
    %c0_i32_0 = arith.constant 0 : i32
    return %arg0, %c0_i32 : i32, i32
  }
  func.func @transform_1(%arg0: i32, %arg1: i32) -> (i32, i32) {
    %c0_i32 = arith.constant 0 : i32
    %c0_i32_0 = arith.constant 0 : i32
    return %c0_i32, %arg1 : i32, i32
  }
  func.func @transform_2(%arg0: i32, %arg1: i32) -> (i32, i32) {
    %c0_i32 = arith.constant 0 : i32
    %c0_i32_0 = arith.constant 0 : i32
    return %c0_i32, %arg1 : i32, i32
  }
  func.func @transform_3(%arg0: i32, %arg1: i32) -> (i32, i32) {
    %c0_i32 = arith.constant 0 : i32
    return %arg0, %arg1 : i32, i32
  }
}

module attributes {stable_mosaic.version = 11 : i64} {
  func.func @_mm_kernel(%arg0: i32, %arg1: i32, %arg2: memref<128x2304xbf16, #tpu.memory_space<vmem>>, %arg3: memref<2304x128xbf16, #tpu.memory_space<vmem>>, %arg4: memref<1x128xf32, #tpu.memory_space<vmem>>, %arg5: memref<128x128xf32, #tpu.memory_space<vmem>>) attributes {dimension_semantics = [#tpu.dimension_semantics<parallel>, #tpu.dimension_semantics<parallel>], iteration_bounds = array<i64: 1, 1>, scalar_prefetch = 0 : i64, scratch_operands = 0 : i64, tpu.core_type = #tpu.core_type<tc>, window_params = [{transform_indices = @transform_0, window_bounds = array<i64: 128, 2304>}, {transform_indices = @transform_1, window_bounds = array<i64: 2304, 128>}, {transform_indices = @transform_2, window_bounds = array<i64: 1, 128>}, {transform_indices = @transform_3, window_bounds = array<i64: 128, 128>}]} {
    %c0 = arith.constant 0 : index
    %c0_0 = arith.constant 0 : index
    %0 = vector.load %arg2[%c0, %c0_0] : memref<128x2304xbf16, #tpu.memory_space<vmem>>, vector<128x2304xbf16>
    %c0_1 = arith.constant 0 : index
    %c0_2 = arith.constant 0 : index
    %1 = vector.load %arg3[%c0_1, %c0_2] : memref<2304x128xbf16, #tpu.memory_space<vmem>>, vector<2304x128xbf16>
    %cst = arith.constant dense<0.000000e+00> : vector<128x128xf32>
    %2 = tpu.matmul %0, %1, %cst {dimension_numbers = #tpu.dot_dimension_numbers<[1], [0], [0], [1], [0, 0, 1, 1], [], []>} : vector<128x2304xbf16>, vector<2304x128xbf16>, vector<128x128xf32> -> vector<128x128xf32>
    %c0_3 = arith.constant 0 : index
    %c0_4 = arith.constant 0 : index
    %3 = vector.load %arg4[%c0_3, %c0_4] : memref<1x128xf32, #tpu.memory_space<vmem>>, vector<1x128xf32>
    %4 = vector.broadcast %3 : vector<1x128xf32> to vector<128x128xf32>
    %5 = arith.addf %2, %4 : vector<128x128xf32>
    %6 = math.tanh %5 : vector<128x128xf32>
    %c0_5 = arith.constant 0 : index
    %c0_6 = arith.constant 0 : index
    %7 = vector.load %arg5[%c0_5, %c0_6] : memref<128x128xf32, #tpu.memory_space<vmem>>, vector<128x128xf32>
    tpu.vector_store %arg5[%c0_5, %c0_6], %6 {strides = array<i32>} : memref<128x128xf32, #tpu.memory_space<vmem>>, vector<128x128xf32>,
    return
  }
  func.func @transform_0(%arg0: i32, %arg1: i32) -> (i32, i32) {
    %c0_i32 = arith.constant 0 : i32
    %c0_i32_0 = arith.constant 0 : i32
    return %arg0, %c0_i32 : i32, i32
  }
  func.func @transform_1(%arg0: i32, %arg1: i32) -> (i32, i32) {
    %c0_i32 = arith.constant 0 : i32
    %c0_i32_0 = arith.constant 0 : i32
    return %c0_i32, %arg1 : i32, i32
  }
  func.func @transform_2(%arg0: i32, %arg1: i32) -> (i32, i32) {
    %c0_i32 = arith.constant 0 : i32
    %c0_i32_0 = arith.constant 0 : i32
    return %c0_i32, %arg1 : i32, i32
  }
  func.func @transform_3(%arg0: i32, %arg1: i32) -> (i32, i32) {
    %c0_i32 = arith.constant 0 : i32
    return %arg0, %arg1 : i32, i32
  }
}

module attributes {stable_mosaic.version = 11 : i64} {
  func.func @_affine_kernel(%arg0: i32, %arg1: memref<2x384xf32, #tpu.memory_space<vmem>>, %arg2: memref<2x384xf32, #tpu.memory_space<vmem>>, %arg3: memref<2x384xf32, #tpu.memory_space<vmem>>, %arg4: memref<2x384xf32, #tpu.memory_space<vmem>>, %arg5: memref<2x1xf32, #tpu.memory_space<vmem>>) attributes {dimension_semantics = [#tpu.dimension_semantics<arbitrary>], iteration_bounds = array<i64: 1>, scalar_prefetch = 0 : i64, scratch_operands = 0 : i64, tpu.core_type = #tpu.core_type<tc>, window_params = [{pipeline_mode = #tpu.pipeline_mode<synchronous>, transform_indices = @transform_0, window_bounds = array<i64: 2, 384>}, {pipeline_mode = #tpu.pipeline_mode<synchronous>, transform_indices = @transform_1, window_bounds = array<i64: 2, 384>}, {pipeline_mode = #tpu.pipeline_mode<synchronous>, transform_indices = @transform_2, window_bounds = array<i64: 2, 384>}, {pipeline_mode = #tpu.pipeline_mode<synchronous>, transform_indices = @transform_3, window_bounds = array<i64: 2, 384>}, {pipeline_mode = #tpu.pipeline_mode<synchronous>, transform_indices = @transform_4, window_bounds = array<i64: 2, 1>}]} {
    %c0 = arith.constant 0 : index
    %c0_0 = arith.constant 0 : index
    %0 = vector.load %arg2[%c0, %c0_0] : memref<2x384xf32, #tpu.memory_space<vmem>>, vector<2x384xf32>
    %cst = arith.constant 2.000000e+00 : f32
    %1 = vector.broadcast %cst : f32 to vector<2x384xf32>
    %2 = arith.addf %0, %1 : vector<2x384xf32>
    %cst_1 = arith.constant 0.000000e+00 : f32
    %3 = vector.broadcast %cst_1 : f32 to vector<2x384xf32>
    %4 = arith.subf %3, %2 : vector<2x384xf32>
    %5 = math.exp %4 : vector<2x384xf32>
    %cst_2 = arith.constant 1.000000e+00 : f32
    %6 = vector.broadcast %cst_2 : f32 to vector<2x384xf32>
    %7 = arith.addf %6, %5 : vector<2x384xf32>
    %cst_3 = arith.constant 1.000000e+00 : f32
    %8 = vector.broadcast %cst_3 : f32 to vector<2x384xf32>
    %9 = arith.divf %8, %7 : vector<2x384xf32>
    %c0_4 = arith.constant 0 : index
    %c0_5 = arith.constant 0 : index
    %10 = vector.load %arg1[%c0_4, %c0_5] : memref<2x384xf32, #tpu.memory_space<vmem>>, vector<2x384xf32>
    %11 = arith.mulf %9, %10 : vector<2x384xf32>
    %c0_6 = arith.constant 0 : index
    %c0_7 = arith.constant 0 : index
    %12 = vector.load %arg3[%c0_6, %c0_7] : memref<2x384xf32, #tpu.memory_space<vmem>>, vector<2x384xf32>
    %13 = arith.addf %11, %12 : vector<2x384xf32>
    %c0_8 = arith.constant 0 : index
    %c0_9 = arith.constant 0 : index
    %14 = vector.load %arg4[%c0_8, %c0_9] : memref<2x384xf32, #tpu.memory_space<vmem>>, vector<2x384xf32>
    tpu.vector_store %arg4[%c0_8, %c0_9], %13 {strides = array<i32>} : memref<2x384xf32, #tpu.memory_space<vmem>>, vector<2x384xf32>,
    %15 = math.log %9 : vector<2x384xf32>
    %cst_10 = arith.constant dense<0.000000e+00> : vector<2xf32>
    %16 = vector.multi_reduction <add>, %15, %cst_10 [1] : vector<2x384xf32> to vector<2xf32>
    %17 = vector.shape_cast %16 : vector<2xf32> to vector<2x1xf32>
    %c0_11 = arith.constant 0 : index
    %c0_12 = arith.constant 0 : index
    %18 = vector.load %arg5[%c0_11, %c0_12] : memref<2x1xf32, #tpu.memory_space<vmem>>, vector<2x1xf32>
    tpu.vector_store %arg5[%c0_11, %c0_12], %17 {strides = array<i32>} : memref<2x1xf32, #tpu.memory_space<vmem>>, vector<2x1xf32>,
    return
  }
  func.func @transform_0(%arg0: i32) -> (i32, i32) {
    %c0_i32 = arith.constant 0 : i32
    %c0_i32_0 = arith.constant 0 : i32
    %c0_i32_1 = arith.constant 0 : i32
    return %c0_i32, %c0_i32_0 : i32, i32
  }
  func.func @transform_1(%arg0: i32) -> (i32, i32) {
    %c0_i32 = arith.constant 0 : i32
    %c0_i32_0 = arith.constant 0 : i32
    %c0_i32_1 = arith.constant 0 : i32
    return %c0_i32, %c0_i32_0 : i32, i32
  }
  func.func @transform_2(%arg0: i32) -> (i32, i32) {
    %c0_i32 = arith.constant 0 : i32
    %c0_i32_0 = arith.constant 0 : i32
    %c0_i32_1 = arith.constant 0 : i32
    return %c0_i32, %c0_i32_0 : i32, i32
  }
  func.func @transform_3(%arg0: i32) -> (i32, i32) {
    %c0_i32 = arith.constant 0 : i32
    %c0_i32_0 = arith.constant 0 : i32
    %c0_i32_1 = arith.constant 0 : i32
    return %c0_i32, %c0_i32_0 : i32, i32
  }
  func.func @transform_4(%arg0: i32) -> (i32, i32) {
    %c0_i32 = arith.constant 0 : i32
    %c0_i32_0 = arith.constant 0 : i32
    %c0_i32_1 = arith.constant 0 : i32
    return %c0_i32, %c0_i32_0 : i32, i32
  }
}

module attributes {stable_mosaic.version = 11 : i64} {
  func.func @_logp_kernel(%arg0: i32, %arg1: memref<2x384xf32, #tpu.memory_space<vmem>>, %arg2: memref<2x384xf32, #tpu.memory_space<vmem>>, %arg3: memref<2x384xf32, #tpu.memory_space<vmem>>, %arg4: memref<2x1xf32, #tpu.memory_space<vmem>>) attributes {dimension_semantics = [#tpu.dimension_semantics<arbitrary>], iteration_bounds = array<i64: 1>, scalar_prefetch = 0 : i64, scratch_operands = 0 : i64, tpu.core_type = #tpu.core_type<tc>, window_params = [{pipeline_mode = #tpu.pipeline_mode<synchronous>, transform_indices = @transform_0, window_bounds = array<i64: 2, 384>}, {pipeline_mode = #tpu.pipeline_mode<synchronous>, transform_indices = @transform_1, window_bounds = array<i64: 2, 384>}, {pipeline_mode = #tpu.pipeline_mode<synchronous>, transform_indices = @transform_2, window_bounds = array<i64: 2, 384>}, {pipeline_mode = #tpu.pipeline_mode<synchronous>, transform_indices = @transform_3, window_bounds = array<i64: 2, 1>}]} {
    %c0 = arith.constant 0 : index
    %c0_0 = arith.constant 0 : index
    %0 = vector.load %arg3[%c0, %c0_0] : memref<2x384xf32, #tpu.memory_space<vmem>>, vector<2x384xf32>
    %c0_1 = arith.constant 0 : index
    %c0_2 = arith.constant 0 : index
    %1 = vector.load %arg1[%c0_1, %c0_2] : memref<2x384xf32, #tpu.memory_space<vmem>>, vector<2x384xf32>
    %c0_3 = arith.constant 0 : index
    %c0_4 = arith.constant 0 : index
    %2 = vector.load %arg2[%c0_3, %c0_4] : memref<2x384xf32, #tpu.memory_space<vmem>>, vector<2x384xf32>
    %3 = arith.subf %1, %2 : vector<2x384xf32>
    %cst = arith.constant 2.000000e+00 : f32
    %4 = vector.broadcast %cst : f32 to vector<2x384xf32>
    %5 = arith.mulf %4, %0 : vector<2x384xf32>
    %6 = arith.mulf %3, %3 : vector<2x384xf32>
    %cst_5 = arith.constant -2.000000e+00 : f32
    %7 = vector.broadcast %cst_5 : f32 to vector<2x384xf32>
    %8 = arith.mulf %7, %0 : vector<2x384xf32>
    %9 = math.exp %8 : vector<2x384xf32>
    %10 = arith.mulf %6, %9 : vector<2x384xf32>
    %11 = arith.addf %5, %10 : vector<2x384xf32>
    %cst_6 = arith.constant 1.83787704 : f32
    %12 = vector.broadcast %cst_6 : f32 to vector<2x384xf32>
    %13 = arith.addf %11, %12 : vector<2x384xf32>
    %cst_7 = arith.constant -5.000000e-01 : f32
    %14 = vector.broadcast %cst_7 : f32 to vector<2x384xf32>
    %15 = arith.mulf %14, %13 : vector<2x384xf32>
    %cst_8 = arith.constant dense<0.000000e+00> : vector<2xf32>
    %16 = vector.multi_reduction <add>, %15, %cst_8 [1] : vector<2x384xf32> to vector<2xf32>
    %17 = vector.shape_cast %16 : vector<2xf32> to vector<2x1xf32>
    %c0_9 = arith.constant 0 : index
    %c0_10 = arith.constant 0 : index
    %18 = vector.load %arg4[%c0_9, %c0_10] : memref<2x1xf32, #tpu.memory_space<vmem>>, vector<2x1xf32>
    tpu.vector_store %arg4[%c0_9, %c0_10], %17 {strides = array<i32>} : memref<2x1xf32, #tpu.memory_space<vmem>>, vector<2x1xf32>,
    return
  }
  func.func @transform_0(%arg0: i32) -> (i32, i32) {
    %c0_i32 = arith.constant 0 : i32
    %c0_i32_0 = arith.constant 0 : i32
    %c0_i32_1 = arith.constant 0 : i32
    return %c0_i32, %c0_i32_0 : i32, i32
  }
  func.func @transform_1(%arg0: i32) -> (i32, i32) {
    %c0_i32 = arith.constant 0 : i32
    %c0_i32_0 = arith.constant 0 : i32
    %c0_i32_1 = arith.constant 0 : i32
    return %c0_i32, %c0_i32_0 : i32, i32
  }
  func.func @transform_2(%arg0: i32) -> (i32, i32) {
    %c0_i32 = arith.constant 0 : i32
    %c0_i32_0 = arith.constant 0 : i32
    %c0_i32_1 = arith.constant 0 : i32
    return %c0_i32, %c0_i32_0 : i32, i32
  }
  func.func @transform_3(%arg0: i32) -> (i32, i32) {
    %c0_i32 = arith.constant 0 : i32
    %c0_i32_0 = arith.constant 0 : i32
    %c0_i32_1 = arith.constant 0 : i32
    return %c0_i32, %c0_i32_0 : i32, i32
  }
}

</mosaic_0001>

<llo_original>
// kernel: _lambda_.50
$region0: #{_lambda_.50}
  #allocation0 [shape = 'u32[]', space=smem, size = 0x4, offset = 0x4, fixed_abs, tag = 'smem constant byte address 0x4 - core index']
  #allocation1 [shape = 'u32[72,128]{1,0:T(1,128)}', space=vmem, size = 0x9000, scoped, tag = 'internal scratch']
  %s0 = inlined_call_operand.vmem [shape: bf16[128,27], index: 0, kind: input, shape index: {}]
  %s1 = inlined_call_operand.vmem [shape: bf16[27,128], index: 1, kind: input, shape index: {}]
  %s2 = inlined_call_operand.vmem [shape: f32[1,128], index: 2, kind: input, shape index: {}]
  %s3 = inlined_call_operand.vmem [shape: f32[128,128], index: 3, kind: output, shape index: {}]
  %s4 = sld [smem:[#allocation0]]
  $region22: #{_lambda_.50} parent=0
    _
  %s6 = ssub.s32 1, %s4
  %s7 = scalar_select 0, %s6, %s4
  // Predicated region
  $region2: #{_lambda_.50} parent=0 // pred_check
    _
  $region3: #{_lambda_.50} parent=0 // pred_check_branch
    %9 = sbr.rel (0) target = $region5
  $region4: #{_lambda_.50} parent=0 // pred_region
    _
  $region5: #{_lambda_.50} parent=0 // pred_fallthru
    _
  // Predicated region
  $region6: #{_lambda_.50} parent=0 // pred_check
    _
  $region7: #{_lambda_.50} parent=0 // pred_check_branch
    %11 = sbr.rel (0) target = $region9
  $region8: #{_lambda_.50} parent=0 // pred_region
    _
  $region9: #{_lambda_.50} parent=0 // pred_fallthru
    _
  // Predicated region
  $region10: #{_lambda_.50} parent=0 // pred_check
    _
  $region11: #{_lambda_.50} parent=0 // pred_check_branch
    %13 = sbr.rel (0) target = $region13
  $region12: #{_lambda_.50} parent=0 // pred_region
    _
  $region13: #{_lambda_.50} parent=0 // pred_fallthru
    _
  %v15 = vld [vmem:[%s0] sm:$0xf]
  %v16 = vld [vmem:[%s0 + $0x4] sm:$0xf]
  %v17 = vld [vmem:[%s0 + $0x8] sm:$0xf]
  %v18 = vld [vmem:[%s0 + $0xc] sm:$0xf]
  %v19 = vld [vmem:[%s0 + $0x10] sm:$0xf]
  %v20 = vld [vmem:[%s0 + $0x14] sm:$0xf]
  %v21 = vld [vmem:[%s0 + $0x18] sm:$0xf]
  %v22 = vld [vmem:[%s0 + $0x1c] sm:$0xf]
  %v23 = vld [vmem:[%s0 + $0x20] sm:$0xf]
  %v24 = vld [vmem:[%s0 + $0x24] sm:$0xf]
  %v25 = vld [vmem:[%s0 + $0x28] sm:$0xf]
  %v26 = vld [vmem:[%s0 + $0x2c] sm:$0xf]
  %v27 = vld [vmem:[%s0 + $0x30] sm:$0xf]
  %v28 = vld [vmem:[%s0 + $0x34] sm:$0xf]
  %v29 = vld [vmem:[%s0 + $0x38] sm:$0xf]
  %v30 = vld [vmem:[%s0 + $0x3c] sm:$0xf]
  %v31 = vld [vmem:[%s1] sm:$0xf]
  %v32 = vld [vmem:[%s1 + $0x4] sm:$0xf]
  %v33 = vld [vmem:[%s1 + $0x8] sm:$0xf]
  %v34 = vld [vmem:[%s1 + $0xc] sm:$0x3]
  %v35 = vld [vmem:[%s2] sm:$0x1]
  %v37 = vperm.slane %v35, 0
  %v55 = vunpack.c.l.b16 %v15
  %v56 = vunpack.c.l.b16 %v16
  %v57 = vunpack.c.l.b16 %v17
  %v58 = vunpack.c.l.b16 %v18
  %v59 = vunpack.c.l.b16 %v19
  %v60 = vunpack.c.l.b16 %v20
  %v61 = vunpack.c.l.b16 %v21
  %v62 = vunpack.c.l.b16 %v22
  %v63 = vunpack.c.l.b16 %v23
  %v64 = vunpack.c.l.b16 %v24
  %v65 = vunpack.c.l.b16 %v25
  %v66 = vunpack.c.l.b16 %v26
  %v67 = vunpack.c.l.b16 %v27
  %v68 = vunpack.c.l.b16 %v28
  %v69 = vunpack.c.l.b16 %v29
  %v70 = vunpack.c.l.b16 %v30
  %v71 = vpack.c.b16 %v56, %v55
  %v72 = vpack.c.b16 %v58, %v57
  %v73 = vpack.c.b16 %v60, %v59
  %v74 = vpack.c.b16 %v62, %v61
  %v75 = vpack.c.b16 %v64, %v63
  %v76 = vpack.c.b16 %v66, %v65
  %v77 = vpack.c.b16 %v68, %v67
  %v78 = vpack.c.b16 %v70, %v69
  %v83 = vunpack.c.l.b16 %v31
  %v84 = vunpack.c.l.b16 %v32
  %v85 = vunpack.c.l.b16 %v33
  %v86 = vunpack.c.l.b16 %v34
  %v87 = vpack.c.b16 %v84, %v83
  %v88 = vpack.c.b16 %v86, %v85
  %vm90 = vcmask 220160
  %v92 = vsel %vm90, %v71, 0
  %v95 = vsel %vm90, %v72, 0
  %v98 = vsel %vm90, %v73, 0
  %v101 = vsel %vm90, %v74, 0
  %v104 = vsel %vm90, %v75, 0
  %v107 = vsel %vm90, %v76, 0
  %v110 = vsel %vm90, %v77, 0
  %v113 = vsel %vm90, %v78, 0
  %vm115 = vcmask 1044480
  %vm116 = vcmask 1045504
  %v117 = vsel %vm115, 4294967295, 65535
  %v118 = vsel %vm116, %v117, 0
  %v120 = vand.u32 %v88, %v118
  %122 = vmatpush.bf16.msra.mxu0 0
  %123 = vmatpush.bf16.msra.mxu0 0
  %124 = vmatpush.bf16.msra.mxu0 0
  %125 = vmatpush.bf16.msra.mxu0 0
  %126 = vmatpush.bf16.msra.mxu0 0
  %127 = vmatpush.bf16.msra.mxu0 0
  %128 = vmatpush.bf16.msra.mxu0 %v120
  %129 = vmatpush.bf16.msra.mxu0 %v87
  %130 = vmatmul.bf16.gmra.mxu0 %v92
  %v131 = vpop.f32.mrf.mxu0
  %v132 = vadd.f32 %v37, %v131
  %v133 = vpop.f32.mrf.mxu0
  %v134 = vadd.f32 %v37, %v133
  %135 = vmatmul.bf16.gmra.mxu0 %v95
  %v136 = vpop.f32.mrf.mxu0
  %v137 = vadd.f32 %v37, %v136
  %v138 = vpop.f32.mrf.mxu0
  %v139 = vadd.f32 %v37, %v138
  %140 = vmatmul.bf16.gmra.mxu0 %v98
  %v141 = vpop.f32.mrf.mxu0
  %v142 = vadd.f32 %v37, %v141
  %v143 = vpop.f32.mrf.mxu0
  %v144 = vadd.f32 %v37, %v143
  %145 = vmatmul.bf16.gmra.mxu0 %v101
  %v146 = vpop.f32.mrf.mxu0
  %v147 = vadd.f32 %v37, %v146
  %v148 = vpop.f32.mrf.mxu0
  %v149 = vadd.f32 %v37, %v148
  %150 = vmatmul.bf16.gmra.mxu0 %v104
  %v151 = vpop.f32.mrf.mxu0
  %v152 = vadd.f32 %v37, %v151
  %v153 = vpop.f32.mrf.mxu0
  %v154 = vadd.f32 %v37, %v153
  %155 = vmatmul.bf16.gmra.mxu0 %v107
  %v156 = vpop.f32.mrf.mxu0
  %v157 = vadd.f32 %v37, %v156
  %v158 = vpop.f32.mrf.mxu0
  %v159 = vadd.f32 %v37, %v158
  %160 = vmatmul.bf16.gmra.mxu0 %v110
  %v161 = vpop.f32.mrf.mxu0
  %v162 = vadd.f32 %v37, %v161
  %v163 = vpop.f32.mrf.mxu0
  %v164 = vadd.f32 %v37, %v163
  %165 = vmatmul.bf16.gmra.mxu0 %v113
  %v166 = vpop.f32.mrf.mxu0
  %v167 = vadd.f32 %v37, %v166
  %v168 = vpop.f32.mrf.mxu0
  %v169 = vadd.f32 %v37, %v168
  %170 = vdwg.mxu0
  %v171 = vmax.f32 %v132, 0.0
  %v172 = vmax.f32 %v134, 0.0
  %v173 = vmax.f32 %v137, 0.0
  %v174 = vmax.f32 %v139, 0.0
  %v175 = vmax.f32 %v142, 0.0
  %v176 = vmax.f32 %v144, 0.0
  %v177 = vmax.f32 %v147, 0.0
  %v178 = vmax.f32 %v149, 0.0
  %v179 = vmax.f32 %v152, 0.0
  %v180 = vmax.f32 %v154, 0.0
  %v181 = vmax.f32 %v157, 0.0
  %v182 = vmax.f32 %v159, 0.0
  %v183 = vmax.f32 %v162, 0.0
  %v184 = vmax.f32 %v164, 0.0
  %v185 = vmax.f32 %v167, 0.0
  %v186 = vmax.f32 %v169, 0.0
  %187 = vst [vmem:[%s3] sm:$0xff] %v171
  %188 = vst [vmem:[%s3 + $0x8] sm:$0xff] %v172
  %189 = vst [vmem:[%s3 + $0x10] sm:$0xff] %v173
  %190 = vst [vmem:[%s3 + $0x18] sm:$0xff] %v174
  %191 = vst [vmem:[%s3 + $0x20] sm:$0xff] %v175
  %192 = vst [vmem:[%s3 + $0x28] sm:$0xff] %v176
  %193 = vst [vmem:[%s3 + $0x30] sm:$0xff] %v177
  %194 = vst [vmem:[%s3 + $0x38] sm:$0xff] %v178
  %195 = vst [vmem:[%s3 + $0x40] sm:$0xff] %v179
  %196 = vst [vmem:[%s3 + $0x48] sm:$0xff] %v180
  %197 = vst [vmem:[%s3 + $0x50] sm:$0xff] %v181
  %198 = vst [vmem:[%s3 + $0x58] sm:$0xff] %v182
  %199 = vst [vmem:[%s3 + $0x60] sm:$0xff] %v183
  %200 = vst [vmem:[%s3 + $0x68] sm:$0xff] %v184
  %201 = vst [vmem:[%s3 + $0x70] sm:$0xff] %v185
  %202 = vst [vmem:[%s3 + $0x78] sm:$0xff] %v186
  // Predicated region
  $region14: #{_lambda_.50} parent=0 // pred_check
    _
  $region15: #{_lambda_.50} parent=0 // pred_check_branch
    %204 = sbr.rel (0) target = $region17
  $region16: #{_lambda_.50} parent=0 // pred_region
    _
  $region17: #{_lambda_.50} parent=0 // pred_fallthru
    _
  // Predicated region
  $region18: #{_lambda_.50} parent=0 // pred_check
    _
  $region19: #{_lambda_.50} parent=0 // pred_check_branch
    %206 = sbr.rel (0) target = $region21
  $region20: #{_lambda_.50} parent=0 // pred_region
    _
  $region21: #{_lambda_.50} parent=0 // pred_fallthru
    _

// kernel: _lambda_.54
$region0: #{_lambda_.54}
  #allocation0 [shape = 'u32[]', space=smem, size = 0x4, offset = 0x4, fixed_abs, tag = 'smem constant byte address 0x4 - core index']
  #allocation1 [shape = 'u32[72,128]{1,0:T(1,128)}', space=vmem, size = 0x9000, scoped, tag = 'internal scratch']
  %s0 = inlined_call_operand.vmem [shape: bf16[32,72], index: 0, kind: input, shape index: {}]
  %s1 = inlined_call_operand.vmem [shape: bf16[72,128], index: 1, kind: input, shape index: {}]
  %s2 = inlined_call_operand.vmem [shape: f32[1,128], index: 2, kind: input, shape index: {}]
  %s3 = inlined_call_operand.vmem [shape: f32[32,128], index: 3, kind: output, shape index: {}]
  %s4 = sld [smem:[#allocation0]]
  $region22: #{_lambda_.54} parent=0
    _
  %s6 = ssub.s32 1, %s4
  %s7 = scalar_select 0, %s6, %s4
  // Predicated region
  $region2: #{_lambda_.54} parent=0 // pred_check
    _
  $region3: #{_lambda_.54} parent=0 // pred_check_branch
    %9 = sbr.rel (0) target = $region5
  $region4: #{_lambda_.54} parent=0 // pred_region
    _
  $region5: #{_lambda_.54} parent=0 // pred_fallthru
    _
  // Predicated region
  $region6: #{_lambda_.54} parent=0 // pred_check
    _
  $region7: #{_lambda_.54} parent=0 // pred_check_branch
    %11 = sbr.rel (0) target = $region9
  $region8: #{_lambda_.54} parent=0 // pred_region
    _
  $region9: #{_lambda_.54} parent=0 // pred_fallthru
    _
  // Predicated region
  $region10: #{_lambda_.54} parent=0 // pred_check
    _
  $region11: #{_lambda_.54} parent=0 // pred_check_branch
    %13 = sbr.rel (0) target = $region13
  $region12: #{_lambda_.54} parent=0 // pred_region
    _
  $region13: #{_lambda_.54} parent=0 // pred_fallthru
    _
  %v15 = vld [vmem:[%s0] sm:$0xf]
  %v16 = vld [vmem:[%s0 + $0x4] sm:$0xf]
  %v17 = vld [vmem:[%s0 + $0x8] sm:$0xf]
  %v18 = vld [vmem:[%s0 + $0xc] sm:$0xf]
  %v19 = vld [vmem:[%s1] sm:$0xf]
  %v20 = vld [vmem:[%s1 + $0x4] sm:$0xf]
  %v21 = vld [vmem:[%s1 + $0x8] sm:$0xf]
  %v22 = vld [vmem:[%s1 + $0xc] sm:$0xf]
  %v23 = vld [vmem:[%s1 + $0x10] sm:$0xf]
  %v24 = vld [vmem:[%s1 + $0x14] sm:$0xf]
  %v25 = vld [vmem:[%s1 + $0x18] sm:$0xf]
  %v26 = vld [vmem:[%s1 + $0x1c] sm:$0xf]
  %v27 = vld [vmem:[%s1 + $0x20] sm:$0xf]
  %v28 = vld [vmem:[%s2] sm:$0x1]
  %v30 = vperm.slane %v28, 0
  %v36 = vunpack.c.l.b16 %v15
  %v37 = vunpack.c.l.b16 %v16
  %v38 = vunpack.c.l.b16 %v17
  %v39 = vunpack.c.l.b16 %v18
  %v40 = vpack.c.b16 %v37, %v36
  %v41 = vpack.c.b16 %v39, %v38
  %v51 = vunpack.c.l.b16 %v19
  %v52 = vunpack.c.l.b16 %v20
  %v53 = vunpack.c.l.b16 %v21
  %v54 = vunpack.c.l.b16 %v22
  %v55 = vunpack.c.l.b16 %v23
  %v56 = vunpack.c.l.b16 %v24
  %v57 = vunpack.c.l.b16 %v25
  %v58 = vunpack.c.l.b16 %v26
  %v59 = vunpack.c.l.b16 %v27
  %v60 = vpack.c.b16 %v52, %v51
  %v61 = vpack.c.b16 %v54, %v53
  %v62 = vpack.c.b16 %v56, %v55
  %v63 = vpack.c.b16 %v58, %v57
  %v64 = vpack.c.b16 %v59, %v59
  %vm69 = vcmask 588800
  %v71 = vsel %vm69, %v40, 0
  %v74 = vsel %vm69, %v41, 0
  %vm76 = vcmask 1043456
  %v78 = vsel %vm76, %v64, 0
  %80 = vmatpush.bf16.msra.mxu0 0
  %81 = vmatpush.bf16.msra.mxu0 0
  %82 = vmatpush.bf16.msra.mxu0 0
  %83 = vmatpush.bf16.msra.mxu0 %v78
  %84 = vmatpush.bf16.msra.mxu0 %v63
  %85 = vmatpush.bf16.msra.mxu0 %v62
  %86 = vmatpush.bf16.msra.mxu0 %v61
  %87 = vmatpush.bf16.msra.mxu0 %v60
  %88 = vmatmul.bf16.gmra.mxu0 %v71
  %v89 = vpop.f32.mrf.mxu0
  %v90 = vadd.f32 %v30, %v89
  %v91 = vpop.f32.mrf.mxu0
  %v92 = vadd.f32 %v30, %v91
  %93 = vmatmul.bf16.gmra.mxu0 %v74
  %v94 = vpop.f32.mrf.mxu0
  %v95 = vadd.f32 %v30, %v94
  %v96 = vpop.f32.mrf.mxu0
  %v97 = vadd.f32 %v30, %v96
  %98 = vdwg.mxu0
  %v99 = vmax.f32 %v90, 0.0
  %v100 = vmax.f32 %v92, 0.0
  %v101 = vmax.f32 %v95, 0.0
  %v102 = vmax.f32 %v97, 0.0
  %103 = vst [vmem:[%s3] sm:$0xff] %v99
  %104 = vst [vmem:[%s3 + $0x8] sm:$0xff] %v100
  %105 = vst [vmem:[%s3 + $0x10] sm:$0xff] %v101
  %106 = vst [vmem:[%s3 + $0x18] sm:$0xff] %v102
  // Predicated region
  $region14: #{_lambda_.54} parent=0 // pred_check
    _
  $region15: #{_lambda_.54} parent=0 // pred_check_branch
    %108 = sbr.rel (0) target = $region17
  $region16: #{_lambda_.54} parent=0 // pred_region
    _
  $region17: #{_lambda_.54} parent=0 // pred_fallthru
    _
  // Predicated region
  $region18: #{_lambda_.54} parent=0 // pred_check
    _
  $region19: #{_lambda_.54} parent=0 // pred_check_branch
    %110 = sbr.rel (0) target = $region21
  $region20: #{_lambda_.54} parent=0 // pred_region
    _
  $region21: #{_lambda_.54} parent=0 // pred_fallthru
    _

// kernel: custom-call.5
$region0: #{custom-call.5}
  %s0 = inlined_call_operand.vmem [shape: f32[2,24,24], index: 0, kind: input, shape index: {}]
  %s1 = inlined_call_operand.vmem [shape: f32[2,24,24], index: 1, kind: output, shape index: {0}]
  %s2 = inlined_call_operand.hbm [shape: s32[2,24], index: 2, kind: output, shape index: {1}]
  %s3 = inlined_call_operand.hbm [shape: s32[2,24], index: 3, kind: output, shape index: {2}]
  %4 = xla_tuple %s1, %s2, %s3
  $region1: #{custom-call.5} parent=0
    #allocation0 [shape = 'u8[24576]{0}', space=vmem, size = 0x6000, scoped, tag = 'operand span for operand 0']
    #allocation1 [shape = 'u8[24576]{0}', space=vmem, size = 0x6000, scoped, tag = 'operand span for operand 1']
    #allocation2 [shape = 'u8[4096]{0}', space=vmem, size = 0x1000, scoped, tag = 'operand span for operand 2']
    #allocation3 [shape = 'u8[2048]{0}', space=vmem, size = 0x800, scoped, tag = 'packed  for operand 2']
    #allocation4 [shape = 's32[2]{0}', space=sflag, size = 0x8, scoped, tag = 'scoped memory for custom-call.5']
    #allocation5 [shape = 'u8[4096]{0}', space=vmem, size = 0x1000, scoped, tag = 'operand span for operand 3']
    #allocation6 [shape = 'u8[2048]{0}', space=vmem, size = 0x800, scoped, tag = 'packed  for operand 3']
    #allocation7 [shape = 's32[2]{0}', space=sflag, size = 0x8, scoped, tag = 'scoped memory for custom-call.5']
    %5 = vsyncpa [#allocation4], 0
    %s6 = scalar_lea.sflag [#allocation4], 1
    %7 = vsyncpa %s6, 0
    %8 = vsyncpa [#allocation7], 0
    %s9 = scalar_lea.sflag [#allocation7], 1
    %10 = vsyncpa %s9, 0
    loop: start=0, step=1, limit=4
    $region2: #{custom-call.5} parent=1 // loop_pre_header
      _
    $region3: #{custom-call.5} parent=1 // loop_header
      %s12 = sphi 0, %s16
      %p13 = scmp.ge.s32.totalorder %s12, 4
      %s24 = sphi 0, %s26
      %s27 = sphi 0, %s24
      %s28 = sphi 0, %s27
      %s44 = sphi 0, %s28
      %s52 = sphi 0, %s54
      %s55 = sphi 0, %s52
      %s56 = sphi 0, %s55
      %s72 = sphi 0, %s56
    $region4: #{custom-call.5} parent=1 // loop_header_branch
      %15 = sbr.rel (%p13) target = $region8
    $region5: #{custom-call.5} parent=1 // loop_body
      %s17 = ssub.s32 %s12, 1
      %s18 = ssub.s32 %s12, 2
      %s19 = sadd.s32 %s12, 1
      %s20 = sshrl.u32 %s12, 3
      %s21 = sshrl.u32 %s19, 3
      %s22 = ssub.s32 %s20, %s21
      %p23 = scmp.eq.s32.totalorder %s22, 0
      %s25 = sadd.s32 %s24, 1
      %s26 = scalar_select %p23, %s24, %s25
      %p29 = pneg %p23
      %p30 = scmp.eq.s32.totalorder %s12, 1
      %p31 = por %p29, %p30
      %p32 = scmp.ne.s32.totalorder %s24, %s27
      %p33 = scmp.eq.s32.totalorder %s12, 0
      %p34 = por %p32, %p33
      %p35 = scmp.ne.s32.totalorder %s24, %s27
      %p36 = scmp.eq.s32.totalorder %s17, 1
      %p37 = por %p35, %p36
      %p38 = scmp.ne.s32.totalorder %s27, %s28
      %p39 = scmp.eq.s32.totalorder %s17, 0
      %p40 = por %p38, %p39
      %p41 = scmp.ne.s32.totalorder %s27, %s28
      %p42 = scmp.eq.s32.totalorder %s18, 1
      %p43 = por %p41, %p42
      %p45 = scmp.ne.s32.totalorder %s28, %s44
      %p46 = scmp.eq.s32.totalorder %s18, 0
      %p47 = por %p45, %p46
      %s48 = sshrl.u32 %s12, 3
      %s49 = sshrl.u32 %s19, 3
      %s50 = ssub.s32 %s48, %s49
      %p51 = scmp.eq.s32.totalorder %s50, 0
      %s53 = sadd.s32 %s52, 1
      %s54 = scalar_select %p51, %s52, %s53
      %p57 = pneg %p51
      %p58 = scmp.eq.s32.totalorder %s12, 1
      %p59 = por %p57, %p58
      %p60 = scmp.ne.s32.totalorder %s52, %s55
      %p61 = scmp.eq.s32.totalorder %s12, 0
      %p62 = por %p60, %p61
      %p63 = scmp.ne.s32.totalorder %s52, %s55
      %p64 = scmp.eq.s32.totalorder %s17, 1
      %p65 = por %p63, %p64
      %p66 = scmp.ne.s32.totalorder %s55, %s56
      %p67 = scmp.eq.s32.totalorder %s17, 0
      %p68 = por %p66, %p67
      %p69 = scmp.ne.s32.totalorder %s55, %s56
      %p70 = scmp.eq.s32.totalorder %s18, 1
      %p71 = por %p69, %p70
      %p73 = scmp.ne.s32.totalorder %s56, %s72
      %p74 = scmp.eq.s32.totalorder %s18, 0
      %p75 = por %p73, %p74
      %p76 = scmp.le.s32.totalorder 1, %s12
      %p77 = scmp.lt.s32.totalorder %s12, 3
      %p78 = pnand %p76, %p77
      %p79 = pneg %p78
      // Predicated region
      $region9: #{custom-call.5} parent=5 // pred_check
        _
      $region10: #{custom-call.5} parent=5 // pred_check_branch
        %81 = sbr.rel (%p78) target = $region12
      $region11: #{custom-call.5} parent=5 // pred_region
        %s82 = ssub.s32 %s12, 1
      $region12: #{custom-call.5} parent=5 // pred_fallthru
        _
      %p83 = scmp.lt.s32.totalorder %s12, 2
      // Predicated region
      $region13: #{custom-call.5} parent=5 // pred_check
        %p84 = pneg %p83
      $region14: #{custom-call.5} parent=5 // pred_check_branch
        %86 = sbr.rel (%p84) target = $region16
      $region15: #{custom-call.5} parent=5 // pred_region
        %s87 = sand.u32 %s12, 1
        %s88 = sand.u32 %s12, 1
        %s89 = smul.addr %s88, 24
        %s90 = scalar_lea.vmem [#allocation0], %s89
        %s91 = smul.addr %s12, 24
        %s92 = scalar_lea.vmem %s0, %s91
        // Predicated region
        $region17: #{custom-call.5} parent=15 // pred_check
          _
        $region18: #{custom-call.5} parent=15 // pred_check_branch
          %94 = sbr.rel (0) target = $region20
        $region19: #{custom-call.5} parent=15 // pred_region
          // Predicated region
          $region21: #{custom-call.5} parent=19 // pred_check
            _
          $region22: #{custom-call.5} parent=19 // pred_check_branch
            %96 = sbr.rel (0) target = $region24
          $region23: #{custom-call.5} parent=19 // pred_region
            loop: start=0, step=1, limit=1
            $region25: #{custom-call.5} parent=23 // loop_pre_header
              _
            $region26: #{custom-call.5} parent=23 // loop_header
              %s98 = sphi 0, %s102
              %p99 = scmp.ge.s32.totalorder %s98, 1
              %s103 = sphi %s92, %s92
              %s104 = sphi %s90, %s90
            $region27: #{custom-call.5} parent=23 // loop_header_branch
              %101 = sbr.rel (%p99) target = $region31
            $region28: #{custom-call.5} parent=23 // loop_body
              %v105 = vld [vmem:[%s103] sm:$0xff]
              %106 = vst [vmem:[%s104] sm:$0xff] %v105
              %v107 = vld [vmem:[%s103 + $0x8] sm:$0xff]
              %108 = vst [vmem:[%s104 + $0x8] sm:$0xff] %v107
              %v109 = vld [vmem:[%s103 + $0x10] sm:$0xff]
              %110 = vst [vmem:[%s104 + $0x10] sm:$0xff] %v109
            $region29: #{custom-call.5} parent=23 // loop_footer
              %s102 = sadd.s32 1, %s98
            $region30: #{custom-call.5} parent=23 // loop_footer_branch
              %97 = sbr.rel target = $region26
            $region31: #{custom-call.5} parent=23 // loop_exit
              _
          $region24: #{custom-call.5} parent=19 // pred_fallthru
            _
          // Predicated region
          $region32: #{custom-call.5} parent=19 // pred_check
            _
          $region33: #{custom-call.5} parent=19 // pred_check_branch
            %112 = sbr.rel target = $region35
          $region34: #{custom-call.5} parent=19 // pred_region
            _
          $region35: #{custom-call.5} parent=19 // pred_fallthru
            _
        $region20: #{custom-call.5} parent=15 // pred_fallthru
          _
        %113 = vnop
      $region16: #{custom-call.5} parent=5 // pred_fallthru
        _
      %p114 = scmp.le.s32.totalorder 1, %s12
      %p115 = scmp.lt.s32.totalorder %s12, 3
      %p116 = pnand %p114, %p115
      %p117 = pneg %p116
      // Predicated region
      $region36: #{custom-call.5} parent=5 // pred_check
        _
      $region37: #{custom-call.5} parent=5 // pred_check_branch
        %119 = sbr.rel (%p116) target = $region39
      $region38: #{custom-call.5} parent=5 // pred_region
        #allocation8 [shape = 's32[24,128]{1,0}', space=vmem, size = 0x3000, scoped, tag = 'scratch for permutations']
        %s120 = ssub.s32 %s12, 1
        %s121 = sand.u32 %s17, 1
        %s122 = sand.u32 %s17, 1
        %s123 = smul.addr %s122, 24
        %s124 = scalar_lea.vmem [#allocation0], %s123
        %s125 = sand.u32 %s17, 1
        %s126 = sand.u32 %s17, 1
        %s127 = smul.addr %s126, 24
        %s128 = scalar_lea.vmem [#allocation0], %s127
        %s129 = sand.u32 %s17, 1
        %s130 = sand.u32 %s17, 1
        %s131 = smul.addr %s130, 24
        %s132 = scalar_lea.vmem [#allocation1], %s131
        %p133 = pneg %p40
        %p134 = pneg %p37
        %s135 = sand.u32 %s27, 1
        %s136 = scalar_lea.sflag [#allocation4], %s135
        %s137 = sand.u32 %s27, 1
        %s138 = smul.addr %s137, 2
        %s139 = scalar_lea.vmem [#allocation3], %s138
        %p140 = pneg %p68
        %p141 = pneg %p65
        %s142 = sand.u32 %s55, 1
        %s143 = scalar_lea.sflag [#allocation7], %s142
        %s144 = sand.u32 %s55, 1
        %s145 = smul.addr %s144, 2
        %s146 = scalar_lea.vmem [#allocation6], %s145
        %s147 = sshrl.u32 %s17, 3
        %s148 = sshrl.u32 %s17, 3
        %v149 = vld [vmem:[%s124] sm:$0xff]
        %150 = vst [vmem:[%s132] sm:$0xff] %v149
        %s151 = scalar_lea.vmem %s132, 8 [#allocation1]
        %s152 = scalar_lea.vmem %s124, 8 [#allocation0]
        %v153 = vld [vmem:[%s152] sm:$0xff]
        %154 = vst [vmem:[%s151] sm:$0xff] %v153
        %s155 = scalar_lea.vmem %s132, 16 [#allocation1]
        %s156 = scalar_lea.vmem %s124, 16 [#allocation0]
        %v157 = vld [vmem:[%s156] sm:$0xff]
        %158 = vst [vmem:[%s155] sm:$0xff] %v157
        %s159 = sand.u32 %s17, 7
        %s160 = scalar_lea.vmem [#allocation2], %s159
        %s161 = sand.u32 %s17, 7
        %s162 = scalar_lea.vmem [#allocation5], %s161
        %163 = vst [vmem:[%s160] sm:$0x1] 0
        %v164 = vlaneseq
        %v165 = vshrl.u32 %v164, 7
        %v166 = vmov %v165
        loop: start=0, step=1, limit=3
        $region40: #{custom-call.5} parent=38 // loop_pre_header
          _
        $region41: #{custom-call.5} parent=38 // loop_header
          %s168 = sphi 0, %s172
          %p169 = scmp.ge.s32.totalorder %s168, 3
        $region42: #{custom-call.5} parent=38 // loop_header_branch
          %171 = sbr.rel (%p169) target = $region46
        $region43: #{custom-call.5} parent=38 // loop_body
          %s173 = smul.addr %s168, 8
          %s174 = scalar_lea.vmem [#allocation8], %s173
          %s175 = smul.u32 %s168, 8
          %v176 = vstv %s175
          %v177 = vadd.s32 %v166, %v176
          %178 = vst [vmem:[%s174] sm:$0xff] %v177
        $region44: #{custom-call.5} parent=38 // loop_footer
          %s172 = sadd.s32 1, %s168
        $region45: #{custom-call.5} parent=38 // loop_footer_branch
          %167 = sbr.rel target = $region41
        $region46: #{custom-call.5} parent=38 // loop_exit
          _
        loop: start=0, step=1, limit=24
        $region47: #{custom-call.5} parent=38 // loop_pre_header
          _
        $region48: #{custom-call.5} parent=38 // loop_header
          %s180 = sphi 0, %s184
          %p181 = scmp.ge.s32.totalorder %s180, 24
        $region49: #{custom-call.5} parent=38 // loop_header_branch
          %183 = sbr.rel (%p181) target = $region53
        $region50: #{custom-call.5} parent=38 // loop_body
          %v185 = vstv %s180
          %v186 = vlaneseq
          %v187 = vshrl.u32 %v186, 7
          %v188 = vmov %v187
          %v189 = vld [vmem:[%s132] sm:$0xff]
          %v190 = vand.u32 2147483647, %v189
          %v192 = vstv %s180
          %vm193 = vcmp.ge.s32.totalorder %v188, %v192
          %vm194 = vcmp.lt.s32.totalorder %v188, 24
          %vm195 = vmand %vm193, %vm194
          %vm196 = vcmp.lt.f32.partialorder -inf, %v190
          %vm197 = vmand %vm195, %vm196
          %v198 = vsel %vm197, %v188, %v185
          %v199 = vsel %vm197, %v190, -inf
          %s200 = scalar_lea.vmem %s132, 8 [#allocation1]
          %v201 = vld [vmem:[%s200] sm:$0xff]
          %v202 = vand.u32 2147483647, %v201
          %v203 = vadd.s32 %v188, 8
          %v204 = vstv %s180
          %vm205 = vcmp.ge.s32.totalorder %v203, %v204
          %vm206 = vcmp.lt.s32.totalorder %v203, 24
          %vm207 = vmand %vm205, %vm206
          %vm208 = vcmp.lt.f32.partialorder %v199, %v202
          %vm209 = vmand %vm207, %vm208
          %v210 = vsel %vm209, %v203, %v198
          %v211 = vsel %vm209, %v202, %v199
          %s212 = scalar_lea.vmem %s132, 16 [#allocation1]
          %v213 = vld [vmem:[%s212] sm:$0xff]
          %v214 = vand.u32 2147483647, %v213
          %v215 = vadd.s32 %v188, 16
          %v216 = vstv %s180
          %vm217 = vcmp.ge.s32.totalorder %v215, %v216
          %vm218 = vcmp.lt.s32.totalorder %v215, 24
          %vm219 = vmand %vm217, %vm218
          %vm220 = vcmp.lt.f32.partialorder %v211, %v214
          %vm221 = vmand %vm219, %vm220
          %v222 = vsel %vm221, %v215, %v210
          %v223 = vsel %vm221, %v214, %v211
          %v224 = vrot.slane %v223, 1
          %v225 = vrot.slane %v222, 1
          %vm226 = vcmp.ge.f32.partialorder %v224, %v223
          %v227 = vsel %vm226, %v224, %v223
          %v228 = vsel %vm226, %v225, %v222
          %v229 = vrot.slane %v224, 1
          %v230 = vrot.slane %v225, 1
          %vm231 = vcmp.ge.f32.partialorder %v229, %v227
          %v232 = vsel %vm231, %v229, %v227
          %v233 = vsel %vm231, %v230, %v228
          %v234 = vrot.slane %v229, 1
          %v235 = vrot.slane %v230, 1
          %vm236 = vcmp.ge.f32.partialorder %v234, %v232
          %v237 = vsel %vm236, %v234, %v232
          %v238 = vsel %vm236, %v235, %v233
          %v239 = vrot.slane %v234, 1
          %v240 = vrot.slane %v235, 1
          %vm241 = vcmp.ge.f32.partialorder %v239, %v237
          %v242 = vsel %vm241, %v239, %v237
          %v243 = vsel %vm241, %v240, %v238
          %v244 = vrot.slane %v239, 1
          %v245 = vrot.slane %v240, 1
          %vm246 = vcmp.ge.f32.partialorder %v244, %v242
          %v247 = vsel %vm246, %v244, %v242
          %v248 = vsel %vm246, %v245, %v243
          %v249 = vrot.slane %v244, 1
          %v250 = vrot.slane %v245, 1
          %vm251 = vcmp.ge.f32.partialorder %v249, %v247
          %v252 = vsel %vm251, %v249, %v247
          %v253 = vsel %vm251, %v250, %v248
          %v254 = vrot.slane %v249, 1
          %v255 = vrot.slane %v250, 1
          %vm256 = vcmp.ge.f32.partialorder %v254, %v252
          %v257 = vsel %vm256, %v254, %v252
          %v258 = vsel %vm256, %v255, %v253
          %s259 = ssub.s32 128, %s180
          %260 = vrot.lane.b32.xlu0 %v258, %s259
          %v261 = vpop.permute.xlu0 %260
          %s262 = vtos %v261
          %v263 = vstv %s180
          %v264 = vlaneseq
          %v265 = vand.u32 %v264, 127
          %vm266 = vcmp.eq.s32.totalorder %v265, %v263
          %v267 = vstv %s262
          %v268 = vld [vmem:[%s160] ss:$0 sm:$0xff]
          %v269 = vsel %vm266, %v267, %v268
          %270 = vst [vmem:[%s160] sm:$0x1] %v269
          %s271 = scalar_lea.vmem %s132, %s180 [#allocation1]
          %s272 = scalar_lea.vmem %s132, %s262 [#allocation1]
          %v273 = vld [vmem:[%s271] ss:$0 sm:$0xff]
          %v274 = vld [vmem:[%s272] ss:$0 sm:$0xff]
          %275 = vst [vmem:[%s272] sm:$0x1] %v273
          %276 = vst [vmem:[%s271] sm:$0x1] %v274
          %s277 = scalar_lea.vmem [#allocation8], %s180
          %s278 = scalar_lea.vmem [#allocation8], %s262
          %v279 = vld [vmem:[%s277] ss:$0 sm:$0xff]
          %v280 = vld [vmem:[%s278] ss:$0 sm:$0xff]
          %281 = vst [vmem:[%s278] sm:$0x1] %v279
          %282 = vst [vmem:[%s277] sm:$0x1] %v280
          %vm283 = vcmp.ne.f32.partialorder %v274, 0.0
          %vm284 = vmand %vm266, %vm283
          %v285 = vsel %vm284, %v274, 1.0
          %v286 = vlaneseq
          %v287 = vand.u32 %v286, 127
          %v288 = vstv %s180
          %vm289 = vcmp.gt.s32.totalorder %v287, %v288
          %v290 = vsel %vm289, %v274, 0.0
          %v291 = vlaneseq
          %v292 = vshrl.u32 %v291, 7
          %v293 = vmov %v292
          %v294 = vld [vmem:[%s132] sm:$0xff]
          %v296 = vstv %s180
          %vm297 = vcmp.gt.s32.totalorder %v293, %v296
          %v298 = vsel %vm297, %v285, 1.0
          %v299 = vrcp.pop %v298
          %v300 = vmul.f32 %v298, %v299
          %v301 = vsub.f32 1.0, %v300
          %v302 = vmul.f32 %v299, %v301
          %v303 = vadd.f32 %v299, %v302
          %vm304 = vweird.f32 %v298
          %vm305 = vweird.f32 %v299
          %vm306 = vmor %vm304, %vm305
          %v307 = vsel %vm306, %v299, %v303
          %v308 = vand.u32 2147483647, %v298
          %vm309 = vcmp.eq.f32.partialorder %v308, 8.507059e+37
          %v310 = vand.u32 %v298, 2147483648
          %v311 = vor.u32 1.1754944e-38, %v310
          %v312 = vsel %vm309, %v311, %v307
          %v313 = vmul.f32 %v294, %v312
          %vm314 = vmand %vm297, %vm266
          %v315 = vsel %vm314, %v313, 0.0
          %316 = vadd.xlane.f32.xlu0 %v315
          %v317 = vpop.xlane.xlu0 %316
          %v318 = vmul.f32 %v317, %v290
          %v319 = vsub.f32 %v313, %v318
          %320 = vst [vmem:[%s132] sm:$0xff] %v319
          %s321 = scalar_lea.vmem %s132, 8 [#allocation1]
          %v322 = vld [vmem:[%s321] sm:$0xff]
          %v323 = vadd.s32 %v293, 8
          %v324 = vstv %s180
          %vm325 = vcmp.gt.s32.totalorder %v323, %v324
          %v326 = vsel %vm325, %v285, 1.0
          %v327 = vrcp.pop %v326
          %v328 = vmul.f32 %v326, %v327
          %v329 = vsub.f32 1.0, %v328
          %v330 = vmul.f32 %v327, %v329
          %v331 = vadd.f32 %v327, %v330
          %vm332 = vweird.f32 %v326
          %vm333 = vweird.f32 %v327
          %vm334 = vmor %vm332, %vm333
          %v335 = vsel %vm334, %v327, %v331
          %v336 = vand.u32 2147483647, %v326
          %vm337 = vcmp.eq.f32.partialorder %v336, 8.507059e+37
          %v338 = vand.u32 %v326, 2147483648
          %v339 = vor.u32 1.1754944e-38, %v338
          %v340 = vsel %vm337, %v339, %v335
          %v341 = vmul.f32 %v322, %v340
          %vm342 = vmand %vm325, %vm266
          %v343 = vsel %vm342, %v341, 0.0
          %344 = vadd.xlane.f32.xlu0 %v343
          %v345 = vpop.xlane.xlu0 %344
          %v346 = vmul.f32 %v345, %v290
          %v347 = vsub.f32 %v341, %v346
          %348 = vst [vmem:[%s321] sm:$0xff] %v347
          %s349 = scalar_lea.vmem %s132, 16 [#allocation1]
          %v350 = vld [vmem:[%s349] sm:$0xff]
          %v351 = vadd.s32 %v293, 16
          %v352 = vstv %s180
          %vm353 = vcmp.gt.s32.totalorder %v351, %v352
          %v354 = vsel %vm353, %v285, 1.0
          %v355 = vrcp.pop %v354
          %v356 = vmul.f32 %v354, %v355
          %v357 = vsub.f32 1.0, %v356
          %v358 = vmul.f32 %v355, %v357
          %v359 = vadd.f32 %v355, %v358
          %vm360 = vweird.f32 %v354
          %vm361 = vweird.f32 %v355
          %vm362 = vmor %vm360, %vm361
          %v363 = vsel %vm362, %v355, %v359
          %v364 = vand.u32 2147483647, %v354
          %vm365 = vcmp.eq.f32.partialorder %v364, 8.507059e+37
          %v366 = vand.u32 %v354, 2147483648
          %v367 = vor.u32 1.1754944e-38, %v366
          %v368 = vsel %vm365, %v367, %v363
          %v369 = vmul.f32 %v350, %v368
          %vm370 = vmand %vm353, %vm266
          %v371 = vsel %vm370, %v369, 0.0
          %372 = vadd.xlane.f32.xlu0 %v371
          %v373 = vpop.xlane.xlu0 %372
          %v374 = vmul.f32 %v373, %v290
          %v375 = vsub.f32 %v369, %v374
          %376 = vst [vmem:[%s349] sm:$0xff] %v375
        $region51: #{custom-call.5} parent=38 // loop_footer
          %s184 = sadd.s32 1, %s180
        $region52: #{custom-call.5} parent=38 // loop_footer_branch
          %179 = sbr.rel target = $region48
        $region53: #{custom-call.5} parent=38 // loop_exit
          _
        %v377 = vld [vmem:[#allocation8] sm:$0xff]
        %s378 = scalar_lea.vmem [#allocation8], 8
        %v379 = vld [vmem:[%s378] sm:$0xff]
        %s380 = scalar_lea.vmem [#allocation8], 16
        %v381 = vld [vmem:[%s380] sm:$0xff]
        %s382 = scalar_lea.vmem [#allocation8], 24
        %s383 = scalar_lea.vmem [#allocation8], 32
        %s384 = scalar_lea.vmem [#allocation8], 40
        %s385 = scalar_lea.vmem [#allocation8], 48
        %s386 = scalar_lea.vmem [#allocation8], 56
        %s387 = scalar_lea.vmem [#allocation8], 64
        %s388 = scalar_lea.vmem [#allocation8], 72
        %s389 = scalar_lea.vmem [#allocation8], 80
        %s390 = scalar_lea.vmem [#allocation8], 88
        %s391 = scalar_lea.vmem [#allocation8], 96
        %s392 = scalar_lea.vmem [#allocation8], 104
        %s393 = scalar_lea.vmem [#allocation8], 112
        %s394 = scalar_lea.vmem [#allocation8], 120
        %395 = vxpose.xlu0.b32.start [1/16] %v377, 128
        %396 = vxpose.xlu0.b32.cont [2/16] %v379, 128
        %397 = vxpose.xlu0.b32.cont [3/16] %v381, 128
        %398 = vxpose.xlu0.b32.cont [4/16] 0, 128
        %399 = vxpose.xlu0.b32.cont [5/16] 0, 128
        %400 = vxpose.xlu0.b32.cont [6/16] 0, 128
        %401 = vxpose.xlu0.b32.cont [7/16] 0, 128
        %402 = vxpose.xlu0.b32.cont [8/16] 0, 128
        %403 = vxpose.xlu0.b32.cont [9/16] 0, 128
        %404 = vxpose.xlu0.b32.cont [10/16] 0, 128
        %405 = vxpose.xlu0.b32.cont [11/16] 0, 128
        %406 = vxpose.xlu0.b32.cont [12/16] 0, 128
        %407 = vxpose.xlu0.b32.cont [13/16] 0, 128
        %408 = vxpose.xlu0.b32.cont [14/16] 0, 128
        %409 = vxpose.xlu0.b32.cont [15/16] 0, 128
        %410 = vxpose.xlu0.b32.end [16/16] 0, 128
        %v411 = vpop.trf.xlu0
        %v412 = vpop.trf.xlu0
        %v413 = vpop.trf.xlu0
        %v414 = vpop.trf.xlu0
        %v415 = vpop.trf.xlu0
        %v416 = vpop.trf.xlu0
        %v417 = vpop.trf.xlu0
        %v418 = vpop.trf.xlu0
        %v419 = vpop.trf.xlu0
        %v420 = vpop.trf.xlu0
        %v421 = vpop.trf.xlu0
        %v422 = vpop.trf.xlu0
        %v423 = vpop.trf.xlu0
        %v424 = vpop.trf.xlu0
        %v425 = vpop.trf.xlu0
        %v426 = vpop.trf.xlu0
        %427 = vst [vmem:[%s162] sm:$0x1] %v411
        %s429 = ssub.s32 4, 1
        %v430 = vld [vmem:[#allocation2] sm:%s429]
        %s432 = ssub.s32 4, 1
        %433 = vst [vmem:[%s139] sm:%s432] %v430
        %s435 = ssub.s32 4, 1
        %v436 = vld [vmem:[#allocation5] sm:%s435]
        %s438 = ssub.s32 4, 1
        %439 = vst [vmem:[%s146] sm:%s438] %v436
        %s440 = sand.u32 %s17, 1
        %s441 = sand.u32 %s17, 1
        %s442 = smul.addr %s441, 24
        %s443 = scalar_lea.vmem [#allocation1], %s442
        %s444 = sand.u32 %s27, 1
        %s445 = scalar_lea.sflag [#allocation4], %s444
        %s446 = sand.u32 %s27, 1
        %s447 = smul.addr %s446, 2
        %s448 = scalar_lea.vmem [#allocation3], %s447
        %s449 = sand.u32 %s55, 1
        %s450 = scalar_lea.sflag [#allocation7], %s449
        %s451 = sand.u32 %s55, 1
        %s452 = smul.addr %s451, 2
        %s453 = scalar_lea.vmem [#allocation6], %s452
        %s454 = smul.addr %s17, 24
        %s455 = scalar_lea.vmem %s1, %s454
        // Predicated region
        $region54: #{custom-call.5} parent=38 // pred_check
          _
        $region55: #{custom-call.5} parent=38 // pred_check_branch
          %457 = sbr.rel (0) target = $region57
        $region56: #{custom-call.5} parent=38 // pred_region
          // Predicated region
          $region58: #{custom-call.5} parent=56 // pred_check
            _
          $region59: #{custom-call.5} parent=56 // pred_check_branch
            %459 = sbr.rel (0) target = $region61
          $region60: #{custom-call.5} parent=56 // pred_region
            loop: start=0, step=1, limit=1
            $region62: #{custom-call.5} parent=60 // loop_pre_header
              _
            $region63: #{custom-call.5} parent=60 // loop_header
              %s461 = sphi 0, %s465
              %p462 = scmp.ge.s32.totalorder %s461, 1
              %s466 = sphi %s443, %s443
              %s467 = sphi %s455, %s455
            $region64: #{custom-call.5} parent=60 // loop_header_branch
              %464 = sbr.rel (%p462) target = $region68
            $region65: #{custom-call.5} parent=60 // loop_body
              %v468 = vld [vmem:[%s466] sm:$0xff]
              %469 = vst [vmem:[%s467] sm:$0xff] %v468
              %v470 = vld [vmem:[%s466 + $0x8] sm:$0xff]
              %471 = vst [vmem:[%s467 + $0x8] sm:$0xff] %v470
              %v472 = vld [vmem:[%s466 + $0x10] sm:$0xff]
              %473 = vst [vmem:[%s467 + $0x10] sm:$0xff] %v472
            $region66: #{custom-call.5} parent=60 // loop_footer
              %s465 = sadd.s32 1, %s461
            $region67: #{custom-call.5} parent=60 // loop_footer_branch
              %460 = sbr.rel target = $region63
            $region68: #{custom-call.5} parent=60 // loop_exit
              _
          $region61: #{custom-call.5} parent=56 // pred_fallthru
            _
          // Predicated region
          $region69: #{custom-call.5} parent=56 // pred_check
            _
          $region70: #{custom-call.5} parent=56 // pred_check_branch
            %475 = sbr.rel target = $region72
          $region71: #{custom-call.5} parent=56 // pred_region
            _
          $region72: #{custom-call.5} parent=56 // pred_fallthru
            _
        $region57: #{custom-call.5} parent=38 // pred_fallthru
          _
        %476 = vnop
        // Predicated region
        $region73: #{custom-call.5} parent=38 // pred_check
          %p477 = pneg %p37
        $region74: #{custom-call.5} parent=38 // pred_check_branch
          %479 = sbr.rel (%p477) target = $region76
        $region75: #{custom-call.5} parent=38 // pred_region
          %s480 = sshrl.u32 %s17, 3
          %482 = vsyncadd %s445, 0
          %s483 = smul.addr %s480, 2
          %s484 = scalar_lea.hbm %s2, %s483
          %s486 = sshll.u32 %s448, 4
          %s487 = int_to_ptr.vmem [resolvable:$true] %s486
          %s488 = sshll.u32 %s484, 4
          %s489 = int_to_ptr.hbm [resolvable:$true] %s488
          %491 = dma.vmem_to_hbm [thread:$0]  %s487, 32, %s489, %s445
        $region76: #{custom-call.5} parent=38 // pred_fallthru
          _
        // Predicated region
        $region77: #{custom-call.5} parent=38 // pred_check
          %p492 = pneg %p65
        $region78: #{custom-call.5} parent=38 // pred_check_branch
          %494 = sbr.rel (%p492) target = $region80
        $region79: #{custom-call.5} parent=38 // pred_region
          %s495 = sshrl.u32 %s17, 3
          %497 = vsyncadd %s450, 0
          %s498 = smul.addr %s495, 2
          %s499 = scalar_lea.hbm %s3, %s498
          %s501 = sshll.u32 %s453, 4
          %s502 = int_to_ptr.vmem [resolvable:$true] %s501
          %s503 = sshll.u32 %s499, 4
          %s504 = int_to_ptr.hbm [resolvable:$true] %s503
          %506 = dma.vmem_to_hbm [thread:$0]  %s502, 32, %s504, %s450
        $region80: #{custom-call.5} parent=38 // pred_fallthru
          _
      $region39: #{custom-call.5} parent=5 // pred_fallthru
        _
      %p507 = scmp.le.s32.totalorder 2, %s12
      // Predicated region
      $region81: #{custom-call.5} parent=5 // pred_check
        %p508 = pneg %p507
      $region82: #{custom-call.5} parent=5 // pred_check_branch
        %510 = sbr.rel (%p508) target = $region84
      $region83: #{custom-call.5} parent=5 // pred_region
        %s511 = ssub.s32 %s12, 2
        %s512 = sand.u32 %s18, 1
        %s513 = sand.u32 %s18, 1
        %s514 = smul.addr %s513, 24
        %s515 = scalar_lea.vmem [#allocation1], %s514
        // Predicated region
        $region85: #{custom-call.5} parent=83 // pred_check
          %p516 = pneg %p43
        $region86: #{custom-call.5} parent=83 // pred_check_branch
          %518 = sbr.rel (%p516) target = $region88
        $region87: #{custom-call.5} parent=83 // pred_region
          %s519 = sand.u32 %s28, 1
          %s520 = scalar_lea.sflag [#allocation4], %s519
          %s521 = sand.u32 %s28, 1
          %s522 = smul.addr %s521, 2
          %s523 = scalar_lea.vmem [#allocation3], %s522
          %525 = dma.done %s520, 32
        $region88: #{custom-call.5} parent=83 // pred_fallthru
          _
        // Predicated region
        $region89: #{custom-call.5} parent=83 // pred_check
          %p526 = pneg %p71
        $region90: #{custom-call.5} parent=83 // pred_check_branch
          %528 = sbr.rel (%p526) target = $region92
        $region91: #{custom-call.5} parent=83 // pred_region
          %s529 = sand.u32 %s56, 1
          %s530 = scalar_lea.sflag [#allocation7], %s529
          %s531 = sand.u32 %s56, 1
          %s532 = smul.addr %s531, 2
          %s533 = scalar_lea.vmem [#allocation6], %s532
          %535 = dma.done %s530, 32
        $region92: #{custom-call.5} parent=83 // pred_fallthru
          _
      $region84: #{custom-call.5} parent=5 // pred_fallthru
        _
    $region6: #{custom-call.5} parent=1 // loop_footer
      %s16 = sadd.s32 1, %s12
    $region7: #{custom-call.5} parent=1 // loop_footer_branch
      %11 = sbr.rel target = $region3
    $region8: #{custom-call.5} parent=1 // loop_exit
      _
    %536 = vsyncpa [#allocation4], 1
    %s537 = scalar_lea.sflag [#allocation4], 1
    %538 = vsyncpa %s537, 1
    %539 = vsyncpa [#allocation7], 1
    %s540 = scalar_lea.sflag [#allocation7], 1
    %541 = vsyncpa %s540, 1

// kernel: _lambda_.55
$region0: #{_lambda_.55}
  #allocation0 [shape = 'u32[]', space=smem, size = 0x4, offset = 0x4, fixed_abs, tag = 'smem constant byte address 0x4 - core index']
  #allocation1 [shape = 'u32[72,128]{1,0:T(1,128)}', space=vmem, size = 0x9000, scoped, tag = 'internal scratch']
  %s0 = inlined_call_operand.vmem [shape: bf16[8,72], index: 0, kind: input, shape index: {}]
  %s1 = inlined_call_operand.vmem [shape: bf16[72,128], index: 1, kind: input, shape index: {}]
  %s2 = inlined_call_operand.vmem [shape: f32[1,128], index: 2, kind: input, shape index: {}]
  %s3 = inlined_call_operand.vmem [shape: f32[8,128], index: 3, kind: output, shape index: {}]
  %s4 = sld [smem:[#allocation0]]
  $region22: #{_lambda_.55} parent=0
    _
  %s6 = ssub.s32 1, %s4
  %s7 = scalar_select 0, %s6, %s4
  // Predicated region
  $region2: #{_lambda_.55} parent=0 // pred_check
    _
  $region3: #{_lambda_.55} parent=0 // pred_check_branch
    %9 = sbr.rel (0) target = $region5
  $region4: #{_lambda_.55} parent=0 // pred_region
    _
  $region5: #{_lambda_.55} parent=0 // pred_fallthru
    _
  // Predicated region
  $region6: #{_lambda_.55} parent=0 // pred_check
    _
  $region7: #{_lambda_.55} parent=0 // pred_check_branch
    %11 = sbr.rel (0) target = $region9
  $region8: #{_lambda_.55} parent=0 // pred_region
    _
  $region9: #{_lambda_.55} parent=0 // pred_fallthru
    _
  // Predicated region
  $region10: #{_lambda_.55} parent=0 // pred_check
    _
  $region11: #{_lambda_.55} parent=0 // pred_check_branch
    %13 = sbr.rel (0) target = $region13
  $region12: #{_lambda_.55} parent=0 // pred_region
    _
  $region13: #{_lambda_.55} parent=0 // pred_fallthru
    _
  %v15 = vld [vmem:[%s0] sm:$0xf]
  %v16 = vld [vmem:[%s1] sm:$0xf]
  %v17 = vld [vmem:[%s1 + $0x4] sm:$0xf]
  %v18 = vld [vmem:[%s1 + $0x8] sm:$0xf]
  %v19 = vld [vmem:[%s1 + $0xc] sm:$0xf]
  %v20 = vld [vmem:[%s1 + $0x10] sm:$0xf]
  %v21 = vld [vmem:[%s1 + $0x14] sm:$0xf]
  %v22 = vld [vmem:[%s1 + $0x18] sm:$0xf]
  %v23 = vld [vmem:[%s1 + $0x1c] sm:$0xf]
  %v24 = vld [vmem:[%s1 + $0x20] sm:$0xf]
  %v25 = vld [vmem:[%s2] sm:$0x1]
  %v27 = vperm.slane %v25, 0
  %v38 = vunpack.c.l.b16 %v16
  %v39 = vunpack.c.l.b16 %v17
  %v40 = vunpack.c.l.b16 %v18
  %v41 = vunpack.c.l.b16 %v19
  %v42 = vunpack.c.l.b16 %v20
  %v43 = vunpack.c.l.b16 %v21
  %v44 = vunpack.c.l.b16 %v22
  %v45 = vunpack.c.l.b16 %v23
  %v46 = vunpack.c.l.b16 %v24
  %v47 = vpack.c.b16 %v39, %v38
  %v48 = vpack.c.b16 %v41, %v40
  %v49 = vpack.c.b16 %v43, %v42
  %v50 = vpack.c.b16 %v45, %v44
  %v51 = vpack.c.b16 %v46, %v46
  %vm56 = vcmask 588800
  %v58 = vsel %vm56, %v15, 0
  %vm60 = vcmask 1043456
  %v62 = vsel %vm60, %v51, 0
  %64 = vmatpush.bf16.msra.mxu0 0
  %65 = vmatpush.bf16.msra.mxu0 0
  %66 = vmatpush.bf16.msra.mxu0 0
  %67 = vmatpush.bf16.msra.mxu0 %v62
  %68 = vmatpush.bf16.msra.mxu0 %v50
  %69 = vmatpush.bf16.msra.mxu0 %v49
  %70 = vmatpush.bf16.msra.mxu0 %v48
  %71 = vmatpush.bf16.msra.mxu0 %v47
  %72 = vmatmul.bf16.gmra.mxu0 %v58
  %v73 = vpop.f32.mrf.mxu0
  %v74 = vadd.f32 %v27, %v73
  %v75 = vpop.f32.mrf.mxu0
  %76 = vdwg.mxu0
  %v77 = vmax.f32 %v74, 0.0
  %78 = vst [vmem:[%s3] sm:$0xff] %v77
  // Predicated region
  $region14: #{_lambda_.55} parent=0 // pred_check
    _
  $region15: #{_lambda_.55} parent=0 // pred_check_branch
    %80 = sbr.rel (0) target = $region17
  $region16: #{_lambda_.55} parent=0 // pred_region
    _
  $region17: #{_lambda_.55} parent=0 // pred_fallthru
    _
  // Predicated region
  $region18: #{_lambda_.55} parent=0 // pred_check
    _
  $region19: #{_lambda_.55} parent=0 // pred_check_branch
    %82 = sbr.rel (0) target = $region21
  $region20: #{_lambda_.55} parent=0 // pred_region
    _
  $region21: #{_lambda_.55} parent=0 // pred_fallthru
    _

// kernel: custom-call.4
$region0: #{custom-call.4}
  %s0 = inlined_call_operand.vmem [shape: f32[2,12,12], index: 0, kind: input, shape index: {}]
  %s1 = inlined_call_operand.vmem [shape: f32[2,12,12], index: 1, kind: output, shape index: {0}]
  %s2 = inlined_call_operand.hbm [shape: s32[2,12], index: 2, kind: output, shape index: {1}]
  %s3 = inlined_call_operand.hbm [shape: s32[2,12], index: 3, kind: output, shape index: {2}]
  %4 = xla_tuple %s1, %s2, %s3
  $region1: #{custom-call.4} parent=0
    #allocation0 [shape = 'u8[16384]{0}', space=vmem, size = 0x4000, scoped, tag = 'operand span for operand 0']
    #allocation1 [shape = 'u8[16384]{0}', space=vmem, size = 0x4000, scoped, tag = 'operand span for operand 1']
    #allocation2 [shape = 'u8[4096]{0}', space=vmem, size = 0x1000, scoped, tag = 'operand span for operand 2']
    #allocation3 [shape = 'u8[2048]{0}', space=vmem, size = 0x800, scoped, tag = 'packed  for operand 2']
    #allocation4 [shape = 's32[2]{0}', space=sflag, size = 0x8, scoped, tag = 'scoped memory for custom-call.4']
    #allocation5 [shape = 'u8[4096]{0}', space=vmem, size = 0x1000, scoped, tag = 'operand span for operand 3']
    #allocation6 [shape = 'u8[2048]{0}', space=vmem, size = 0x800, scoped, tag = 'packed  for operand 3']
    #allocation7 [shape = 's32[2]{0}', space=sflag, size = 0x8, scoped, tag = 'scoped memory for custom-call.4']
    %5 = vsyncpa [#allocation4], 0
    %s6 = scalar_lea.sflag [#allocation4], 1
    %7 = vsyncpa %s6, 0
    %8 = vsyncpa [#allocation7], 0
    %s9 = scalar_lea.sflag [#allocation7], 1
    %10 = vsyncpa %s9, 0
    loop: start=0, step=1, limit=4
    $region2: #{custom-call.4} parent=1 // loop_pre_header
      _
    $region3: #{custom-call.4} parent=1 // loop_header
      %s12 = sphi 0, %s16
      %p13 = scmp.ge.s32.totalorder %s12, 4
      %s24 = sphi 0, %s26
      %s27 = sphi 0, %s24
      %s28 = sphi 0, %s27
      %s44 = sphi 0, %s28
      %s52 = sphi 0, %s54
      %s55 = sphi 0, %s52
      %s56 = sphi 0, %s55
      %s72 = sphi 0, %s56
    $region4: #{custom-call.4} parent=1 // loop_header_branch
      %15 = sbr.rel (%p13) target = $region8
    $region5: #{custom-call.4} parent=1 // loop_body
      %s17 = ssub.s32 %s12, 1
      %s18 = ssub.s32 %s12, 2
      %s19 = sadd.s32 %s12, 1
      %s20 = sshrl.u32 %s12, 3
      %s21 = sshrl.u32 %s19, 3
      %s22 = ssub.s32 %s20, %s21
      %p23 = scmp.eq.s32.totalorder %s22, 0
      %s25 = sadd.s32 %s24, 1
      %s26 = scalar_select %p23, %s24, %s25
      %p29 = pneg %p23
      %p30 = scmp.eq.s32.totalorder %s12, 1
      %p31 = por %p29, %p30
      %p32 = scmp.ne.s32.totalorder %s24, %s27
      %p33 = scmp.eq.s32.totalorder %s12, 0
      %p34 = por %p32, %p33
      %p35 = scmp.ne.s32.totalorder %s24, %s27
      %p36 = scmp.eq.s32.totalorder %s17, 1
      %p37 = por %p35, %p36
      %p38 = scmp.ne.s32.totalorder %s27, %s28
      %p39 = scmp.eq.s32.totalorder %s17, 0
      %p40 = por %p38, %p39
      %p41 = scmp.ne.s32.totalorder %s27, %s28
      %p42 = scmp.eq.s32.totalorder %s18, 1
      %p43 = por %p41, %p42
      %p45 = scmp.ne.s32.totalorder %s28, %s44
      %p46 = scmp.eq.s32.totalorder %s18, 0
      %p47 = por %p45, %p46
      %s48 = sshrl.u32 %s12, 3
      %s49 = sshrl.u32 %s19, 3
      %s50 = ssub.s32 %s48, %s49
      %p51 = scmp.eq.s32.totalorder %s50, 0
      %s53 = sadd.s32 %s52, 1
      %s54 = scalar_select %p51, %s52, %s53
      %p57 = pneg %p51
      %p58 = scmp.eq.s32.totalorder %s12, 1
      %p59 = por %p57, %p58
      %p60 = scmp.ne.s32.totalorder %s52, %s55
      %p61 = scmp.eq.s32.totalorder %s12, 0
      %p62 = por %p60, %p61
      %p63 = scmp.ne.s32.totalorder %s52, %s55
      %p64 = scmp.eq.s32.totalorder %s17, 1
      %p65 = por %p63, %p64
      %p66 = scmp.ne.s32.totalorder %s55, %s56
      %p67 = scmp.eq.s32.totalorder %s17, 0
      %p68 = por %p66, %p67
      %p69 = scmp.ne.s32.totalorder %s55, %s56
      %p70 = scmp.eq.s32.totalorder %s18, 1
      %p71 = por %p69, %p70
      %p73 = scmp.ne.s32.totalorder %s56, %s72
      %p74 = scmp.eq.s32.totalorder %s18, 0
      %p75 = por %p73, %p74
      %p76 = scmp.le.s32.totalorder 1, %s12
      %p77 = scmp.lt.s32.totalorder %s12, 3
      %p78 = pnand %p76, %p77
      %p79 = pneg %p78
      // Predicated region
      $region9: #{custom-call.4} parent=5 // pred_check
        _
      $region10: #{custom-call.4} parent=5 // pred_check_branch
        %81 = sbr.rel (%p78) target = $region12
      $region11: #{custom-call.4} parent=5 // pred_region
        %s82 = ssub.s32 %s12, 1
      $region12: #{custom-call.4} parent=5 // pred_fallthru
        _
      %p83 = scmp.lt.s32.totalorder %s12, 2
      // Predicated region
      $region13: #{custom-call.4} parent=5 // pred_check
        %p84 = pneg %p83
      $region14: #{custom-call.4} parent=5 // pred_check_branch
        %86 = sbr.rel (%p84) target = $region16
      $region15: #{custom-call.4} parent=5 // pred_region
        %s87 = sand.u32 %s12, 1
        %s88 = sand.u32 %s12, 1
        %s89 = smul.addr %s88, 16
        %s90 = scalar_lea.vmem [#allocation0], %s89
        %s91 = smul.addr %s12, 16
        %s92 = scalar_lea.vmem %s0, %s91
        // Predicated region
        $region17: #{custom-call.4} parent=15 // pred_check
          _
        $region18: #{custom-call.4} parent=15 // pred_check_branch
          %94 = sbr.rel (0) target = $region20
        $region19: #{custom-call.4} parent=15 // pred_region
          // Predicated region
          $region21: #{custom-call.4} parent=19 // pred_check
            _
          $region22: #{custom-call.4} parent=19 // pred_check_branch
            %96 = sbr.rel (0) target = $region24
          $region23: #{custom-call.4} parent=19 // pred_region
            loop: start=0, step=1, limit=1
            $region25: #{custom-call.4} parent=23 // loop_pre_header
              _
            $region26: #{custom-call.4} parent=23 // loop_header
              %s98 = sphi 0, %s102
              %p99 = scmp.ge.s32.totalorder %s98, 1
              %s103 = sphi %s92, %s92
              %s104 = sphi %s90, %s90
            $region27: #{custom-call.4} parent=23 // loop_header_branch
              %101 = sbr.rel (%p99) target = $region31
            $region28: #{custom-call.4} parent=23 // loop_body
              %v105 = vld [vmem:[%s103] sm:$0xff]
              %106 = vst [vmem:[%s104] sm:$0xff] %v105
              %v107 = vld [vmem:[%s103 + $0x8] sm:$0xff]
              %108 = vst [vmem:[%s104 + $0x8] sm:$0xff] %v107
            $region29: #{custom-call.4} parent=23 // loop_footer
              %s102 = sadd.s32 1, %s98
            $region30: #{custom-call.4} parent=23 // loop_footer_branch
              %97 = sbr.rel target = $region26
            $region31: #{custom-call.4} parent=23 // loop_exit
              _
          $region24: #{custom-call.4} parent=19 // pred_fallthru
            _
          // Predicated region
          $region32: #{custom-call.4} parent=19 // pred_check
            _
          $region33: #{custom-call.4} parent=19 // pred_check_branch
            %110 = sbr.rel target = $region35
          $region34: #{custom-call.4} parent=19 // pred_region
            _
          $region35: #{custom-call.4} parent=19 // pred_fallthru
            _
        $region20: #{custom-call.4} parent=15 // pred_fallthru
          _
        %111 = vnop
      $region16: #{custom-call.4} parent=5 // pred_fallthru
        _
      %p112 = scmp.le.s32.totalorder 1, %s12
      %p113 = scmp.lt.s32.totalorder %s12, 3
      %p114 = pnand %p112, %p113
      %p115 = pneg %p114
      // Predicated region
      $region36: #{custom-call.4} parent=5 // pred_check
        _
      $region37: #{custom-call.4} parent=5 // pred_check_branch
        %117 = sbr.rel (%p114) target = $region39
      $region38: #{custom-call.4} parent=5 // pred_region
        #allocation8 [shape = 's32[12,128]{1,0}', space=vmem, size = 0x2000, scoped, tag = 'scratch for permutations']
        %s118 = ssub.s32 %s12, 1
        %s119 = sand.u32 %s17, 1
        %s120 = sand.u32 %s17, 1
        %s121 = smul.addr %s120, 16
        %s122 = scalar_lea.vmem [#allocation0], %s121
        %s123 = sand.u32 %s17, 1
        %s124 = sand.u32 %s17, 1
        %s125 = smul.addr %s124, 16
        %s126 = scalar_lea.vmem [#allocation0], %s125
        %s127 = sand.u32 %s17, 1
        %s128 = sand.u32 %s17, 1
        %s129 = smul.addr %s128, 16
        %s130 = scalar_lea.vmem [#allocation1], %s129
        %p131 = pneg %p40
        %p132 = pneg %p37
        %s133 = sand.u32 %s27, 1
        %s134 = scalar_lea.sflag [#allocation4], %s133
        %s135 = sand.u32 %s27, 1
        %s136 = smul.addr %s135, 2
        %s137 = scalar_lea.vmem [#allocation3], %s136
        %p138 = pneg %p68
        %p139 = pneg %p65
        %s140 = sand.u32 %s55, 1
        %s141 = scalar_lea.sflag [#allocation7], %s140
        %s142 = sand.u32 %s55, 1
        %s143 = smul.addr %s142, 2
        %s144 = scalar_lea.vmem [#allocation6], %s143
        %s145 = sshrl.u32 %s17, 3
        %s146 = sshrl.u32 %s17, 3
        %v147 = vld [vmem:[%s122] sm:$0xff]
        %148 = vst [vmem:[%s130] sm:$0xff] %v147
        %s149 = scalar_lea.vmem %s130, 8 [#allocation1]
        %s150 = scalar_lea.vmem %s122, 8 [#allocation0]
        %v151 = vld [vmem:[%s150] sm:$0xff]
        %152 = vst [vmem:[%s149] sm:$0xff] %v151
        %s153 = sand.u32 %s17, 7
        %s154 = scalar_lea.vmem [#allocation2], %s153
        %s155 = sand.u32 %s17, 7
        %s156 = scalar_lea.vmem [#allocation5], %s155
        %157 = vst [vmem:[%s154] sm:$0x1] 0
        %v158 = vlaneseq
        %v159 = vshrl.u32 %v158, 7
        %v160 = vmov %v159
        loop: start=0, step=1, limit=2
        $region40: #{custom-call.4} parent=38 // loop_pre_header
          _
        $region41: #{custom-call.4} parent=38 // loop_header
          %s162 = sphi 0, %s166
          %p163 = scmp.ge.s32.totalorder %s162, 2
        $region42: #{custom-call.4} parent=38 // loop_header_branch
          %165 = sbr.rel (%p163) target = $region46
        $region43: #{custom-call.4} parent=38 // loop_body
          %s167 = smul.addr %s162, 8
          %s168 = scalar_lea.vmem [#allocation8], %s167
          %s169 = smul.u32 %s162, 8
          %v170 = vstv %s169
          %v171 = vadd.s32 %v160, %v170
          %172 = vst [vmem:[%s168] sm:$0xff] %v171
        $region44: #{custom-call.4} parent=38 // loop_footer
          %s166 = sadd.s32 1, %s162
        $region45: #{custom-call.4} parent=38 // loop_footer_branch
          %161 = sbr.rel target = $region41
        $region46: #{custom-call.4} parent=38 // loop_exit
          _
        loop: start=0, step=1, limit=12
        $region47: #{custom-call.4} parent=38 // loop_pre_header
          _
        $region48: #{custom-call.4} parent=38 // loop_header
          %s174 = sphi 0, %s178
          %p175 = scmp.ge.s32.totalorder %s174, 12
        $region49: #{custom-call.4} parent=38 // loop_header_branch
          %177 = sbr.rel (%p175) target = $region53
        $region50: #{custom-call.4} parent=38 // loop_body
          %v179 = vstv %s174
          %v180 = vlaneseq
          %v181 = vshrl.u32 %v180, 7
          %v182 = vmov %v181
          %v183 = vld [vmem:[%s130] sm:$0xff]
          %v184 = vand.u32 2147483647, %v183
          %v186 = vstv %s174
          %vm187 = vcmp.ge.s32.totalorder %v182, %v186
          %vm188 = vcmp.lt.s32.totalorder %v182, 12
          %vm189 = vmand %vm187, %vm188
          %vm190 = vcmp.lt.f32.partialorder -inf, %v184
          %vm191 = vmand %vm189, %vm190
          %v192 = vsel %vm191, %v182, %v179
          %v193 = vsel %vm191, %v184, -inf
          %s194 = scalar_lea.vmem %s130, 8 [#allocation1]
          %v195 = vld [vmem:[%s194] sm:$0xff]
          %v196 = vand.u32 2147483647, %v195
          %v197 = vadd.s32 %v182, 8
          %v198 = vstv %s174
          %vm199 = vcmp.ge.s32.totalorder %v197, %v198
          %vm200 = vcmp.lt.s32.totalorder %v197, 12
          %vm201 = vmand %vm199, %vm200
          %vm202 = vcmp.lt.f32.partialorder %v193, %v196
          %vm203 = vmand %vm201, %vm202
          %v204 = vsel %vm203, %v197, %v192
          %v205 = vsel %vm203, %v196, %v193
          %v206 = vrot.slane %v205, 1
          %v207 = vrot.slane %v204, 1
          %vm208 = vcmp.ge.f32.partialorder %v206, %v205
          %v209 = vsel %vm208, %v206, %v205
          %v210 = vsel %vm208, %v207, %v204
          %v211 = vrot.slane %v206, 1
          %v212 = vrot.slane %v207, 1
          %vm213 = vcmp.ge.f32.partialorder %v211, %v209
          %v214 = vsel %vm213, %v211, %v209
          %v215 = vsel %vm213, %v212, %v210
          %v216 = vrot.slane %v211, 1
          %v217 = vrot.slane %v212, 1
          %vm218 = vcmp.ge.f32.partialorder %v216, %v214
          %v219 = vsel %vm218, %v216, %v214
          %v220 = vsel %vm218, %v217, %v215
          %v221 = vrot.slane %v216, 1
          %v222 = vrot.slane %v217, 1
          %vm223 = vcmp.ge.f32.partialorder %v221, %v219
          %v224 = vsel %vm223, %v221, %v219
          %v225 = vsel %vm223, %v222, %v220
          %v226 = vrot.slane %v221, 1
          %v227 = vrot.slane %v222, 1
          %vm228 = vcmp.ge.f32.partialorder %v226, %v224
          %v229 = vsel %vm228, %v226, %v224
          %v230 = vsel %vm228, %v227, %v225
          %v231 = vrot.slane %v226, 1
          %v232 = vrot.slane %v227, 1
          %vm233 = vcmp.ge.f32.partialorder %v231, %v229
          %v234 = vsel %vm233, %v231, %v229
          %v235 = vsel %vm233, %v232, %v230
          %v236 = vrot.slane %v231, 1
          %v237 = vrot.slane %v232, 1
          %vm238 = vcmp.ge.f32.partialorder %v236, %v234
          %v239 = vsel %vm238, %v236, %v234
          %v240 = vsel %vm238, %v237, %v235
          %s241 = ssub.s32 128, %s174
          %242 = vrot.lane.b32.xlu0 %v240, %s241
          %v243 = vpop.permute.xlu0 %242
          %s244 = vtos %v243
          %v245 = vstv %s174
          %v246 = vlaneseq
          %v247 = vand.u32 %v246, 127
          %vm248 = vcmp.eq.s32.totalorder %v247, %v245
          %v249 = vstv %s244
          %v250 = vld [vmem:[%s154] ss:$0 sm:$0xff]
          %v251 = vsel %vm248, %v249, %v250
          %252 = vst [vmem:[%s154] sm:$0x1] %v251
          %s253 = scalar_lea.vmem %s130, %s174 [#allocation1]
          %s254 = scalar_lea.vmem %s130, %s244 [#allocation1]
          %v255 = vld [vmem:[%s253] ss:$0 sm:$0xff]
          %v256 = vld [vmem:[%s254] ss:$0 sm:$0xff]
          %257 = vst [vmem:[%s254] sm:$0x1] %v255
          %258 = vst [vmem:[%s253] sm:$0x1] %v256
          %s259 = scalar_lea.vmem [#allocation8], %s174
          %s260 = scalar_lea.vmem [#allocation8], %s244
          %v261 = vld [vmem:[%s259] ss:$0 sm:$0xff]
          %v262 = vld [vmem:[%s260] ss:$0 sm:$0xff]
          %263 = vst [vmem:[%s260] sm:$0x1] %v261
          %264 = vst [vmem:[%s259] sm:$0x1] %v262
          %vm265 = vcmp.ne.f32.partialorder %v256, 0.0
          %vm266 = vmand %vm248, %vm265
          %v267 = vsel %vm266, %v256, 1.0
          %v268 = vlaneseq
          %v269 = vand.u32 %v268, 127
          %v270 = vstv %s174
          %vm271 = vcmp.gt.s32.totalorder %v269, %v270
          %v272 = vsel %vm271, %v256, 0.0
          %v273 = vlaneseq
          %v274 = vshrl.u32 %v273, 7
          %v275 = vmov %v274
          %v276 = vld [vmem:[%s130] sm:$0xff]
          %v278 = vstv %s174
          %vm279 = vcmp.gt.s32.totalorder %v275, %v278
          %v280 = vsel %vm279, %v267, 1.0
          %v281 = vrcp.pop %v280
          %v282 = vmul.f32 %v280, %v281
          %v283 = vsub.f32 1.0, %v282
          %v284 = vmul.f32 %v281, %v283
          %v285 = vadd.f32 %v281, %v284
          %vm286 = vweird.f32 %v280
          %vm287 = vweird.f32 %v281
          %vm288 = vmor %vm286, %vm287
          %v289 = vsel %vm288, %v281, %v285
          %v290 = vand.u32 2147483647, %v280
          %vm291 = vcmp.eq.f32.partialorder %v290, 8.507059e+37
          %v292 = vand.u32 %v280, 2147483648
          %v293 = vor.u32 1.1754944e-38, %v292
          %v294 = vsel %vm291, %v293, %v289
          %v295 = vmul.f32 %v276, %v294
          %vm296 = vmand %vm279, %vm248
          %v297 = vsel %vm296, %v295, 0.0
          %298 = vadd.xlane.f32.xlu0 %v297
          %v299 = vpop.xlane.xlu0 %298
          %v300 = vmul.f32 %v299, %v272
          %v301 = vsub.f32 %v295, %v300
          %302 = vst [vmem:[%s130] sm:$0xff] %v301
          %s303 = scalar_lea.vmem %s130, 8 [#allocation1]
          %v304 = vld [vmem:[%s303] sm:$0xff]
          %v305 = vadd.s32 %v275, 8
          %v306 = vstv %s174
          %vm307 = vcmp.gt.s32.totalorder %v305, %v306
          %v308 = vsel %vm307, %v267, 1.0
          %v309 = vrcp.pop %v308
          %v310 = vmul.f32 %v308, %v309
          %v311 = vsub.f32 1.0, %v310
          %v312 = vmul.f32 %v309, %v311
          %v313 = vadd.f32 %v309, %v312
          %vm314 = vweird.f32 %v308
          %vm315 = vweird.f32 %v309
          %vm316 = vmor %vm314, %vm315
          %v317 = vsel %vm316, %v309, %v313
          %v318 = vand.u32 2147483647, %v308
          %vm319 = vcmp.eq.f32.partialorder %v318, 8.507059e+37
          %v320 = vand.u32 %v308, 2147483648
          %v321 = vor.u32 1.1754944e-38, %v320
          %v322 = vsel %vm319, %v321, %v317
          %v323 = vmul.f32 %v304, %v322
          %vm324 = vmand %vm307, %vm248
          %v325 = vsel %vm324, %v323, 0.0
          %326 = vadd.xlane.f32.xlu0 %v325
          %v327 = vpop.xlane.xlu0 %326
          %v328 = vmul.f32 %v327, %v272
          %v329 = vsub.f32 %v323, %v328
          %330 = vst [vmem:[%s303] sm:$0xff] %v329
        $region51: #{custom-call.4} parent=38 // loop_footer
          %s178 = sadd.s32 1, %s174
        $region52: #{custom-call.4} parent=38 // loop_footer_branch
          %173 = sbr.rel target = $region48
        $region53: #{custom-call.4} parent=38 // loop_exit
          _
        %v331 = vld [vmem:[#allocation8] sm:$0xff]
        %s332 = scalar_lea.vmem [#allocation8], 8
        %v333 = vld [vmem:[%s332] sm:$0xff]
        %s334 = scalar_lea.vmem [#allocation8], 16
        %s335 = scalar_lea.vmem [#allocation8], 24
        %s336 = scalar_lea.vmem [#allocation8], 32
        %s337 = scalar_lea.vmem [#allocation8], 40
        %s338 = scalar_lea.vmem [#allocation8], 48
        %s339 = scalar_lea.vmem [#allocation8], 56
        %s340 = scalar_lea.vmem [#allocation8], 64
        %s341 = scalar_lea.vmem [#allocation8], 72
        %s342 = scalar_lea.vmem [#allocation8], 80
        %s343 = scalar_lea.vmem [#allocation8], 88
        %s344 = scalar_lea.vmem [#allocation8], 96
        %s345 = scalar_lea.vmem [#allocation8], 104
        %s346 = scalar_lea.vmem [#allocation8], 112
        %s347 = scalar_lea.vmem [#allocation8], 120
        %348 = vxpose.xlu0.b32.start [1/16] %v331, 128
        %349 = vxpose.xlu0.b32.cont [2/16] %v333, 128
        %350 = vxpose.xlu0.b32.cont [3/16] 0, 128
        %351 = vxpose.xlu0.b32.cont [4/16] 0, 128
        %352 = vxpose.xlu0.b32.cont [5/16] 0, 128
        %353 = vxpose.xlu0.b32.cont [6/16] 0, 128
        %354 = vxpose.xlu0.b32.cont [7/16] 0, 128
        %355 = vxpose.xlu0.b32.cont [8/16] 0, 128
        %356 = vxpose.xlu0.b32.cont [9/16] 0, 128
        %357 = vxpose.xlu0.b32.cont [10/16] 0, 128
        %358 = vxpose.xlu0.b32.cont [11/16] 0, 128
        %359 = vxpose.xlu0.b32.cont [12/16] 0, 128
        %360 = vxpose.xlu0.b32.cont [13/16] 0, 128
        %361 = vxpose.xlu0.b32.cont [14/16] 0, 128
        %362 = vxpose.xlu0.b32.cont [15/16] 0, 128
        %363 = vxpose.xlu0.b32.end [16/16] 0, 128
        %v364 = vpop.trf.xlu0
        %v365 = vpop.trf.xlu0
        %v366 = vpop.trf.xlu0
        %v367 = vpop.trf.xlu0
        %v368 = vpop.trf.xlu0
        %v369 = vpop.trf.xlu0
        %v370 = vpop.trf.xlu0
        %v371 = vpop.trf.xlu0
        %v372 = vpop.trf.xlu0
        %v373 = vpop.trf.xlu0
        %v374 = vpop.trf.xlu0
        %v375 = vpop.trf.xlu0
        %v376 = vpop.trf.xlu0
        %v377 = vpop.trf.xlu0
        %v378 = vpop.trf.xlu0
        %v379 = vpop.trf.xlu0
        %380 = vst [vmem:[%s156] sm:$0x1] %v364
        %s382 = ssub.s32 4, 1
        %v383 = vld [vmem:[#allocation2] sm:%s382]
        %s385 = ssub.s32 4, 1
        %386 = vst [vmem:[%s137] sm:%s385] %v383
        %s388 = ssub.s32 4, 1
        %v389 = vld [vmem:[#allocation5] sm:%s388]
        %s391 = ssub.s32 4, 1
        %392 = vst [vmem:[%s144] sm:%s391] %v389
        %s393 = sand.u32 %s17, 1
        %s394 = sand.u32 %s17, 1
        %s395 = smul.addr %s394, 16
        %s396 = scalar_lea.vmem [#allocation1], %s395
        %s397 = sand.u32 %s27, 1
        %s398 = scalar_lea.sflag [#allocation4], %s397
        %s399 = sand.u32 %s27, 1
        %s400 = smul.addr %s399, 2
        %s401 = scalar_lea.vmem [#allocation3], %s400
        %s402 = sand.u32 %s55, 1
        %s403 = scalar_lea.sflag [#allocation7], %s402
        %s404 = sand.u32 %s55, 1
        %s405 = smul.addr %s404, 2
        %s406 = scalar_lea.vmem [#allocation6], %s405
        %s407 = smul.addr %s17, 16
        %s408 = scalar_lea.vmem %s1, %s407
        // Predicated region
        $region54: #{custom-call.4} parent=38 // pred_check
          _
        $region55: #{custom-call.4} parent=38 // pred_check_branch
          %410 = sbr.rel (0) target = $region57
        $region56: #{custom-call.4} parent=38 // pred_region
          // Predicated region
          $region58: #{custom-call.4} parent=56 // pred_check
            _
          $region59: #{custom-call.4} parent=56 // pred_check_branch
            %412 = sbr.rel (0) target = $region61
          $region60: #{custom-call.4} parent=56 // pred_region
            loop: start=0, step=1, limit=1
            $region62: #{custom-call.4} parent=60 // loop_pre_header
              _
            $region63: #{custom-call.4} parent=60 // loop_header
              %s414 = sphi 0, %s418
              %p415 = scmp.ge.s32.totalorder %s414, 1
              %s419 = sphi %s396, %s396
              %s420 = sphi %s408, %s408
            $region64: #{custom-call.4} parent=60 // loop_header_branch
              %417 = sbr.rel (%p415) target = $region68
            $region65: #{custom-call.4} parent=60 // loop_body
              %v421 = vld [vmem:[%s419] sm:$0xff]
              %422 = vst [vmem:[%s420] sm:$0xff] %v421
              %v423 = vld [vmem:[%s419 + $0x8] sm:$0xff]
              %424 = vst [vmem:[%s420 + $0x8] sm:$0xff] %v423
            $region66: #{custom-call.4} parent=60 // loop_footer
              %s418 = sadd.s32 1, %s414
            $region67: #{custom-call.4} parent=60 // loop_footer_branch
              %413 = sbr.rel target = $region63
            $region68: #{custom-call.4} parent=60 // loop_exit
              _
          $region61: #{custom-call.4} parent=56 // pred_fallthru
            _
          // Predicated region
          $region69: #{custom-call.4} parent=56 // pred_check
            _
          $region70: #{custom-call.4} parent=56 // pred_check_branch
            %426 = sbr.rel target = $region72
          $region71: #{custom-call.4} parent=56 // pred_region
            _
          $region72: #{custom-call.4} parent=56 // pred_fallthru
            _
        $region57: #{custom-call.4} parent=38 // pred_fallthru
          _
        %427 = vnop
        // Predicated region
        $region73: #{custom-call.4} parent=38 // pred_check
          %p428 = pneg %p37
        $region74: #{custom-call.4} parent=38 // pred_check_branch
          %430 = sbr.rel (%p428) target = $region76
        $region75: #{custom-call.4} parent=38 // pred_region
          %s431 = sshrl.u32 %s17, 3
          %433 = vsyncadd %s398, 0
          %s434 = smul.addr %s431, 2
          %s435 = scalar_lea.hbm %s2, %s434
          %s437 = sshll.u32 %s401, 4
          %s438 = int_to_ptr.vmem [resolvable:$true] %s437
          %s439 = sshll.u32 %s435, 4
          %s440 = int_to_ptr.hbm [resolvable:$true] %s439
          %442 = dma.vmem_to_hbm [thread:$0]  %s438, 32, %s440, %s398
        $region76: #{custom-call.4} parent=38 // pred_fallthru
          _
        // Predicated region
        $region77: #{custom-call.4} parent=38 // pred_check
          %p443 = pneg %p65
        $region78: #{custom-call.4} parent=38 // pred_check_branch
          %445 = sbr.rel (%p443) target = $region80
        $region79: #{custom-call.4} parent=38 // pred_region
          %s446 = sshrl.u32 %s17, 3
          %448 = vsyncadd %s403, 0
          %s449 = smul.addr %s446, 2
          %s450 = scalar_lea.hbm %s3, %s449
          %s452 = sshll.u32 %s406, 4
          %s453 = int_to_ptr.vmem [resolvable:$true] %s452
          %s454 = sshll.u32 %s450, 4
          %s455 = int_to_ptr.hbm [resolvable:$true] %s454
          %457 = dma.vmem_to_hbm [thread:$0]  %s453, 32, %s455, %s403
        $region80: #{custom-call.4} parent=38 // pred_fallthru
          _
      $region39: #{custom-call.4} parent=5 // pred_fallthru
        _
      %p458 = scmp.le.s32.totalorder 2, %s12
      // Predicated region
      $region81: #{custom-call.4} parent=5 // pred_check
        %p459 = pneg %p458
      $region82: #{custom-call.4} parent=5 // pred_check_branch
        %461 = sbr.rel (%p459) target = $region84
      $region83: #{custom-call.4} parent=5 // pred_region
        %s462 = ssub.s32 %s12, 2
        %s463 = sand.u32 %s18, 1
        %s464 = sand.u32 %s18, 1
        %s465 = smul.addr %s464, 16
        %s466 = scalar_lea.vmem [#allocation1], %s465
        // Predicated region
        $region85: #{custom-call.4} parent=83 // pred_check
          %p467 = pneg %p43
        $region86: #{custom-call.4} parent=83 // pred_check_branch
          %469 = sbr.rel (%p467) target = $region88
        $region87: #{custom-call.4} parent=83 // pred_region
          %s470 = sand.u32 %s28, 1
          %s471 = scalar_lea.sflag [#allocation4], %s470
          %s472 = sand.u32 %s28, 1
          %s473 = smul.addr %s472, 2
          %s474 = scalar_lea.vmem [#allocation3], %s473
          %476 = dma.done %s471, 32
        $region88: #{custom-call.4} parent=83 // pred_fallthru
          _
        // Predicated region
        $region89: #{custom-call.4} parent=83 // pred_check
          %p477 = pneg %p71
        $region90: #{custom-call.4} parent=83 // pred_check_branch
          %479 = sbr.rel (%p477) target = $region92
        $region91: #{custom-call.4} parent=83 // pred_region
          %s480 = sand.u32 %s56, 1
          %s481 = scalar_lea.sflag [#allocation7], %s480
          %s482 = sand.u32 %s56, 1
          %s483 = smul.addr %s482, 2
          %s484 = scalar_lea.vmem [#allocation6], %s483
          %486 = dma.done %s481, 32
        $region92: #{custom-call.4} parent=83 // pred_fallthru
          _
      $region84: #{custom-call.4} parent=5 // pred_fallthru
        _
    $region6: #{custom-call.4} parent=1 // loop_footer
      %s16 = sadd.s32 1, %s12
    $region7: #{custom-call.4} parent=1 // loop_footer_branch
      %11 = sbr.rel target = $region3
    $region8: #{custom-call.4} parent=1 // loop_exit
      _
    %487 = vsyncpa [#allocation4], 1
    %s488 = scalar_lea.sflag [#allocation4], 1
    %489 = vsyncpa %s488, 1
    %490 = vsyncpa [#allocation7], 1
    %s491 = scalar_lea.sflag [#allocation7], 1
    %492 = vsyncpa %s491, 1

// kernel: _lambda_.56
$region0: #{_lambda_.56}
  #allocation0 [shape = 'u32[]', space=smem, size = 0x4, offset = 0x4, fixed_abs, tag = 'smem constant byte address 0x4 - core index']
  #allocation1 [shape = 'u32[72,128]{1,0:T(1,128)}', space=vmem, size = 0x9000, scoped, tag = 'internal scratch']
  %s0 = inlined_call_operand.vmem [shape: bf16[8,32], index: 0, kind: input, shape index: {}]
  %s1 = inlined_call_operand.vmem [shape: bf16[32,32], index: 1, kind: input, shape index: {}]
  %s2 = inlined_call_operand.vmem [shape: f32[1,32], index: 2, kind: input, shape index: {}]
  %s3 = inlined_call_operand.vmem [shape: bf16[32,32], index: 3, kind: input, shape index: {}]
  %s4 = inlined_call_operand.vmem [shape: f32[1,32], index: 4, kind: input, shape index: {}]
  %s5 = inlined_call_operand.vmem [shape: bf16[32,640], index: 5, kind: input, shape index: {}]
  %s6 = inlined_call_operand.vmem [shape: f32[1,640], index: 6, kind: input, shape index: {}]
  %s7 = inlined_call_operand.vmem [shape: f32[8,640], index: 7, kind: output, shape index: {}]
  %s8 = sld [smem:[#allocation0]]
  $region38: #{_lambda_.56} parent=0
    _
  %s10 = ssub.s32 1, %s8
  %s11 = scalar_select 0, %s10, %s8
  // Predicated region
  $region2: #{_lambda_.56} parent=0 // pred_check
    _
  $region3: #{_lambda_.56} parent=0 // pred_check_branch
    %13 = sbr.rel (0) target = $region5
  $region4: #{_lambda_.56} parent=0 // pred_region
    _
  $region5: #{_lambda_.56} parent=0 // pred_fallthru
    _
  // Predicated region
  $region6: #{_lambda_.56} parent=0 // pred_check
    _
  $region7: #{_lambda_.56} parent=0 // pred_check_branch
    %15 = sbr.rel (0) target = $region9
  $region8: #{_lambda_.56} parent=0 // pred_region
    _
  $region9: #{_lambda_.56} parent=0 // pred_fallthru
    _
  // Predicated region
  $region10: #{_lambda_.56} parent=0 // pred_check
    _
  $region11: #{_lambda_.56} parent=0 // pred_check_branch
    %17 = sbr.rel (0) target = $region13
  $region12: #{_lambda_.56} parent=0 // pred_region
    _
  $region13: #{_lambda_.56} parent=0 // pred_fallthru
    _
  // Predicated region
  $region14: #{_lambda_.56} parent=0 // pred_check
    _
  $region15: #{_lambda_.56} parent=0 // pred_check_branch
    %19 = sbr.rel (0) target = $region17
  $region16: #{_lambda_.56} parent=0 // pred_region
    _
  $region17: #{_lambda_.56} parent=0 // pred_fallthru
    _
  // Predicated region
  $region18: #{_lambda_.56} parent=0 // pred_check
    _
  $region19: #{_lambda_.56} parent=0 // pred_check_branch
    %21 = sbr.rel (0) target = $region21
  $region20: #{_lambda_.56} parent=0 // pred_region
    _
  $region21: #{_lambda_.56} parent=0 // pred_fallthru
    _
  // Predicated region
  $region22: #{_lambda_.56} parent=0 // pred_check
    _
  $region23: #{_lambda_.56} parent=0 // pred_check_branch
    %23 = sbr.rel (0) target = $region25
  $region24: #{_lambda_.56} parent=0 // pred_region
    _
  $region25: #{_lambda_.56} parent=0 // pred_fallthru
    _
  // Predicated region
  $region26: #{_lambda_.56} parent=0 // pred_check
    _
  $region27: #{_lambda_.56} parent=0 // pred_check_branch
    %25 = sbr.rel (0) target = $region29
  $region28: #{_lambda_.56} parent=0 // pred_region
    _
  $region29: #{_lambda_.56} parent=0 // pred_fallthru
    _
  %v27 = vld [vmem:[%s0] sm:$0xf]
  %v28 = vld [vmem:[%s1] sm:$0xf]
  %v29 = vld [vmem:[%s1 + $0x4] sm:$0xf]
  %v30 = vld [vmem:[%s1 + $0x8] sm:$0xf]
  %v31 = vld [vmem:[%s1 + $0xc] sm:$0xf]
  %v32 = vld [vmem:[%s2] sm:$0x1]
  %v34 = vperm.slane %v32, 0
  %v40 = vunpack.c.l.b16 %v28
  %v41 = vunpack.c.l.b16 %v29
  %v42 = vunpack.c.l.b16 %v30
  %v43 = vunpack.c.l.b16 %v31
  %v44 = vpack.c.b16 %v41, %v40
  %v45 = vpack.c.b16 %v43, %v42
  %vm48 = vcmask 261120
  %v50 = vsel %vm48, %v27, 0
  %52 = vmatpush.bf16.msra.mxu0 0
  %53 = vmatpush.bf16.msra.mxu0 0
  %54 = vmatpush.bf16.msra.mxu0 0
  %55 = vmatpush.bf16.msra.mxu0 0
  %56 = vmatpush.bf16.msra.mxu0 0
  %57 = vmatpush.bf16.msra.mxu0 0
  %58 = vmatpush.bf16.msra.mxu0 %v45
  %59 = vmatpush.bf16.msra.mxu0 %v44
  %60 = vmatmul.bf16.gmra.mxu0 %v50
  %v61 = vpop.f32.mrf.mxu0
  %v62 = vadd.f32 %v34, %v61
  %v63 = vpop.f32.mrf.mxu0
  %64 = vdwg.mxu0
  %v65 = vmax.f32 %v62, 0.0
  %v66 = vpack.c.bf16 %v65, %v65
  %v67 = vld [vmem:[%s3] sm:$0xf]
  %v68 = vld [vmem:[%s3 + $0x4] sm:$0xf]
  %v69 = vld [vmem:[%s3 + $0x8] sm:$0xf]
  %v70 = vld [vmem:[%s3 + $0xc] sm:$0xf]
  %v71 = vld [vmem:[%s4] sm:$0x1]
  %v73 = vperm.slane %v71, 0
  %v79 = vunpack.c.l.b16 %v67
  %v80 = vunpack.c.l.b16 %v68
  %v81 = vunpack.c.l.b16 %v69
  %v82 = vunpack.c.l.b16 %v70
  %v83 = vpack.c.b16 %v80, %v79
  %v84 = vpack.c.b16 %v82, %v81
  %v88 = vsel %vm48, %v66, 0
  %90 = vmatpush.bf16.msra.mxu0 0
  %91 = vmatpush.bf16.msra.mxu0 0
  %92 = vmatpush.bf16.msra.mxu0 0
  %93 = vmatpush.bf16.msra.mxu0 0
  %94 = vmatpush.bf16.msra.mxu0 0
  %95 = vmatpush.bf16.msra.mxu0 0
  %96 = vmatpush.bf16.msra.mxu0 %v84
  %97 = vmatpush.bf16.msra.mxu0 %v83
  %98 = vmatmul.bf16.gmra.mxu0 %v88
  %v99 = vpop.f32.mrf.mxu0
  %v100 = vadd.f32 %v73, %v99
  %v101 = vpop.f32.mrf.mxu0
  %102 = vdwg.mxu0
  %v103 = vmax.f32 %v100, 0.0
  %v104 = vpack.c.bf16 %v103, %v103
  %v105 = vld [vmem:[%s5] sm:$0xff]
  %v106 = vld [vmem:[%s5 + $0x8] sm:$0xff]
  %v107 = vld [vmem:[%s5 + $0x10] sm:$0xf]
  %v108 = vld [vmem:[%s5 + $0x14] sm:$0xff]
  %v109 = vld [vmem:[%s5 + $0x1c] sm:$0xff]
  %v110 = vld [vmem:[%s5 + $0x24] sm:$0xf]
  %v111 = vld [vmem:[%s5 + $0x28] sm:$0xff]
  %v112 = vld [vmem:[%s5 + $0x30] sm:$0xff]
  %v113 = vld [vmem:[%s5 + $0x38] sm:$0xf]
  %v114 = vld [vmem:[%s5 + $0x3c] sm:$0xff]
  %v115 = vld [vmem:[%s5 + $0x44] sm:$0xff]
  %v116 = vld [vmem:[%s5 + $0x4c] sm:$0xf]
  %v117 = vld [vmem:[%s6] sm:$0x1f]
  %v119 = vperm.slane %v117, 0
  %v120 = vperm.slane %v117, 1
  %v121 = vperm.slane %v117, 2
  %v122 = vperm.slane %v117, 3
  %v123 = vperm.slane %v117, 4
  %v141 = vunpack.c.l.b16 %v105
  %v142 = vunpack.c.h.b16 %v105
  %v143 = vunpack.c.l.b16 %v106
  %v144 = vunpack.c.h.b16 %v106
  %v145 = vunpack.c.l.b16 %v107
  %v146 = vunpack.c.l.b16 %v108
  %v147 = vunpack.c.h.b16 %v108
  %v148 = vunpack.c.l.b16 %v109
  %v149 = vunpack.c.h.b16 %v109
  %v150 = vunpack.c.l.b16 %v110
  %v151 = vunpack.c.l.b16 %v111
  %v152 = vunpack.c.h.b16 %v111
  %v153 = vunpack.c.l.b16 %v112
  %v154 = vunpack.c.h.b16 %v112
  %v155 = vunpack.c.l.b16 %v113
  %v156 = vunpack.c.l.b16 %v114
  %v157 = vunpack.c.h.b16 %v114
  %v158 = vunpack.c.l.b16 %v115
  %v159 = vunpack.c.h.b16 %v115
  %v160 = vunpack.c.l.b16 %v116
  %v161 = vpack.c.b16 %v146, %v141
  %v162 = vpack.c.b16 %v147, %v142
  %v163 = vpack.c.b16 %v148, %v143
  %v164 = vpack.c.b16 %v149, %v144
  %v165 = vpack.c.b16 %v150, %v145
  %v166 = vpack.c.b16 %v156, %v151
  %v167 = vpack.c.b16 %v157, %v152
  %v168 = vpack.c.b16 %v158, %v153
  %v169 = vpack.c.b16 %v159, %v154
  %v170 = vpack.c.b16 %v160, %v155
  %v182 = vsel %vm48, %v104, 0
  %184 = vmatpush.bf16.msra.mxu0 0
  %185 = vmatpush.bf16.msra.mxu0 0
  %186 = vmatpush.bf16.msra.mxu0 0
  %187 = vmatpush.bf16.msra.mxu0 0
  %188 = vmatpush.bf16.msra.mxu0 0
  %189 = vmatpush.bf16.msra.mxu0 0
  %190 = vmatpush.bf16.msra.mxu0 %v166
  %191 = vmatpush.bf16.msra.mxu0 %v161
  %192 = vmatmul.bf16.gmra.mxu0 %v182
  %v193 = vpop.f32.mrf.mxu0
  %v194 = vadd.f32 %v119, %v193
  %v195 = vpop.f32.mrf.mxu0
  %196 = vdwg.mxu0
  %197 = vmatpush.bf16.msra.mxu0 0
  %198 = vmatpush.bf16.msra.mxu0 0
  %199 = vmatpush.bf16.msra.mxu0 0
  %200 = vmatpush.bf16.msra.mxu0 0
  %201 = vmatpush.bf16.msra.mxu0 0
  %202 = vmatpush.bf16.msra.mxu0 0
  %203 = vmatpush.bf16.msra.mxu0 %v167
  %204 = vmatpush.bf16.msra.mxu0 %v162
  %205 = vmatmul.bf16.gmra.mxu0 %v182
  %v206 = vpop.f32.mrf.mxu0
  %v207 = vadd.f32 %v120, %v206
  %v208 = vpop.f32.mrf.mxu0
  %209 = vdwg.mxu0
  %210 = vmatpush.bf16.msra.mxu0 0
  %211 = vmatpush.bf16.msra.mxu0 0
  %212 = vmatpush.bf16.msra.mxu0 0
  %213 = vmatpush.bf16.msra.mxu0 0
  %214 = vmatpush.bf16.msra.mxu0 0
  %215 = vmatpush.bf16.msra.mxu0 0
  %216 = vmatpush.bf16.msra.mxu0 %v168
  %217 = vmatpush.bf16.msra.mxu0 %v163
  %218 = vmatmul.bf16.gmra.mxu0 %v182
  %v219 = vpop.f32.mrf.mxu0
  %v220 = vadd.f32 %v121, %v219
  %v221 = vpop.f32.mrf.mxu0
  %222 = vdwg.mxu0
  %223 = vmatpush.bf16.msra.mxu0 0
  %224 = vmatpush.bf16.msra.mxu0 0
  %225 = vmatpush.bf16.msra.mxu0 0
  %226 = vmatpush.bf16.msra.mxu0 0
  %227 = vmatpush.bf16.msra.mxu0 0
  %228 = vmatpush.bf16.msra.mxu0 0
  %229 = vmatpush.bf16.msra.mxu0 %v169
  %230 = vmatpush.bf16.msra.mxu0 %v164
  %231 = vmatmul.bf16.gmra.mxu0 %v182
  %v232 = vpop.f32.mrf.mxu0
  %v233 = vadd.f32 %v122, %v232
  %v234 = vpop.f32.mrf.mxu0
  %235 = vdwg.mxu0
  %236 = vmatpush.bf16.msra.mxu0 0
  %237 = vmatpush.bf16.msra.mxu0 0
  %238 = vmatpush.bf16.msra.mxu0 0
  %239 = vmatpush.bf16.msra.mxu0 0
  %240 = vmatpush.bf16.msra.mxu0 0
  %241 = vmatpush.bf16.msra.mxu0 0
  %242 = vmatpush.bf16.msra.mxu0 %v170
  %243 = vmatpush.bf16.msra.mxu0 %v165
  %244 = vmatmul.bf16.gmra.mxu0 %v182
  %v245 = vpop.f32.mrf.mxu0
  %v246 = vadd.f32 %v123, %v245
  %v247 = vpop.f32.mrf.mxu0
  %248 = vdwg.mxu0
  %v249 = vtanh.pop %v194
  %v250 = vtanh.pop %v207
  %v251 = vtanh.pop %v220
  %v252 = vtanh.pop %v233
  %v253 = vtanh.pop %v246
  %254 = vst [vmem:[%s7] sm:$0xff] %v249
  %255 = vst [vmem:[%s7 + $0x8] sm:$0xff] %v250
  %256 = vst [vmem:[%s7 + $0x10] sm:$0xff] %v251
  %257 = vst [vmem:[%s7 + $0x18] sm:$0xff] %v252
  %258 = vst [vmem:[%s7 + $0x20] sm:$0xff] %v253
  // Predicated region
  $region30: #{_lambda_.56} parent=0 // pred_check
    _
  $region31: #{_lambda_.56} parent=0 // pred_check_branch
    %260 = sbr.rel (0) target = $region33
  $region32: #{_lambda_.56} parent=0 // pred_region
    _
  $region33: #{_lambda_.56} parent=0 // pred_fallthru
    _
  // Predicated region
  $region34: #{_lambda_.56} parent=0 // pred_check
    _
  $region35: #{_lambda_.56} parent=0 // pred_check_branch
    %262 = sbr.rel (0) target = $region37
  $region36: #{_lambda_.56} parent=0 // pred_region
    _
  $region37: #{_lambda_.56} parent=0 // pred_fallthru
    _

// kernel: _lambda_.39
$region0: #{_lambda_.39}
  #allocation0 [shape = 'u32[]', space=smem, size = 0x4, offset = 0x4, fixed_abs, tag = 'smem constant byte address 0x4 - core index']
  #allocation1 [shape = 'u32[72,128]{1,0:T(1,128)}', space=vmem, size = 0x9000, scoped, tag = 'internal scratch']
  %s0 = inlined_call_operand.vmem [shape: bf16[8,32], index: 0, kind: input, shape index: {}]
  %s1 = inlined_call_operand.vmem [shape: bf16[32,32], index: 1, kind: input, shape index: {}]
  %s2 = inlined_call_operand.vmem [shape: f32[1,32], index: 2, kind: input, shape index: {}]
  %s3 = inlined_call_operand.vmem [shape: bf16[32,32], index: 3, kind: input, shape index: {}]
  %s4 = inlined_call_operand.vmem [shape: f32[1,32], index: 4, kind: input, shape index: {}]
  %s5 = inlined_call_operand.vmem [shape: bf16[32,256], index: 5, kind: input, shape index: {}]
  %s6 = inlined_call_operand.vmem [shape: f32[1,256], index: 6, kind: input, shape index: {}]
  %s7 = inlined_call_operand.vmem [shape: f32[8,256], index: 7, kind: output, shape index: {}]
  %s8 = sld [smem:[#allocation0]]
  $region38: #{_lambda_.39} parent=0
    _
  %s10 = ssub.s32 1, %s8
  %s11 = scalar_select 0, %s10, %s8
  // Predicated region
  $region2: #{_lambda_.39} parent=0 // pred_check
    _
  $region3: #{_lambda_.39} parent=0 // pred_check_branch
    %13 = sbr.rel (0) target = $region5
  $region4: #{_lambda_.39} parent=0 // pred_region
    _
  $region5: #{_lambda_.39} parent=0 // pred_fallthru
    _
  // Predicated region
  $region6: #{_lambda_.39} parent=0 // pred_check
    _
  $region7: #{_lambda_.39} parent=0 // pred_check_branch
    %15 = sbr.rel (0) target = $region9
  $region8: #{_lambda_.39} parent=0 // pred_region
    _
  $region9: #{_lambda_.39} parent=0 // pred_fallthru
    _
  // Predicated region
  $region10: #{_lambda_.39} parent=0 // pred_check
    _
  $region11: #{_lambda_.39} parent=0 // pred_check_branch
    %17 = sbr.rel (0) target = $region13
  $region12: #{_lambda_.39} parent=0 // pred_region
    _
  $region13: #{_lambda_.39} parent=0 // pred_fallthru
    _
  // Predicated region
  $region14: #{_lambda_.39} parent=0 // pred_check
    _
  $region15: #{_lambda_.39} parent=0 // pred_check_branch
    %19 = sbr.rel (0) target = $region17
  $region16: #{_lambda_.39} parent=0 // pred_region
    _
  $region17: #{_lambda_.39} parent=0 // pred_fallthru
    _
  // Predicated region
  $region18: #{_lambda_.39} parent=0 // pred_check
    _
  $region19: #{_lambda_.39} parent=0 // pred_check_branch
    %21 = sbr.rel (0) target = $region21
  $region20: #{_lambda_.39} parent=0 // pred_region
    _
  $region21: #{_lambda_.39} parent=0 // pred_fallthru
    _
  // Predicated region
  $region22: #{_lambda_.39} parent=0 // pred_check
    _
  $region23: #{_lambda_.39} parent=0 // pred_check_branch
    %23 = sbr.rel (0) target = $region25
  $region24: #{_lambda_.39} parent=0 // pred_region
    _
  $region25: #{_lambda_.39} parent=0 // pred_fallthru
    _
  // Predicated region
  $region26: #{_lambda_.39} parent=0 // pred_check
    _
  $region27: #{_lambda_.39} parent=0 // pred_check_branch
    %25 = sbr.rel (0) target = $region29
  $region28: #{_lambda_.39} parent=0 // pred_region
    _
  $region29: #{_lambda_.39} parent=0 // pred_fallthru
    _
  %v27 = vld [vmem:[%s0] sm:$0xf]
  %v28 = vld [vmem:[%s1] sm:$0xf]
  %v29 = vld [vmem:[%s1 + $0x4] sm:$0xf]
  %v30 = vld [vmem:[%s1 + $0x8] sm:$0xf]
  %v31 = vld [vmem:[%s1 + $0xc] sm:$0xf]
  %v32 = vld [vmem:[%s2] sm:$0x1]
  %v34 = vperm.slane %v32, 0
  %v40 = vunpack.c.l.b16 %v28
  %v41 = vunpack.c.l.b16 %v29
  %v42 = vunpack.c.l.b16 %v30
  %v43 = vunpack.c.l.b16 %v31
  %v44 = vpack.c.b16 %v41, %v40
  %v45 = vpack.c.b16 %v43, %v42
  %vm48 = vcmask 261120
  %v50 = vsel %vm48, %v27, 0
  %52 = vmatpush.bf16.msra.mxu0 0
  %53 = vmatpush.bf16.msra.mxu0 0
  %54 = vmatpush.bf16.msra.mxu0 0
  %55 = vmatpush.bf16.msra.mxu0 0
  %56 = vmatpush.bf16.msra.mxu0 0
  %57 = vmatpush.bf16.msra.mxu0 0
  %58 = vmatpush.bf16.msra.mxu0 %v45
  %59 = vmatpush.bf16.msra.mxu0 %v44
  %60 = vmatmul.bf16.gmra.mxu0 %v50
  %v61 = vpop.f32.mrf.mxu0
  %v62 = vadd.f32 %v34, %v61
  %v63 = vpop.f32.mrf.mxu0
  %64 = vdwg.mxu0
  %v65 = vmax.f32 %v62, 0.0
  %v66 = vpack.c.bf16 %v65, %v65
  %v67 = vld [vmem:[%s3] sm:$0xf]
  %v68 = vld [vmem:[%s3 + $0x4] sm:$0xf]
  %v69 = vld [vmem:[%s3 + $0x8] sm:$0xf]
  %v70 = vld [vmem:[%s3 + $0xc] sm:$0xf]
  %v71 = vld [vmem:[%s4] sm:$0x1]
  %v73 = vperm.slane %v71, 0
  %v79 = vunpack.c.l.b16 %v67
  %v80 = vunpack.c.l.b16 %v68
  %v81 = vunpack.c.l.b16 %v69
  %v82 = vunpack.c.l.b16 %v70
  %v83 = vpack.c.b16 %v80, %v79
  %v84 = vpack.c.b16 %v82, %v81
  %v88 = vsel %vm48, %v66, 0
  %90 = vmatpush.bf16.msra.mxu0 0
  %91 = vmatpush.bf16.msra.mxu0 0
  %92 = vmatpush.bf16.msra.mxu0 0
  %93 = vmatpush.bf16.msra.mxu0 0
  %94 = vmatpush.bf16.msra.mxu0 0
  %95 = vmatpush.bf16.msra.mxu0 0
  %96 = vmatpush.bf16.msra.mxu0 %v84
  %97 = vmatpush.bf16.msra.mxu0 %v83
  %98 = vmatmul.bf16.gmra.mxu0 %v88
  %v99 = vpop.f32.mrf.mxu0
  %v100 = vadd.f32 %v73, %v99
  %v101 = vpop.f32.mrf.mxu0
  %102 = vdwg.mxu0
  %v103 = vmax.f32 %v100, 0.0
  %v104 = vpack.c.bf16 %v103, %v103
  %v105 = vld [vmem:[%s5] sm:$0xff]
  %v106 = vld [vmem:[%s5 + $0x8] sm:$0xff]
  %v107 = vld [vmem:[%s5 + $0x10] sm:$0xff]
  %v108 = vld [vmem:[%s5 + $0x18] sm:$0xff]
  %v109 = vld [vmem:[%s6] sm:$0x3]
  %v111 = vperm.slane %v109, 0
  %v112 = vperm.slane %v109, 1
  %v119 = vunpack.c.l.b16 %v105
  %v120 = vunpack.c.h.b16 %v105
  %v121 = vunpack.c.l.b16 %v106
  %v122 = vunpack.c.h.b16 %v106
  %v123 = vunpack.c.l.b16 %v107
  %v124 = vunpack.c.h.b16 %v107
  %v125 = vunpack.c.l.b16 %v108
  %v126 = vunpack.c.h.b16 %v108
  %v127 = vpack.c.b16 %v121, %v119
  %v128 = vpack.c.b16 %v122, %v120
  %v129 = vpack.c.b16 %v125, %v123
  %v130 = vpack.c.b16 %v126, %v124
  %v136 = vsel %vm48, %v104, 0
  %138 = vmatpush.bf16.msra.mxu0 0
  %139 = vmatpush.bf16.msra.mxu0 0
  %140 = vmatpush.bf16.msra.mxu0 0
  %141 = vmatpush.bf16.msra.mxu0 0
  %142 = vmatpush.bf16.msra.mxu0 0
  %143 = vmatpush.bf16.msra.mxu0 0
  %144 = vmatpush.bf16.msra.mxu0 %v129
  %145 = vmatpush.bf16.msra.mxu0 %v127
  %146 = vmatmul.bf16.gmra.mxu0 %v136
  %v147 = vpop.f32.mrf.mxu0
  %v148 = vadd.f32 %v111, %v147
  %v149 = vpop.f32.mrf.mxu0
  %150 = vdwg.mxu0
  %151 = vmatpush.bf16.msra.mxu0 0
  %152 = vmatpush.bf16.msra.mxu0 0
  %153 = vmatpush.bf16.msra.mxu0 0
  %154 = vmatpush.bf16.msra.mxu0 0
  %155 = vmatpush.bf16.msra.mxu0 0
  %156 = vmatpush.bf16.msra.mxu0 0
  %157 = vmatpush.bf16.msra.mxu0 %v130
  %158 = vmatpush.bf16.msra.mxu0 %v128
  %159 = vmatmul.bf16.gmra.mxu0 %v136
  %v160 = vpop.f32.mrf.mxu0
  %v161 = vadd.f32 %v112, %v160
  %v162 = vpop.f32.mrf.mxu0
  %163 = vdwg.mxu0
  %v164 = vtanh.pop %v148
  %v165 = vtanh.pop %v161
  %166 = vst [vmem:[%s7] sm:$0xff] %v164
  %167 = vst [vmem:[%s7 + $0x8] sm:$0xff] %v165
  // Predicated region
  $region30: #{_lambda_.39} parent=0 // pred_check
    _
  $region31: #{_lambda_.39} parent=0 // pred_check_branch
    %169 = sbr.rel (0) target = $region33
  $region32: #{_lambda_.39} parent=0 // pred_region
    _
  $region33: #{_lambda_.39} parent=0 // pred_fallthru
    _
  // Predicated region
  $region34: #{_lambda_.39} parent=0 // pred_check
    _
  $region35: #{_lambda_.39} parent=0 // pred_check_branch
    %171 = sbr.rel (0) target = $region37
  $region36: #{_lambda_.39} parent=0 // pred_region
    _
  $region37: #{_lambda_.39} parent=0 // pred_fallthru
    _

// kernel: _lambda_.53
$region0: #{_lambda_.53}
  #allocation0 [shape = 'u32[]', space=smem, size = 0x4, offset = 0x4, fixed_abs, tag = 'smem constant byte address 0x4 - core index']
  #allocation1 [shape = 'u32[72,128]{1,0:T(1,128)}', space=vmem, size = 0x9000, scoped, tag = 'internal scratch']
  %s0 = inlined_call_operand.vmem [shape: bf16[8,32], index: 0, kind: input, shape index: {}]
  %s1 = inlined_call_operand.vmem [shape: bf16[32,32], index: 1, kind: input, shape index: {}]
  %s2 = inlined_call_operand.vmem [shape: f32[1,32], index: 2, kind: input, shape index: {}]
  %s3 = inlined_call_operand.vmem [shape: bf16[32,32], index: 3, kind: input, shape index: {}]
  %s4 = inlined_call_operand.vmem [shape: f32[1,32], index: 4, kind: input, shape index: {}]
  %s5 = inlined_call_operand.vmem [shape: bf16[32,128], index: 5, kind: input, shape index: {}]
  %s6 = inlined_call_operand.vmem [shape: f32[1,128], index: 6, kind: input, shape index: {}]
  %s7 = inlined_call_operand.vmem [shape: f32[8,128], index: 7, kind: output, shape index: {}]
  %s8 = sld [smem:[#allocation0]]
  $region38: #{_lambda_.53} parent=0
    _
  %s10 = ssub.s32 1, %s8
  %s11 = scalar_select 0, %s10, %s8
  // Predicated region
  $region2: #{_lambda_.53} parent=0 // pred_check
    _
  $region3: #{_lambda_.53} parent=0 // pred_check_branch
    %13 = sbr.rel (0) target = $region5
  $region4: #{_lambda_.53} parent=0 // pred_region
    _
  $region5: #{_lambda_.53} parent=0 // pred_fallthru
    _
  // Predicated region
  $region6: #{_lambda_.53} parent=0 // pred_check
    _
  $region7: #{_lambda_.53} parent=0 // pred_check_branch
    %15 = sbr.rel (0) target = $region9
  $region8: #{_lambda_.53} parent=0 // pred_region
    _
  $region9: #{_lambda_.53} parent=0 // pred_fallthru
    _
  // Predicated region
  $region10: #{_lambda_.53} parent=0 // pred_check
    _
  $region11: #{_lambda_.53} parent=0 // pred_check_branch
    %17 = sbr.rel (0) target = $region13
  $region12: #{_lambda_.53} parent=0 // pred_region
    _
  $region13: #{_lambda_.53} parent=0 // pred_fallthru
    _
  // Predicated region
  $region14: #{_lambda_.53} parent=0 // pred_check
    _
  $region15: #{_lambda_.53} parent=0 // pred_check_branch
    %19 = sbr.rel (0) target = $region17
  $region16: #{_lambda_.53} parent=0 // pred_region
    _
  $region17: #{_lambda_.53} parent=0 // pred_fallthru
    _
  // Predicated region
  $region18: #{_lambda_.53} parent=0 // pred_check
    _
  $region19: #{_lambda_.53} parent=0 // pred_check_branch
    %21 = sbr.rel (0) target = $region21
  $region20: #{_lambda_.53} parent=0 // pred_region
    _
  $region21: #{_lambda_.53} parent=0 // pred_fallthru
    _
  // Predicated region
  $region22: #{_lambda_.53} parent=0 // pred_check
    _
  $region23: #{_lambda_.53} parent=0 // pred_check_branch
    %23 = sbr.rel (0) target = $region25
  $region24: #{_lambda_.53} parent=0 // pred_region
    _
  $region25: #{_lambda_.53} parent=0 // pred_fallthru
    _
  // Predicated region
  $region26: #{_lambda_.53} parent=0 // pred_check
    _
  $region27: #{_lambda_.53} parent=0 // pred_check_branch
    %25 = sbr.rel (0) target = $region29
  $region28: #{_lambda_.53} parent=0 // pred_region
    _
  $region29: #{_lambda_.53} parent=0 // pred_fallthru
    _
  %v27 = vld [vmem:[%s0] sm:$0xf]
  %v28 = vld [vmem:[%s1] sm:$0xf]
  %v29 = vld [vmem:[%s1 + $0x4] sm:$0xf]
  %v30 = vld [vmem:[%s1 + $0x8] sm:$0xf]
  %v31 = vld [vmem:[%s1 + $0xc] sm:$0xf]
  %v32 = vld [vmem:[%s2] sm:$0x1]
  %v34 = vperm.slane %v32, 0
  %v40 = vunpack.c.l.b16 %v28
  %v41 = vunpack.c.l.b16 %v29
  %v42 = vunpack.c.l.b16 %v30
  %v43 = vunpack.c.l.b16 %v31
  %v44 = vpack.c.b16 %v41, %v40
  %v45 = vpack.c.b16 %v43, %v42
  %vm48 = vcmask 261120
  %v50 = vsel %vm48, %v27, 0
  %52 = vmatpush.bf16.msra.mxu0 0
  %53 = vmatpush.bf16.msra.mxu0 0
  %54 = vmatpush.bf16.msra.mxu0 0
  %55 = vmatpush.bf16.msra.mxu0 0
  %56 = vmatpush.bf16.msra.mxu0 0
  %57 = vmatpush.bf16.msra.mxu0 0
  %58 = vmatpush.bf16.msra.mxu0 %v45
  %59 = vmatpush.bf16.msra.mxu0 %v44
  %60 = vmatmul.bf16.gmra.mxu0 %v50
  %v61 = vpop.f32.mrf.mxu0
  %v62 = vadd.f32 %v34, %v61
  %v63 = vpop.f32.mrf.mxu0
  %64 = vdwg.mxu0
  %v65 = vmax.f32 %v62, 0.0
  %v66 = vpack.c.bf16 %v65, %v65
  %v67 = vld [vmem:[%s3] sm:$0xf]
  %v68 = vld [vmem:[%s3 + $0x4] sm:$0xf]
  %v69 = vld [vmem:[%s3 + $0x8] sm:$0xf]
  %v70 = vld [vmem:[%s3 + $0xc] sm:$0xf]
  %v71 = vld [vmem:[%s4] sm:$0x1]
  %v73 = vperm.slane %v71, 0
  %v79 = vunpack.c.l.b16 %v67
  %v80 = vunpack.c.l.b16 %v68
  %v81 = vunpack.c.l.b16 %v69
  %v82 = vunpack.c.l.b16 %v70
  %v83 = vpack.c.b16 %v80, %v79
  %v84 = vpack.c.b16 %v82, %v81
  %v88 = vsel %vm48, %v66, 0
  %90 = vmatpush.bf16.msra.mxu0 0
  %91 = vmatpush.bf16.msra.mxu0 0
  %92 = vmatpush.bf16.msra.mxu0 0
  %93 = vmatpush.bf16.msra.mxu0 0
  %94 = vmatpush.bf16.msra.mxu0 0
  %95 = vmatpush.bf16.msra.mxu0 0
  %96 = vmatpush.bf16.msra.mxu0 %v84
  %97 = vmatpush.bf16.msra.mxu0 %v83
  %98 = vmatmul.bf16.gmra.mxu0 %v88
  %v99 = vpop.f32.mrf.mxu0
  %v100 = vadd.f32 %v73, %v99
  %v101 = vpop.f32.mrf.mxu0
  %102 = vdwg.mxu0
  %v103 = vmax.f32 %v100, 0.0
  %v104 = vpack.c.bf16 %v103, %v103
  %v105 = vld [vmem:[%s5] sm:$0xf]
  %v106 = vld [vmem:[%s5 + $0x4] sm:$0xf]
  %v107 = vld [vmem:[%s5 + $0x8] sm:$0xf]
  %v108 = vld [vmem:[%s5 + $0xc] sm:$0xf]
  %v109 = vld [vmem:[%s6] sm:$0x1]
  %v111 = vperm.slane %v109, 0
  %v117 = vunpack.c.l.b16 %v105
  %v118 = vunpack.c.l.b16 %v106
  %v119 = vunpack.c.l.b16 %v107
  %v120 = vunpack.c.l.b16 %v108
  %v121 = vpack.c.b16 %v118, %v117
  %v122 = vpack.c.b16 %v120, %v119
  %v126 = vsel %vm48, %v104, 0
  %128 = vmatpush.bf16.msra.mxu0 0
  %129 = vmatpush.bf16.msra.mxu0 0
  %130 = vmatpush.bf16.msra.mxu0 0
  %131 = vmatpush.bf16.msra.mxu0 0
  %132 = vmatpush.bf16.msra.mxu0 0
  %133 = vmatpush.bf16.msra.mxu0 0
  %134 = vmatpush.bf16.msra.mxu0 %v122
  %135 = vmatpush.bf16.msra.mxu0 %v121
  %136 = vmatmul.bf16.gmra.mxu0 %v126
  %v137 = vpop.f32.mrf.mxu0
  %v138 = vadd.f32 %v111, %v137
  %v139 = vpop.f32.mrf.mxu0
  %140 = vdwg.mxu0
  %v141 = vtanh.pop %v138
  %142 = vst [vmem:[%s7] sm:$0xff] %v141
  // Predicated region
  $region30: #{_lambda_.53} parent=0 // pred_check
    _
  $region31: #{_lambda_.53} parent=0 // pred_check_branch
    %144 = sbr.rel (0) target = $region33
  $region32: #{_lambda_.53} parent=0 // pred_region
    _
  $region33: #{_lambda_.53} parent=0 // pred_fallthru
    _
  // Predicated region
  $region34: #{_lambda_.53} parent=0 // pred_check
    _
  $region35: #{_lambda_.53} parent=0 // pred_check_branch
    %146 = sbr.rel (0) target = $region37
  $region36: #{_lambda_.53} parent=0 // pred_region
    _
  $region37: #{_lambda_.53} parent=0 // pred_fallthru
    _

// kernel: _lambda_.40
$region0: #{_lambda_.40}
  #allocation0 [shape = 'u32[]', space=smem, size = 0x4, offset = 0x4, fixed_abs, tag = 'smem constant byte address 0x4 - core index']
  #allocation1 [shape = 'u32[72,128]{1,0:T(1,128)}', space=vmem, size = 0x9000, scoped, tag = 'internal scratch']
  %s0 = inlined_call_operand.vmem [shape: f32[2,64,12], index: 0, kind: input, shape index: {}]
  %s1 = inlined_call_operand.vmem [shape: f32[2,1,12], index: 1, kind: input, shape index: {}]
  %s2 = inlined_call_operand.vmem [shape: f32[2,1,12], index: 2, kind: input, shape index: {}]
  %s3 = inlined_call_operand.vmem [shape: f32[2,12,12], index: 3, kind: input, shape index: {}]
  %s4 = inlined_call_operand.vmem [shape: f32[2,64,12], index: 4, kind: output, shape index: {}]
  %s5 = sld [smem:[#allocation0]]
  $region26: #{_lambda_.40} parent=0
    _
  %s7 = ssub.s32 1, %s5
  %s8 = scalar_select 0, %s7, %s5
  // Predicated region
  $region2: #{_lambda_.40} parent=0 // pred_check
    _
  $region3: #{_lambda_.40} parent=0 // pred_check_branch
    %10 = sbr.rel (0) target = $region5
  $region4: #{_lambda_.40} parent=0 // pred_region
    _
  $region5: #{_lambda_.40} parent=0 // pred_fallthru
    _
  // Predicated region
  $region6: #{_lambda_.40} parent=0 // pred_check
    _
  $region7: #{_lambda_.40} parent=0 // pred_check_branch
    %12 = sbr.rel (0) target = $region9
  $region8: #{_lambda_.40} parent=0 // pred_region
    _
  $region9: #{_lambda_.40} parent=0 // pred_fallthru
    _
  // Predicated region
  $region10: #{_lambda_.40} parent=0 // pred_check
    _
  $region11: #{_lambda_.40} parent=0 // pred_check_branch
    %14 = sbr.rel (0) target = $region13
  $region12: #{_lambda_.40} parent=0 // pred_region
    _
  $region13: #{_lambda_.40} parent=0 // pred_fallthru
    _
  // Predicated region
  $region14: #{_lambda_.40} parent=0 // pred_check
    _
  $region15: #{_lambda_.40} parent=0 // pred_check_branch
    %16 = sbr.rel (0) target = $region17
  $region16: #{_lambda_.40} parent=0 // pred_region
    _
  $region17: #{_lambda_.40} parent=0 // pred_fallthru
    _
  %v17 = vld [vmem:[%s0] sm:$0xff]
  %v18 = vld [vmem:[%s0 + $0x8] sm:$0xff]
  %v19 = vld [vmem:[%s0 + $0x10] sm:$0xff]
  %v20 = vld [vmem:[%s0 + $0x18] sm:$0xff]
  %v21 = vld [vmem:[%s0 + $0x20] sm:$0xff]
  %v22 = vld [vmem:[%s0 + $0x28] sm:$0xff]
  %v23 = vld [vmem:[%s0 + $0x30] sm:$0xff]
  %v24 = vld [vmem:[%s0 + $0x38] sm:$0xff]
  %v25 = vld [vmem:[%s0 + $0x40] sm:$0xff]
  %v26 = vld [vmem:[%s0 + $0x48] sm:$0xff]
  %v27 = vld [vmem:[%s0 + $0x50] sm:$0xff]
  %v28 = vld [vmem:[%s0 + $0x58] sm:$0xff]
  %v29 = vld [vmem:[%s0 + $0x60] sm:$0xff]
  %v30 = vld [vmem:[%s0 + $0x68] sm:$0xff]
  %v31 = vld [vmem:[%s0 + $0x70] sm:$0xff]
  %v32 = vld [vmem:[%s0 + $0x78] sm:$0xff]
  %v33 = vld [vmem:[%s1] sm:$0x1]
  %v34 = vld [vmem:[%s1 + $0x1] sm:$0x1]
  %v35 = vmul.f32 %v33, 1.442695
  %v36 = vpow.pop %v35
  %v37 = vmul.f32 %v34, 1.442695
  %v38 = vpow.pop %v37
  %v41 = vperm.slane %v36, 0
  %v42 = vperm.slane %v38, 0
  %v45 = vmul.f32 %v17, %v41
  %v46 = vmul.f32 %v18, %v41
  %v47 = vmul.f32 %v19, %v41
  %v48 = vmul.f32 %v20, %v41
  %v49 = vmul.f32 %v21, %v41
  %v50 = vmul.f32 %v22, %v41
  %v51 = vmul.f32 %v23, %v41
  %v52 = vmul.f32 %v24, %v41
  %v53 = vmul.f32 %v25, %v42
  %v54 = vmul.f32 %v26, %v42
  %v55 = vmul.f32 %v27, %v42
  %v56 = vmul.f32 %v28, %v42
  %v57 = vmul.f32 %v29, %v42
  %v58 = vmul.f32 %v30, %v42
  %v59 = vmul.f32 %v31, %v42
  %v60 = vmul.f32 %v32, %v42
  %v61 = vld [vmem:[%s2] sm:$0x1]
  %v62 = vld [vmem:[%s2 + $0x1] sm:$0x1]
  %v65 = vperm.slane %v61, 0
  %v66 = vperm.slane %v62, 0
  %v69 = vadd.f32 %v45, %v65
  %v70 = vadd.f32 %v46, %v65
  %v71 = vadd.f32 %v47, %v65
  %v72 = vadd.f32 %v48, %v65
  %v73 = vadd.f32 %v49, %v65
  %v74 = vadd.f32 %v50, %v65
  %v75 = vadd.f32 %v51, %v65
  %v76 = vadd.f32 %v52, %v65
  %v77 = vadd.f32 %v53, %v66
  %v78 = vadd.f32 %v54, %v66
  %v79 = vadd.f32 %v55, %v66
  %v80 = vadd.f32 %v56, %v66
  %v81 = vadd.f32 %v57, %v66
  %v82 = vadd.f32 %v58, %v66
  %v83 = vadd.f32 %v59, %v66
  %v84 = vadd.f32 %v60, %v66
  %v85 = vld [vmem:[%s3] sm:$0xff]
  %v86 = vld [vmem:[%s3 + $0x8] sm:$0xf]
  %v87 = vld [vmem:[%s3 + $0x10] sm:$0xff]
  %v88 = vld [vmem:[%s3 + $0x18] sm:$0xf]
  %vm89 = vcmask 97280
  %v91 = vsel %vm89, %v69, 0
  %v94 = vsel %vm89, %v70, 0
  %v97 = vsel %vm89, %v71, 0
  %v100 = vsel %vm89, %v72, 0
  %v103 = vsel %vm89, %v73, 0
  %v106 = vsel %vm89, %v74, 0
  %v109 = vsel %vm89, %v75, 0
  %v112 = vsel %vm89, %v76, 0
  %v115 = vsel %vm89, %v85, 0
  %v118 = vsel %vm89, %v86, 0
  %120 = vmatpush.xpose.msra.mxu0 0.0
  %121 = vmatpush.xpose.msra.mxu0 0.0
  %122 = vmatpush.xpose.msra.mxu0 0.0
  %123 = vmatpush.xpose.msra.mxu0 0.0
  %124 = vmatpush.xpose.msra.mxu0 0.0
  %125 = vmatpush.xpose.msra.mxu0 0.0
  %126 = vmatpush.xpose.msra.mxu0 0.0
  %127 = vmatpush.xpose.msra.mxu0 0.0
  %128 = vmatpush.xpose.msra.mxu0 0.0
  %129 = vmatpush.xpose.msra.mxu0 0.0
  %130 = vmatpush.xpose.msra.mxu0 0.0
  %131 = vmatpush.xpose.msra.mxu0 0.0
  %132 = vmatpush.xpose.msra.mxu0 0.0
  %133 = vmatpush.xpose.msra.mxu0 0.0
  %134 = vmatpush.xpose.msra.mxu0 %v118
  %135 = vmatpush.xpose.msra.mxu0 %v115
  %136 = vmatmul.f32.gmra.mxu0 %v91
  %v137 = vpop.f32.mrf.mxu0
  %v138 = vadd.f32 0.0, %v137
  %139 = vmatmul.f32.gmra.mxu0 %v94
  %v140 = vpop.f32.mrf.mxu0
  %v141 = vadd.f32 0.0, %v140
  %142 = vmatmul.f32.gmra.mxu0 %v97
  %v143 = vpop.f32.mrf.mxu0
  %v144 = vadd.f32 0.0, %v143
  %145 = vmatmul.f32.gmra.mxu0 %v100
  %v146 = vpop.f32.mrf.mxu0
  %v147 = vadd.f32 0.0, %v146
  %148 = vmatmul.f32.gmra.mxu0 %v103
  %v149 = vpop.f32.mrf.mxu0
  %v150 = vadd.f32 0.0, %v149
  %151 = vmatmul.f32.gmra.mxu0 %v106
  %v152 = vpop.f32.mrf.mxu0
  %v153 = vadd.f32 0.0, %v152
  %154 = vmatmul.f32.gmra.mxu0 %v109
  %v155 = vpop.f32.mrf.mxu0
  %v156 = vadd.f32 0.0, %v155
  %157 = vmatmul.f32.gmra.mxu0 %v112
  %v158 = vpop.f32.mrf.mxu0
  %v159 = vadd.f32 0.0, %v158
  %160 = vdwg.mxu0
  %v162 = vsel %vm89, %v77, 0
  %v165 = vsel %vm89, %v78, 0
  %v168 = vsel %vm89, %v79, 0
  %v171 = vsel %vm89, %v80, 0
  %v174 = vsel %vm89, %v81, 0
  %v177 = vsel %vm89, %v82, 0
  %v180 = vsel %vm89, %v83, 0
  %v183 = vsel %vm89, %v84, 0
  %v186 = vsel %vm89, %v87, 0
  %v189 = vsel %vm89, %v88, 0
  %191 = vmatpush.xpose.msra.mxu0 0.0
  %192 = vmatpush.xpose.msra.mxu0 0.0
  %193 = vmatpush.xpose.msra.mxu0 0.0
  %194 = vmatpush.xpose.msra.mxu0 0.0
  %195 = vmatpush.xpose.msra.mxu0 0.0
  %196 = vmatpush.xpose.msra.mxu0 0.0
  %197 = vmatpush.xpose.msra.mxu0 0.0
  %198 = vmatpush.xpose.msra.mxu0 0.0
  %199 = vmatpush.xpose.msra.mxu0 0.0
  %200 = vmatpush.xpose.msra.mxu0 0.0
  %201 = vmatpush.xpose.msra.mxu0 0.0
  %202 = vmatpush.xpose.msra.mxu0 0.0
  %203 = vmatpush.xpose.msra.mxu0 0.0
  %204 = vmatpush.xpose.msra.mxu0 0.0
  %205 = vmatpush.xpose.msra.mxu0 %v189
  %206 = vmatpush.xpose.msra.mxu0 %v186
  %207 = vmatmul.f32.gmra.mxu0 %v162
  %v208 = vpop.f32.mrf.mxu0
  %v209 = vadd.f32 0.0, %v208
  %210 = vmatmul.f32.gmra.mxu0 %v165
  %v211 = vpop.f32.mrf.mxu0
  %v212 = vadd.f32 0.0, %v211
  %213 = vmatmul.f32.gmra.mxu0 %v168
  %v214 = vpop.f32.mrf.mxu0
  %v215 = vadd.f32 0.0, %v214
  %216 = vmatmul.f32.gmra.mxu0 %v171
  %v217 = vpop.f32.mrf.mxu0
  %v218 = vadd.f32 0.0, %v217
  %219 = vmatmul.f32.gmra.mxu0 %v174
  %v220 = vpop.f32.mrf.mxu0
  %v221 = vadd.f32 0.0, %v220
  %222 = vmatmul.f32.gmra.mxu0 %v177
  %v223 = vpop.f32.mrf.mxu0
  %v224 = vadd.f32 0.0, %v223
  %225 = vmatmul.f32.gmra.mxu0 %v180
  %v226 = vpop.f32.mrf.mxu0
  %v227 = vadd.f32 0.0, %v226
  %228 = vmatmul.f32.gmra.mxu0 %v183
  %v229 = vpop.f32.mrf.mxu0
  %v230 = vadd.f32 0.0, %v229
  %231 = vdwg.mxu0
  %232 = vst.msk [vmem:[%s4] sm:$0xff] %vm89, %v138
  %233 = vst.msk [vmem:[%s4 + $0x8] sm:$0xff] %vm89, %v141
  %234 = vst.msk [vmem:[%s4 + $0x10] sm:$0xff] %vm89, %v144
  %235 = vst.msk [vmem:[%s4 + $0x18] sm:$0xff] %vm89, %v147
  %236 = vst.msk [vmem:[%s4 + $0x20] sm:$0xff] %vm89, %v150
  %237 = vst.msk [vmem:[%s4 + $0x28] sm:$0xff] %vm89, %v153
  %238 = vst.msk [vmem:[%s4 + $0x30] sm:$0xff] %vm89, %v156
  %239 = vst.msk [vmem:[%s4 + $0x38] sm:$0xff] %vm89, %v159
  %240 = vst.msk [vmem:[%s4 + $0x40] sm:$0xff] %vm89, %v209
  %241 = vst.msk [vmem:[%s4 + $0x48] sm:$0xff] %vm89, %v212
  %242 = vst.msk [vmem:[%s4 + $0x50] sm:$0xff] %vm89, %v215
  %243 = vst.msk [vmem:[%s4 + $0x58] sm:$0xff] %vm89, %v218
  %244 = vst.msk [vmem:[%s4 + $0x60] sm:$0xff] %vm89, %v221
  %245 = vst.msk [vmem:[%s4 + $0x68] sm:$0xff] %vm89, %v224
  %246 = vst.msk [vmem:[%s4 + $0x70] sm:$0xff] %vm89, %v227
  %247 = vst.msk [vmem:[%s4 + $0x78] sm:$0xff] %vm89, %v230
  // Predicated region
  $region18: #{_lambda_.40} parent=0 // pred_check
    _
  $region19: #{_lambda_.40} parent=0 // pred_check_branch
    %249 = sbr.rel (0) target = $region21
  $region20: #{_lambda_.40} parent=0 // pred_region
    _
  $region21: #{_lambda_.40} parent=0 // pred_fallthru
    _
  // Predicated region
  $region22: #{_lambda_.40} parent=0 // pred_check
    _
  $region23: #{_lambda_.40} parent=0 // pred_check_branch
    %251 = sbr.rel (0) target = $region25
  $region24: #{_lambda_.40} parent=0 // pred_region
    _
  $region25: #{_lambda_.40} parent=0 // pred_fallthru
    _

// kernel: _lambda_.57
$region0: #{_lambda_.57}
  #allocation0 [shape = 'u32[]', space=smem, size = 0x4, offset = 0x4, fixed_abs, tag = 'smem constant byte address 0x4 - core index']
  #allocation1 [shape = 'u32[72,128]{1,0:T(1,128)}', space=vmem, size = 0x9000, scoped, tag = 'internal scratch']
  %s0 = inlined_call_operand.vmem [shape: f32[2,16,24], index: 0, kind: input, shape index: {}]
  %s1 = inlined_call_operand.vmem [shape: f32[2,1,24], index: 1, kind: input, shape index: {}]
  %s2 = inlined_call_operand.vmem [shape: f32[2,1,24], index: 2, kind: input, shape index: {}]
  %s3 = inlined_call_operand.vmem [shape: f32[2,24,24], index: 3, kind: input, shape index: {}]
  %s4 = inlined_call_operand.vmem [shape: f32[2,16,24], index: 4, kind: output, shape index: {}]
  %s5 = sld [smem:[#allocation0]]
  $region26: #{_lambda_.57} parent=0
    _
  %s7 = ssub.s32 1, %s5
  %s8 = scalar_select 0, %s7, %s5
  // Predicated region
  $region2: #{_lambda_.57} parent=0 // pred_check
    _
  $region3: #{_lambda_.57} parent=0 // pred_check_branch
    %10 = sbr.rel (0) target = $region5
  $region4: #{_lambda_.57} parent=0 // pred_region
    _
  $region5: #{_lambda_.57} parent=0 // pred_fallthru
    _
  // Predicated region
  $region6: #{_lambda_.57} parent=0 // pred_check
    _
  $region7: #{_lambda_.57} parent=0 // pred_check_branch
    %12 = sbr.rel (0) target = $region9
  $region8: #{_lambda_.57} parent=0 // pred_region
    _
  $region9: #{_lambda_.57} parent=0 // pred_fallthru
    _
  // Predicated region
  $region10: #{_lambda_.57} parent=0 // pred_check
    _
  $region11: #{_lambda_.57} parent=0 // pred_check_branch
    %14 = sbr.rel (0) target = $region13
  $region12: #{_lambda_.57} parent=0 // pred_region
    _
  $region13: #{_lambda_.57} parent=0 // pred_fallthru
    _
  // Predicated region
  $region14: #{_lambda_.57} parent=0 // pred_check
    _
  $region15: #{_lambda_.57} parent=0 // pred_check_branch
    %16 = sbr.rel (0) target = $region17
  $region16: #{_lambda_.57} parent=0 // pred_region
    _
  $region17: #{_lambda_.57} parent=0 // pred_fallthru
    _
  %v17 = vld [vmem:[%s0] sm:$0xff]
  %v18 = vld [vmem:[%s0 + $0x8] sm:$0xff]
  %v19 = vld [vmem:[%s0 + $0x10] sm:$0xff]
  %v20 = vld [vmem:[%s0 + $0x18] sm:$0xff]
  %v21 = vld [vmem:[%s1] sm:$0x1]
  %v22 = vld [vmem:[%s1 + $0x1] sm:$0x1]
  %v23 = vmul.f32 %v21, 1.442695
  %v24 = vpow.pop %v23
  %v25 = vmul.f32 %v22, 1.442695
  %v26 = vpow.pop %v25
  %v29 = vperm.slane %v24, 0
  %v30 = vperm.slane %v26, 0
  %v33 = vmul.f32 %v17, %v29
  %v34 = vmul.f32 %v18, %v29
  %v35 = vmul.f32 %v19, %v30
  %v36 = vmul.f32 %v20, %v30
  %v37 = vld [vmem:[%s2] sm:$0x1]
  %v38 = vld [vmem:[%s2 + $0x1] sm:$0x1]
  %v41 = vperm.slane %v37, 0
  %v42 = vperm.slane %v38, 0
  %v45 = vadd.f32 %v33, %v41
  %v46 = vadd.f32 %v34, %v41
  %v47 = vadd.f32 %v35, %v42
  %v48 = vadd.f32 %v36, %v42
  %v49 = vld [vmem:[%s3] sm:$0xff]
  %v50 = vld [vmem:[%s3 + $0x8] sm:$0xff]
  %v51 = vld [vmem:[%s3 + $0x10] sm:$0xff]
  %v52 = vld [vmem:[%s3 + $0x18] sm:$0xff]
  %v53 = vld [vmem:[%s3 + $0x20] sm:$0xff]
  %v54 = vld [vmem:[%s3 + $0x28] sm:$0xff]
  %vm55 = vcmask 195584
  %v57 = vsel %vm55, %v45, 0
  %v60 = vsel %vm55, %v46, 0
  %v63 = vsel %vm55, %v49, 0
  %v66 = vsel %vm55, %v50, 0
  %v69 = vsel %vm55, %v51, 0
  %71 = vmatpush.xpose.msra.mxu0 0.0
  %72 = vmatpush.xpose.msra.mxu0 0.0
  %73 = vmatpush.xpose.msra.mxu0 0.0
  %74 = vmatpush.xpose.msra.mxu0 0.0
  %75 = vmatpush.xpose.msra.mxu0 0.0
  %76 = vmatpush.xpose.msra.mxu0 0.0
  %77 = vmatpush.xpose.msra.mxu0 0.0
  %78 = vmatpush.xpose.msra.mxu0 0.0
  %79 = vmatpush.xpose.msra.mxu0 0.0
  %80 = vmatpush.xpose.msra.mxu0 0.0
  %81 = vmatpush.xpose.msra.mxu0 0.0
  %82 = vmatpush.xpose.msra.mxu0 0.0
  %83 = vmatpush.xpose.msra.mxu0 0.0
  %84 = vmatpush.xpose.msra.mxu0 %v69
  %85 = vmatpush.xpose.msra.mxu0 %v66
  %86 = vmatpush.xpose.msra.mxu0 %v63
  %87 = vmatmul.f32.gmra.mxu0 %v57
  %v88 = vpop.f32.mrf.mxu0
  %v89 = vadd.f32 0.0, %v88
  %90 = vmatmul.f32.gmra.mxu0 %v60
  %v91 = vpop.f32.mrf.mxu0
  %v92 = vadd.f32 0.0, %v91
  %93 = vdwg.mxu0
  %v95 = vsel %vm55, %v47, 0
  %v98 = vsel %vm55, %v48, 0
  %v101 = vsel %vm55, %v52, 0
  %v104 = vsel %vm55, %v53, 0
  %v107 = vsel %vm55, %v54, 0
  %109 = vmatpush.xpose.msra.mxu0 0.0
  %110 = vmatpush.xpose.msra.mxu0 0.0
  %111 = vmatpush.xpose.msra.mxu0 0.0
  %112 = vmatpush.xpose.msra.mxu0 0.0
  %113 = vmatpush.xpose.msra.mxu0 0.0
  %114 = vmatpush.xpose.msra.mxu0 0.0
  %115 = vmatpush.xpose.msra.mxu0 0.0
  %116 = vmatpush.xpose.msra.mxu0 0.0
  %117 = vmatpush.xpose.msra.mxu0 0.0
  %118 = vmatpush.xpose.msra.mxu0 0.0
  %119 = vmatpush.xpose.msra.mxu0 0.0
  %120 = vmatpush.xpose.msra.mxu0 0.0
  %121 = vmatpush.xpose.msra.mxu0 0.0
  %122 = vmatpush.xpose.msra.mxu0 %v107
  %123 = vmatpush.xpose.msra.mxu0 %v104
  %124 = vmatpush.xpose.msra.mxu0 %v101
  %125 = vmatmul.f32.gmra.mxu0 %v95
  %v126 = vpop.f32.mrf.mxu0
  %v127 = vadd.f32 0.0, %v126
  %128 = vmatmul.f32.gmra.mxu0 %v98
  %v129 = vpop.f32.mrf.mxu0
  %v130 = vadd.f32 0.0, %v129
  %131 = vdwg.mxu0
  %132 = vst.msk [vmem:[%s4] sm:$0xff] %vm55, %v89
  %133 = vst.msk [vmem:[%s4 + $0x8] sm:$0xff] %vm55, %v92
  %134 = vst.msk [vmem:[%s4 + $0x10] sm:$0xff] %vm55, %v127
  %135 = vst.msk [vmem:[%s4 + $0x18] sm:$0xff] %vm55, %v130
  // Predicated region
  $region18: #{_lambda_.57} parent=0 // pred_check
    _
  $region19: #{_lambda_.57} parent=0 // pred_check_branch
    %137 = sbr.rel (0) target = $region21
  $region20: #{_lambda_.57} parent=0 // pred_region
    _
  $region21: #{_lambda_.57} parent=0 // pred_fallthru
    _
  // Predicated region
  $region22: #{_lambda_.57} parent=0 // pred_check
    _
  $region23: #{_lambda_.57} parent=0 // pred_check_branch
    %139 = sbr.rel (0) target = $region25
  $region24: #{_lambda_.57} parent=0 // pred_region
    _
  $region25: #{_lambda_.57} parent=0 // pred_fallthru
    _

// kernel: _lambda_.48
$region0: #{_lambda_.48}
  #allocation0 [shape = 'u32[]', space=smem, size = 0x4, offset = 0x4, fixed_abs, tag = 'smem constant byte address 0x4 - core index']
  #allocation1 [shape = 'u32[72,128]{1,0:T(1,128)}', space=vmem, size = 0x9000, scoped, tag = 'internal scratch']
  %s0 = inlined_call_operand.vmem [shape: bf16[128,54], index: 0, kind: input, shape index: {}]
  %s1 = inlined_call_operand.vmem [shape: bf16[54,128], index: 1, kind: input, shape index: {}]
  %s2 = inlined_call_operand.vmem [shape: f32[1,128], index: 2, kind: input, shape index: {}]
  %s3 = inlined_call_operand.vmem [shape: f32[128,128], index: 3, kind: output, shape index: {}]
  %s4 = sld [smem:[#allocation0]]
  $region22: #{_lambda_.48} parent=0
    _
  %s6 = ssub.s32 1, %s4
  %s7 = scalar_select 0, %s6, %s4
  // Predicated region
  $region2: #{_lambda_.48} parent=0 // pred_check
    _
  $region3: #{_lambda_.48} parent=0 // pred_check_branch
    %9 = sbr.rel (0) target = $region5
  $region4: #{_lambda_.48} parent=0 // pred_region
    _
  $region5: #{_lambda_.48} parent=0 // pred_fallthru
    _
  // Predicated region
  $region6: #{_lambda_.48} parent=0 // pred_check
    _
  $region7: #{_lambda_.48} parent=0 // pred_check_branch
    %11 = sbr.rel (0) target = $region9
  $region8: #{_lambda_.48} parent=0 // pred_region
    _
  $region9: #{_lambda_.48} parent=0 // pred_fallthru
    _
  // Predicated region
  $region10: #{_lambda_.48} parent=0 // pred_check
    _
  $region11: #{_lambda_.48} parent=0 // pred_check_branch
    %13 = sbr.rel (0) target = $region13
  $region12: #{_lambda_.48} parent=0 // pred_region
    _
  $region13: #{_lambda_.48} parent=0 // pred_fallthru
    _
  %v15 = vld [vmem:[%s0] sm:$0xf]
  %v16 = vld [vmem:[%s0 + $0x4] sm:$0xf]
  %v17 = vld [vmem:[%s0 + $0x8] sm:$0xf]
  %v18 = vld [vmem:[%s0 + $0xc] sm:$0xf]
  %v19 = vld [vmem:[%s0 + $0x10] sm:$0xf]
  %v20 = vld [vmem:[%s0 + $0x14] sm:$0xf]
  %v21 = vld [vmem:[%s0 + $0x18] sm:$0xf]
  %v22 = vld [vmem:[%s0 + $0x1c] sm:$0xf]
  %v23 = vld [vmem:[%s0 + $0x20] sm:$0xf]
  %v24 = vld [vmem:[%s0 + $0x24] sm:$0xf]
  %v25 = vld [vmem:[%s0 + $0x28] sm:$0xf]
  %v26 = vld [vmem:[%s0 + $0x2c] sm:$0xf]
  %v27 = vld [vmem:[%s0 + $0x30] sm:$0xf]
  %v28 = vld [vmem:[%s0 + $0x34] sm:$0xf]
  %v29 = vld [vmem:[%s0 + $0x38] sm:$0xf]
  %v30 = vld [vmem:[%s0 + $0x3c] sm:$0xf]
  %v31 = vld [vmem:[%s1] sm:$0xf]
  %v32 = vld [vmem:[%s1 + $0x4] sm:$0xf]
  %v33 = vld [vmem:[%s1 + $0x8] sm:$0xf]
  %v34 = vld [vmem:[%s1 + $0xc] sm:$0xf]
  %v35 = vld [vmem:[%s1 + $0x10] sm:$0xf]
  %v36 = vld [vmem:[%s1 + $0x14] sm:$0xf]
  %v37 = vld [vmem:[%s1 + $0x18] sm:$0x7]
  %v38 = vld [vmem:[%s2] sm:$0x1]
  %v40 = vperm.slane %v38, 0
  %v58 = vunpack.c.l.b16 %v15
  %v59 = vunpack.c.l.b16 %v16
  %v60 = vunpack.c.l.b16 %v17
  %v61 = vunpack.c.l.b16 %v18
  %v62 = vunpack.c.l.b16 %v19
  %v63 = vunpack.c.l.b16 %v20
  %v64 = vunpack.c.l.b16 %v21
  %v65 = vunpack.c.l.b16 %v22
  %v66 = vunpack.c.l.b16 %v23
  %v67 = vunpack.c.l.b16 %v24
  %v68 = vunpack.c.l.b16 %v25
  %v69 = vunpack.c.l.b16 %v26
  %v70 = vunpack.c.l.b16 %v27
  %v71 = vunpack.c.l.b16 %v28
  %v72 = vunpack.c.l.b16 %v29
  %v73 = vunpack.c.l.b16 %v30
  %v74 = vpack.c.b16 %v59, %v58
  %v75 = vpack.c.b16 %v61, %v60
  %v76 = vpack.c.b16 %v63, %v62
  %v77 = vpack.c.b16 %v65, %v64
  %v78 = vpack.c.b16 %v67, %v66
  %v79 = vpack.c.b16 %v69, %v68
  %v80 = vpack.c.b16 %v71, %v70
  %v81 = vpack.c.b16 %v73, %v72
  %v89 = vunpack.c.l.b16 %v31
  %v90 = vunpack.c.l.b16 %v32
  %v91 = vunpack.c.l.b16 %v33
  %v92 = vunpack.c.l.b16 %v34
  %v93 = vunpack.c.l.b16 %v35
  %v94 = vunpack.c.l.b16 %v36
  %v95 = vunpack.c.l.b16 %v37
  %v96 = vpack.c.b16 %v90, %v89
  %v97 = vpack.c.b16 %v92, %v91
  %v98 = vpack.c.b16 %v94, %v93
  %v99 = vpack.c.b16 %v95, %v95
  %vm103 = vcmask 441344
  %v105 = vsel %vm103, %v74, 0
  %v108 = vsel %vm103, %v75, 0
  %v111 = vsel %vm103, %v76, 0
  %v114 = vsel %vm103, %v77, 0
  %v117 = vsel %vm103, %v78, 0
  %v120 = vsel %vm103, %v79, 0
  %v123 = vsel %vm103, %v80, 0
  %v126 = vsel %vm103, %v81, 0
  %vm128 = vcmask 1042432
  %v130 = vsel %vm128, %v99, 0
  %132 = vmatpush.bf16.msra.mxu0 0
  %133 = vmatpush.bf16.msra.mxu0 0
  %134 = vmatpush.bf16.msra.mxu0 0
  %135 = vmatpush.bf16.msra.mxu0 0
  %136 = vmatpush.bf16.msra.mxu0 %v130
  %137 = vmatpush.bf16.msra.mxu0 %v98
  %138 = vmatpush.bf16.msra.mxu0 %v97
  %139 = vmatpush.bf16.msra.mxu0 %v96
  %140 = vmatmul.bf16.gmra.mxu0 %v105
  %v141 = vpop.f32.mrf.mxu0
  %v142 = vadd.f32 %v40, %v141
  %v143 = vpop.f32.mrf.mxu0
  %v144 = vadd.f32 %v40, %v143
  %145 = vmatmul.bf16.gmra.mxu0 %v108
  %v146 = vpop.f32.mrf.mxu0
  %v147 = vadd.f32 %v40, %v146
  %v148 = vpop.f32.mrf.mxu0
  %v149 = vadd.f32 %v40, %v148
  %150 = vmatmul.bf16.gmra.mxu0 %v111
  %v151 = vpop.f32.mrf.mxu0
  %v152 = vadd.f32 %v40, %v151
  %v153 = vpop.f32.mrf.mxu0
  %v154 = vadd.f32 %v40, %v153
  %155 = vmatmul.bf16.gmra.mxu0 %v114
  %v156 = vpop.f32.mrf.mxu0
  %v157 = vadd.f32 %v40, %v156
  %v158 = vpop.f32.mrf.mxu0
  %v159 = vadd.f32 %v40, %v158
  %160 = vmatmul.bf16.gmra.mxu0 %v117
  %v161 = vpop.f32.mrf.mxu0
  %v162 = vadd.f32 %v40, %v161
  %v163 = vpop.f32.mrf.mxu0
  %v164 = vadd.f32 %v40, %v163
  %165 = vmatmul.bf16.gmra.mxu0 %v120
  %v166 = vpop.f32.mrf.mxu0
  %v167 = vadd.f32 %v40, %v166
  %v168 = vpop.f32.mrf.mxu0
  %v169 = vadd.f32 %v40, %v168
  %170 = vmatmul.bf16.gmra.mxu0 %v123
  %v171 = vpop.f32.mrf.mxu0
  %v172 = vadd.f32 %v40, %v171
  %v173 = vpop.f32.mrf.mxu0
  %v174 = vadd.f32 %v40, %v173
  %175 = vmatmul.bf16.gmra.mxu0 %v126
  %v176 = vpop.f32.mrf.mxu0
  %v177 = vadd.f32 %v40, %v176
  %v178 = vpop.f32.mrf.mxu0
  %v179 = vadd.f32 %v40, %v178
  %180 = vdwg.mxu0
  %181 = vst [vmem:[%s3] sm:$0xff] %v142
  %182 = vst [vmem:[%s3 + $0x8] sm:$0xff] %v144
  %183 = vst [vmem:[%s3 + $0x10] sm:$0xff] %v147
  %184 = vst [vmem:[%s3 + $0x18] sm:$0xff] %v149
  %185 = vst [vmem:[%s3 + $0x20] sm:$0xff] %v152
  %186 = vst [vmem:[%s3 + $0x28] sm:$0xff] %v154
  %187 = vst [vmem:[%s3 + $0x30] sm:$0xff] %v157
  %188 = vst [vmem:[%s3 + $0x38] sm:$0xff] %v159
  %189 = vst [vmem:[%s3 + $0x40] sm:$0xff] %v162
  %190 = vst [vmem:[%s3 + $0x48] sm:$0xff] %v164
  %191 = vst [vmem:[%s3 + $0x50] sm:$0xff] %v167
  %192 = vst [vmem:[%s3 + $0x58] sm:$0xff] %v169
  %193 = vst [vmem:[%s3 + $0x60] sm:$0xff] %v172
  %194 = vst [vmem:[%s3 + $0x68] sm:$0xff] %v174
  %195 = vst [vmem:[%s3 + $0x70] sm:$0xff] %v177
  %196 = vst [vmem:[%s3 + $0x78] sm:$0xff] %v179
  // Predicated region
  $region14: #{_lambda_.48} parent=0 // pred_check
    _
  $region15: #{_lambda_.48} parent=0 // pred_check_branch
    %198 = sbr.rel (0) target = $region17
  $region16: #{_lambda_.48} parent=0 // pred_region
    _
  $region17: #{_lambda_.48} parent=0 // pred_fallthru
    _
  // Predicated region
  $region18: #{_lambda_.48} parent=0 // pred_check
    _
  $region19: #{_lambda_.48} parent=0 // pred_check_branch
    %200 = sbr.rel (0) target = $region21
  $region20: #{_lambda_.48} parent=0 // pred_region
    _
  $region21: #{_lambda_.48} parent=0 // pred_fallthru
    _

// kernel: _lambda_.41
$region0: #{_lambda_.41}
  #allocation0 [shape = 'u32[]', space=smem, size = 0x4, offset = 0x4, fixed_abs, tag = 'smem constant byte address 0x4 - core index']
  #allocation1 [shape = 'u32[72,128]{1,0:T(1,128)}', space=vmem, size = 0x9000, scoped, tag = 'internal scratch']
  %s0 = inlined_call_operand.vmem [shape: bf16[512,27], index: 0, kind: input, shape index: {}]
  %s1 = inlined_call_operand.vmem [shape: bf16[27,128], index: 1, kind: input, shape index: {}]
  %s2 = inlined_call_operand.vmem [shape: f32[1,128], index: 2, kind: input, shape index: {}]
  %s3 = inlined_call_operand.vmem [shape: f32[512,128], index: 3, kind: output, shape index: {}]
  %s4 = sld [smem:[#allocation0]]
  $region45: #{_lambda_.41} parent=0
    _
  %s6 = ssub.s32 1, %s4
  %s7 = scalar_select 0, %s6, %s4
  loop: start=0, step=1, limit=4
  $region2: #{_lambda_.41} parent=0 // loop_pre_header
    _
  $region3: #{_lambda_.41} parent=0 // loop_header
    %s9 = sphi 0, %s13
    %p10 = scmp.ge.s32.totalorder %s9, 4
    %s16 = sphi 0, %s28
    %s17 = sphi 0, %s24
    %s18 = sphi 0, %s16
    %s19 = sphi 0, %s17
    %s20 = sphi 0, %s18
    %s21 = sphi 0, %s19
    %s31 = sphi 0, %s33
    %s34 = sphi 0, %s31
    %s35 = sphi 0, %s34
    %s51 = sphi 0, %s35
    %s57 = sphi 0, %s59
    %s60 = sphi 0, %s57
    %s61 = sphi 0, %s60
    %s77 = sphi 0, %s61
    %s83 = sphi 0, %s85
    %s86 = sphi 0, %s83
    %s87 = sphi 0, %s86
    %s103 = sphi 0, %s87
    %s111 = sphi 0, %s113
    %s114 = sphi 0, %s111
    %s115 = sphi 0, %s114
    %s131 = sphi 0, %s115
  $region4: #{_lambda_.41} parent=0 // loop_header_branch
    %12 = sbr.rel (%p10) target = $region8
  $region5: #{_lambda_.41} parent=0 // loop_body
    %s14 = ssub.s32 %s9, 1
    %s15 = ssub.s32 %s9, 2
    %s22 = sadd.s32 1, %s17
    %p23 = scmp.ge.s32.totalorder %s22, 1
    %s24 = scalar_select %p23, 0, %s22
    %s25 = sadd.s32 1, %s16
    %s26 = scalar_select %p23, %s25, %s16
    %p27 = scmp.ge.s32.totalorder %s26, 2
    %s28 = scalar_select %p27, 0, %s26
    %s29 = ssub.s32 %s16, %s28
    %p30 = scmp.eq.s32.totalorder %s29, 0
    %s32 = sadd.s32 %s31, 1
    %s33 = scalar_select %p30, %s31, %s32
    %p36 = pneg %p30
    %p37 = scmp.eq.s32.totalorder %s9, 1
    %p38 = por %p36, %p37
    %p39 = scmp.ne.s32.totalorder %s31, %s34
    %p40 = scmp.eq.s32.totalorder %s9, 0
    %p41 = por %p39, %p40
    %p42 = scmp.ne.s32.totalorder %s31, %s34
    %p43 = scmp.eq.s32.totalorder %s14, 1
    %p44 = por %p42, %p43
    %p45 = scmp.ne.s32.totalorder %s34, %s35
    %p46 = scmp.eq.s32.totalorder %s14, 0
    %p47 = por %p45, %p46
    %p48 = scmp.ne.s32.totalorder %s34, %s35
    %p49 = scmp.eq.s32.totalorder %s15, 1
    %p50 = por %p48, %p49
    %p52 = scmp.ne.s32.totalorder %s35, %s51
    %p53 = scmp.eq.s32.totalorder %s15, 0
    %p54 = por %p52, %p53
    %s55 = ssub.s32 %s17, %s24
    %p56 = scmp.eq.s32.totalorder %s55, 0
    %s58 = sadd.s32 %s57, 1
    %s59 = scalar_select %p56, %s57, %s58
    %p62 = pneg %p56
    %p63 = scmp.eq.s32.totalorder %s9, 1
    %p64 = por %p62, %p63
    %p65 = scmp.ne.s32.totalorder %s57, %s60
    %p66 = scmp.eq.s32.totalorder %s9, 0
    %p67 = por %p65, %p66
    %p68 = scmp.ne.s32.totalorder %s57, %s60
    %p69 = scmp.eq.s32.totalorder %s14, 1
    %p70 = por %p68, %p69
    %p71 = scmp.ne.s32.totalorder %s60, %s61
    %p72 = scmp.eq.s32.totalorder %s14, 0
    %p73 = por %p71, %p72
    %p74 = scmp.ne.s32.totalorder %s60, %s61
    %p75 = scmp.eq.s32.totalorder %s15, 1
    %p76 = por %p74, %p75
    %p78 = scmp.ne.s32.totalorder %s61, %s77
    %p79 = scmp.eq.s32.totalorder %s15, 0
    %p80 = por %p78, %p79
    %s81 = ssub.s32 %s17, %s24
    %p82 = scmp.eq.s32.totalorder %s81, 0
    %s84 = sadd.s32 %s83, 1
    %s85 = scalar_select %p82, %s83, %s84
    %p88 = pneg %p82
    %p89 = scmp.eq.s32.totalorder %s9, 1
    %p90 = por %p88, %p89
    %p91 = scmp.ne.s32.totalorder %s83, %s86
    %p92 = scmp.eq.s32.totalorder %s9, 0
    %p93 = por %p91, %p92
    %p94 = scmp.ne.s32.totalorder %s83, %s86
    %p95 = scmp.eq.s32.totalorder %s14, 1
    %p96 = por %p94, %p95
    %p97 = scmp.ne.s32.totalorder %s86, %s87
    %p98 = scmp.eq.s32.totalorder %s14, 0
    %p99 = por %p97, %p98
    %p100 = scmp.ne.s32.totalorder %s86, %s87
    %p101 = scmp.eq.s32.totalorder %s15, 1
    %p102 = por %p100, %p101
    %p104 = scmp.ne.s32.totalorder %s87, %s103
    %p105 = scmp.eq.s32.totalorder %s15, 0
    %p106 = por %p104, %p105
    %s107 = ssub.s32 %s16, %s28
    %s108 = ssub.s32 %s17, %s24
    %s109 = sor.u32 %s107, %s108
    %p110 = scmp.eq.s32.totalorder %s109, 0
    %s112 = sadd.s32 %s111, 1
    %s113 = scalar_select %p110, %s111, %s112
    %p116 = pneg %p110
    %p117 = scmp.eq.s32.totalorder %s9, 1
    %p118 = por %p116, %p117
    %p119 = scmp.ne.s32.totalorder %s111, %s114
    %p120 = scmp.eq.s32.totalorder %s9, 0
    %p121 = por %p119, %p120
    %p122 = scmp.ne.s32.totalorder %s111, %s114
    %p123 = scmp.eq.s32.totalorder %s14, 1
    %p124 = por %p122, %p123
    %p125 = scmp.ne.s32.totalorder %s114, %s115
    %p126 = scmp.eq.s32.totalorder %s14, 0
    %p127 = por %p125, %p126
    %p128 = scmp.ne.s32.totalorder %s114, %s115
    %p129 = scmp.eq.s32.totalorder %s15, 1
    %p130 = por %p128, %p129
    %p132 = scmp.ne.s32.totalorder %s115, %s131
    %p133 = scmp.eq.s32.totalorder %s15, 0
    %p134 = por %p132, %p133
    %p135 = scmp.le.s32.totalorder 1, %s9
    %p136 = scmp.lt.s32.totalorder %s9, 3
    %p137 = pnand %p135, %p136
    %p138 = pneg %p137
    // Predicated region
    $region9: #{_lambda_.41} parent=5 // pred_check
      _
    $region10: #{_lambda_.41} parent=5 // pred_check_branch
      %140 = sbr.rel (%p137) target = $region12
    $region11: #{_lambda_.41} parent=5 // pred_region
      %s141 = ssub.s32 %s9, 1
      // Predicated region
      $region13: #{_lambda_.41} parent=11 // pred_check
        %p142 = pneg %p73
      $region14: #{_lambda_.41} parent=11 // pred_check_branch
        %144 = sbr.rel (%p142) target = $region16
      $region15: #{_lambda_.41} parent=11 // pred_region
        %p145 = scmp.lt.s32.totalorder %s19, 0
        %s146 = scalar_select %p145, %s19, 0
        %s147 = smul.addr %s146, 4
        %s148 = scalar_lea.vmem %s1, %s147
      $region16: #{_lambda_.41} parent=11 // pred_fallthru
        _
      // Predicated region
      $region17: #{_lambda_.41} parent=11 // pred_check
        %p149 = pneg %p99
      $region18: #{_lambda_.41} parent=11 // pred_check_branch
        %151 = sbr.rel (%p149) target = $region20
      $region19: #{_lambda_.41} parent=11 // pred_region
        %p152 = scmp.lt.s32.totalorder %s19, 0
        %s153 = scalar_select %p152, %s19, 0
        %s154 = scalar_lea.vmem %s2, %s153
      $region20: #{_lambda_.41} parent=11 // pred_fallthru
        _
    $region12: #{_lambda_.41} parent=5 // pred_fallthru
      _
    %p155 = scmp.lt.s32.totalorder %s9, 2
    // Predicated region
    $region21: #{_lambda_.41} parent=5 // pred_check
      %p156 = pneg %p155
    $region22: #{_lambda_.41} parent=5 // pred_check_branch
      %158 = sbr.rel (%p156) target = $region24
    $region23: #{_lambda_.41} parent=5 // pred_region
      // Predicated region
      $region25: #{_lambda_.41} parent=23 // pred_check
        %p159 = pneg %p41
      $region26: #{_lambda_.41} parent=23 // pred_check_branch
        %161 = sbr.rel (%p159) target = $region28
      $region27: #{_lambda_.41} parent=23 // pred_region
        %s162 = smul.u32 32, %s16
        %p163 = scmp.lt.s32.totalorder %s162, 63
        %s164 = scalar_select %p163, %s162, 63
        %s165 = smul.addr %s164, 4
        %s166 = scalar_lea.vmem %s0, %s165
        %s167 = smul.u32 32, %s16
      $region28: #{_lambda_.41} parent=23 // pred_fallthru
        _
    $region24: #{_lambda_.41} parent=5 // pred_fallthru
      _
    %p168 = scmp.le.s32.totalorder 1, %s9
    %p169 = scmp.lt.s32.totalorder %s9, 3
    %p170 = pnand %p168, %p169
    %p171 = pneg %p170
    // Predicated region
    $region29: #{_lambda_.41} parent=5 // pred_check
      _
    $region30: #{_lambda_.41} parent=5 // pred_check_branch
      %173 = sbr.rel (%p170) target = $region32
    $region31: #{_lambda_.41} parent=5 // pred_region
      %s174 = ssub.s32 %s9, 1
      %s175 = smul.u32 32, %s18
      %p176 = scmp.lt.s32.totalorder %s175, 63
      %s177 = scalar_select %p176, %s175, 63
      %s178 = smul.addr %s177, 4
      %s179 = scalar_lea.vmem %s0, %s178
      %p180 = pneg %p47
      %p181 = pneg %p44
      %p182 = scmp.lt.s32.totalorder %s19, 0
      %s183 = scalar_select %p182, %s19, 0
      %s184 = smul.addr %s183, 4
      %s185 = scalar_lea.vmem %s1, %s184
      %p186 = pneg %p73
      %p187 = pneg %p70
      %p188 = scmp.lt.s32.totalorder %s19, 0
      %s189 = scalar_select %p188, %s19, 0
      %s190 = scalar_lea.vmem %s2, %s189
      %p191 = pneg %p99
      %p192 = pneg %p96
      %p193 = pneg %p127
      %p194 = pneg %p124
      %s195 = smul.u32 32, %s18
      %p196 = scmp.lt.s32.totalorder %s195, 63
      %s197 = scalar_select %p196, %s195, 63
      %p198 = scmp.lt.s32.totalorder %s19, 0
      %s199 = scalar_select %p198, %s19, 0
      %s200 = sadd.s32 %s199, %s197
      %s201 = smul.addr %s200, 8
      %s202 = scalar_lea.vmem %s3, %s201
      %s203 = smul.u32 32, %s18
      %p204 = scmp.lt.s32.totalorder %s203, 63
      %s205 = scalar_select %p204, %s203, 63
      %s206 = smul.addr %s205, 4
      %s207 = scalar_lea.vmem %s0, %s206
      %s208 = smul.u32 32, %s18
      %p209 = scmp.lt.s32.totalorder %s19, 0
      %s210 = scalar_select %p209, %s19, 0
      %s211 = smul.addr %s210, 4
      %s212 = scalar_lea.vmem %s1, %s211
      %p213 = scmp.lt.s32.totalorder %s19, 0
      %s214 = scalar_select %p213, %s19, 0
      %s215 = scalar_lea.vmem %s2, %s214
      %s216 = smul.u32 32, %s18
      %p217 = scmp.lt.s32.totalorder %s216, 63
      %s218 = scalar_select %p217, %s216, 63
      %p219 = scmp.lt.s32.totalorder %s19, 0
      %s220 = scalar_select %p219, %s19, 0
      %s221 = sadd.s32 %s220, %s218
      %s222 = smul.addr %s221, 8
      %s223 = scalar_lea.vmem %s3, %s222
      %s224 = smul.u32 32, %s18
      %v226 = vld [vmem:[%s207] sm:$0xf]
      %v227 = vld [vmem:[%s207 + $0x4] sm:$0xf]
      %v228 = vld [vmem:[%s207 + $0x8] sm:$0xf]
      %v229 = vld [vmem:[%s207 + $0xc] sm:$0xf]
      %v230 = vld [vmem:[%s207 + $0x10] sm:$0xf]
      %v231 = vld [vmem:[%s207 + $0x14] sm:$0xf]
      %v232 = vld [vmem:[%s207 + $0x18] sm:$0xf]
      %v233 = vld [vmem:[%s207 + $0x1c] sm:$0xf]
      %v234 = vld [vmem:[%s207 + $0x20] sm:$0xf]
      %v235 = vld [vmem:[%s207 + $0x24] sm:$0xf]
      %v236 = vld [vmem:[%s207 + $0x28] sm:$0xf]
      %v237 = vld [vmem:[%s207 + $0x2c] sm:$0xf]
      %v238 = vld [vmem:[%s207 + $0x30] sm:$0xf]
      %v239 = vld [vmem:[%s207 + $0x34] sm:$0xf]
      %v240 = vld [vmem:[%s207 + $0x38] sm:$0xf]
      %v241 = vld [vmem:[%s207 + $0x3c] sm:$0xf]
      %v242 = vld [vmem:[%s207 + $0x40] sm:$0xf]
      %v243 = vld [vmem:[%s207 + $0x44] sm:$0xf]
      %v244 = vld [vmem:[%s207 + $0x48] sm:$0xf]
      %v245 = vld [vmem:[%s207 + $0x4c] sm:$0xf]
      %v246 = vld [vmem:[%s207 + $0x50] sm:$0xf]
      %v247 = vld [vmem:[%s207 + $0x54] sm:$0xf]
      %v248 = vld [vmem:[%s207 + $0x58] sm:$0xf]
      %v249 = vld [vmem:[%s207 + $0x5c] sm:$0xf]
      %v250 = vld [vmem:[%s207 + $0x60] sm:$0xf]
      %v251 = vld [vmem:[%s207 + $0x64] sm:$0xf]
      %v252 = vld [vmem:[%s207 + $0x68] sm:$0xf]
      %v253 = vld [vmem:[%s207 + $0x6c] sm:$0xf]
      %v254 = vld [vmem:[%s207 + $0x70] sm:$0xf]
      %v255 = vld [vmem:[%s207 + $0x74] sm:$0xf]
      %v256 = vld [vmem:[%s207 + $0x78] sm:$0xf]
      %v257 = vld [vmem:[%s207 + $0x7c] sm:$0xf]
      %v258 = vld [vmem:[%s212] sm:$0xf]
      %v259 = vld [vmem:[%s212 + $0x4] sm:$0xf]
      %v260 = vld [vmem:[%s212 + $0x8] sm:$0xf]
      %v261 = vld [vmem:[%s212 + $0xc] sm:$0x3]
      %v262 = vld [vmem:[%s215] sm:$0x1]
      %v264 = vperm.slane %v262, 0
      %v298 = vunpack.c.l.b16 %v226
      %v299 = vunpack.c.l.b16 %v227
      %v300 = vunpack.c.l.b16 %v228
      %v301 = vunpack.c.l.b16 %v229
      %v302 = vunpack.c.l.b16 %v230
      %v303 = vunpack.c.l.b16 %v231
      %v304 = vunpack.c.l.b16 %v232
      %v305 = vunpack.c.l.b16 %v233
      %v306 = vunpack.c.l.b16 %v234
      %v307 = vunpack.c.l.b16 %v235
      %v308 = vunpack.c.l.b16 %v236
      %v309 = vunpack.c.l.b16 %v237
      %v310 = vunpack.c.l.b16 %v238
      %v311 = vunpack.c.l.b16 %v239
      %v312 = vunpack.c.l.b16 %v240
      %v313 = vunpack.c.l.b16 %v241
      %v314 = vunpack.c.l.b16 %v242
      %v315 = vunpack.c.l.b16 %v243
      %v316 = vunpack.c.l.b16 %v244
      %v317 = vunpack.c.l.b16 %v245
      %v318 = vunpack.c.l.b16 %v246
      %v319 = vunpack.c.l.b16 %v247
      %v320 = vunpack.c.l.b16 %v248
      %v321 = vunpack.c.l.b16 %v249
      %v322 = vunpack.c.l.b16 %v250
      %v323 = vunpack.c.l.b16 %v251
      %v324 = vunpack.c.l.b16 %v252
      %v325 = vunpack.c.l.b16 %v253
      %v326 = vunpack.c.l.b16 %v254
      %v327 = vunpack.c.l.b16 %v255
      %v328 = vunpack.c.l.b16 %v256
      %v329 = vunpack.c.l.b16 %v257
      %v330 = vpack.c.b16 %v299, %v298
      %v331 = vpack.c.b16 %v301, %v300
      %v332 = vpack.c.b16 %v303, %v302
      %v333 = vpack.c.b16 %v305, %v304
      %v334 = vpack.c.b16 %v307, %v306
      %v335 = vpack.c.b16 %v309, %v308
      %v336 = vpack.c.b16 %v311, %v310
      %v337 = vpack.c.b16 %v313, %v312
      %v338 = vpack.c.b16 %v315, %v314
      %v339 = vpack.c.b16 %v317, %v316
      %v340 = vpack.c.b16 %v319, %v318
      %v341 = vpack.c.b16 %v321, %v320
      %v342 = vpack.c.b16 %v323, %v322
      %v343 = vpack.c.b16 %v325, %v324
      %v344 = vpack.c.b16 %v327, %v326
      %v345 = vpack.c.b16 %v329, %v328
      %v350 = vunpack.c.l.b16 %v258
      %v351 = vunpack.c.l.b16 %v259
      %v352 = vunpack.c.l.b16 %v260
      %v353 = vunpack.c.l.b16 %v261
      %v354 = vpack.c.b16 %v351, %v350
      %v355 = vpack.c.b16 %v353, %v352
      %vm357 = vcmask 220160
      %v359 = vsel %vm357, %v330, 0
      %v362 = vsel %vm357, %v331, 0
      %v365 = vsel %vm357, %v332, 0
      %v368 = vsel %vm357, %v333, 0
      %v371 = vsel %vm357, %v334, 0
      %v374 = vsel %vm357, %v335, 0
      %v377 = vsel %vm357, %v336, 0
      %v380 = vsel %vm357, %v337, 0
      %v383 = vsel %vm357, %v338, 0
      %v386 = vsel %vm357, %v339, 0
      %v389 = vsel %vm357, %v340, 0
      %v392 = vsel %vm357, %v341, 0
      %v395 = vsel %vm357, %v342, 0
      %v398 = vsel %vm357, %v343, 0
      %v401 = vsel %vm357, %v344, 0
      %v404 = vsel %vm357, %v345, 0
      %vm406 = vcmask 1044480
      %vm407 = vcmask 1045504
      %v408 = vsel %vm406, 4294967295, 65535
      %v409 = vsel %vm407, %v408, 0
      %v411 = vand.u32 %v355, %v409
      %413 = vmatpush.bf16.msra.mxu0 0
      %414 = vmatpush.bf16.msra.mxu0 0
      %415 = vmatpush.bf16.msra.mxu0 0
      %416 = vmatpush.bf16.msra.mxu0 0
      %417 = vmatpush.bf16.msra.mxu0 0
      %418 = vmatpush.bf16.msra.mxu0 0
      %419 = vmatpush.bf16.msra.mxu0 %v411
      %420 = vmatpush.bf16.msra.mxu0 %v354
      %421 = vmatmul.bf16.gmra.mxu0 %v359
      %v422 = vpop.f32.mrf.mxu0
      %v423 = vadd.f32 %v264, %v422
      %v424 = vpop.f32.mrf.mxu0
      %v425 = vadd.f32 %v264, %v424
      %426 = vmatmul.bf16.gmra.mxu0 %v362
      %v427 = vpop.f32.mrf.mxu0
      %v428 = vadd.f32 %v264, %v427
      %v429 = vpop.f32.mrf.mxu0
      %v430 = vadd.f32 %v264, %v429
      %431 = vmatmul.bf16.gmra.mxu0 %v365
      %v432 = vpop.f32.mrf.mxu0
      %v433 = vadd.f32 %v264, %v432
      %v434 = vpop.f32.mrf.mxu0
      %v435 = vadd.f32 %v264, %v434
      %436 = vmatmul.bf16.gmra.mxu0 %v368
      %v437 = vpop.f32.mrf.mxu0
      %v438 = vadd.f32 %v264, %v437
      %v439 = vpop.f32.mrf.mxu0
      %v440 = vadd.f32 %v264, %v439
      %441 = vmatmul.bf16.gmra.mxu0 %v371
      %v442 = vpop.f32.mrf.mxu0
      %v443 = vadd.f32 %v264, %v442
      %v444 = vpop.f32.mrf.mxu0
      %v445 = vadd.f32 %v264, %v444
      %446 = vmatmul.bf16.gmra.mxu0 %v374
      %v447 = vpop.f32.mrf.mxu0
      %v448 = vadd.f32 %v264, %v447
      %v449 = vpop.f32.mrf.mxu0
      %v450 = vadd.f32 %v264, %v449
      %451 = vmatmul.bf16.gmra.mxu0 %v377
      %v452 = vpop.f32.mrf.mxu0
      %v453 = vadd.f32 %v264, %v452
      %v454 = vpop.f32.mrf.mxu0
      %v455 = vadd.f32 %v264, %v454
      %456 = vmatmul.bf16.gmra.mxu0 %v380
      %v457 = vpop.f32.mrf.mxu0
      %v458 = vadd.f32 %v264, %v457
      %v459 = vpop.f32.mrf.mxu0
      %v460 = vadd.f32 %v264, %v459
      %461 = vmatmul.bf16.gmra.mxu0 %v383
      %v462 = vpop.f32.mrf.mxu0
      %v463 = vadd.f32 %v264, %v462
      %v464 = vpop.f32.mrf.mxu0
      %v465 = vadd.f32 %v264, %v464
      %466 = vmatmul.bf16.gmra.mxu0 %v386
      %v467 = vpop.f32.mrf.mxu0
      %v468 = vadd.f32 %v264, %v467
      %v469 = vpop.f32.mrf.mxu0
      %v470 = vadd.f32 %v264, %v469
      %471 = vmatmul.bf16.gmra.mxu0 %v389
      %v472 = vpop.f32.mrf.mxu0
      %v473 = vadd.f32 %v264, %v472
      %v474 = vpop.f32.mrf.mxu0
      %v475 = vadd.f32 %v264, %v474
      %476 = vmatmul.bf16.gmra.mxu0 %v392
      %v477 = vpop.f32.mrf.mxu0
      %v478 = vadd.f32 %v264, %v477
      %v479 = vpop.f32.mrf.mxu0
      %v480 = vadd.f32 %v264, %v479
      %481 = vmatmul.bf16.gmra.mxu0 %v395
      %v482 = vpop.f32.mrf.mxu0
      %v483 = vadd.f32 %v264, %v482
      %v484 = vpop.f32.mrf.mxu0
      %v485 = vadd.f32 %v264, %v484
      %486 = vmatmul.bf16.gmra.mxu0 %v398
      %v487 = vpop.f32.mrf.mxu0
      %v488 = vadd.f32 %v264, %v487
      %v489 = vpop.f32.mrf.mxu0
      %v490 = vadd.f32 %v264, %v489
      %491 = vmatmul.bf16.gmra.mxu0 %v401
      %v492 = vpop.f32.mrf.mxu0
      %v493 = vadd.f32 %v264, %v492
      %v494 = vpop.f32.mrf.mxu0
      %v495 = vadd.f32 %v264, %v494
      %496 = vmatmul.bf16.gmra.mxu0 %v404
      %v497 = vpop.f32.mrf.mxu0
      %v498 = vadd.f32 %v264, %v497
      %v499 = vpop.f32.mrf.mxu0
      %v500 = vadd.f32 %v264, %v499
      %501 = vdwg.mxu0
      %v502 = vmax.f32 %v423, 0.0
      %v503 = vmax.f32 %v425, 0.0
      %v504 = vmax.f32 %v428, 0.0
      %v505 = vmax.f32 %v430, 0.0
      %v506 = vmax.f32 %v433, 0.0
      %v507 = vmax.f32 %v435, 0.0
      %v508 = vmax.f32 %v438, 0.0
      %v509 = vmax.f32 %v440, 0.0
      %v510 = vmax.f32 %v443, 0.0
      %v511 = vmax.f32 %v445, 0.0
      %v512 = vmax.f32 %v448, 0.0
      %v513 = vmax.f32 %v450, 0.0
      %v514 = vmax.f32 %v453, 0.0
      %v515 = vmax.f32 %v455, 0.0
      %v516 = vmax.f32 %v458, 0.0
      %v517 = vmax.f32 %v460, 0.0
      %v518 = vmax.f32 %v463, 0.0
      %v519 = vmax.f32 %v465, 0.0
      %v520 = vmax.f32 %v468, 0.0
      %v521 = vmax.f32 %v470, 0.0
      %v522 = vmax.f32 %v473, 0.0
      %v523 = vmax.f32 %v475, 0.0
      %v524 = vmax.f32 %v478, 0.0
      %v525 = vmax.f32 %v480, 0.0
      %v526 = vmax.f32 %v483, 0.0
      %v527 = vmax.f32 %v485, 0.0
      %v528 = vmax.f32 %v488, 0.0
      %v529 = vmax.f32 %v490, 0.0
      %v530 = vmax.f32 %v493, 0.0
      %v531 = vmax.f32 %v495, 0.0
      %v532 = vmax.f32 %v498, 0.0
      %v533 = vmax.f32 %v500, 0.0
      %534 = vst [vmem:[%s223] sm:$0xff] %v502
      %535 = vst [vmem:[%s223 + $0x8] sm:$0xff] %v503
      %536 = vst [vmem:[%s223 + $0x10] sm:$0xff] %v504
      %537 = vst [vmem:[%s223 + $0x18] sm:$0xff] %v505
      %538 = vst [vmem:[%s223 + $0x20] sm:$0xff] %v506
      %539 = vst [vmem:[%s223 + $0x28] sm:$0xff] %v507
      %540 = vst [vmem:[%s223 + $0x30] sm:$0xff] %v508
      %541 = vst [vmem:[%s223 + $0x38] sm:$0xff] %v509
      %542 = vst [vmem:[%s223 + $0x40] sm:$0xff] %v510
      %543 = vst [vmem:[%s223 + $0x48] sm:$0xff] %v511
      %544 = vst [vmem:[%s223 + $0x50] sm:$0xff] %v512
      %545 = vst [vmem:[%s223 + $0x58] sm:$0xff] %v513
      %546 = vst [vmem:[%s223 + $0x60] sm:$0xff] %v514
      %547 = vst [vmem:[%s223 + $0x68] sm:$0xff] %v515
      %548 = vst [vmem:[%s223 + $0x70] sm:$0xff] %v516
      %549 = vst [vmem:[%s223 + $0x78] sm:$0xff] %v517
      %550 = vst [vmem:[%s223 + $0x80] sm:$0xff] %v518
      %551 = vst [vmem:[%s223 + $0x88] sm:$0xff] %v519
      %552 = vst [vmem:[%s223 + $0x90] sm:$0xff] %v520
      %553 = vst [vmem:[%s223 + $0x98] sm:$0xff] %v521
      %554 = vst [vmem:[%s223 + $0xa0] sm:$0xff] %v522
      %555 = vst [vmem:[%s223 + $0xa8] sm:$0xff] %v523
      %556 = vst [vmem:[%s223 + $0xb0] sm:$0xff] %v524
      %557 = vst [vmem:[%s223 + $0xb8] sm:$0xff] %v525
      %558 = vst [vmem:[%s223 + $0xc0] sm:$0xff] %v526
      %559 = vst [vmem:[%s223 + $0xc8] sm:$0xff] %v527
      %560 = vst [vmem:[%s223 + $0xd0] sm:$0xff] %v528
      %561 = vst [vmem:[%s223 + $0xd8] sm:$0xff] %v529
      %562 = vst [vmem:[%s223 + $0xe0] sm:$0xff] %v530
      %563 = vst [vmem:[%s223 + $0xe8] sm:$0xff] %v531
      %564 = vst [vmem:[%s223 + $0xf0] sm:$0xff] %v532
      %565 = vst [vmem:[%s223 + $0xf8] sm:$0xff] %v533
      %s566 = smul.u32 32, %s18
      %p567 = scmp.lt.s32.totalorder %s566, 63
      %s568 = scalar_select %p567, %s566, 63
      %p569 = scmp.lt.s32.totalorder %s19, 0
      %s570 = scalar_select %p569, %s19, 0
      %s571 = sadd.s32 %s570, %s568
      %s572 = smul.addr %s571, 8
      %s573 = scalar_lea.vmem %s3, %s572
      // Predicated region
      $region33: #{_lambda_.41} parent=31 // pred_check
        %p574 = pneg %p124
      $region34: #{_lambda_.41} parent=31 // pred_check_branch
        %576 = sbr.rel (%p574) target = $region36
      $region35: #{_lambda_.41} parent=31 // pred_region
        %s577 = smul.u32 32, %s18
      $region36: #{_lambda_.41} parent=31 // pred_fallthru
        _
    $region32: #{_lambda_.41} parent=5 // pred_fallthru
      _
    %p578 = scmp.le.s32.totalorder 2, %s9
    // Predicated region
    $region37: #{_lambda_.41} parent=5 // pred_check
      %p579 = pneg %p578
    $region38: #{_lambda_.41} parent=5 // pred_check_branch
      %581 = sbr.rel (%p579) target = $region40
    $region39: #{_lambda_.41} parent=5 // pred_region
      %s582 = ssub.s32 %s9, 2
      // Predicated region
      $region41: #{_lambda_.41} parent=39 // pred_check
        %p583 = pneg %p130
      $region42: #{_lambda_.41} parent=39 // pred_check_branch
        %585 = sbr.rel (%p583) target = $region44
      $region43: #{_lambda_.41} parent=39 // pred_region
        %s586 = smul.u32 32, %s20
        %p587 = scmp.lt.s32.totalorder %s586, 63
        %s588 = scalar_select %p587, %s586, 63
        %p589 = scmp.lt.s32.totalorder %s21, 0
        %s590 = scalar_select %p589, %s21, 0
        %s591 = sadd.s32 %s590, %s588
        %s592 = smul.addr %s591, 8
        %s593 = scalar_lea.vmem %s3, %s592
      $region44: #{_lambda_.41} parent=39 // pred_fallthru
        _
    $region40: #{_lambda_.41} parent=5 // pred_fallthru
      _
  $region6: #{_lambda_.41} parent=0 // loop_footer
    %s13 = sadd.s32 1, %s9
  $region7: #{_lambda_.41} parent=0 // loop_footer_branch
    %8 = sbr.rel target = $region3
  $region8: #{_lambda_.41} parent=0 // loop_exit
    _

// kernel: _lambda_.42
$region0: #{_lambda_.42}
  #allocation0 [shape = 'u32[]', space=smem, size = 0x4, offset = 0x4, fixed_abs, tag = 'smem constant byte address 0x4 - core index']
  #allocation1 [shape = 'u32[72,128]{1,0:T(1,128)}', space=vmem, size = 0x9000, scoped, tag = 'internal scratch']
  %s0 = inlined_call_operand.vmem [shape: bf16[128,144], index: 0, kind: input, shape index: {}]
  %s1 = inlined_call_operand.vmem [shape: bf16[144,128], index: 1, kind: input, shape index: {}]
  %s2 = inlined_call_operand.vmem [shape: f32[1,128], index: 2, kind: input, shape index: {}]
  %s3 = inlined_call_operand.vmem [shape: f32[128,128], index: 3, kind: output, shape index: {}]
  %s4 = sld [smem:[#allocation0]]
  $region22: #{_lambda_.42} parent=0
    _
  %s6 = ssub.s32 1, %s4
  %s7 = scalar_select 0, %s6, %s4
  // Predicated region
  $region2: #{_lambda_.42} parent=0 // pred_check
    _
  $region3: #{_lambda_.42} parent=0 // pred_check_branch
    %9 = sbr.rel (0) target = $region5
  $region4: #{_lambda_.42} parent=0 // pred_region
    _
  $region5: #{_lambda_.42} parent=0 // pred_fallthru
    _
  // Predicated region
  $region6: #{_lambda_.42} parent=0 // pred_check
    _
  $region7: #{_lambda_.42} parent=0 // pred_check_branch
    %11 = sbr.rel (0) target = $region9
  $region8: #{_lambda_.42} parent=0 // pred_region
    _
  $region9: #{_lambda_.42} parent=0 // pred_fallthru
    _
  // Predicated region
  $region10: #{_lambda_.42} parent=0 // pred_check
    _
  $region11: #{_lambda_.42} parent=0 // pred_check_branch
    %13 = sbr.rel (0) target = $region13
  $region12: #{_lambda_.42} parent=0 // pred_region
    _
  $region13: #{_lambda_.42} parent=0 // pred_fallthru
    _
  %v15 = vld [vmem:[%s0] sm:$0xff]
  %v16 = vld [vmem:[%s0 + $0x8] sm:$0xff]
  %v17 = vld [vmem:[%s0 + $0x10] sm:$0xff]
  %v18 = vld [vmem:[%s0 + $0x18] sm:$0xff]
  %v19 = vld [vmem:[%s0 + $0x20] sm:$0xff]
  %v20 = vld [vmem:[%s0 + $0x28] sm:$0xff]
  %v21 = vld [vmem:[%s0 + $0x30] sm:$0xff]
  %v22 = vld [vmem:[%s0 + $0x38] sm:$0xff]
  %v23 = vld [vmem:[%s0 + $0x40] sm:$0xff]
  %v24 = vld [vmem:[%s0 + $0x48] sm:$0xff]
  %v25 = vld [vmem:[%s0 + $0x50] sm:$0xff]
  %v26 = vld [vmem:[%s0 + $0x58] sm:$0xff]
  %v27 = vld [vmem:[%s0 + $0x60] sm:$0xff]
  %v28 = vld [vmem:[%s0 + $0x68] sm:$0xff]
  %v29 = vld [vmem:[%s0 + $0x70] sm:$0xff]
  %v30 = vld [vmem:[%s0 + $0x78] sm:$0xff]
  %v31 = vld [vmem:[%s1] sm:$0xf]
  %v32 = vld [vmem:[%s1 + $0x4] sm:$0xf]
  %v33 = vld [vmem:[%s1 + $0x8] sm:$0xf]
  %v34 = vld [vmem:[%s1 + $0xc] sm:$0xf]
  %v35 = vld [vmem:[%s1 + $0x10] sm:$0xf]
  %v36 = vld [vmem:[%s1 + $0x14] sm:$0xf]
  %v37 = vld [vmem:[%s1 + $0x18] sm:$0xf]
  %v38 = vld [vmem:[%s1 + $0x1c] sm:$0xf]
  %v39 = vld [vmem:[%s1 + $0x20] sm:$0xf]
  %v40 = vld [vmem:[%s1 + $0x24] sm:$0xf]
  %v41 = vld [vmem:[%s1 + $0x28] sm:$0xf]
  %v42 = vld [vmem:[%s1 + $0x2c] sm:$0xf]
  %v43 = vld [vmem:[%s1 + $0x30] sm:$0xf]
  %v44 = vld [vmem:[%s1 + $0x34] sm:$0xf]
  %v45 = vld [vmem:[%s1 + $0x38] sm:$0xf]
  %v46 = vld [vmem:[%s1 + $0x3c] sm:$0xf]
  %v47 = vld [vmem:[%s1 + $0x40] sm:$0xf]
  %v48 = vld [vmem:[%s1 + $0x44] sm:$0xf]
  %v49 = vld [vmem:[%s2] sm:$0x1]
  %v51 = vperm.slane %v49, 0
  %v69 = vunpack.c.l.b16 %v15
  %v70 = vunpack.c.h.b16 %v15
  %v71 = vunpack.c.l.b16 %v16
  %v72 = vunpack.c.h.b16 %v16
  %v73 = vunpack.c.l.b16 %v17
  %v74 = vunpack.c.h.b16 %v17
  %v75 = vunpack.c.l.b16 %v18
  %v76 = vunpack.c.h.b16 %v18
  %v77 = vunpack.c.l.b16 %v19
  %v78 = vunpack.c.h.b16 %v19
  %v79 = vunpack.c.l.b16 %v20
  %v80 = vunpack.c.h.b16 %v20
  %v81 = vunpack.c.l.b16 %v21
  %v82 = vunpack.c.h.b16 %v21
  %v83 = vunpack.c.l.b16 %v22
  %v84 = vunpack.c.h.b16 %v22
  %v85 = vunpack.c.l.b16 %v23
  %v86 = vunpack.c.h.b16 %v23
  %v87 = vunpack.c.l.b16 %v24
  %v88 = vunpack.c.h.b16 %v24
  %v89 = vunpack.c.l.b16 %v25
  %v90 = vunpack.c.h.b16 %v25
  %v91 = vunpack.c.l.b16 %v26
  %v92 = vunpack.c.h.b16 %v26
  %v93 = vunpack.c.l.b16 %v27
  %v94 = vunpack.c.h.b16 %v27
  %v95 = vunpack.c.l.b16 %v28
  %v96 = vunpack.c.h.b16 %v28
  %v97 = vunpack.c.l.b16 %v29
  %v98 = vunpack.c.h.b16 %v29
  %v99 = vunpack.c.l.b16 %v30
  %v100 = vunpack.c.h.b16 %v30
  %v101 = vpack.c.b16 %v71, %v69
  %v102 = vpack.c.b16 %v72, %v70
  %v103 = vpack.c.b16 %v75, %v73
  %v104 = vpack.c.b16 %v76, %v74
  %v105 = vpack.c.b16 %v79, %v77
  %v106 = vpack.c.b16 %v80, %v78
  %v107 = vpack.c.b16 %v83, %v81
  %v108 = vpack.c.b16 %v84, %v82
  %v109 = vpack.c.b16 %v87, %v85
  %v110 = vpack.c.b16 %v88, %v86
  %v111 = vpack.c.b16 %v91, %v89
  %v112 = vpack.c.b16 %v92, %v90
  %v113 = vpack.c.b16 %v95, %v93
  %v114 = vpack.c.b16 %v96, %v94
  %v115 = vpack.c.b16 %v99, %v97
  %v116 = vpack.c.b16 %v100, %v98
  %v143 = vunpack.c.l.b16 %v31
  %v144 = vunpack.c.l.b16 %v32
  %v145 = vunpack.c.l.b16 %v33
  %v146 = vunpack.c.l.b16 %v34
  %v147 = vunpack.c.l.b16 %v35
  %v148 = vunpack.c.l.b16 %v36
  %v149 = vunpack.c.l.b16 %v37
  %v150 = vunpack.c.l.b16 %v38
  %v151 = vunpack.c.l.b16 %v39
  %v152 = vunpack.c.l.b16 %v40
  %v153 = vunpack.c.l.b16 %v41
  %v154 = vunpack.c.l.b16 %v42
  %v155 = vunpack.c.l.b16 %v43
  %v156 = vunpack.c.l.b16 %v44
  %v157 = vunpack.c.l.b16 %v45
  %v158 = vunpack.c.l.b16 %v46
  %v159 = vunpack.c.l.b16 %v47
  %v160 = vunpack.c.l.b16 %v48
  %v161 = vpack.c.b16 %v144, %v143
  %v162 = vpack.c.b16 %v146, %v145
  %v163 = vpack.c.b16 %v148, %v147
  %v164 = vpack.c.b16 %v150, %v149
  %v165 = vpack.c.b16 %v152, %v151
  %v166 = vpack.c.b16 %v154, %v153
  %v167 = vpack.c.b16 %v156, %v155
  %v168 = vpack.c.b16 %v158, %v157
  %v169 = vpack.c.b16 %v160, %v159
  %vm179 = vcmask 130048
  %v181 = vsel %vm179, %v102, 0
  %v184 = vsel %vm179, %v104, 0
  %v187 = vsel %vm179, %v106, 0
  %v190 = vsel %vm179, %v108, 0
  %v193 = vsel %vm179, %v110, 0
  %v196 = vsel %vm179, %v112, 0
  %v199 = vsel %vm179, %v114, 0
  %v202 = vsel %vm179, %v116, 0
  %204 = vmatpush.bf16.msra.mxu0 %v168
  %205 = vmatpush.bf16.msra.mxu0 %v167
  %206 = vmatpush.bf16.msra.mxu0 %v166
  %207 = vmatpush.bf16.msra.mxu0 %v165
  %208 = vmatpush.bf16.msra.mxu0 %v164
  %209 = vmatpush.bf16.msra.mxu0 %v163
  %210 = vmatpush.bf16.msra.mxu0 %v162
  %211 = vmatpush.bf16.msra.mxu0 %v161
  %212 = vmatmul.bf16.gmra.mxu0 %v101
  %v213 = vpop.f32.mrf.mxu0
  %v214 = vadd.f32 %v51, %v213
  %v215 = vpop.f32.mrf.mxu0
  %v216 = vadd.f32 %v51, %v215
  %217 = vmatmul.bf16.gmra.mxu0 %v103
  %v218 = vpop.f32.mrf.mxu0
  %v219 = vadd.f32 %v51, %v218
  %v220 = vpop.f32.mrf.mxu0
  %v221 = vadd.f32 %v51, %v220
  %222 = vmatmul.bf16.gmra.mxu0 %v105
  %v223 = vpop.f32.mrf.mxu0
  %v224 = vadd.f32 %v51, %v223
  %v225 = vpop.f32.mrf.mxu0
  %v226 = vadd.f32 %v51, %v225
  %227 = vmatmul.bf16.gmra.mxu0 %v107
  %v228 = vpop.f32.mrf.mxu0
  %v229 = vadd.f32 %v51, %v228
  %v230 = vpop.f32.mrf.mxu0
  %v231 = vadd.f32 %v51, %v230
  %232 = vmatmul.bf16.gmra.mxu0 %v109
  %v233 = vpop.f32.mrf.mxu0
  %v234 = vadd.f32 %v51, %v233
  %v235 = vpop.f32.mrf.mxu0
  %v236 = vadd.f32 %v51, %v235
  %237 = vmatmul.bf16.gmra.mxu0 %v111
  %v238 = vpop.f32.mrf.mxu0
  %v239 = vadd.f32 %v51, %v238
  %v240 = vpop.f32.mrf.mxu0
  %v241 = vadd.f32 %v51, %v240
  %242 = vmatmul.bf16.gmra.mxu0 %v113
  %v243 = vpop.f32.mrf.mxu0
  %v244 = vadd.f32 %v51, %v243
  %v245 = vpop.f32.mrf.mxu0
  %v246 = vadd.f32 %v51, %v245
  %247 = vmatmul.bf16.gmra.mxu0 %v115
  %v248 = vpop.f32.mrf.mxu0
  %v249 = vadd.f32 %v51, %v248
  %v250 = vpop.f32.mrf.mxu0
  %v251 = vadd.f32 %v51, %v250
  %252 = vdwg.mxu0
  %253 = vmatpush.bf16.msra.mxu0 0
  %254 = vmatpush.bf16.msra.mxu0 0
  %255 = vmatpush.bf16.msra.mxu0 0
  %256 = vmatpush.bf16.msra.mxu0 0
  %257 = vmatpush.bf16.msra.mxu0 0
  %258 = vmatpush.bf16.msra.mxu0 0
  %259 = vmatpush.bf16.msra.mxu0 0
  %260 = vmatpush.bf16.msra.mxu0 %v169
  %261 = vmatmul.bf16.gmra.mxu0 %v181
  %v262 = vpop.f32.mrf.mxu0
  %v263 = vadd.f32 %v214, %v262
  %v264 = vpop.f32.mrf.mxu0
  %v265 = vadd.f32 %v216, %v264
  %266 = vmatmul.bf16.gmra.mxu0 %v184
  %v267 = vpop.f32.mrf.mxu0
  %v268 = vadd.f32 %v219, %v267
  %v269 = vpop.f32.mrf.mxu0
  %v270 = vadd.f32 %v221, %v269
  %271 = vmatmul.bf16.gmra.mxu0 %v187
  %v272 = vpop.f32.mrf.mxu0
  %v273 = vadd.f32 %v224, %v272
  %v274 = vpop.f32.mrf.mxu0
  %v275 = vadd.f32 %v226, %v274
  %276 = vmatmul.bf16.gmra.mxu0 %v190
  %v277 = vpop.f32.mrf.mxu0
  %v278 = vadd.f32 %v229, %v277
  %v279 = vpop.f32.mrf.mxu0
  %v280 = vadd.f32 %v231, %v279
  %281 = vmatmul.bf16.gmra.mxu0 %v193
  %v282 = vpop.f32.mrf.mxu0
  %v283 = vadd.f32 %v234, %v282
  %v284 = vpop.f32.mrf.mxu0
  %v285 = vadd.f32 %v236, %v284
  %286 = vmatmul.bf16.gmra.mxu0 %v196
  %v287 = vpop.f32.mrf.mxu0
  %v288 = vadd.f32 %v239, %v287
  %v289 = vpop.f32.mrf.mxu0
  %v290 = vadd.f32 %v241, %v289
  %291 = vmatmul.bf16.gmra.mxu0 %v199
  %v292 = vpop.f32.mrf.mxu0
  %v293 = vadd.f32 %v244, %v292
  %v294 = vpop.f32.mrf.mxu0
  %v295 = vadd.f32 %v246, %v294
  %296 = vmatmul.bf16.gmra.mxu0 %v202
  %v297 = vpop.f32.mrf.mxu0
  %v298 = vadd.f32 %v249, %v297
  %v299 = vpop.f32.mrf.mxu0
  %v300 = vadd.f32 %v251, %v299
  %301 = vdwg.mxu0
  %v302 = vmax.f32 %v263, 0.0
  %v303 = vmax.f32 %v265, 0.0
  %v304 = vmax.f32 %v268, 0.0
  %v305 = vmax.f32 %v270, 0.0
  %v306 = vmax.f32 %v273, 0.0
  %v307 = vmax.f32 %v275, 0.0
  %v308 = vmax.f32 %v278, 0.0
  %v309 = vmax.f32 %v280, 0.0
  %v310 = vmax.f32 %v283, 0.0
  %v311 = vmax.f32 %v285, 0.0
  %v312 = vmax.f32 %v288, 0.0
  %v313 = vmax.f32 %v290, 0.0
  %v314 = vmax.f32 %v293, 0.0
  %v315 = vmax.f32 %v295, 0.0
  %v316 = vmax.f32 %v298, 0.0
  %v317 = vmax.f32 %v300, 0.0
  %318 = vst [vmem:[%s3] sm:$0xff] %v302
  %319 = vst [vmem:[%s3 + $0x8] sm:$0xff] %v303
  %320 = vst [vmem:[%s3 + $0x10] sm:$0xff] %v304
  %321 = vst [vmem:[%s3 + $0x18] sm:$0xff] %v305
  %322 = vst [vmem:[%s3 + $0x20] sm:$0xff] %v306
  %323 = vst [vmem:[%s3 + $0x28] sm:$0xff] %v307
  %324 = vst [vmem:[%s3 + $0x30] sm:$0xff] %v308
  %325 = vst [vmem:[%s3 + $0x38] sm:$0xff] %v309
  %326 = vst [vmem:[%s3 + $0x40] sm:$0xff] %v310
  %327 = vst [vmem:[%s3 + $0x48] sm:$0xff] %v311
  %328 = vst [vmem:[%s3 + $0x50] sm:$0xff] %v312
  %329 = vst [vmem:[%s3 + $0x58] sm:$0xff] %v313
  %330 = vst [vmem:[%s3 + $0x60] sm:$0xff] %v314
  %331 = vst [vmem:[%s3 + $0x68] sm:$0xff] %v315
  %332 = vst [vmem:[%s3 + $0x70] sm:$0xff] %v316
  %333 = vst [vmem:[%s3 + $0x78] sm:$0xff] %v317
  // Predicated region
  $region14: #{_lambda_.42} parent=0 // pred_check
    _
  $region15: #{_lambda_.42} parent=0 // pred_check_branch
    %335 = sbr.rel (0) target = $region17
  $region16: #{_lambda_.42} parent=0 // pred_region
    _
  $region17: #{_lambda_.42} parent=0 // pred_fallthru
    _
  // Predicated region
  $region18: #{_lambda_.42} parent=0 // pred_check
    _
  $region19: #{_lambda_.42} parent=0 // pred_check_branch
    %337 = sbr.rel (0) target = $region21
  $region20: #{_lambda_.42} parent=0 // pred_region
    _
  $region21: #{_lambda_.42} parent=0 // pred_fallthru
    _

// kernel: _lambda_.59
$region0: #{_lambda_.59}
  #allocation0 [shape = 'u32[]', space=smem, size = 0x4, offset = 0x4, fixed_abs, tag = 'smem constant byte address 0x4 - core index']
  #allocation1 [shape = 'u32[72,128]{1,0:T(1,128)}', space=vmem, size = 0x9000, scoped, tag = 'internal scratch']
  %s0 = inlined_call_operand.vmem [shape: bf16[32,144], index: 0, kind: input, shape index: {}]
  %s1 = inlined_call_operand.vmem [shape: bf16[144,128], index: 1, kind: input, shape index: {}]
  %s2 = inlined_call_operand.vmem [shape: f32[1,128], index: 2, kind: input, shape index: {}]
  %s3 = inlined_call_operand.vmem [shape: f32[32,128], index: 3, kind: output, shape index: {}]
  %s4 = sld [smem:[#allocation0]]
  $region22: #{_lambda_.59} parent=0
    _
  %s6 = ssub.s32 1, %s4
  %s7 = scalar_select 0, %s6, %s4
  // Predicated region
  $region2: #{_lambda_.59} parent=0 // pred_check
    _
  $region3: #{_lambda_.59} parent=0 // pred_check_branch
    %9 = sbr.rel (0) target = $region5
  $region4: #{_lambda_.59} parent=0 // pred_region
    _
  $region5: #{_lambda_.59} parent=0 // pred_fallthru
    _
  // Predicated region
  $region6: #{_lambda_.59} parent=0 // pred_check
    _
  $region7: #{_lambda_.59} parent=0 // pred_check_branch
    %11 = sbr.rel (0) target = $region9
  $region8: #{_lambda_.59} parent=0 // pred_region
    _
  $region9: #{_lambda_.59} parent=0 // pred_fallthru
    _
  // Predicated region
  $region10: #{_lambda_.59} parent=0 // pred_check
    _
  $region11: #{_lambda_.59} parent=0 // pred_check_branch
    %13 = sbr.rel (0) target = $region13
  $region12: #{_lambda_.59} parent=0 // pred_region
    _
  $region13: #{_lambda_.59} parent=0 // pred_fallthru
    _
  %v15 = vld [vmem:[%s0] sm:$0xff]
  %v16 = vld [vmem:[%s0 + $0x8] sm:$0xff]
  %v17 = vld [vmem:[%s0 + $0x10] sm:$0xff]
  %v18 = vld [vmem:[%s0 + $0x18] sm:$0xff]
  %v19 = vld [vmem:[%s1] sm:$0xf]
  %v20 = vld [vmem:[%s1 + $0x4] sm:$0xf]
  %v21 = vld [vmem:[%s1 + $0x8] sm:$0xf]
  %v22 = vld [vmem:[%s1 + $0xc] sm:$0xf]
  %v23 = vld [vmem:[%s1 + $0x10] sm:$0xf]
  %v24 = vld [vmem:[%s1 + $0x14] sm:$0xf]
  %v25 = vld [vmem:[%s1 + $0x18] sm:$0xf]
  %v26 = vld [vmem:[%s1 + $0x1c] sm:$0xf]
  %v27 = vld [vmem:[%s1 + $0x20] sm:$0xf]
  %v28 = vld [vmem:[%s1 + $0x24] sm:$0xf]
  %v29 = vld [vmem:[%s1 + $0x28] sm:$0xf]
  %v30 = vld [vmem:[%s1 + $0x2c] sm:$0xf]
  %v31 = vld [vmem:[%s1 + $0x30] sm:$0xf]
  %v32 = vld [vmem:[%s1 + $0x34] sm:$0xf]
  %v33 = vld [vmem:[%s1 + $0x38] sm:$0xf]
  %v34 = vld [vmem:[%s1 + $0x3c] sm:$0xf]
  %v35 = vld [vmem:[%s1 + $0x40] sm:$0xf]
  %v36 = vld [vmem:[%s1 + $0x44] sm:$0xf]
  %v37 = vld [vmem:[%s2] sm:$0x1]
  %v39 = vperm.slane %v37, 0
  %v45 = vunpack.c.l.b16 %v15
  %v46 = vunpack.c.h.b16 %v15
  %v47 = vunpack.c.l.b16 %v16
  %v48 = vunpack.c.h.b16 %v16
  %v49 = vunpack.c.l.b16 %v17
  %v50 = vunpack.c.h.b16 %v17
  %v51 = vunpack.c.l.b16 %v18
  %v52 = vunpack.c.h.b16 %v18
  %v53 = vpack.c.b16 %v47, %v45
  %v54 = vpack.c.b16 %v48, %v46
  %v55 = vpack.c.b16 %v51, %v49
  %v56 = vpack.c.b16 %v52, %v50
  %v77 = vunpack.c.l.b16 %v19
  %v78 = vunpack.c.l.b16 %v20
  %v79 = vunpack.c.l.b16 %v21
  %v80 = vunpack.c.l.b16 %v22
  %v81 = vunpack.c.l.b16 %v23
  %v82 = vunpack.c.l.b16 %v24
  %v83 = vunpack.c.l.b16 %v25
  %v84 = vunpack.c.l.b16 %v26
  %v85 = vunpack.c.l.b16 %v27
  %v86 = vunpack.c.l.b16 %v28
  %v87 = vunpack.c.l.b16 %v29
  %v88 = vunpack.c.l.b16 %v30
  %v89 = vunpack.c.l.b16 %v31
  %v90 = vunpack.c.l.b16 %v32
  %v91 = vunpack.c.l.b16 %v33
  %v92 = vunpack.c.l.b16 %v34
  %v93 = vunpack.c.l.b16 %v35
  %v94 = vunpack.c.l.b16 %v36
  %v95 = vpack.c.b16 %v78, %v77
  %v96 = vpack.c.b16 %v80, %v79
  %v97 = vpack.c.b16 %v82, %v81
  %v98 = vpack.c.b16 %v84, %v83
  %v99 = vpack.c.b16 %v86, %v85
  %v100 = vpack.c.b16 %v88, %v87
  %v101 = vpack.c.b16 %v90, %v89
  %v102 = vpack.c.b16 %v92, %v91
  %v103 = vpack.c.b16 %v94, %v93
  %vm113 = vcmask 130048
  %v115 = vsel %vm113, %v54, 0
  %v118 = vsel %vm113, %v56, 0
  %120 = vmatpush.bf16.msra.mxu0 %v102
  %121 = vmatpush.bf16.msra.mxu0 %v101
  %122 = vmatpush.bf16.msra.mxu0 %v100
  %123 = vmatpush.bf16.msra.mxu0 %v99
  %124 = vmatpush.bf16.msra.mxu0 %v98
  %125 = vmatpush.bf16.msra.mxu0 %v97
  %126 = vmatpush.bf16.msra.mxu0 %v96
  %127 = vmatpush.bf16.msra.mxu0 %v95
  %128 = vmatmul.bf16.gmra.mxu0 %v53
  %v129 = vpop.f32.mrf.mxu0
  %v130 = vadd.f32 %v39, %v129
  %v131 = vpop.f32.mrf.mxu0
  %v132 = vadd.f32 %v39, %v131
  %133 = vmatmul.bf16.gmra.mxu0 %v55
  %v134 = vpop.f32.mrf.mxu0
  %v135 = vadd.f32 %v39, %v134
  %v136 = vpop.f32.mrf.mxu0
  %v137 = vadd.f32 %v39, %v136
  %138 = vdwg.mxu0
  %139 = vmatpush.bf16.msra.mxu0 0
  %140 = vmatpush.bf16.msra.mxu0 0
  %141 = vmatpush.bf16.msra.mxu0 0
  %142 = vmatpush.bf16.msra.mxu0 0
  %143 = vmatpush.bf16.msra.mxu0 0
  %144 = vmatpush.bf16.msra.mxu0 0
  %145 = vmatpush.bf16.msra.mxu0 0
  %146 = vmatpush.bf16.msra.mxu0 %v103
  %147 = vmatmul.bf16.gmra.mxu0 %v115
  %v148 = vpop.f32.mrf.mxu0
  %v149 = vadd.f32 %v130, %v148
  %v150 = vpop.f32.mrf.mxu0
  %v151 = vadd.f32 %v132, %v150
  %152 = vmatmul.bf16.gmra.mxu0 %v118
  %v153 = vpop.f32.mrf.mxu0
  %v154 = vadd.f32 %v135, %v153
  %v155 = vpop.f32.mrf.mxu0
  %v156 = vadd.f32 %v137, %v155
  %157 = vdwg.mxu0
  %v158 = vmax.f32 %v149, 0.0
  %v159 = vmax.f32 %v151, 0.0
  %v160 = vmax.f32 %v154, 0.0
  %v161 = vmax.f32 %v156, 0.0
  %162 = vst [vmem:[%s3] sm:$0xff] %v158
  %163 = vst [vmem:[%s3 + $0x8] sm:$0xff] %v159
  %164 = vst [vmem:[%s3 + $0x10] sm:$0xff] %v160
  %165 = vst [vmem:[%s3 + $0x18] sm:$0xff] %v161
  // Predicated region
  $region14: #{_lambda_.59} parent=0 // pred_check
    _
  $region15: #{_lambda_.59} parent=0 // pred_check_branch
    %167 = sbr.rel (0) target = $region17
  $region16: #{_lambda_.59} parent=0 // pred_region
    _
  $region17: #{_lambda_.59} parent=0 // pred_fallthru
    _
  // Predicated region
  $region18: #{_lambda_.59} parent=0 // pred_check
    _
  $region19: #{_lambda_.59} parent=0 // pred_check_branch
    %169 = sbr.rel (0) target = $region21
  $region20: #{_lambda_.59} parent=0 // pred_region
    _
  $region21: #{_lambda_.59} parent=0 // pred_fallthru
    _

// kernel: _lambda_.60
$region0: #{_lambda_.60}
  #allocation0 [shape = 'u32[]', space=smem, size = 0x4, offset = 0x4, fixed_abs, tag = 'smem constant byte address 0x4 - core index']
  #allocation1 [shape = 'u32[72,128]{1,0:T(1,128)}', space=vmem, size = 0x9000, scoped, tag = 'internal scratch']
  %s0 = inlined_call_operand.vmem [shape: bf16[32,108], index: 0, kind: input, shape index: {}]
  %s1 = inlined_call_operand.vmem [shape: bf16[108,128], index: 1, kind: input, shape index: {}]
  %s2 = inlined_call_operand.vmem [shape: f32[1,128], index: 2, kind: input, shape index: {}]
  %s3 = inlined_call_operand.vmem [shape: f32[32,128], index: 3, kind: output, shape index: {}]
  %s4 = sld [smem:[#allocation0]]
  $region22: #{_lambda_.60} parent=0
    _
  %s6 = ssub.s32 1, %s4
  %s7 = scalar_select 0, %s6, %s4
  // Predicated region
  $region2: #{_lambda_.60} parent=0 // pred_check
    _
  $region3: #{_lambda_.60} parent=0 // pred_check_branch
    %9 = sbr.rel (0) target = $region5
  $region4: #{_lambda_.60} parent=0 // pred_region
    _
  $region5: #{_lambda_.60} parent=0 // pred_fallthru
    _
  // Predicated region
  $region6: #{_lambda_.60} parent=0 // pred_check
    _
  $region7: #{_lambda_.60} parent=0 // pred_check_branch
    %11 = sbr.rel (0) target = $region9
  $region8: #{_lambda_.60} parent=0 // pred_region
    _
  $region9: #{_lambda_.60} parent=0 // pred_fallthru
    _
  // Predicated region
  $region10: #{_lambda_.60} parent=0 // pred_check
    _
  $region11: #{_lambda_.60} parent=0 // pred_check_branch
    %13 = sbr.rel (0) target = $region13
  $region12: #{_lambda_.60} parent=0 // pred_region
    _
  $region13: #{_lambda_.60} parent=0 // pred_fallthru
    _
  %v15 = vld [vmem:[%s0] sm:$0xf]
  %v16 = vld [vmem:[%s0 + $0x4] sm:$0xf]
  %v17 = vld [vmem:[%s0 + $0x8] sm:$0xf]
  %v18 = vld [vmem:[%s0 + $0xc] sm:$0xf]
  %v19 = vld [vmem:[%s1] sm:$0xf]
  %v20 = vld [vmem:[%s1 + $0x4] sm:$0xf]
  %v21 = vld [vmem:[%s1 + $0x8] sm:$0xf]
  %v22 = vld [vmem:[%s1 + $0xc] sm:$0xf]
  %v23 = vld [vmem:[%s1 + $0x10] sm:$0xf]
  %v24 = vld [vmem:[%s1 + $0x14] sm:$0xf]
  %v25 = vld [vmem:[%s1 + $0x18] sm:$0xf]
  %v26 = vld [vmem:[%s1 + $0x1c] sm:$0xf]
  %v27 = vld [vmem:[%s1 + $0x20] sm:$0xf]
  %v28 = vld [vmem:[%s1 + $0x24] sm:$0xf]
  %v29 = vld [vmem:[%s1 + $0x28] sm:$0xf]
  %v30 = vld [vmem:[%s1 + $0x2c] sm:$0xf]
  %v31 = vld [vmem:[%s1 + $0x30] sm:$0xf]
  %v32 = vld [vmem:[%s1 + $0x34] sm:$0x3]
  %v33 = vld [vmem:[%s2] sm:$0x1]
  %v35 = vperm.slane %v33, 0
  %v41 = vunpack.c.l.b16 %v15
  %v42 = vunpack.c.l.b16 %v16
  %v43 = vunpack.c.l.b16 %v17
  %v44 = vunpack.c.l.b16 %v18
  %v45 = vpack.c.b16 %v42, %v41
  %v46 = vpack.c.b16 %v44, %v43
  %v61 = vunpack.c.l.b16 %v19
  %v62 = vunpack.c.l.b16 %v20
  %v63 = vunpack.c.l.b16 %v21
  %v64 = vunpack.c.l.b16 %v22
  %v65 = vunpack.c.l.b16 %v23
  %v66 = vunpack.c.l.b16 %v24
  %v67 = vunpack.c.l.b16 %v25
  %v68 = vunpack.c.l.b16 %v26
  %v69 = vunpack.c.l.b16 %v27
  %v70 = vunpack.c.l.b16 %v28
  %v71 = vunpack.c.l.b16 %v29
  %v72 = vunpack.c.l.b16 %v30
  %v73 = vunpack.c.l.b16 %v31
  %v74 = vunpack.c.l.b16 %v32
  %v75 = vpack.c.b16 %v62, %v61
  %v76 = vpack.c.b16 %v64, %v63
  %v77 = vpack.c.b16 %v66, %v65
  %v78 = vpack.c.b16 %v68, %v67
  %v79 = vpack.c.b16 %v70, %v69
  %v80 = vpack.c.b16 %v72, %v71
  %v81 = vpack.c.b16 %v74, %v73
  %vm88 = vcmask 883712
  %v90 = vsel %vm88, %v45, 0
  %v93 = vsel %vm88, %v46, 0
  %vm95 = vcmask 1045504
  %v97 = vsel %vm95, %v81, 0
  %99 = vmatpush.bf16.msra.mxu0 0
  %100 = vmatpush.bf16.msra.mxu0 %v97
  %101 = vmatpush.bf16.msra.mxu0 %v80
  %102 = vmatpush.bf16.msra.mxu0 %v79
  %103 = vmatpush.bf16.msra.mxu0 %v78
  %104 = vmatpush.bf16.msra.mxu0 %v77
  %105 = vmatpush.bf16.msra.mxu0 %v76
  %106 = vmatpush.bf16.msra.mxu0 %v75
  %107 = vmatmul.bf16.gmra.mxu0 %v90
  %v108 = vpop.f32.mrf.mxu0
  %v109 = vadd.f32 %v35, %v108
  %v110 = vpop.f32.mrf.mxu0
  %v111 = vadd.f32 %v35, %v110
  %112 = vmatmul.bf16.gmra.mxu0 %v93
  %v113 = vpop.f32.mrf.mxu0
  %v114 = vadd.f32 %v35, %v113
  %v115 = vpop.f32.mrf.mxu0
  %v116 = vadd.f32 %v35, %v115
  %117 = vdwg.mxu0
  %v118 = vmax.f32 %v109, 0.0
  %v119 = vmax.f32 %v111, 0.0
  %v120 = vmax.f32 %v114, 0.0
  %v121 = vmax.f32 %v116, 0.0
  %122 = vst [vmem:[%s3] sm:$0xff] %v118
  %123 = vst [vmem:[%s3 + $0x8] sm:$0xff] %v119
  %124 = vst [vmem:[%s3 + $0x10] sm:$0xff] %v120
  %125 = vst [vmem:[%s3 + $0x18] sm:$0xff] %v121
  // Predicated region
  $region14: #{_lambda_.60} parent=0 // pred_check
    _
  $region15: #{_lambda_.60} parent=0 // pred_check_branch
    %127 = sbr.rel (0) target = $region17
  $region16: #{_lambda_.60} parent=0 // pred_region
    _
  $region17: #{_lambda_.60} parent=0 // pred_fallthru
    _
  // Predicated region
  $region18: #{_lambda_.60} parent=0 // pred_check
    _
  $region19: #{_lambda_.60} parent=0 // pred_check_branch
    %129 = sbr.rel (0) target = $region21
  $region20: #{_lambda_.60} parent=0 // pred_region
    _
  $region21: #{_lambda_.60} parent=0 // pred_fallthru
    _

// kernel: _lambda_.61
$region0: #{_lambda_.61}
  #allocation0 [shape = 'u32[]', space=smem, size = 0x4, offset = 0x4, fixed_abs, tag = 'smem constant byte address 0x4 - core index']
  #allocation1 [shape = 'u32[72,128]{1,0:T(1,128)}', space=vmem, size = 0x9000, scoped, tag = 'internal scratch']
  %s0 = inlined_call_operand.vmem [shape: bf16[32,216], index: 0, kind: input, shape index: {}]
  %s1 = inlined_call_operand.vmem [shape: bf16[216,256], index: 1, kind: input, shape index: {}]
  %s2 = inlined_call_operand.vmem [shape: f32[1,256], index: 2, kind: input, shape index: {}]
  %s3 = inlined_call_operand.vmem [shape: f32[32,256], index: 3, kind: output, shape index: {}]
  %s4 = sld [smem:[#allocation0]]
  $region22: #{_lambda_.61} parent=0
    _
  %s6 = ssub.s32 1, %s4
  %s7 = scalar_select 0, %s6, %s4
  // Predicated region
  $region2: #{_lambda_.61} parent=0 // pred_check
    _
  $region3: #{_lambda_.61} parent=0 // pred_check_branch
    %9 = sbr.rel (0) target = $region5
  $region4: #{_lambda_.61} parent=0 // pred_region
    _
  $region5: #{_lambda_.61} parent=0 // pred_fallthru
    _
  // Predicated region
  $region6: #{_lambda_.61} parent=0 // pred_check
    _
  $region7: #{_lambda_.61} parent=0 // pred_check_branch
    %11 = sbr.rel (0) target = $region9
  $region8: #{_lambda_.61} parent=0 // pred_region
    _
  $region9: #{_lambda_.61} parent=0 // pred_fallthru
    _
  // Predicated region
  $region10: #{_lambda_.61} parent=0 // pred_check
    _
  $region11: #{_lambda_.61} parent=0 // pred_check_branch
    %13 = sbr.rel (0) target = $region13
  $region12: #{_lambda_.61} parent=0 // pred_region
    _
  $region13: #{_lambda_.61} parent=0 // pred_fallthru
    _
  %v15 = vld [vmem:[%s0] sm:$0xff]
  %v16 = vld [vmem:[%s0 + $0x8] sm:$0xff]
  %v17 = vld [vmem:[%s0 + $0x10] sm:$0xff]
  %v18 = vld [vmem:[%s0 + $0x18] sm:$0xff]
  %v19 = vld [vmem:[%s1] sm:$0xff]
  %v20 = vld [vmem:[%s1 + $0x8] sm:$0xff]
  %v21 = vld [vmem:[%s1 + $0x10] sm:$0xff]
  %v22 = vld [vmem:[%s1 + $0x18] sm:$0xff]
  %v23 = vld [vmem:[%s1 + $0x20] sm:$0xff]
  %v24 = vld [vmem:[%s1 + $0x28] sm:$0xff]
  %v25 = vld [vmem:[%s1 + $0x30] sm:$0xff]
  %v26 = vld [vmem:[%s1 + $0x38] sm:$0xff]
  %v27 = vld [vmem:[%s1 + $0x40] sm:$0xff]
  %v28 = vld [vmem:[%s1 + $0x48] sm:$0xff]
  %v29 = vld [vmem:[%s1 + $0x50] sm:$0xff]
  %v30 = vld [vmem:[%s1 + $0x58] sm:$0xff]
  %v31 = vld [vmem:[%s1 + $0x60] sm:$0xff]
  %v32 = vld [vmem:[%s1 + $0x68] sm:$0xff]
  %v33 = vld [vmem:[%s1 + $0x70] sm:$0xff]
  %v34 = vld [vmem:[%s1 + $0x78] sm:$0xff]
  %v35 = vld [vmem:[%s1 + $0x80] sm:$0xff]
  %v36 = vld [vmem:[%s1 + $0x88] sm:$0xff]
  %v37 = vld [vmem:[%s1 + $0x90] sm:$0xff]
  %v38 = vld [vmem:[%s1 + $0x98] sm:$0xff]
  %v39 = vld [vmem:[%s1 + $0xa0] sm:$0xff]
  %v40 = vld [vmem:[%s1 + $0xa8] sm:$0xff]
  %v41 = vld [vmem:[%s1 + $0xb0] sm:$0xff]
  %v42 = vld [vmem:[%s1 + $0xb8] sm:$0xff]
  %v43 = vld [vmem:[%s1 + $0xc0] sm:$0xff]
  %v44 = vld [vmem:[%s1 + $0xc8] sm:$0xff]
  %v45 = vld [vmem:[%s1 + $0xd0] sm:$0xff]
  %v46 = vld [vmem:[%s2] sm:$0x3]
  %v48 = vperm.slane %v46, 0
  %v49 = vperm.slane %v46, 1
  %v56 = vunpack.c.l.b16 %v15
  %v57 = vunpack.c.h.b16 %v15
  %v58 = vunpack.c.l.b16 %v16
  %v59 = vunpack.c.h.b16 %v16
  %v60 = vunpack.c.l.b16 %v17
  %v61 = vunpack.c.h.b16 %v17
  %v62 = vunpack.c.l.b16 %v18
  %v63 = vunpack.c.h.b16 %v18
  %v64 = vpack.c.b16 %v58, %v56
  %v65 = vpack.c.b16 %v59, %v57
  %v66 = vpack.c.b16 %v62, %v60
  %v67 = vpack.c.b16 %v63, %v61
  %v97 = vunpack.c.l.b16 %v19
  %v98 = vunpack.c.h.b16 %v19
  %v99 = vunpack.c.l.b16 %v20
  %v100 = vunpack.c.h.b16 %v20
  %v101 = vunpack.c.l.b16 %v21
  %v102 = vunpack.c.h.b16 %v21
  %v103 = vunpack.c.l.b16 %v22
  %v104 = vunpack.c.h.b16 %v22
  %v105 = vunpack.c.l.b16 %v23
  %v106 = vunpack.c.h.b16 %v23
  %v107 = vunpack.c.l.b16 %v24
  %v108 = vunpack.c.h.b16 %v24
  %v109 = vunpack.c.l.b16 %v25
  %v110 = vunpack.c.h.b16 %v25
  %v111 = vunpack.c.l.b16 %v26
  %v112 = vunpack.c.h.b16 %v26
  %v113 = vunpack.c.l.b16 %v27
  %v114 = vunpack.c.h.b16 %v27
  %v115 = vunpack.c.l.b16 %v28
  %v116 = vunpack.c.h.b16 %v28
  %v117 = vunpack.c.l.b16 %v29
  %v118 = vunpack.c.h.b16 %v29
  %v119 = vunpack.c.l.b16 %v30
  %v120 = vunpack.c.h.b16 %v30
  %v121 = vunpack.c.l.b16 %v31
  %v122 = vunpack.c.h.b16 %v31
  %v123 = vunpack.c.l.b16 %v32
  %v124 = vunpack.c.h.b16 %v32
  %v125 = vunpack.c.l.b16 %v33
  %v126 = vunpack.c.h.b16 %v33
  %v127 = vunpack.c.l.b16 %v34
  %v128 = vunpack.c.h.b16 %v34
  %v129 = vunpack.c.l.b16 %v35
  %v130 = vunpack.c.h.b16 %v35
  %v131 = vunpack.c.l.b16 %v36
  %v132 = vunpack.c.h.b16 %v36
  %v133 = vunpack.c.l.b16 %v37
  %v134 = vunpack.c.h.b16 %v37
  %v135 = vunpack.c.l.b16 %v38
  %v136 = vunpack.c.h.b16 %v38
  %v137 = vunpack.c.l.b16 %v39
  %v138 = vunpack.c.h.b16 %v39
  %v139 = vunpack.c.l.b16 %v40
  %v140 = vunpack.c.h.b16 %v40
  %v141 = vunpack.c.l.b16 %v41
  %v142 = vunpack.c.h.b16 %v41
  %v143 = vunpack.c.l.b16 %v42
  %v144 = vunpack.c.h.b16 %v42
  %v145 = vunpack.c.l.b16 %v43
  %v146 = vunpack.c.h.b16 %v43
  %v147 = vunpack.c.l.b16 %v44
  %v148 = vunpack.c.h.b16 %v44
  %v149 = vunpack.c.l.b16 %v45
  %v150 = vunpack.c.h.b16 %v45
  %v151 = vpack.c.b16 %v99, %v97
  %v152 = vpack.c.b16 %v100, %v98
  %v153 = vpack.c.b16 %v103, %v101
  %v154 = vpack.c.b16 %v104, %v102
  %v155 = vpack.c.b16 %v107, %v105
  %v156 = vpack.c.b16 %v108, %v106
  %v157 = vpack.c.b16 %v111, %v109
  %v158 = vpack.c.b16 %v112, %v110
  %v159 = vpack.c.b16 %v115, %v113
  %v160 = vpack.c.b16 %v116, %v114
  %v161 = vpack.c.b16 %v119, %v117
  %v162 = vpack.c.b16 %v120, %v118
  %v163 = vpack.c.b16 %v123, %v121
  %v164 = vpack.c.b16 %v124, %v122
  %v165 = vpack.c.b16 %v127, %v125
  %v166 = vpack.c.b16 %v128, %v126
  %v167 = vpack.c.b16 %v131, %v129
  %v168 = vpack.c.b16 %v132, %v130
  %v169 = vpack.c.b16 %v135, %v133
  %v170 = vpack.c.b16 %v136, %v134
  %v171 = vpack.c.b16 %v139, %v137
  %v172 = vpack.c.b16 %v140, %v138
  %v173 = vpack.c.b16 %v143, %v141
  %v174 = vpack.c.b16 %v144, %v142
  %v175 = vpack.c.b16 %v147, %v145
  %v176 = vpack.c.b16 %v148, %v146
  %v177 = vpack.c.b16 %v149, %v149
  %v178 = vpack.c.b16 %v150, %v150
  %vm205 = vcmask 719872
  %v207 = vsel %vm205, %v65, 0
  %v210 = vsel %vm205, %v67, 0
  %vm212 = vcmask 1043456
  %v214 = vsel %vm212, %v177, 0
  %v217 = vsel %vm212, %v178, 0
  %219 = vmatpush.bf16.msra.mxu0 %v165
  %220 = vmatpush.bf16.msra.mxu0 %v163
  %221 = vmatpush.bf16.msra.mxu0 %v161
  %222 = vmatpush.bf16.msra.mxu0 %v159
  %223 = vmatpush.bf16.msra.mxu0 %v157
  %224 = vmatpush.bf16.msra.mxu0 %v155
  %225 = vmatpush.bf16.msra.mxu0 %v153
  %226 = vmatpush.bf16.msra.mxu0 %v151
  %227 = vmatmul.bf16.gmra.mxu0 %v64
  %v228 = vpop.f32.mrf.mxu0
  %v229 = vadd.f32 %v48, %v228
  %v230 = vpop.f32.mrf.mxu0
  %v231 = vadd.f32 %v48, %v230
  %232 = vmatmul.bf16.gmra.mxu0 %v66
  %v233 = vpop.f32.mrf.mxu0
  %v234 = vadd.f32 %v48, %v233
  %v235 = vpop.f32.mrf.mxu0
  %v236 = vadd.f32 %v48, %v235
  %237 = vdwg.mxu0
  %238 = vmatpush.bf16.msra.mxu0 0
  %239 = vmatpush.bf16.msra.mxu0 0
  %240 = vmatpush.bf16.msra.mxu0 %v214
  %241 = vmatpush.bf16.msra.mxu0 %v175
  %242 = vmatpush.bf16.msra.mxu0 %v173
  %243 = vmatpush.bf16.msra.mxu0 %v171
  %244 = vmatpush.bf16.msra.mxu0 %v169
  %245 = vmatpush.bf16.msra.mxu0 %v167
  %246 = vmatmul.bf16.gmra.mxu0 %v207
  %v247 = vpop.f32.mrf.mxu0
  %v248 = vadd.f32 %v229, %v247
  %v249 = vpop.f32.mrf.mxu0
  %v250 = vadd.f32 %v231, %v249
  %251 = vmatmul.bf16.gmra.mxu0 %v210
  %v252 = vpop.f32.mrf.mxu0
  %v253 = vadd.f32 %v234, %v252
  %v254 = vpop.f32.mrf.mxu0
  %v255 = vadd.f32 %v236, %v254
  %256 = vdwg.mxu0
  %257 = vmatpush.bf16.msra.mxu0 %v166
  %258 = vmatpush.bf16.msra.mxu0 %v164
  %259 = vmatpush.bf16.msra.mxu0 %v162
  %260 = vmatpush.bf16.msra.mxu0 %v160
  %261 = vmatpush.bf16.msra.mxu0 %v158
  %262 = vmatpush.bf16.msra.mxu0 %v156
  %263 = vmatpush.bf16.msra.mxu0 %v154
  %264 = vmatpush.bf16.msra.mxu0 %v152
  %265 = vmatmul.bf16.gmra.mxu0 %v64
  %v266 = vpop.f32.mrf.mxu0
  %v267 = vadd.f32 %v49, %v266
  %v268 = vpop.f32.mrf.mxu0
  %v269 = vadd.f32 %v49, %v268
  %270 = vmatmul.bf16.gmra.mxu0 %v66
  %v271 = vpop.f32.mrf.mxu0
  %v272 = vadd.f32 %v49, %v271
  %v273 = vpop.f32.mrf.mxu0
  %v274 = vadd.f32 %v49, %v273
  %275 = vdwg.mxu0
  %276 = vmatpush.bf16.msra.mxu0 0
  %277 = vmatpush.bf16.msra.mxu0 0
  %278 = vmatpush.bf16.msra.mxu0 %v217
  %279 = vmatpush.bf16.msra.mxu0 %v176
  %280 = vmatpush.bf16.msra.mxu0 %v174
  %281 = vmatpush.bf16.msra.mxu0 %v172
  %282 = vmatpush.bf16.msra.mxu0 %v170
  %283 = vmatpush.bf16.msra.mxu0 %v168
  %284 = vmatmul.bf16.gmra.mxu0 %v207
  %v285 = vpop.f32.mrf.mxu0
  %v286 = vadd.f32 %v267, %v285
  %v287 = vpop.f32.mrf.mxu0
  %v288 = vadd.f32 %v269, %v287
  %289 = vmatmul.bf16.gmra.mxu0 %v210
  %v290 = vpop.f32.mrf.mxu0
  %v291 = vadd.f32 %v272, %v290
  %v292 = vpop.f32.mrf.mxu0
  %v293 = vadd.f32 %v274, %v292
  %294 = vdwg.mxu0
  %v295 = vmax.f32 %v248, 0.0
  %v296 = vmax.f32 %v286, 0.0
  %v297 = vmax.f32 %v250, 0.0
  %v298 = vmax.f32 %v288, 0.0
  %v299 = vmax.f32 %v253, 0.0
  %v300 = vmax.f32 %v291, 0.0
  %v301 = vmax.f32 %v255, 0.0
  %v302 = vmax.f32 %v293, 0.0
  %303 = vst [vmem:[%s3] sm:$0xff] %v295
  %304 = vst [vmem:[%s3 + $0x8] sm:$0xff] %v296
  %305 = vst [vmem:[%s3 + $0x10] sm:$0xff] %v297
  %306 = vst [vmem:[%s3 + $0x18] sm:$0xff] %v298
  %307 = vst [vmem:[%s3 + $0x20] sm:$0xff] %v299
  %308 = vst [vmem:[%s3 + $0x28] sm:$0xff] %v300
  %309 = vst [vmem:[%s3 + $0x30] sm:$0xff] %v301
  %310 = vst [vmem:[%s3 + $0x38] sm:$0xff] %v302
  // Predicated region
  $region14: #{_lambda_.61} parent=0 // pred_check
    _
  $region15: #{_lambda_.61} parent=0 // pred_check_branch
    %312 = sbr.rel (0) target = $region17
  $region16: #{_lambda_.61} parent=0 // pred_region
    _
  $region17: #{_lambda_.61} parent=0 // pred_fallthru
    _
  // Predicated region
  $region18: #{_lambda_.61} parent=0 // pred_check
    _
  $region19: #{_lambda_.61} parent=0 // pred_check_branch
    %314 = sbr.rel (0) target = $region21
  $region20: #{_lambda_.61} parent=0 // pred_region
    _
  $region21: #{_lambda_.61} parent=0 // pred_fallthru
    _

// kernel: _lambda_.62
$region0: #{_lambda_.62}
  #allocation0 [shape = 'u32[]', space=smem, size = 0x4, offset = 0x4, fixed_abs, tag = 'smem constant byte address 0x4 - core index']
  #allocation1 [shape = 'u32[72,128]{1,0:T(1,128)}', space=vmem, size = 0x9000, scoped, tag = 'internal scratch']
  %s0 = inlined_call_operand.vmem [shape: bf16[32,256], index: 0, kind: input, shape index: {}]
  %s1 = inlined_call_operand.vmem [shape: bf16[256,256], index: 1, kind: input, shape index: {}]
  %s2 = inlined_call_operand.vmem [shape: f32[1,256], index: 2, kind: input, shape index: {}]
  %s3 = inlined_call_operand.vmem [shape: f32[32,256], index: 3, kind: output, shape index: {}]
  %s4 = sld [smem:[#allocation0]]
  $region22: #{_lambda_.62} parent=0
    _
  %s6 = ssub.s32 1, %s4
  %s7 = scalar_select 0, %s6, %s4
  // Predicated region
  $region2: #{_lambda_.62} parent=0 // pred_check
    _
  $region3: #{_lambda_.62} parent=0 // pred_check_branch
    %9 = sbr.rel (0) target = $region5
  $region4: #{_lambda_.62} parent=0 // pred_region
    _
  $region5: #{_lambda_.62} parent=0 // pred_fallthru
    _
  // Predicated region
  $region6: #{_lambda_.62} parent=0 // pred_check
    _
  $region7: #{_lambda_.62} parent=0 // pred_check_branch
    %11 = sbr.rel (0) target = $region9
  $region8: #{_lambda_.62} parent=0 // pred_region
    _
  $region9: #{_lambda_.62} parent=0 // pred_fallthru
    _
  // Predicated region
  $region10: #{_lambda_.62} parent=0 // pred_check
    _
  $region11: #{_lambda_.62} parent=0 // pred_check_branch
    %13 = sbr.rel (0) target = $region13
  $region12: #{_lambda_.62} parent=0 // pred_region
    _
  $region13: #{_lambda_.62} parent=0 // pred_fallthru
    _
  %v14 = vld [vmem:[%s0] sm:$0xff]
  %v15 = vld [vmem:[%s0 + $0x8] sm:$0xff]
  %v16 = vld [vmem:[%s0 + $0x10] sm:$0xff]
  %v17 = vld [vmem:[%s0 + $0x18] sm:$0xff]
  %v18 = vld [vmem:[%s1] sm:$0xff]
  %v19 = vld [vmem:[%s1 + $0x8] sm:$0xff]
  %v20 = vld [vmem:[%s1 + $0x10] sm:$0xff]
  %v21 = vld [vmem:[%s1 + $0x18] sm:$0xff]
  %v22 = vld [vmem:[%s1 + $0x20] sm:$0xff]
  %v23 = vld [vmem:[%s1 + $0x28] sm:$0xff]
  %v24 = vld [vmem:[%s1 + $0x30] sm:$0xff]
  %v25 = vld [vmem:[%s1 + $0x38] sm:$0xff]
  %v26 = vld [vmem:[%s1 + $0x40] sm:$0xff]
  %v27 = vld [vmem:[%s1 + $0x48] sm:$0xff]
  %v28 = vld [vmem:[%s1 + $0x50] sm:$0xff]
  %v29 = vld [vmem:[%s1 + $0x58] sm:$0xff]
  %v30 = vld [vmem:[%s1 + $0x60] sm:$0xff]
  %v31 = vld [vmem:[%s1 + $0x68] sm:$0xff]
  %v32 = vld [vmem:[%s1 + $0x70] sm:$0xff]
  %v33 = vld [vmem:[%s1 + $0x78] sm:$0xff]
  %v34 = vld [vmem:[%s1 + $0x80] sm:$0xff]
  %v35 = vld [vmem:[%s1 + $0x88] sm:$0xff]
  %v36 = vld [vmem:[%s1 + $0x90] sm:$0xff]
  %v37 = vld [vmem:[%s1 + $0x98] sm:$0xff]
  %v38 = vld [vmem:[%s1 + $0xa0] sm:$0xff]
  %v39 = vld [vmem:[%s1 + $0xa8] sm:$0xff]
  %v40 = vld [vmem:[%s1 + $0xb0] sm:$0xff]
  %v41 = vld [vmem:[%s1 + $0xb8] sm:$0xff]
  %v42 = vld [vmem:[%s1 + $0xc0] sm:$0xff]
  %v43 = vld [vmem:[%s1 + $0xc8] sm:$0xff]
  %v44 = vld [vmem:[%s1 + $0xd0] sm:$0xff]
  %v45 = vld [vmem:[%s1 + $0xd8] sm:$0xff]
  %v46 = vld [vmem:[%s1 + $0xe0] sm:$0xff]
  %v47 = vld [vmem:[%s1 + $0xe8] sm:$0xff]
  %v48 = vld [vmem:[%s1 + $0xf0] sm:$0xff]
  %v49 = vld [vmem:[%s1 + $0xf8] sm:$0xff]
  %v50 = vld [vmem:[%s2] sm:$0x3]
  %v52 = vperm.slane %v50, 0
  %v53 = vperm.slane %v50, 1
  %v60 = vunpack.c.l.b16 %v14
  %v61 = vunpack.c.h.b16 %v14
  %v62 = vunpack.c.l.b16 %v15
  %v63 = vunpack.c.h.b16 %v15
  %v64 = vunpack.c.l.b16 %v16
  %v65 = vunpack.c.h.b16 %v16
  %v66 = vunpack.c.l.b16 %v17
  %v67 = vunpack.c.h.b16 %v17
  %v68 = vpack.c.b16 %v62, %v60
  %v69 = vpack.c.b16 %v63, %v61
  %v70 = vpack.c.b16 %v66, %v64
  %v71 = vpack.c.b16 %v67, %v65
  %v108 = vunpack.c.l.b16 %v18
  %v109 = vunpack.c.h.b16 %v18
  %v110 = vunpack.c.l.b16 %v19
  %v111 = vunpack.c.h.b16 %v19
  %v112 = vunpack.c.l.b16 %v20
  %v113 = vunpack.c.h.b16 %v20
  %v114 = vunpack.c.l.b16 %v21
  %v115 = vunpack.c.h.b16 %v21
  %v116 = vunpack.c.l.b16 %v22
  %v117 = vunpack.c.h.b16 %v22
  %v118 = vunpack.c.l.b16 %v23
  %v119 = vunpack.c.h.b16 %v23
  %v120 = vunpack.c.l.b16 %v24
  %v121 = vunpack.c.h.b16 %v24
  %v122 = vunpack.c.l.b16 %v25
  %v123 = vunpack.c.h.b16 %v25
  %v124 = vunpack.c.l.b16 %v26
  %v125 = vunpack.c.h.b16 %v26
  %v126 = vunpack.c.l.b16 %v27
  %v127 = vunpack.c.h.b16 %v27
  %v128 = vunpack.c.l.b16 %v28
  %v129 = vunpack.c.h.b16 %v28
  %v130 = vunpack.c.l.b16 %v29
  %v131 = vunpack.c.h.b16 %v29
  %v132 = vunpack.c.l.b16 %v30
  %v133 = vunpack.c.h.b16 %v30
  %v134 = vunpack.c.l.b16 %v31
  %v135 = vunpack.c.h.b16 %v31
  %v136 = vunpack.c.l.b16 %v32
  %v137 = vunpack.c.h.b16 %v32
  %v138 = vunpack.c.l.b16 %v33
  %v139 = vunpack.c.h.b16 %v33
  %v140 = vunpack.c.l.b16 %v34
  %v141 = vunpack.c.h.b16 %v34
  %v142 = vunpack.c.l.b16 %v35
  %v143 = vunpack.c.h.b16 %v35
  %v144 = vunpack.c.l.b16 %v36
  %v145 = vunpack.c.h.b16 %v36
  %v146 = vunpack.c.l.b16 %v37
  %v147 = vunpack.c.h.b16 %v37
  %v148 = vunpack.c.l.b16 %v38
  %v149 = vunpack.c.h.b16 %v38
  %v150 = vunpack.c.l.b16 %v39
  %v151 = vunpack.c.h.b16 %v39
  %v152 = vunpack.c.l.b16 %v40
  %v153 = vunpack.c.h.b16 %v40
  %v154 = vunpack.c.l.b16 %v41
  %v155 = vunpack.c.h.b16 %v41
  %v156 = vunpack.c.l.b16 %v42
  %v157 = vunpack.c.h.b16 %v42
  %v158 = vunpack.c.l.b16 %v43
  %v159 = vunpack.c.h.b16 %v43
  %v160 = vunpack.c.l.b16 %v44
  %v161 = vunpack.c.h.b16 %v44
  %v162 = vunpack.c.l.b16 %v45
  %v163 = vunpack.c.h.b16 %v45
  %v164 = vunpack.c.l.b16 %v46
  %v165 = vunpack.c.h.b16 %v46
  %v166 = vunpack.c.l.b16 %v47
  %v167 = vunpack.c.h.b16 %v47
  %v168 = vunpack.c.l.b16 %v48
  %v169 = vunpack.c.h.b16 %v48
  %v170 = vunpack.c.l.b16 %v49
  %v171 = vunpack.c.h.b16 %v49
  %v172 = vpack.c.b16 %v110, %v108
  %v173 = vpack.c.b16 %v111, %v109
  %v174 = vpack.c.b16 %v114, %v112
  %v175 = vpack.c.b16 %v115, %v113
  %v176 = vpack.c.b16 %v118, %v116
  %v177 = vpack.c.b16 %v119, %v117
  %v178 = vpack.c.b16 %v122, %v120
  %v179 = vpack.c.b16 %v123, %v121
  %v180 = vpack.c.b16 %v126, %v124
  %v181 = vpack.c.b16 %v127, %v125
  %v182 = vpack.c.b16 %v130, %v128
  %v183 = vpack.c.b16 %v131, %v129
  %v184 = vpack.c.b16 %v134, %v132
  %v185 = vpack.c.b16 %v135, %v133
  %v186 = vpack.c.b16 %v138, %v136
  %v187 = vpack.c.b16 %v139, %v137
  %v188 = vpack.c.b16 %v142, %v140
  %v189 = vpack.c.b16 %v143, %v141
  %v190 = vpack.c.b16 %v146, %v144
  %v191 = vpack.c.b16 %v147, %v145
  %v192 = vpack.c.b16 %v150, %v148
  %v193 = vpack.c.b16 %v151, %v149
  %v194 = vpack.c.b16 %v154, %v152
  %v195 = vpack.c.b16 %v155, %v153
  %v196 = vpack.c.b16 %v158, %v156
  %v197 = vpack.c.b16 %v159, %v157
  %v198 = vpack.c.b16 %v162, %v160
  %v199 = vpack.c.b16 %v163, %v161
  %v200 = vpack.c.b16 %v166, %v164
  %v201 = vpack.c.b16 %v167, %v165
  %v202 = vpack.c.b16 %v170, %v168
  %v203 = vpack.c.b16 %v171, %v169
  %236 = vmatpush.bf16.msra.mxu0 %v186
  %237 = vmatpush.bf16.msra.mxu0 %v184
  %238 = vmatpush.bf16.msra.mxu0 %v182
  %239 = vmatpush.bf16.msra.mxu0 %v180
  %240 = vmatpush.bf16.msra.mxu0 %v178
  %241 = vmatpush.bf16.msra.mxu0 %v176
  %242 = vmatpush.bf16.msra.mxu0 %v174
  %243 = vmatpush.bf16.msra.mxu0 %v172
  %244 = vmatmul.bf16.gmra.mxu0 %v68
  %v245 = vpop.f32.mrf.mxu0
  %v246 = vadd.f32 %v52, %v245
  %v247 = vpop.f32.mrf.mxu0
  %v248 = vadd.f32 %v52, %v247
  %249 = vmatmul.bf16.gmra.mxu0 %v70
  %v250 = vpop.f32.mrf.mxu0
  %v251 = vadd.f32 %v52, %v250
  %v252 = vpop.f32.mrf.mxu0
  %v253 = vadd.f32 %v52, %v252
  %254 = vdwg.mxu0
  %255 = vmatpush.bf16.msra.mxu0 %v202
  %256 = vmatpush.bf16.msra.mxu0 %v200
  %257 = vmatpush.bf16.msra.mxu0 %v198
  %258 = vmatpush.bf16.msra.mxu0 %v196
  %259 = vmatpush.bf16.msra.mxu0 %v194
  %260 = vmatpush.bf16.msra.mxu0 %v192
  %261 = vmatpush.bf16.msra.mxu0 %v190
  %262 = vmatpush.bf16.msra.mxu0 %v188
  %263 = vmatmul.bf16.gmra.mxu0 %v69
  %v264 = vpop.f32.mrf.mxu0
  %v265 = vadd.f32 %v246, %v264
  %v266 = vpop.f32.mrf.mxu0
  %v267 = vadd.f32 %v248, %v266
  %268 = vmatmul.bf16.gmra.mxu0 %v71
  %v269 = vpop.f32.mrf.mxu0
  %v270 = vadd.f32 %v251, %v269
  %v271 = vpop.f32.mrf.mxu0
  %v272 = vadd.f32 %v253, %v271
  %273 = vdwg.mxu0
  %274 = vmatpush.bf16.msra.mxu0 %v187
  %275 = vmatpush.bf16.msra.mxu0 %v185
  %276 = vmatpush.bf16.msra.mxu0 %v183
  %277 = vmatpush.bf16.msra.mxu0 %v181
  %278 = vmatpush.bf16.msra.mxu0 %v179
  %279 = vmatpush.bf16.msra.mxu0 %v177
  %280 = vmatpush.bf16.msra.mxu0 %v175
  %281 = vmatpush.bf16.msra.mxu0 %v173
  %282 = vmatmul.bf16.gmra.mxu0 %v68
  %v283 = vpop.f32.mrf.mxu0
  %v284 = vadd.f32 %v53, %v283
  %v285 = vpop.f32.mrf.mxu0
  %v286 = vadd.f32 %v53, %v285
  %287 = vmatmul.bf16.gmra.mxu0 %v70
  %v288 = vpop.f32.mrf.mxu0
  %v289 = vadd.f32 %v53, %v288
  %v290 = vpop.f32.mrf.mxu0
  %v291 = vadd.f32 %v53, %v290
  %292 = vdwg.mxu0
  %293 = vmatpush.bf16.msra.mxu0 %v203
  %294 = vmatpush.bf16.msra.mxu0 %v201
  %295 = vmatpush.bf16.msra.mxu0 %v199
  %296 = vmatpush.bf16.msra.mxu0 %v197
  %297 = vmatpush.bf16.msra.mxu0 %v195
  %298 = vmatpush.bf16.msra.mxu0 %v193
  %299 = vmatpush.bf16.msra.mxu0 %v191
  %300 = vmatpush.bf16.msra.mxu0 %v189
  %301 = vmatmul.bf16.gmra.mxu0 %v69
  %v302 = vpop.f32.mrf.mxu0
  %v303 = vadd.f32 %v284, %v302
  %v304 = vpop.f32.mrf.mxu0
  %v305 = vadd.f32 %v286, %v304
  %306 = vmatmul.bf16.gmra.mxu0 %v71
  %v307 = vpop.f32.mrf.mxu0
  %v308 = vadd.f32 %v289, %v307
  %v309 = vpop.f32.mrf.mxu0
  %v310 = vadd.f32 %v291, %v309
  %311 = vdwg.mxu0
  %v312 = vmax.f32 %v265, 0.0
  %v313 = vmax.f32 %v303, 0.0
  %v314 = vmax.f32 %v267, 0.0
  %v315 = vmax.f32 %v305, 0.0
  %v316 = vmax.f32 %v270, 0.0
  %v317 = vmax.f32 %v308, 0.0
  %v318 = vmax.f32 %v272, 0.0
  %v319 = vmax.f32 %v310, 0.0
  %320 = vst [vmem:[%s3] sm:$0xff] %v312
  %321 = vst [vmem:[%s3 + $0x8] sm:$0xff] %v313
  %322 = vst [vmem:[%s3 + $0x10] sm:$0xff] %v314
  %323 = vst [vmem:[%s3 + $0x18] sm:$0xff] %v315
  %324 = vst [vmem:[%s3 + $0x20] sm:$0xff] %v316
  %325 = vst [vmem:[%s3 + $0x28] sm:$0xff] %v317
  %326 = vst [vmem:[%s3 + $0x30] sm:$0xff] %v318
  %327 = vst [vmem:[%s3 + $0x38] sm:$0xff] %v319
  // Predicated region
  $region14: #{_lambda_.62} parent=0 // pred_check
    _
  $region15: #{_lambda_.62} parent=0 // pred_check_branch
    %329 = sbr.rel (0) target = $region17
  $region16: #{_lambda_.62} parent=0 // pred_region
    _
  $region17: #{_lambda_.62} parent=0 // pred_fallthru
    _
  // Predicated region
  $region18: #{_lambda_.62} parent=0 // pred_check
    _
  $region19: #{_lambda_.62} parent=0 // pred_check_branch
    %331 = sbr.rel (0) target = $region21
  $region20: #{_lambda_.62} parent=0 // pred_region
    _
  $region21: #{_lambda_.62} parent=0 // pred_fallthru
    _

// kernel: _lambda_.64
$region0: #{_lambda_.64}
  #allocation0 [shape = 'u32[]', space=smem, size = 0x4, offset = 0x4, fixed_abs, tag = 'smem constant byte address 0x4 - core index']
  #allocation1 [shape = 'u32[72,128]{1,0:T(1,128)}', space=vmem, size = 0x9000, scoped, tag = 'internal scratch']
  %s0 = inlined_call_operand.vmem [shape: f32[2,192], index: 0, kind: input, shape index: {}]
  %s1 = inlined_call_operand.vmem [shape: f32[2,192], index: 1, kind: input, shape index: {}]
  %s2 = inlined_call_operand.vmem [shape: f32[2,192], index: 2, kind: input, shape index: {}]
  %s3 = inlined_call_operand.vmem [shape: f32[2,192], index: 3, kind: output, shape index: {0}]
  %s4 = inlined_call_operand.vmem [shape: f32[2,1], index: 4, kind: output, shape index: {1}]
  %5 = xla_tuple %s3, %s4
  %s6 = sld [smem:[#allocation0]]
  $region30: #{_lambda_.64} parent=0
    _
  %s8 = ssub.s32 1, %s6
  %s9 = scalar_select 0, %s8, %s6
  // Predicated region
  $region2: #{_lambda_.64} parent=0 // pred_check
    _
  $region3: #{_lambda_.64} parent=0 // pred_check_branch
    %11 = sbr.rel (0) target = $region5
  $region4: #{_lambda_.64} parent=0 // pred_region
    _
  $region5: #{_lambda_.64} parent=0 // pred_fallthru
    _
  // Predicated region
  $region6: #{_lambda_.64} parent=0 // pred_check
    _
  $region7: #{_lambda_.64} parent=0 // pred_check_branch
    %13 = sbr.rel (0) target = $region9
  $region8: #{_lambda_.64} parent=0 // pred_region
    _
  $region9: #{_lambda_.64} parent=0 // pred_fallthru
    _
  // Predicated region
  $region10: #{_lambda_.64} parent=0 // pred_check
    _
  $region11: #{_lambda_.64} parent=0 // pred_check_branch
    %15 = sbr.rel (0) target = $region13
  $region12: #{_lambda_.64} parent=0 // pred_region
    _
  $region13: #{_lambda_.64} parent=0 // pred_fallthru
    _
  %v16 = vld [vmem:[%s1] sm:$0xf]
  %v17 = vadd.f32 %v16, 2.0
  %v18 = vsub.f32 0.0, %v17
  %v19 = vmul.f32 %v18, 1.442695
  %v20 = vpow.pop %v19
  %v21 = vadd.f32 %v20, 1.0
  %v22 = vrcp.pop %v21
  %v23 = vmul.f32 %v21, %v22
  %v24 = vsub.f32 1.0, %v23
  %v25 = vmul.f32 %v22, %v24
  %v26 = vadd.f32 %v22, %v25
  %vm27 = vweird.f32 %v21
  %vm28 = vweird.f32 %v22
  %vm29 = vmor %vm27, %vm28
  %v30 = vsel %vm29, %v22, %v26
  %v31 = vand.u32 2147483647, %v21
  %vm32 = vcmp.eq.f32.partialorder %v31, 8.507059e+37
  %v33 = vand.u32 %v21, 2147483648
  %v34 = vor.u32 1.1754944e-38, %v33
  %v35 = vsel %vm32, %v34, %v30
  %v36 = vmul.f32 1.0, %v35
  %v37 = vld [vmem:[%s0] sm:$0xf]
  %v38 = vmul.f32 %v36, %v37
  %v39 = vld [vmem:[%s2] sm:$0xf]
  %v40 = vadd.f32 %v38, %v39
  %vm41 = vcmask 1041408
  %vm42 = vcmask 519170
  %vm43 = vmor %vm42, %vm41
  %44 = vst.msk [vmem:[%s3] sm:$0xf] %vm43, %v40
  %v45 = vlog2.pop %v36
  %v46 = vmul.f32 %v45, 0.6931472
  %48 = vst [vmem:[#allocation1] ss:$4 sm:$0xff] %v46
  %v49 = vld.sshfl [vmem:[#allocation1] sm:$0xff pattern:$0x73625140]
  %v50 = vld.sshfl [vmem:[#allocation1 + $0x8] sm:$0xff pattern:$0x73625140]
  %v53 = vsel %vm41, %v49, 0.0
  %vm54 = vcmask 517120
  %v55 = vsel %vm54, %v50, 0.0
  %v56 = vadd.f32 %v53, %v55
  %57 = vadd.xlane.f32.xlu0 %v56
  %v58 = vpop.xlane.xlu0 %57
  %vm59 = vcmask 1024
  %60 = vst.msk [vmem:[%s4] sm:$0x3] %vm59, %v58
  // Predicated region
  $region14: #{_lambda_.64} parent=0 // pred_check
    _
  $region15: #{_lambda_.64} parent=0 // pred_check_branch
    %62 = sbr.rel (0) target = $region17
  $region16: #{_lambda_.64} parent=0 // pred_region
    _
  $region17: #{_lambda_.64} parent=0 // pred_fallthru
    _
  // Predicated region
  $region18: #{_lambda_.64} parent=0 // pred_check
    _
  $region19: #{_lambda_.64} parent=0 // pred_check_branch
    %64 = sbr.rel (0) target = $region21
  $region20: #{_lambda_.64} parent=0 // pred_region
    _
  $region21: #{_lambda_.64} parent=0 // pred_fallthru
    _
  // Predicated region
  $region22: #{_lambda_.64} parent=0 // pred_check
    _
  $region23: #{_lambda_.64} parent=0 // pred_check_branch
    %66 = sbr.rel (0) target = $region25
  $region24: #{_lambda_.64} parent=0 // pred_region
    _
  $region25: #{_lambda_.64} parent=0 // pred_fallthru
    _
  // Predicated region
  $region26: #{_lambda_.64} parent=0 // pred_check
    _
  $region27: #{_lambda_.64} parent=0 // pred_check_branch
    %68 = sbr.rel (0) target = $region29
  $region28: #{_lambda_.64} parent=0 // pred_region
    _
  $region29: #{_lambda_.64} parent=0 // pred_fallthru
    _

// kernel: _lambda_.65
$region0: #{_lambda_.65}
  #allocation0 [shape = 'u32[]', space=smem, size = 0x4, offset = 0x4, fixed_abs, tag = 'smem constant byte address 0x4 - core index']
  #allocation1 [shape = 'u32[72,128]{1,0:T(1,128)}', space=vmem, size = 0x9000, scoped, tag = 'internal scratch']
  %s0 = inlined_call_operand.vmem [shape: f32[2,384], index: 0, kind: input, shape index: {}]
  %s1 = inlined_call_operand.vmem [shape: f32[1,384], index: 1, kind: input, shape index: {}, may-alias: {1,2}]
  %s2 = inlined_call_operand.vmem [shape: f32[1,384], index: 2, kind: input, shape index: {}, may-alias: {1,2}]
  %s3 = inlined_call_operand.vmem [shape: f32[2,1], index: 3, kind: output, shape index: {}]
  %s4 = sld [smem:[#allocation0]]
  $region22: #{_lambda_.65} parent=0
    _
  %s6 = ssub.s32 1, %s4
  %s7 = scalar_select 0, %s6, %s4
  // Predicated region
  $region2: #{_lambda_.65} parent=0 // pred_check
    _
  $region3: #{_lambda_.65} parent=0 // pred_check_branch
    %9 = sbr.rel (0) target = $region5
  $region4: #{_lambda_.65} parent=0 // pred_region
    _
  $region5: #{_lambda_.65} parent=0 // pred_fallthru
    _
  // Predicated region
  $region6: #{_lambda_.65} parent=0 // pred_check
    _
  $region7: #{_lambda_.65} parent=0 // pred_check_branch
    %11 = sbr.rel (0) target = $region9
  $region8: #{_lambda_.65} parent=0 // pred_region
    _
  $region9: #{_lambda_.65} parent=0 // pred_fallthru
    _
  // Predicated region
  $region10: #{_lambda_.65} parent=0 // pred_check
    _
  $region11: #{_lambda_.65} parent=0 // pred_check_branch
    %13 = sbr.rel (0) target = $region13
  $region12: #{_lambda_.65} parent=0 // pred_region
    _
  $region13: #{_lambda_.65} parent=0 // pred_fallthru
    _
  %v14 = vld [vmem:[%s2] sm:$0x7]
  %v15 = vld [vmem:[%s0] sm:$0x3f]
  %v16 = vld [vmem:[%s1] sm:$0x7]
  %v18 = vperm.slane %v16, 0
  %v19 = vperm.slane %v16, 1
  %v20 = vperm.slane %v16, 2
  %v21 = vrot.slane %v19, 6
  %v22 = vrot.slane %v20, 4
  %vm23 = vcmask 1041408
  %v24 = vsel %vm23, %v18, %v21
  %vm25 = vcmask 1043456
  %v26 = vsel %vm25, %v24, %v22
  %v28 = vsub.f32 %v15, %v26
  %v29 = vmul.f32 %v14, 2.0
  %v30 = vmul.f32 %v28, %v28
  %v31 = vmul.f32 %v14, -2.0
  %v32 = vmul.f32 %v31, 1.442695
  %v33 = vpow.pop %v32
  %v35 = vperm.slane %v33, 0
  %v36 = vperm.slane %v33, 1
  %v37 = vperm.slane %v33, 2
  %v38 = vrot.slane %v36, 6
  %v39 = vrot.slane %v37, 4
  %v40 = vsel %vm23, %v35, %v38
  %v41 = vsel %vm25, %v40, %v39
  %v43 = vmul.f32 %v30, %v41
  %v45 = vperm.slane %v29, 0
  %v46 = vperm.slane %v29, 1
  %v47 = vperm.slane %v29, 2
  %52 = vst [vmem:[#allocation1] ss:$4 sm:$0xff] %v43
  %v53 = vld.sshfl [vmem:[#allocation1] sm:$0xff pattern:$0x73625140]
  %v54 = vld.sshfl [vmem:[#allocation1 + $0x8] sm:$0xff pattern:$0x73625140]
  %v55 = vld.sshfl [vmem:[#allocation1 + $0x10] sm:$0xff pattern:$0x73625140]
  %v59 = vadd.f32 %v45, %v53
  %v60 = vadd.f32 %v46, %v54
  %v61 = vadd.f32 %v47, %v55
  %v62 = vadd.f32 %v59, 1.837877
  %v63 = vadd.f32 %v60, 1.837877
  %v64 = vadd.f32 %v61, 1.837877
  %v65 = vmul.f32 %v62, -0.5
  %v66 = vmul.f32 %v63, -0.5
  %v67 = vmul.f32 %v64, -0.5
  %v68 = vsel %vm23, %v65, 0.0
  %v69 = vsel %vm23, %v66, 0.0
  %v70 = vadd.f32 %v68, %v69
  %v71 = vsel %vm23, %v67, 0.0
  %v72 = vadd.f32 %v70, %v71
  %73 = vadd.xlane.f32.xlu0 %v72
  %v74 = vpop.xlane.xlu0 %73
  %vm75 = vcmask 1024
  %76 = vst.msk [vmem:[%s3] sm:$0x3] %vm75, %v74
  // Predicated region
  $region14: #{_lambda_.65} parent=0 // pred_check
    _
  $region15: #{_lambda_.65} parent=0 // pred_check_branch
    %78 = sbr.rel (0) target = $region17
  $region16: #{_lambda_.65} parent=0 // pred_region
    _
  $region17: #{_lambda_.65} parent=0 // pred_fallthru
    _
  // Predicated region
  $region18: #{_lambda_.65} parent=0 // pred_check
    _
  $region19: #{_lambda_.65} parent=0 // pred_check_branch
    %80 = sbr.rel (0) target = $region21
  $region20: #{_lambda_.65} parent=0 // pred_region
    _
  $region21: #{_lambda_.65} parent=0 // pred_fallthru
    _

// kernel: _lambda_.43
$region0: #{_lambda_.43}
  #allocation0 [shape = 'u32[]', space=smem, size = 0x4, offset = 0x4, fixed_abs, tag = 'smem constant byte address 0x4 - core index']
  #allocation1 [shape = 'u32[72,128]{1,0:T(1,128)}', space=vmem, size = 0x9000, scoped, tag = 'internal scratch']
  %s0 = inlined_call_operand.vmem [shape: bf16[128,54], index: 0, kind: input, shape index: {}]
  %s1 = inlined_call_operand.vmem [shape: bf16[54,128], index: 1, kind: input, shape index: {}]
  %s2 = inlined_call_operand.vmem [shape: f32[1,128], index: 2, kind: input, shape index: {}]
  %s3 = inlined_call_operand.vmem [shape: f32[128,128], index: 3, kind: output, shape index: {}]
  %s4 = sld [smem:[#allocation0]]
  $region22: #{_lambda_.43} parent=0
    _
  %s6 = ssub.s32 1, %s4
  %s7 = scalar_select 0, %s6, %s4
  // Predicated region
  $region2: #{_lambda_.43} parent=0 // pred_check
    _
  $region3: #{_lambda_.43} parent=0 // pred_check_branch
    %9 = sbr.rel (0) target = $region5
  $region4: #{_lambda_.43} parent=0 // pred_region
    _
  $region5: #{_lambda_.43} parent=0 // pred_fallthru
    _
  // Predicated region
  $region6: #{_lambda_.43} parent=0 // pred_check
    _
  $region7: #{_lambda_.43} parent=0 // pred_check_branch
    %11 = sbr.rel (0) target = $region9
  $region8: #{_lambda_.43} parent=0 // pred_region
    _
  $region9: #{_lambda_.43} parent=0 // pred_fallthru
    _
  // Predicated region
  $region10: #{_lambda_.43} parent=0 // pred_check
    _
  $region11: #{_lambda_.43} parent=0 // pred_check_branch
    %13 = sbr.rel (0) target = $region13
  $region12: #{_lambda_.43} parent=0 // pred_region
    _
  $region13: #{_lambda_.43} parent=0 // pred_fallthru
    _
  %v15 = vld [vmem:[%s0] sm:$0xf]
  %v16 = vld [vmem:[%s0 + $0x4] sm:$0xf]
  %v17 = vld [vmem:[%s0 + $0x8] sm:$0xf]
  %v18 = vld [vmem:[%s0 + $0xc] sm:$0xf]
  %v19 = vld [vmem:[%s0 + $0x10] sm:$0xf]
  %v20 = vld [vmem:[%s0 + $0x14] sm:$0xf]
  %v21 = vld [vmem:[%s0 + $0x18] sm:$0xf]
  %v22 = vld [vmem:[%s0 + $0x1c] sm:$0xf]
  %v23 = vld [vmem:[%s0 + $0x20] sm:$0xf]
  %v24 = vld [vmem:[%s0 + $0x24] sm:$0xf]
  %v25 = vld [vmem:[%s0 + $0x28] sm:$0xf]
  %v26 = vld [vmem:[%s0 + $0x2c] sm:$0xf]
  %v27 = vld [vmem:[%s0 + $0x30] sm:$0xf]
  %v28 = vld [vmem:[%s0 + $0x34] sm:$0xf]
  %v29 = vld [vmem:[%s0 + $0x38] sm:$0xf]
  %v30 = vld [vmem:[%s0 + $0x3c] sm:$0xf]
  %v31 = vld [vmem:[%s1] sm:$0xf]
  %v32 = vld [vmem:[%s1 + $0x4] sm:$0xf]
  %v33 = vld [vmem:[%s1 + $0x8] sm:$0xf]
  %v34 = vld [vmem:[%s1 + $0xc] sm:$0xf]
  %v35 = vld [vmem:[%s1 + $0x10] sm:$0xf]
  %v36 = vld [vmem:[%s1 + $0x14] sm:$0xf]
  %v37 = vld [vmem:[%s1 + $0x18] sm:$0x7]
  %v38 = vld [vmem:[%s2] sm:$0x1]
  %v40 = vperm.slane %v38, 0
  %v58 = vunpack.c.l.b16 %v15
  %v59 = vunpack.c.l.b16 %v16
  %v60 = vunpack.c.l.b16 %v17
  %v61 = vunpack.c.l.b16 %v18
  %v62 = vunpack.c.l.b16 %v19
  %v63 = vunpack.c.l.b16 %v20
  %v64 = vunpack.c.l.b16 %v21
  %v65 = vunpack.c.l.b16 %v22
  %v66 = vunpack.c.l.b16 %v23
  %v67 = vunpack.c.l.b16 %v24
  %v68 = vunpack.c.l.b16 %v25
  %v69 = vunpack.c.l.b16 %v26
  %v70 = vunpack.c.l.b16 %v27
  %v71 = vunpack.c.l.b16 %v28
  %v72 = vunpack.c.l.b16 %v29
  %v73 = vunpack.c.l.b16 %v30
  %v74 = vpack.c.b16 %v59, %v58
  %v75 = vpack.c.b16 %v61, %v60
  %v76 = vpack.c.b16 %v63, %v62
  %v77 = vpack.c.b16 %v65, %v64
  %v78 = vpack.c.b16 %v67, %v66
  %v79 = vpack.c.b16 %v69, %v68
  %v80 = vpack.c.b16 %v71, %v70
  %v81 = vpack.c.b16 %v73, %v72
  %v89 = vunpack.c.l.b16 %v31
  %v90 = vunpack.c.l.b16 %v32
  %v91 = vunpack.c.l.b16 %v33
  %v92 = vunpack.c.l.b16 %v34
  %v93 = vunpack.c.l.b16 %v35
  %v94 = vunpack.c.l.b16 %v36
  %v95 = vunpack.c.l.b16 %v37
  %v96 = vpack.c.b16 %v90, %v89
  %v97 = vpack.c.b16 %v92, %v91
  %v98 = vpack.c.b16 %v94, %v93
  %v99 = vpack.c.b16 %v95, %v95
  %vm103 = vcmask 441344
  %v105 = vsel %vm103, %v74, 0
  %v108 = vsel %vm103, %v75, 0
  %v111 = vsel %vm103, %v76, 0
  %v114 = vsel %vm103, %v77, 0
  %v117 = vsel %vm103, %v78, 0
  %v120 = vsel %vm103, %v79, 0
  %v123 = vsel %vm103, %v80, 0
  %v126 = vsel %vm103, %v81, 0
  %vm128 = vcmask 1042432
  %v130 = vsel %vm128, %v99, 0
  %132 = vmatpush.bf16.msra.mxu0 0
  %133 = vmatpush.bf16.msra.mxu0 0
  %134 = vmatpush.bf16.msra.mxu0 0
  %135 = vmatpush.bf16.msra.mxu0 0
  %136 = vmatpush.bf16.msra.mxu0 %v130
  %137 = vmatpush.bf16.msra.mxu0 %v98
  %138 = vmatpush.bf16.msra.mxu0 %v97
  %139 = vmatpush.bf16.msra.mxu0 %v96
  %140 = vmatmul.bf16.gmra.mxu0 %v105
  %v141 = vpop.f32.mrf.mxu0
  %v142 = vadd.f32 %v40, %v141
  %v143 = vpop.f32.mrf.mxu0
  %v144 = vadd.f32 %v40, %v143
  %145 = vmatmul.bf16.gmra.mxu0 %v108
  %v146 = vpop.f32.mrf.mxu0
  %v147 = vadd.f32 %v40, %v146
  %v148 = vpop.f32.mrf.mxu0
  %v149 = vadd.f32 %v40, %v148
  %150 = vmatmul.bf16.gmra.mxu0 %v111
  %v151 = vpop.f32.mrf.mxu0
  %v152 = vadd.f32 %v40, %v151
  %v153 = vpop.f32.mrf.mxu0
  %v154 = vadd.f32 %v40, %v153
  %155 = vmatmul.bf16.gmra.mxu0 %v114
  %v156 = vpop.f32.mrf.mxu0
  %v157 = vadd.f32 %v40, %v156
  %v158 = vpop.f32.mrf.mxu0
  %v159 = vadd.f32 %v40, %v158
  %160 = vmatmul.bf16.gmra.mxu0 %v117
  %v161 = vpop.f32.mrf.mxu0
  %v162 = vadd.f32 %v40, %v161
  %v163 = vpop.f32.mrf.mxu0
  %v164 = vadd.f32 %v40, %v163
  %165 = vmatmul.bf16.gmra.mxu0 %v120
  %v166 = vpop.f32.mrf.mxu0
  %v167 = vadd.f32 %v40, %v166
  %v168 = vpop.f32.mrf.mxu0
  %v169 = vadd.f32 %v40, %v168
  %170 = vmatmul.bf16.gmra.mxu0 %v123
  %v171 = vpop.f32.mrf.mxu0
  %v172 = vadd.f32 %v40, %v171
  %v173 = vpop.f32.mrf.mxu0
  %v174 = vadd.f32 %v40, %v173
  %175 = vmatmul.bf16.gmra.mxu0 %v126
  %v176 = vpop.f32.mrf.mxu0
  %v177 = vadd.f32 %v40, %v176
  %v178 = vpop.f32.mrf.mxu0
  %v179 = vadd.f32 %v40, %v178
  %180 = vdwg.mxu0
  %v181 = vmax.f32 %v142, 0.0
  %v182 = vmax.f32 %v144, 0.0
  %v183 = vmax.f32 %v147, 0.0
  %v184 = vmax.f32 %v149, 0.0
  %v185 = vmax.f32 %v152, 0.0
  %v186 = vmax.f32 %v154, 0.0
  %v187 = vmax.f32 %v157, 0.0
  %v188 = vmax.f32 %v159, 0.0
  %v189 = vmax.f32 %v162, 0.0
  %v190 = vmax.f32 %v164, 0.0
  %v191 = vmax.f32 %v167, 0.0
  %v192 = vmax.f32 %v169, 0.0
  %v193 = vmax.f32 %v172, 0.0
  %v194 = vmax.f32 %v174, 0.0
  %v195 = vmax.f32 %v177, 0.0
  %v196 = vmax.f32 %v179, 0.0
  %197 = vst [vmem:[%s3] sm:$0xff] %v181
  %198 = vst [vmem:[%s3 + $0x8] sm:$0xff] %v182
  %199 = vst [vmem:[%s3 + $0x10] sm:$0xff] %v183
  %200 = vst [vmem:[%s3 + $0x18] sm:$0xff] %v184
  %201 = vst [vmem:[%s3 + $0x20] sm:$0xff] %v185
  %202 = vst [vmem:[%s3 + $0x28] sm:$0xff] %v186
  %203 = vst [vmem:[%s3 + $0x30] sm:$0xff] %v187
  %204 = vst [vmem:[%s3 + $0x38] sm:$0xff] %v188
  %205 = vst [vmem:[%s3 + $0x40] sm:$0xff] %v189
  %206 = vst [vmem:[%s3 + $0x48] sm:$0xff] %v190
  %207 = vst [vmem:[%s3 + $0x50] sm:$0xff] %v191
  %208 = vst [vmem:[%s3 + $0x58] sm:$0xff] %v192
  %209 = vst [vmem:[%s3 + $0x60] sm:$0xff] %v193
  %210 = vst [vmem:[%s3 + $0x68] sm:$0xff] %v194
  %211 = vst [vmem:[%s3 + $0x70] sm:$0xff] %v195
  %212 = vst [vmem:[%s3 + $0x78] sm:$0xff] %v196
  // Predicated region
  $region14: #{_lambda_.43} parent=0 // pred_check
    _
  $region15: #{_lambda_.43} parent=0 // pred_check_branch
    %214 = sbr.rel (0) target = $region17
  $region16: #{_lambda_.43} parent=0 // pred_region
    _
  $region17: #{_lambda_.43} parent=0 // pred_fallthru
    _
  // Predicated region
  $region18: #{_lambda_.43} parent=0 // pred_check
    _
  $region19: #{_lambda_.43} parent=0 // pred_check_branch
    %216 = sbr.rel (0) target = $region21
  $region20: #{_lambda_.43} parent=0 // pred_region
    _
  $region21: #{_lambda_.43} parent=0 // pred_fallthru
    _

// kernel: _lambda_.63
$region0: #{_lambda_.63}
  #allocation0 [shape = 'u32[]', space=smem, size = 0x4, offset = 0x4, fixed_abs, tag = 'smem constant byte address 0x4 - core index']
  #allocation1 [shape = 'u32[72,128]{1,0:T(1,128)}', space=vmem, size = 0x9000, scoped, tag = 'internal scratch']
  %s0 = inlined_call_operand.vmem [shape: bf16[32,2304], index: 0, kind: input, shape index: {}]
  %s1 = inlined_call_operand.vmem [shape: bf16[2304,128], index: 1, kind: input, shape index: {}]
  %s2 = inlined_call_operand.vmem [shape: f32[1,128], index: 2, kind: input, shape index: {}]
  %s3 = inlined_call_operand.vmem [shape: f32[32,128], index: 3, kind: output, shape index: {}]
  %s4 = sld [smem:[#allocation0]]
  $region22: #{_lambda_.63} parent=0
    _
  %s6 = ssub.s32 1, %s4
  %s7 = scalar_select 0, %s6, %s4
  // Predicated region
  $region2: #{_lambda_.63} parent=0 // pred_check
    _
  $region3: #{_lambda_.63} parent=0 // pred_check_branch
    %9 = sbr.rel (0) target = $region5
  $region4: #{_lambda_.63} parent=0 // pred_region
    _
  $region5: #{_lambda_.63} parent=0 // pred_fallthru
    _
  // Predicated region
  $region6: #{_lambda_.63} parent=0 // pred_check
    _
  $region7: #{_lambda_.63} parent=0 // pred_check_branch
    %11 = sbr.rel (0) target = $region9
  $region8: #{_lambda_.63} parent=0 // pred_region
    _
  $region9: #{_lambda_.63} parent=0 // pred_fallthru
    _
  // Predicated region
  $region10: #{_lambda_.63} parent=0 // pred_check
    _
  $region11: #{_lambda_.63} parent=0 // pred_check_branch
    %13 = sbr.rel (0) target = $region13
  $region12: #{_lambda_.63} parent=0 // pred_region
    _
  $region13: #{_lambda_.63} parent=0 // pred_fallthru
    _
  %v14 = vld [vmem:[%s0] sm:$0xff]
  %v15 = vld [vmem:[%s0 + $0x8] sm:$0xff]
  %v16 = vld [vmem:[%s0 + $0x10] sm:$0xff]
  %v17 = vld [vmem:[%s0 + $0x18] sm:$0xff]
  %v18 = vld [vmem:[%s0 + $0x20] sm:$0xff]
  %v19 = vld [vmem:[%s0 + $0x28] sm:$0xff]
  %v20 = vld [vmem:[%s0 + $0x30] sm:$0xff]
  %v21 = vld [vmem:[%s0 + $0x38] sm:$0xff]
  %v22 = vld [vmem:[%s0 + $0x40] sm:$0xff]
  %v23 = vld [vmem:[%s0 + $0x48] sm:$0xff]
  %v24 = vld [vmem:[%s0 + $0x50] sm:$0xff]
  %v25 = vld [vmem:[%s0 + $0x58] sm:$0xff]
  %v26 = vld [vmem:[%s0 + $0x60] sm:$0xff]
  %v27 = vld [vmem:[%s0 + $0x68] sm:$0xff]
  %v28 = vld [vmem:[%s0 + $0x70] sm:$0xff]
  %v29 = vld [vmem:[%s0 + $0x78] sm:$0xff]
  %v30 = vld [vmem:[%s0 + $0x80] sm:$0xff]
  %v31 = vld [vmem:[%s0 + $0x88] sm:$0xff]
  %v32 = vld [vmem:[%s0 + $0x90] sm:$0xff]
  %v33 = vld [vmem:[%s0 + $0x98] sm:$0xff]
  %v34 = vld [vmem:[%s0 + $0xa0] sm:$0xff]
  %v35 = vld [vmem:[%s0 + $0xa8] sm:$0xff]
  %v36 = vld [vmem:[%s0 + $0xb0] sm:$0xff]
  %v37 = vld [vmem:[%s0 + $0xb8] sm:$0xff]
  %v38 = vld [vmem:[%s0 + $0xc0] sm:$0xff]
  %v39 = vld [vmem:[%s0 + $0xc8] sm:$0xff]
  %v40 = vld [vmem:[%s0 + $0xd0] sm:$0xff]
  %v41 = vld [vmem:[%s0 + $0xd8] sm:$0xff]
  %v42 = vld [vmem:[%s0 + $0xe0] sm:$0xff]
  %v43 = vld [vmem:[%s0 + $0xe8] sm:$0xff]
  %v44 = vld [vmem:[%s0 + $0xf0] sm:$0xff]
  %v45 = vld [vmem:[%s0 + $0xf8] sm:$0xff]
  %v46 = vld [vmem:[%s0 + $0x100] sm:$0xff]
  %v47 = vld [vmem:[%s0 + $0x108] sm:$0xff]
  %v48 = vld [vmem:[%s0 + $0x110] sm:$0xff]
  %v49 = vld [vmem:[%s0 + $0x118] sm:$0xff]
  %v50 = vld [vmem:[%s1] sm:$0xf]
  %v51 = vld [vmem:[%s1 + $0x4] sm:$0xf]
  %v52 = vld [vmem:[%s1 + $0x8] sm:$0xf]
  %v53 = vld [vmem:[%s1 + $0xc] sm:$0xf]
  %v54 = vld [vmem:[%s1 + $0x10] sm:$0xf]
  %v55 = vld [vmem:[%s1 + $0x14] sm:$0xf]
  %v56 = vld [vmem:[%s1 + $0x18] sm:$0xf]
  %v57 = vld [vmem:[%s1 + $0x1c] sm:$0xf]
  %v58 = vld [vmem:[%s1 + $0x20] sm:$0xf]
  %v59 = vld [vmem:[%s1 + $0x24] sm:$0xf]
  %v60 = vld [vmem:[%s1 + $0x28] sm:$0xf]
  %v61 = vld [vmem:[%s1 + $0x2c] sm:$0xf]
  %v62 = vld [vmem:[%s1 + $0x30] sm:$0xf]
  %v63 = vld [vmem:[%s1 + $0x34] sm:$0xf]
  %v64 = vld [vmem:[%s1 + $0x38] sm:$0xf]
  %v65 = vld [vmem:[%s1 + $0x3c] sm:$0xf]
  %v66 = vld [vmem:[%s1 + $0x40] sm:$0xf]
  %v67 = vld [vmem:[%s1 + $0x44] sm:$0xf]
  %v68 = vld [vmem:[%s1 + $0x48] sm:$0xf]
  %v69 = vld [vmem:[%s1 + $0x4c] sm:$0xf]
  %v70 = vld [vmem:[%s1 + $0x50] sm:$0xf]
  %v71 = vld [vmem:[%s1 + $0x54] sm:$0xf]
  %v72 = vld [vmem:[%s1 + $0x58] sm:$0xf]
  %v73 = vld [vmem:[%s1 + $0x5c] sm:$0xf]
  %v74 = vld [vmem:[%s1 + $0x60] sm:$0xf]
  %v75 = vld [vmem:[%s1 + $0x64] sm:$0xf]
  %v76 = vld [vmem:[%s1 + $0x68] sm:$0xf]
  %v77 = vld [vmem:[%s1 + $0x6c] sm:$0xf]
  %v78 = vld [vmem:[%s1 + $0x70] sm:$0xf]
  %v79 = vld [vmem:[%s1 + $0x74] sm:$0xf]
  %v80 = vld [vmem:[%s1 + $0x78] sm:$0xf]
  %v81 = vld [vmem:[%s1 + $0x7c] sm:$0xf]
  %v82 = vld [vmem:[%s1 + $0x80] sm:$0xf]
  %v83 = vld [vmem:[%s1 + $0x84] sm:$0xf]
  %v84 = vld [vmem:[%s1 + $0x88] sm:$0xf]
  %v85 = vld [vmem:[%s1 + $0x8c] sm:$0xf]
  %v86 = vld [vmem:[%s1 + $0x90] sm:$0xf]
  %v87 = vld [vmem:[%s1 + $0x94] sm:$0xf]
  %v88 = vld [vmem:[%s1 + $0x98] sm:$0xf]
  %v89 = vld [vmem:[%s1 + $0x9c] sm:$0xf]
  %v90 = vld [vmem:[%s1 + $0xa0] sm:$0xf]
  %v91 = vld [vmem:[%s1 + $0xa4] sm:$0xf]
  %v92 = vld [vmem:[%s1 + $0xa8] sm:$0xf]
  %v93 = vld [vmem:[%s1 + $0xac] sm:$0xf]
  %v94 = vld [vmem:[%s1 + $0xb0] sm:$0xf]
  %v95 = vld [vmem:[%s1 + $0xb4] sm:$0xf]
  %v96 = vld [vmem:[%s1 + $0xb8] sm:$0xf]
  %v97 = vld [vmem:[%s1 + $0xbc] sm:$0xf]
  %v98 = vld [vmem:[%s1 + $0xc0] sm:$0xf]
  %v99 = vld [vmem:[%s1 + $0xc4] sm:$0xf]
  %v100 = vld [vmem:[%s1 + $0xc8] sm:$0xf]
  %v101 = vld [vmem:[%s1 + $0xcc] sm:$0xf]
  %v102 = vld [vmem:[%s1 + $0xd0] sm:$0xf]
  %v103 = vld [vmem:[%s1 + $0xd4] sm:$0xf]
  %v104 = vld [vmem:[%s1 + $0xd8] sm:$0xf]
  %v105 = vld [vmem:[%s1 + $0xdc] sm:$0xf]
  %v106 = vld [vmem:[%s1 + $0xe0] sm:$0xf]
  %v107 = vld [vmem:[%s1 + $0xe4] sm:$0xf]
  %v108 = vld [vmem:[%s1 + $0xe8] sm:$0xf]
  %v109 = vld [vmem:[%s1 + $0xec] sm:$0xf]
  %v110 = vld [vmem:[%s1 + $0xf0] sm:$0xf]
  %v111 = vld [vmem:[%s1 + $0xf4] sm:$0xf]
  %v112 = vld [vmem:[%s1 + $0xf8] sm:$0xf]
  %v113 = vld [vmem:[%s1 + $0xfc] sm:$0xf]
  %v114 = vld [vmem:[%s1 + $0x100] sm:$0xf]
  %v115 = vld [vmem:[%s1 + $0x104] sm:$0xf]
  %v116 = vld [vmem:[%s1 + $0x108] sm:$0xf]
  %v117 = vld [vmem:[%s1 + $0x10c] sm:$0xf]
  %v118 = vld [vmem:[%s1 + $0x110] sm:$0xf]
  %v119 = vld [vmem:[%s1 + $0x114] sm:$0xf]
  %v120 = vld [vmem:[%s1 + $0x118] sm:$0xf]
  %v121 = vld [vmem:[%s1 + $0x11c] sm:$0xf]
  %v122 = vld [vmem:[%s1 + $0x120] sm:$0xf]
  %v123 = vld [vmem:[%s1 + $0x124] sm:$0xf]
  %v124 = vld [vmem:[%s1 + $0x128] sm:$0xf]
  %v125 = vld [vmem:[%s1 + $0x12c] sm:$0xf]
  %v126 = vld [vmem:[%s1 + $0x130] sm:$0xf]
  %v127 = vld [vmem:[%s1 + $0x134] sm:$0xf]
  %v128 = vld [vmem:[%s1 + $0x138] sm:$0xf]
  %v129 = vld [vmem:[%s1 + $0x13c] sm:$0xf]
  %v130 = vld [vmem:[%s1 + $0x140] sm:$0xf]
  %v131 = vld [vmem:[%s1 + $0x144] sm:$0xf]
  %v132 = vld [vmem:[%s1 + $0x148] sm:$0xf]
  %v133 = vld [vmem:[%s1 + $0x14c] sm:$0xf]
  %v134 = vld [vmem:[%s1 + $0x150] sm:$0xf]
  %v135 = vld [vmem:[%s1 + $0x154] sm:$0xf]
  %v136 = vld [vmem:[%s1 + $0x158] sm:$0xf]
  %v137 = vld [vmem:[%s1 + $0x15c] sm:$0xf]
  %v138 = vld [vmem:[%s1 + $0x160] sm:$0xf]
  %v139 = vld [vmem:[%s1 + $0x164] sm:$0xf]
  %v140 = vld [vmem:[%s1 + $0x168] sm:$0xf]
  %v141 = vld [vmem:[%s1 + $0x16c] sm:$0xf]
  %v142 = vld [vmem:[%s1 + $0x170] sm:$0xf]
  %v143 = vld [vmem:[%s1 + $0x174] sm:$0xf]
  %v144 = vld [vmem:[%s1 + $0x178] sm:$0xf]
  %v145 = vld [vmem:[%s1 + $0x17c] sm:$0xf]
  %v146 = vld [vmem:[%s1 + $0x180] sm:$0xf]
  %v147 = vld [vmem:[%s1 + $0x184] sm:$0xf]
  %v148 = vld [vmem:[%s1 + $0x188] sm:$0xf]
  %v149 = vld [vmem:[%s1 + $0x18c] sm:$0xf]
  %v150 = vld [vmem:[%s1 + $0x190] sm:$0xf]
  %v151 = vld [vmem:[%s1 + $0x194] sm:$0xf]
  %v152 = vld [vmem:[%s1 + $0x198] sm:$0xf]
  %v153 = vld [vmem:[%s1 + $0x19c] sm:$0xf]
  %v154 = vld [vmem:[%s1 + $0x1a0] sm:$0xf]
  %v155 = vld [vmem:[%s1 + $0x1a4] sm:$0xf]
  %v156 = vld [vmem:[%s1 + $0x1a8] sm:$0xf]
  %v157 = vld [vmem:[%s1 + $0x1ac] sm:$0xf]
  %v158 = vld [vmem:[%s1 + $0x1b0] sm:$0xf]
  %v159 = vld [vmem:[%s1 + $0x1b4] sm:$0xf]
  %v160 = vld [vmem:[%s1 + $0x1b8] sm:$0xf]
  %v161 = vld [vmem:[%s1 + $0x1bc] sm:$0xf]
  %v162 = vld [vmem:[%s1 + $0x1c0] sm:$0xf]
  %v163 = vld [vmem:[%s1 + $0x1c4] sm:$0xf]
  %v164 = vld [vmem:[%s1 + $0x1c8] sm:$0xf]
  %v165 = vld [vmem:[%s1 + $0x1cc] sm:$0xf]
  %v166 = vld [vmem:[%s1 + $0x1d0] sm:$0xf]
  %v167 = vld [vmem:[%s1 + $0x1d4] sm:$0xf]
  %v168 = vld [vmem:[%s1 + $0x1d8] sm:$0xf]
  %v169 = vld [vmem:[%s1 + $0x1dc] sm:$0xf]
  %v170 = vld [vmem:[%s1 + $0x1e0] sm:$0xf]
  %v171 = vld [vmem:[%s1 + $0x1e4] sm:$0xf]
  %v172 = vld [vmem:[%s1 + $0x1e8] sm:$0xf]
  %v173 = vld [vmem:[%s1 + $0x1ec] sm:$0xf]
  %v174 = vld [vmem:[%s1 + $0x1f0] sm:$0xf]
  %v175 = vld [vmem:[%s1 + $0x1f4] sm:$0xf]
  %v176 = vld [vmem:[%s1 + $0x1f8] sm:$0xf]
  %v177 = vld [vmem:[%s1 + $0x1fc] sm:$0xf]
  %v178 = vld [vmem:[%s1 + $0x200] sm:$0xf]
  %v179 = vld [vmem:[%s1 + $0x204] sm:$0xf]
  %v180 = vld [vmem:[%s1 + $0x208] sm:$0xf]
  %v181 = vld [vmem:[%s1 + $0x20c] sm:$0xf]
  %v182 = vld [vmem:[%s1 + $0x210] sm:$0xf]
  %v183 = vld [vmem:[%s1 + $0x214] sm:$0xf]
  %v184 = vld [vmem:[%s1 + $0x218] sm:$0xf]
  %v185 = vld [vmem:[%s1 + $0x21c] sm:$0xf]
  %v186 = vld [vmem:[%s1 + $0x220] sm:$0xf]
  %v187 = vld [vmem:[%s1 + $0x224] sm:$0xf]
  %v188 = vld [vmem:[%s1 + $0x228] sm:$0xf]
  %v189 = vld [vmem:[%s1 + $0x22c] sm:$0xf]
  %v190 = vld [vmem:[%s1 + $0x230] sm:$0xf]
  %v191 = vld [vmem:[%s1 + $0x234] sm:$0xf]
  %v192 = vld [vmem:[%s1 + $0x238] sm:$0xf]
  %v193 = vld [vmem:[%s1 + $0x23c] sm:$0xf]
  %v194 = vld [vmem:[%s1 + $0x240] sm:$0xf]
  %v195 = vld [vmem:[%s1 + $0x244] sm:$0xf]
  %v196 = vld [vmem:[%s1 + $0x248] sm:$0xf]
  %v197 = vld [vmem:[%s1 + $0x24c] sm:$0xf]
  %v198 = vld [vmem:[%s1 + $0x250] sm:$0xf]
  %v199 = vld [vmem:[%s1 + $0x254] sm:$0xf]
  %v200 = vld [vmem:[%s1 + $0x258] sm:$0xf]
  %v201 = vld [vmem:[%s1 + $0x25c] sm:$0xf]
  %v202 = vld [vmem:[%s1 + $0x260] sm:$0xf]
  %v203 = vld [vmem:[%s1 + $0x264] sm:$0xf]
  %v204 = vld [vmem:[%s1 + $0x268] sm:$0xf]
  %v205 = vld [vmem:[%s1 + $0x26c] sm:$0xf]
  %v206 = vld [vmem:[%s1 + $0x270] sm:$0xf]
  %v207 = vld [vmem:[%s1 + $0x274] sm:$0xf]
  %v208 = vld [vmem:[%s1 + $0x278] sm:$0xf]
  %v209 = vld [vmem:[%s1 + $0x27c] sm:$0xf]
  %v210 = vld [vmem:[%s1 + $0x280] sm:$0xf]
  %v211 = vld [vmem:[%s1 + $0x284] sm:$0xf]
  %v212 = vld [vmem:[%s1 + $0x288] sm:$0xf]
  %v213 = vld [vmem:[%s1 + $0x28c] sm:$0xf]
  %v214 = vld [vmem:[%s1 + $0x290] sm:$0xf]
  %v215 = vld [vmem:[%s1 + $0x294] sm:$0xf]
  %v216 = vld [vmem:[%s1 + $0x298] sm:$0xf]
  %v217 = vld [vmem:[%s1 + $0x29c] sm:$0xf]
  %v218 = vld [vmem:[%s1 + $0x2a0] sm:$0xf]
  %v219 = vld [vmem:[%s1 + $0x2a4] sm:$0xf]
  %v220 = vld [vmem:[%s1 + $0x2a8] sm:$0xf]
  %v221 = vld [vmem:[%s1 + $0x2ac] sm:$0xf]
  %v222 = vld [vmem:[%s1 + $0x2b0] sm:$0xf]
  %v223 = vld [vmem:[%s1 + $0x2b4] sm:$0xf]
  %v224 = vld [vmem:[%s1 + $0x2b8] sm:$0xf]
  %v225 = vld [vmem:[%s1 + $0x2bc] sm:$0xf]
  %v226 = vld [vmem:[%s1 + $0x2c0] sm:$0xf]
  %v227 = vld [vmem:[%s1 + $0x2c4] sm:$0xf]
  %v228 = vld [vmem:[%s1 + $0x2c8] sm:$0xf]
  %v229 = vld [vmem:[%s1 + $0x2cc] sm:$0xf]
  %v230 = vld [vmem:[%s1 + $0x2d0] sm:$0xf]
  %v231 = vld [vmem:[%s1 + $0x2d4] sm:$0xf]
  %v232 = vld [vmem:[%s1 + $0x2d8] sm:$0xf]
  %v233 = vld [vmem:[%s1 + $0x2dc] sm:$0xf]
  %v234 = vld [vmem:[%s1 + $0x2e0] sm:$0xf]
  %v235 = vld [vmem:[%s1 + $0x2e4] sm:$0xf]
  %v236 = vld [vmem:[%s1 + $0x2e8] sm:$0xf]
  %v237 = vld [vmem:[%s1 + $0x2ec] sm:$0xf]
  %v238 = vld [vmem:[%s1 + $0x2f0] sm:$0xf]
  %v239 = vld [vmem:[%s1 + $0x2f4] sm:$0xf]
  %v240 = vld [vmem:[%s1 + $0x2f8] sm:$0xf]
  %v241 = vld [vmem:[%s1 + $0x2fc] sm:$0xf]
  %v242 = vld [vmem:[%s1 + $0x300] sm:$0xf]
  %v243 = vld [vmem:[%s1 + $0x304] sm:$0xf]
  %v244 = vld [vmem:[%s1 + $0x308] sm:$0xf]
  %v245 = vld [vmem:[%s1 + $0x30c] sm:$0xf]
  %v246 = vld [vmem:[%s1 + $0x310] sm:$0xf]
  %v247 = vld [vmem:[%s1 + $0x314] sm:$0xf]
  %v248 = vld [vmem:[%s1 + $0x318] sm:$0xf]
  %v249 = vld [vmem:[%s1 + $0x31c] sm:$0xf]
  %v250 = vld [vmem:[%s1 + $0x320] sm:$0xf]
  %v251 = vld [vmem:[%s1 + $0x324] sm:$0xf]
  %v252 = vld [vmem:[%s1 + $0x328] sm:$0xf]
  %v253 = vld [vmem:[%s1 + $0x32c] sm:$0xf]
  %v254 = vld [vmem:[%s1 + $0x330] sm:$0xf]
  %v255 = vld [vmem:[%s1 + $0x334] sm:$0xf]
  %v256 = vld [vmem:[%s1 + $0x338] sm:$0xf]
  %v257 = vld [vmem:[%s1 + $0x33c] sm:$0xf]
  %v258 = vld [vmem:[%s1 + $0x340] sm:$0xf]
  %v259 = vld [vmem:[%s1 + $0x344] sm:$0xf]
  %v260 = vld [vmem:[%s1 + $0x348] sm:$0xf]
  %v261 = vld [vmem:[%s1 + $0x34c] sm:$0xf]
  %v262 = vld [vmem:[%s1 + $0x350] sm:$0xf]
  %v263 = vld [vmem:[%s1 + $0x354] sm:$0xf]
  %v264 = vld [vmem:[%s1 + $0x358] sm:$0xf]
  %v265 = vld [vmem:[%s1 + $0x35c] sm:$0xf]
  %v266 = vld [vmem:[%s1 + $0x360] sm:$0xf]
  %v267 = vld [vmem:[%s1 + $0x364] sm:$0xf]
  %v268 = vld [vmem:[%s1 + $0x368] sm:$0xf]
  %v269 = vld [vmem:[%s1 + $0x36c] sm:$0xf]
  %v270 = vld [vmem:[%s1 + $0x370] sm:$0xf]
  %v271 = vld [vmem:[%s1 + $0x374] sm:$0xf]
  %v272 = vld [vmem:[%s1 + $0x378] sm:$0xf]
  %v273 = vld [vmem:[%s1 + $0x37c] sm:$0xf]
  %v274 = vld [vmem:[%s1 + $0x380] sm:$0xf]
  %v275 = vld [vmem:[%s1 + $0x384] sm:$0xf]
  %v276 = vld [vmem:[%s1 + $0x388] sm:$0xf]
  %v277 = vld [vmem:[%s1 + $0x38c] sm:$0xf]
  %v278 = vld [vmem:[%s1 + $0x390] sm:$0xf]
  %v279 = vld [vmem:[%s1 + $0x394] sm:$0xf]
  %v280 = vld [vmem:[%s1 + $0x398] sm:$0xf]
  %v281 = vld [vmem:[%s1 + $0x39c] sm:$0xf]
  %v282 = vld [vmem:[%s1 + $0x3a0] sm:$0xf]
  %v283 = vld [vmem:[%s1 + $0x3a4] sm:$0xf]
  %v284 = vld [vmem:[%s1 + $0x3a8] sm:$0xf]
  %v285 = vld [vmem:[%s1 + $0x3ac] sm:$0xf]
  %v286 = vld [vmem:[%s1 + $0x3b0] sm:$0xf]
  %v287 = vld [vmem:[%s1 + $0x3b4] sm:$0xf]
  %v288 = vld [vmem:[%s1 + $0x3b8] sm:$0xf]
  %v289 = vld [vmem:[%s1 + $0x3bc] sm:$0xf]
  %v290 = vld [vmem:[%s1 + $0x3c0] sm:$0xf]
  %v291 = vld [vmem:[%s1 + $0x3c4] sm:$0xf]
  %v292 = vld [vmem:[%s1 + $0x3c8] sm:$0xf]
  %v293 = vld [vmem:[%s1 + $0x3cc] sm:$0xf]
  %v294 = vld [vmem:[%s1 + $0x3d0] sm:$0xf]
  %v295 = vld [vmem:[%s1 + $0x3d4] sm:$0xf]
  %v296 = vld [vmem:[%s1 + $0x3d8] sm:$0xf]
  %v297 = vld [vmem:[%s1 + $0x3dc] sm:$0xf]
  %v298 = vld [vmem:[%s1 + $0x3e0] sm:$0xf]
  %v299 = vld [vmem:[%s1 + $0x3e4] sm:$0xf]
  %v300 = vld [vmem:[%s1 + $0x3e8] sm:$0xf]
  %v301 = vld [vmem:[%s1 + $0x3ec] sm:$0xf]
  %v302 = vld [vmem:[%s1 + $0x3f0] sm:$0xf]
  %v303 = vld [vmem:[%s1 + $0x3f4] sm:$0xf]
  %v304 = vld [vmem:[%s1 + $0x3f8] sm:$0xf]
  %v305 = vld [vmem:[%s1 + $0x3fc] sm:$0xf]
  %v306 = vld [vmem:[%s1 + $0x400] sm:$0xf]
  %v307 = vld [vmem:[%s1 + $0x404] sm:$0xf]
  %v308 = vld [vmem:[%s1 + $0x408] sm:$0xf]
  %v309 = vld [vmem:[%s1 + $0x40c] sm:$0xf]
  %v310 = vld [vmem:[%s1 + $0x410] sm:$0xf]
  %v311 = vld [vmem:[%s1 + $0x414] sm:$0xf]
  %v312 = vld [vmem:[%s1 + $0x418] sm:$0xf]
  %v313 = vld [vmem:[%s1 + $0x41c] sm:$0xf]
  %v314 = vld [vmem:[%s1 + $0x420] sm:$0xf]
  %v315 = vld [vmem:[%s1 + $0x424] sm:$0xf]
  %v316 = vld [vmem:[%s1 + $0x428] sm:$0xf]
  %v317 = vld [vmem:[%s1 + $0x42c] sm:$0xf]
  %v318 = vld [vmem:[%s1 + $0x430] sm:$0xf]
  %v319 = vld [vmem:[%s1 + $0x434] sm:$0xf]
  %v320 = vld [vmem:[%s1 + $0x438] sm:$0xf]
  %v321 = vld [vmem:[%s1 + $0x43c] sm:$0xf]
  %v322 = vld [vmem:[%s1 + $0x440] sm:$0xf]
  %v323 = vld [vmem:[%s1 + $0x444] sm:$0xf]
  %v324 = vld [vmem:[%s1 + $0x448] sm:$0xf]
  %v325 = vld [vmem:[%s1 + $0x44c] sm:$0xf]
  %v326 = vld [vmem:[%s1 + $0x450] sm:$0xf]
  %v327 = vld [vmem:[%s1 + $0x454] sm:$0xf]
  %v328 = vld [vmem:[%s1 + $0x458] sm:$0xf]
  %v329 = vld [vmem:[%s1 + $0x45c] sm:$0xf]
  %v330 = vld [vmem:[%s1 + $0x460] sm:$0xf]
  %v331 = vld [vmem:[%s1 + $0x464] sm:$0xf]
  %v332 = vld [vmem:[%s1 + $0x468] sm:$0xf]
  %v333 = vld [vmem:[%s1 + $0x46c] sm:$0xf]
  %v334 = vld [vmem:[%s1 + $0x470] sm:$0xf]
  %v335 = vld [vmem:[%s1 + $0x474] sm:$0xf]
  %v336 = vld [vmem:[%s1 + $0x478] sm:$0xf]
  %v337 = vld [vmem:[%s1 + $0x47c] sm:$0xf]
  %v338 = vld [vmem:[%s2] sm:$0x1]
  %v340 = vperm.slane %v338, 0
  %v378 = vunpack.c.l.b16 %v14
  %v379 = vunpack.c.h.b16 %v14
  %v380 = vunpack.c.l.b16 %v15
  %v381 = vunpack.c.h.b16 %v15
  %v382 = vunpack.c.l.b16 %v16
  %v383 = vunpack.c.h.b16 %v16
  %v384 = vunpack.c.l.b16 %v17
  %v385 = vunpack.c.h.b16 %v17
  %v386 = vunpack.c.l.b16 %v18
  %v387 = vunpack.c.h.b16 %v18
  %v388 = vunpack.c.l.b16 %v19
  %v389 = vunpack.c.h.b16 %v19
  %v390 = vunpack.c.l.b16 %v20
  %v391 = vunpack.c.h.b16 %v20
  %v392 = vunpack.c.l.b16 %v21
  %v393 = vunpack.c.h.b16 %v21
  %v394 = vunpack.c.l.b16 %v22
  %v395 = vunpack.c.h.b16 %v22
  %v396 = vunpack.c.l.b16 %v23
  %v397 = vunpack.c.h.b16 %v23
  %v398 = vunpack.c.l.b16 %v24
  %v399 = vunpack.c.h.b16 %v24
  %v400 = vunpack.c.l.b16 %v25
  %v401 = vunpack.c.h.b16 %v25
  %v402 = vunpack.c.l.b16 %v26
  %v403 = vunpack.c.h.b16 %v26
  %v404 = vunpack.c.l.b16 %v27
  %v405 = vunpack.c.h.b16 %v27
  %v406 = vunpack.c.l.b16 %v28
  %v407 = vunpack.c.h.b16 %v28
  %v408 = vunpack.c.l.b16 %v29
  %v409 = vunpack.c.h.b16 %v29
  %v410 = vunpack.c.l.b16 %v30
  %v411 = vunpack.c.h.b16 %v30
  %v412 = vunpack.c.l.b16 %v31
  %v413 = vunpack.c.h.b16 %v31
  %v414 = vunpack.c.l.b16 %v32
  %v415 = vunpack.c.h.b16 %v32
  %v416 = vunpack.c.l.b16 %v33
  %v417 = vunpack.c.h.b16 %v33
  %v418 = vunpack.c.l.b16 %v34
  %v419 = vunpack.c.h.b16 %v34
  %v420 = vunpack.c.l.b16 %v35
  %v421 = vunpack.c.h.b16 %v35
  %v422 = vunpack.c.l.b16 %v36
  %v423 = vunpack.c.h.b16 %v36
  %v424 = vunpack.c.l.b16 %v37
  %v425 = vunpack.c.h.b16 %v37
  %v426 = vunpack.c.l.b16 %v38
  %v427 = vunpack.c.h.b16 %v38
  %v428 = vunpack.c.l.b16 %v39
  %v429 = vunpack.c.h.b16 %v39
  %v430 = vunpack.c.l.b16 %v40
  %v431 = vunpack.c.h.b16 %v40
  %v432 = vunpack.c.l.b16 %v41
  %v433 = vunpack.c.h.b16 %v41
  %v434 = vunpack.c.l.b16 %v42
  %v435 = vunpack.c.h.b16 %v42
  %v436 = vunpack.c.l.b16 %v43
  %v437 = vunpack.c.h.b16 %v43
  %v438 = vunpack.c.l.b16 %v44
  %v439 = vunpack.c.h.b16 %v44
  %v440 = vunpack.c.l.b16 %v45
  %v441 = vunpack.c.h.b16 %v45
  %v442 = vunpack.c.l.b16 %v46
  %v443 = vunpack.c.h.b16 %v46
  %v444 = vunpack.c.l.b16 %v47
  %v445 = vunpack.c.h.b16 %v47
  %v446 = vunpack.c.l.b16 %v48
  %v447 = vunpack.c.h.b16 %v48
  %v448 = vunpack.c.l.b16 %v49
  %v449 = vunpack.c.h.b16 %v49
  %v450 = vpack.c.b16 %v396, %v378
  %v451 = vpack.c.b16 %v397, %v379
  %v452 = vpack.c.b16 %v398, %v380
  %v453 = vpack.c.b16 %v399, %v381
  %v454 = vpack.c.b16 %v400, %v382
  %v455 = vpack.c.b16 %v401, %v383
  %v456 = vpack.c.b16 %v402, %v384
  %v457 = vpack.c.b16 %v403, %v385
  %v458 = vpack.c.b16 %v404, %v386
  %v459 = vpack.c.b16 %v405, %v387
  %v460 = vpack.c.b16 %v406, %v388
  %v461 = vpack.c.b16 %v407, %v389
  %v462 = vpack.c.b16 %v408, %v390
  %v463 = vpack.c.b16 %v409, %v391
  %v464 = vpack.c.b16 %v410, %v392
  %v465 = vpack.c.b16 %v411, %v393
  %v466 = vpack.c.b16 %v412, %v394
  %v467 = vpack.c.b16 %v413, %v395
  %v468 = vpack.c.b16 %v432, %v414
  %v469 = vpack.c.b16 %v433, %v415
  %v470 = vpack.c.b16 %v434, %v416
  %v471 = vpack.c.b16 %v435, %v417
  %v472 = vpack.c.b16 %v436, %v418
  %v473 = vpack.c.b16 %v437, %v419
  %v474 = vpack.c.b16 %v438, %v420
  %v475 = vpack.c.b16 %v439, %v421
  %v476 = vpack.c.b16 %v440, %v422
  %v477 = vpack.c.b16 %v441, %v423
  %v478 = vpack.c.b16 %v442, %v424
  %v479 = vpack.c.b16 %v443, %v425
  %v480 = vpack.c.b16 %v444, %v426
  %v481 = vpack.c.b16 %v445, %v427
  %v482 = vpack.c.b16 %v446, %v428
  %v483 = vpack.c.b16 %v447, %v429
  %v484 = vpack.c.b16 %v448, %v430
  %v485 = vpack.c.b16 %v449, %v431
  %v810 = vunpack.c.l.b16 %v50
  %v811 = vunpack.c.l.b16 %v51
  %v812 = vunpack.c.l.b16 %v52
  %v813 = vunpack.c.l.b16 %v53
  %v814 = vunpack.c.l.b16 %v54
  %v815 = vunpack.c.l.b16 %v55
  %v816 = vunpack.c.l.b16 %v56
  %v817 = vunpack.c.l.b16 %v57
  %v818 = vunpack.c.l.b16 %v58
  %v819 = vunpack.c.l.b16 %v59
  %v820 = vunpack.c.l.b16 %v60
  %v821 = vunpack.c.l.b16 %v61
  %v822 = vunpack.c.l.b16 %v62
  %v823 = vunpack.c.l.b16 %v63
  %v824 = vunpack.c.l.b16 %v64
  %v825 = vunpack.c.l.b16 %v65
  %v826 = vunpack.c.l.b16 %v66
  %v827 = vunpack.c.l.b16 %v67
  %v828 = vunpack.c.l.b16 %v68
  %v829 = vunpack.c.l.b16 %v69
  %v830 = vunpack.c.l.b16 %v70
  %v831 = vunpack.c.l.b16 %v71
  %v832 = vunpack.c.l.b16 %v72
  %v833 = vunpack.c.l.b16 %v73
  %v834 = vunpack.c.l.b16 %v74
  %v835 = vunpack.c.l.b16 %v75
  %v836 = vunpack.c.l.b16 %v76
  %v837 = vunpack.c.l.b16 %v77
  %v838 = vunpack.c.l.b16 %v78
  %v839 = vunpack.c.l.b16 %v79
  %v840 = vunpack.c.l.b16 %v80
  %v841 = vunpack.c.l.b16 %v81
  %v842 = vunpack.c.l.b16 %v82
  %v843 = vunpack.c.l.b16 %v83
  %v844 = vunpack.c.l.b16 %v84
  %v845 = vunpack.c.l.b16 %v85
  %v846 = vunpack.c.l.b16 %v86
  %v847 = vunpack.c.l.b16 %v87
  %v848 = vunpack.c.l.b16 %v88
  %v849 = vunpack.c.l.b16 %v89
  %v850 = vunpack.c.l.b16 %v90
  %v851 = vunpack.c.l.b16 %v91
  %v852 = vunpack.c.l.b16 %v92
  %v853 = vunpack.c.l.b16 %v93
  %v854 = vunpack.c.l.b16 %v94
  %v855 = vunpack.c.l.b16 %v95
  %v856 = vunpack.c.l.b16 %v96
  %v857 = vunpack.c.l.b16 %v97
  %v858 = vunpack.c.l.b16 %v98
  %v859 = vunpack.c.l.b16 %v99
  %v860 = vunpack.c.l.b16 %v100
  %v861 = vunpack.c.l.b16 %v101
  %v862 = vunpack.c.l.b16 %v102
  %v863 = vunpack.c.l.b16 %v103
  %v864 = vunpack.c.l.b16 %v104
  %v865 = vunpack.c.l.b16 %v105
  %v866 = vunpack.c.l.b16 %v106
  %v867 = vunpack.c.l.b16 %v107
  %v868 = vunpack.c.l.b16 %v108
  %v869 = vunpack.c.l.b16 %v109
  %v870 = vunpack.c.l.b16 %v110
  %v871 = vunpack.c.l.b16 %v111
  %v872 = vunpack.c.l.b16 %v112
  %v873 = vunpack.c.l.b16 %v113
  %v874 = vunpack.c.l.b16 %v114
  %v875 = vunpack.c.l.b16 %v115
  %v876 = vunpack.c.l.b16 %v116
  %v877 = vunpack.c.l.b16 %v117
  %v878 = vunpack.c.l.b16 %v118
  %v879 = vunpack.c.l.b16 %v119
  %v880 = vunpack.c.l.b16 %v120
  %v881 = vunpack.c.l.b16 %v121
  %v882 = vunpack.c.l.b16 %v122
  %v883 = vunpack.c.l.b16 %v123
  %v884 = vunpack.c.l.b16 %v124
  %v885 = vunpack.c.l.b16 %v125
  %v886 = vunpack.c.l.b16 %v126
  %v887 = vunpack.c.l.b16 %v127
  %v888 = vunpack.c.l.b16 %v128
  %v889 = vunpack.c.l.b16 %v129
  %v890 = vunpack.c.l.b16 %v130
  %v891 = vunpack.c.l.b16 %v131
  %v892 = vunpack.c.l.b16 %v132
  %v893 = vunpack.c.l.b16 %v133
  %v894 = vunpack.c.l.b16 %v134
  %v895 = vunpack.c.l.b16 %v135
  %v896 = vunpack.c.l.b16 %v136
  %v897 = vunpack.c.l.b16 %v137
  %v898 = vunpack.c.l.b16 %v138
  %v899 = vunpack.c.l.b16 %v139
  %v900 = vunpack.c.l.b16 %v140
  %v901 = vunpack.c.l.b16 %v141
  %v902 = vunpack.c.l.b16 %v142
  %v903 = vunpack.c.l.b16 %v143
  %v904 = vunpack.c.l.b16 %v144
  %v905 = vunpack.c.l.b16 %v145
  %v906 = vunpack.c.l.b16 %v146
  %v907 = vunpack.c.l.b16 %v147
  %v908 = vunpack.c.l.b16 %v148
  %v909 = vunpack.c.l.b16 %v149
  %v910 = vunpack.c.l.b16 %v150
  %v911 = vunpack.c.l.b16 %v151
  %v912 = vunpack.c.l.b16 %v152
  %v913 = vunpack.c.l.b16 %v153
  %v914 = vunpack.c.l.b16 %v154
  %v915 = vunpack.c.l.b16 %v155
  %v916 = vunpack.c.l.b16 %v156
  %v917 = vunpack.c.l.b16 %v157
  %v918 = vunpack.c.l.b16 %v158
  %v919 = vunpack.c.l.b16 %v159
  %v920 = vunpack.c.l.b16 %v160
  %v921 = vunpack.c.l.b16 %v161
  %v922 = vunpack.c.l.b16 %v162
  %v923 = vunpack.c.l.b16 %v163
  %v924 = vunpack.c.l.b16 %v164
  %v925 = vunpack.c.l.b16 %v165
  %v926 = vunpack.c.l.b16 %v166
  %v927 = vunpack.c.l.b16 %v167
  %v928 = vunpack.c.l.b16 %v168
  %v929 = vunpack.c.l.b16 %v169
  %v930 = vunpack.c.l.b16 %v170
  %v931 = vunpack.c.l.b16 %v171
  %v932 = vunpack.c.l.b16 %v172
  %v933 = vunpack.c.l.b16 %v173
  %v934 = vunpack.c.l.b16 %v174
  %v935 = vunpack.c.l.b16 %v175
  %v936 = vunpack.c.l.b16 %v176
  %v937 = vunpack.c.l.b16 %v177
  %v938 = vunpack.c.l.b16 %v178
  %v939 = vunpack.c.l.b16 %v179
  %v940 = vunpack.c.l.b16 %v180
  %v941 = vunpack.c.l.b16 %v181
  %v942 = vunpack.c.l.b16 %v182
  %v943 = vunpack.c.l.b16 %v183
  %v944 = vunpack.c.l.b16 %v184
  %v945 = vunpack.c.l.b16 %v185
  %v946 = vunpack.c.l.b16 %v186
  %v947 = vunpack.c.l.b16 %v187
  %v948 = vunpack.c.l.b16 %v188
  %v949 = vunpack.c.l.b16 %v189
  %v950 = vunpack.c.l.b16 %v190
  %v951 = vunpack.c.l.b16 %v191
  %v952 = vunpack.c.l.b16 %v192
  %v953 = vunpack.c.l.b16 %v193
  %v954 = vunpack.c.l.b16 %v194
  %v955 = vunpack.c.l.b16 %v195
  %v956 = vunpack.c.l.b16 %v196
  %v957 = vunpack.c.l.b16 %v197
  %v958 = vunpack.c.l.b16 %v198
  %v959 = vunpack.c.l.b16 %v199
  %v960 = vunpack.c.l.b16 %v200
  %v961 = vunpack.c.l.b16 %v201
  %v962 = vunpack.c.l.b16 %v202
  %v963 = vunpack.c.l.b16 %v203
  %v964 = vunpack.c.l.b16 %v204
  %v965 = vunpack.c.l.b16 %v205
  %v966 = vunpack.c.l.b16 %v206
  %v967 = vunpack.c.l.b16 %v207
  %v968 = vunpack.c.l.b16 %v208
  %v969 = vunpack.c.l.b16 %v209
  %v970 = vunpack.c.l.b16 %v210
  %v971 = vunpack.c.l.b16 %v211
  %v972 = vunpack.c.l.b16 %v212
  %v973 = vunpack.c.l.b16 %v213
  %v974 = vunpack.c.l.b16 %v214
  %v975 = vunpack.c.l.b16 %v215
  %v976 = vunpack.c.l.b16 %v216
  %v977 = vunpack.c.l.b16 %v217
  %v978 = vunpack.c.l.b16 %v218
  %v979 = vunpack.c.l.b16 %v219
  %v980 = vunpack.c.l.b16 %v220
  %v981 = vunpack.c.l.b16 %v221
  %v982 = vunpack.c.l.b16 %v222
  %v983 = vunpack.c.l.b16 %v223
  %v984 = vunpack.c.l.b16 %v224
  %v985 = vunpack.c.l.b16 %v225
  %v986 = vunpack.c.l.b16 %v226
  %v987 = vunpack.c.l.b16 %v227
  %v988 = vunpack.c.l.b16 %v228
  %v989 = vunpack.c.l.b16 %v229
  %v990 = vunpack.c.l.b16 %v230
  %v991 = vunpack.c.l.b16 %v231
  %v992 = vunpack.c.l.b16 %v232
  %v993 = vunpack.c.l.b16 %v233
  %v994 = vunpack.c.l.b16 %v234
  %v995 = vunpack.c.l.b16 %v235
  %v996 = vunpack.c.l.b16 %v236
  %v997 = vunpack.c.l.b16 %v237
  %v998 = vunpack.c.l.b16 %v238
  %v999 = vunpack.c.l.b16 %v239
  %v1000 = vunpack.c.l.b16 %v240
  %v1001 = vunpack.c.l.b16 %v241
  %v1002 = vunpack.c.l.b16 %v242
  %v1003 = vunpack.c.l.b16 %v243
  %v1004 = vunpack.c.l.b16 %v244
  %v1005 = vunpack.c.l.b16 %v245
  %v1006 = vunpack.c.l.b16 %v246
  %v1007 = vunpack.c.l.b16 %v247
  %v1008 = vunpack.c.l.b16 %v248
  %v1009 = vunpack.c.l.b16 %v249
  %v1010 = vunpack.c.l.b16 %v250
  %v1011 = vunpack.c.l.b16 %v251
  %v1012 = vunpack.c.l.b16 %v252
  %v1013 = vunpack.c.l.b16 %v253
  %v1014 = vunpack.c.l.b16 %v254
  %v1015 = vunpack.c.l.b16 %v255
  %v1016 = vunpack.c.l.b16 %v256
  %v1017 = vunpack.c.l.b16 %v257
  %v1018 = vunpack.c.l.b16 %v258
  %v1019 = vunpack.c.l.b16 %v259
  %v1020 = vunpack.c.l.b16 %v260
  %v1021 = vunpack.c.l.b16 %v261
  %v1022 = vunpack.c.l.b16 %v262
  %v1023 = vunpack.c.l.b16 %v263
  %v1024 = vunpack.c.l.b16 %v264
  %v1025 = vunpack.c.l.b16 %v265
  %v1026 = vunpack.c.l.b16 %v266
  %v1027 = vunpack.c.l.b16 %v267
  %v1028 = vunpack.c.l.b16 %v268
  %v1029 = vunpack.c.l.b16 %v269
  %v1030 = vunpack.c.l.b16 %v270
  %v1031 = vunpack.c.l.b16 %v271
  %v1032 = vunpack.c.l.b16 %v272
  %v1033 = vunpack.c.l.b16 %v273
  %v1034 = vunpack.c.l.b16 %v274
  %v1035 = vunpack.c.l.b16 %v275
  %v1036 = vunpack.c.l.b16 %v276
  %v1037 = vunpack.c.l.b16 %v277
  %v1038 = vunpack.c.l.b16 %v278
  %v1039 = vunpack.c.l.b16 %v279
  %v1040 = vunpack.c.l.b16 %v280
  %v1041 = vunpack.c.l.b16 %v281
  %v1042 = vunpack.c.l.b16 %v282
  %v1043 = vunpack.c.l.b16 %v283
  %v1044 = vunpack.c.l.b16 %v284
  %v1045 = vunpack.c.l.b16 %v285
  %v1046 = vunpack.c.l.b16 %v286
  %v1047 = vunpack.c.l.b16 %v287
  %v1048 = vunpack.c.l.b16 %v288
  %v1049 = vunpack.c.l.b16 %v289
  %v1050 = vunpack.c.l.b16 %v290
  %v1051 = vunpack.c.l.b16 %v291
  %v1052 = vunpack.c.l.b16 %v292
  %v1053 = vunpack.c.l.b16 %v293
  %v1054 = vunpack.c.l.b16 %v294
  %v1055 = vunpack.c.l.b16 %v295
  %v1056 = vunpack.c.l.b16 %v296
  %v1057 = vunpack.c.l.b16 %v297
  %v1058 = vunpack.c.l.b16 %v298
  %v1059 = vunpack.c.l.b16 %v299
  %v1060 = vunpack.c.l.b16 %v300
  %v1061 = vunpack.c.l.b16 %v301
  %v1062 = vunpack.c.l.b16 %v302
  %v1063 = vunpack.c.l.b16 %v303
  %v1064 = vunpack.c.l.b16 %v304
  %v1065 = vunpack.c.l.b16 %v305
  %v1066 = vunpack.c.l.b16 %v306
  %v1067 = vunpack.c.l.b16 %v307
  %v1068 = vunpack.c.l.b16 %v308
  %v1069 = vunpack.c.l.b16 %v309
  %v1070 = vunpack.c.l.b16 %v310
  %v1071 = vunpack.c.l.b16 %v311
  %v1072 = vunpack.c.l.b16 %v312
  %v1073 = vunpack.c.l.b16 %v313
  %v1074 = vunpack.c.l.b16 %v314
  %v1075 = vunpack.c.l.b16 %v315
  %v1076 = vunpack.c.l.b16 %v316
  %v1077 = vunpack.c.l.b16 %v317
  %v1078 = vunpack.c.l.b16 %v318
  %v1079 = vunpack.c.l.b16 %v319
  %v1080 = vunpack.c.l.b16 %v320
  %v1081 = vunpack.c.l.b16 %v321
  %v1082 = vunpack.c.l.b16 %v322
  %v1083 = vunpack.c.l.b16 %v323
  %v1084 = vunpack.c.l.b16 %v324
  %v1085 = vunpack.c.l.b16 %v325
  %v1086 = vunpack.c.l.b16 %v326
  %v1087 = vunpack.c.l.b16 %v327
  %v1088 = vunpack.c.l.b16 %v328
  %v1089 = vunpack.c.l.b16 %v329
  %v1090 = vunpack.c.l.b16 %v330
  %v1091 = vunpack.c.l.b16 %v331
  %v1092 = vunpack.c.l.b16 %v332
  %v1093 = vunpack.c.l.b16 %v333
  %v1094 = vunpack.c.l.b16 %v334
  %v1095 = vunpack.c.l.b16 %v335
  %v1096 = vunpack.c.l.b16 %v336
  %v1097 = vunpack.c.l.b16 %v337
  %v1098 = vpack.c.b16 %v811, %v810
  %v1099 = vpack.c.b16 %v813, %v812
  %v1100 = vpack.c.b16 %v815, %v814
  %v1101 = vpack.c.b16 %v817, %v816
  %v1102 = vpack.c.b16 %v819, %v818
  %v1103 = vpack.c.b16 %v821, %v820
  %v1104 = vpack.c.b16 %v823, %v822
  %v1105 = vpack.c.b16 %v825, %v824
  %v1106 = vpack.c.b16 %v827, %v826
  %v1107 = vpack.c.b16 %v829, %v828
  %v1108 = vpack.c.b16 %v831, %v830
  %v1109 = vpack.c.b16 %v833, %v832
  %v1110 = vpack.c.b16 %v835, %v834
  %v1111 = vpack.c.b16 %v837, %v836
  %v1112 = vpack.c.b16 %v839, %v838
  %v1113 = vpack.c.b16 %v841, %v840
  %v1114 = vpack.c.b16 %v843, %v842
  %v1115 = vpack.c.b16 %v845, %v844
  %v1116 = vpack.c.b16 %v847, %v846
  %v1117 = vpack.c.b16 %v849, %v848
  %v1118 = vpack.c.b16 %v851, %v850
  %v1119 = vpack.c.b16 %v853, %v852
  %v1120 = vpack.c.b16 %v855, %v854
  %v1121 = vpack.c.b16 %v857, %v856
  %v1122 = vpack.c.b16 %v859, %v858
  %v1123 = vpack.c.b16 %v861, %v860
  %v1124 = vpack.c.b16 %v863, %v862
  %v1125 = vpack.c.b16 %v865, %v864
  %v1126 = vpack.c.b16 %v867, %v866
  %v1127 = vpack.c.b16 %v869, %v868
  %v1128 = vpack.c.b16 %v871, %v870
  %v1129 = vpack.c.b16 %v873, %v872
  %v1130 = vpack.c.b16 %v875, %v874
  %v1131 = vpack.c.b16 %v877, %v876
  %v1132 = vpack.c.b16 %v879, %v878
  %v1133 = vpack.c.b16 %v881, %v880
  %v1134 = vpack.c.b16 %v883, %v882
  %v1135 = vpack.c.b16 %v885, %v884
  %v1136 = vpack.c.b16 %v887, %v886
  %v1137 = vpack.c.b16 %v889, %v888
  %v1138 = vpack.c.b16 %v891, %v890
  %v1139 = vpack.c.b16 %v893, %v892
  %v1140 = vpack.c.b16 %v895, %v894
  %v1141 = vpack.c.b16 %v897, %v896
  %v1142 = vpack.c.b16 %v899, %v898
  %v1143 = vpack.c.b16 %v901, %v900
  %v1144 = vpack.c.b16 %v903, %v902
  %v1145 = vpack.c.b16 %v905, %v904
  %v1146 = vpack.c.b16 %v907, %v906
  %v1147 = vpack.c.b16 %v909, %v908
  %v1148 = vpack.c.b16 %v911, %v910
  %v1149 = vpack.c.b16 %v913, %v912
  %v1150 = vpack.c.b16 %v915, %v914
  %v1151 = vpack.c.b16 %v917, %v916
  %v1152 = vpack.c.b16 %v919, %v918
  %v1153 = vpack.c.b16 %v921, %v920
  %v1154 = vpack.c.b16 %v923, %v922
  %v1155 = vpack.c.b16 %v925, %v924
  %v1156 = vpack.c.b16 %v927, %v926
  %v1157 = vpack.c.b16 %v929, %v928
  %v1158 = vpack.c.b16 %v931, %v930
  %v1159 = vpack.c.b16 %v933, %v932
  %v1160 = vpack.c.b16 %v935, %v934
  %v1161 = vpack.c.b16 %v937, %v936
  %v1162 = vpack.c.b16 %v939, %v938
  %v1163 = vpack.c.b16 %v941, %v940
  %v1164 = vpack.c.b16 %v943, %v942
  %v1165 = vpack.c.b16 %v945, %v944
  %v1166 = vpack.c.b16 %v947, %v946
  %v1167 = vpack.c.b16 %v949, %v948
  %v1168 = vpack.c.b16 %v951, %v950
  %v1169 = vpack.c.b16 %v953, %v952
  %v1170 = vpack.c.b16 %v955, %v954
  %v1171 = vpack.c.b16 %v957, %v956
  %v1172 = vpack.c.b16 %v959, %v958
  %v1173 = vpack.c.b16 %v961, %v960
  %v1174 = vpack.c.b16 %v963, %v962
  %v1175 = vpack.c.b16 %v965, %v964
  %v1176 = vpack.c.b16 %v967, %v966
  %v1177 = vpack.c.b16 %v969, %v968
  %v1178 = vpack.c.b16 %v971, %v970
  %v1179 = vpack.c.b16 %v973, %v972
  %v1180 = vpack.c.b16 %v975, %v974
  %v1181 = vpack.c.b16 %v977, %v976
  %v1182 = vpack.c.b16 %v979, %v978
  %v1183 = vpack.c.b16 %v981, %v980
  %v1184 = vpack.c.b16 %v983, %v982
  %v1185 = vpack.c.b16 %v985, %v984
  %v1186 = vpack.c.b16 %v987, %v986
  %v1187 = vpack.c.b16 %v989, %v988
  %v1188 = vpack.c.b16 %v991, %v990
  %v1189 = vpack.c.b16 %v993, %v992
  %v1190 = vpack.c.b16 %v995, %v994
  %v1191 = vpack.c.b16 %v997, %v996
  %v1192 = vpack.c.b16 %v999, %v998
  %v1193 = vpack.c.b16 %v1001, %v1000
  %v1194 = vpack.c.b16 %v1003, %v1002
  %v1195 = vpack.c.b16 %v1005, %v1004
  %v1196 = vpack.c.b16 %v1007, %v1006
  %v1197 = vpack.c.b16 %v1009, %v1008
  %v1198 = vpack.c.b16 %v1011, %v1010
  %v1199 = vpack.c.b16 %v1013, %v1012
  %v1200 = vpack.c.b16 %v1015, %v1014
  %v1201 = vpack.c.b16 %v1017, %v1016
  %v1202 = vpack.c.b16 %v1019, %v1018
  %v1203 = vpack.c.b16 %v1021, %v1020
  %v1204 = vpack.c.b16 %v1023, %v1022
  %v1205 = vpack.c.b16 %v1025, %v1024
  %v1206 = vpack.c.b16 %v1027, %v1026
  %v1207 = vpack.c.b16 %v1029, %v1028
  %v1208 = vpack.c.b16 %v1031, %v1030
  %v1209 = vpack.c.b16 %v1033, %v1032
  %v1210 = vpack.c.b16 %v1035, %v1034
  %v1211 = vpack.c.b16 %v1037, %v1036
  %v1212 = vpack.c.b16 %v1039, %v1038
  %v1213 = vpack.c.b16 %v1041, %v1040
  %v1214 = vpack.c.b16 %v1043, %v1042
  %v1215 = vpack.c.b16 %v1045, %v1044
  %v1216 = vpack.c.b16 %v1047, %v1046
  %v1217 = vpack.c.b16 %v1049, %v1048
  %v1218 = vpack.c.b16 %v1051, %v1050
  %v1219 = vpack.c.b16 %v1053, %v1052
  %v1220 = vpack.c.b16 %v1055, %v1054
  %v1221 = vpack.c.b16 %v1057, %v1056
  %v1222 = vpack.c.b16 %v1059, %v1058
  %v1223 = vpack.c.b16 %v1061, %v1060
  %v1224 = vpack.c.b16 %v1063, %v1062
  %v1225 = vpack.c.b16 %v1065, %v1064
  %v1226 = vpack.c.b16 %v1067, %v1066
  %v1227 = vpack.c.b16 %v1069, %v1068
  %v1228 = vpack.c.b16 %v1071, %v1070
  %v1229 = vpack.c.b16 %v1073, %v1072
  %v1230 = vpack.c.b16 %v1075, %v1074
  %v1231 = vpack.c.b16 %v1077, %v1076
  %v1232 = vpack.c.b16 %v1079, %v1078
  %v1233 = vpack.c.b16 %v1081, %v1080
  %v1234 = vpack.c.b16 %v1083, %v1082
  %v1235 = vpack.c.b16 %v1085, %v1084
  %v1236 = vpack.c.b16 %v1087, %v1086
  %v1237 = vpack.c.b16 %v1089, %v1088
  %v1238 = vpack.c.b16 %v1091, %v1090
  %v1239 = vpack.c.b16 %v1093, %v1092
  %v1240 = vpack.c.b16 %v1095, %v1094
  %v1241 = vpack.c.b16 %v1097, %v1096
  %1386 = vmatpush.bf16.msra.mxu0 %v1105
  %1387 = vmatpush.bf16.msra.mxu0 %v1104
  %1388 = vmatpush.bf16.msra.mxu0 %v1103
  %1389 = vmatpush.bf16.msra.mxu0 %v1102
  %1390 = vmatpush.bf16.msra.mxu0 %v1101
  %1391 = vmatpush.bf16.msra.mxu0 %v1100
  %1392 = vmatpush.bf16.msra.mxu0 %v1099
  %1393 = vmatpush.bf16.msra.mxu0 %v1098
  %1394 = vmatmul.bf16.gmra.mxu0 %v450
  %v1395 = vpop.f32.mrf.mxu0
  %v1396 = vadd.f32 %v340, %v1395
  %v1397 = vpop.f32.mrf.mxu0
  %v1398 = vadd.f32 %v340, %v1397
  %1399 = vmatmul.bf16.gmra.mxu0 %v468
  %v1400 = vpop.f32.mrf.mxu0
  %v1401 = vadd.f32 %v340, %v1400
  %v1402 = vpop.f32.mrf.mxu0
  %v1403 = vadd.f32 %v340, %v1402
  %1404 = vdwg.mxu0
  %1405 = vmatpush.bf16.msra.mxu0 %v1113
  %1406 = vmatpush.bf16.msra.mxu0 %v1112
  %1407 = vmatpush.bf16.msra.mxu0 %v1111
  %1408 = vmatpush.bf16.msra.mxu0 %v1110
  %1409 = vmatpush.bf16.msra.mxu0 %v1109
  %1410 = vmatpush.bf16.msra.mxu0 %v1108
  %1411 = vmatpush.bf16.msra.mxu0 %v1107
  %1412 = vmatpush.bf16.msra.mxu0 %v1106
  %1413 = vmatmul.bf16.gmra.mxu0 %v451
  %v1414 = vpop.f32.mrf.mxu0
  %v1415 = vadd.f32 %v1396, %v1414
  %v1416 = vpop.f32.mrf.mxu0
  %v1417 = vadd.f32 %v1398, %v1416
  %1418 = vmatmul.bf16.gmra.mxu0 %v469
  %v1419 = vpop.f32.mrf.mxu0
  %v1420 = vadd.f32 %v1401, %v1419
  %v1421 = vpop.f32.mrf.mxu0
  %v1422 = vadd.f32 %v1403, %v1421
  %1423 = vdwg.mxu0
  %1424 = vmatpush.bf16.msra.mxu0 %v1121
  %1425 = vmatpush.bf16.msra.mxu0 %v1120
  %1426 = vmatpush.bf16.msra.mxu0 %v1119
  %1427 = vmatpush.bf16.msra.mxu0 %v1118
  %1428 = vmatpush.bf16.msra.mxu0 %v1117
  %1429 = vmatpush.bf16.msra.mxu0 %v1116
  %1430 = vmatpush.bf16.msra.mxu0 %v1115
  %1431 = vmatpush.bf16.msra.mxu0 %v1114
  %1432 = vmatmul.bf16.gmra.mxu0 %v452
  %v1433 = vpop.f32.mrf.mxu0
  %v1434 = vadd.f32 %v1415, %v1433
  %v1435 = vpop.f32.mrf.mxu0
  %v1436 = vadd.f32 %v1417, %v1435
  %1437 = vmatmul.bf16.gmra.mxu0 %v470
  %v1438 = vpop.f32.mrf.mxu0
  %v1439 = vadd.f32 %v1420, %v1438
  %v1440 = vpop.f32.mrf.mxu0
  %v1441 = vadd.f32 %v1422, %v1440
  %1442 = vdwg.mxu0
  %1443 = vmatpush.bf16.msra.mxu0 %v1129
  %1444 = vmatpush.bf16.msra.mxu0 %v1128
  %1445 = vmatpush.bf16.msra.mxu0 %v1127
  %1446 = vmatpush.bf16.msra.mxu0 %v1126
  %1447 = vmatpush.bf16.msra.mxu0 %v1125
  %1448 = vmatpush.bf16.msra.mxu0 %v1124
  %1449 = vmatpush.bf16.msra.mxu0 %v1123
  %1450 = vmatpush.bf16.msra.mxu0 %v1122
  %1451 = vmatmul.bf16.gmra.mxu0 %v453
  %v1452 = vpop.f32.mrf.mxu0
  %v1453 = vadd.f32 %v1434, %v1452
  %v1454 = vpop.f32.mrf.mxu0
  %v1455 = vadd.f32 %v1436, %v1454
  %1456 = vmatmul.bf16.gmra.mxu0 %v471
  %v1457 = vpop.f32.mrf.mxu0
  %v1458 = vadd.f32 %v1439, %v1457
  %v1459 = vpop.f32.mrf.mxu0
  %v1460 = vadd.f32 %v1441, %v1459
  %1461 = vdwg.mxu0
  %1462 = vmatpush.bf16.msra.mxu0 %v1137
  %1463 = vmatpush.bf16.msra.mxu0 %v1136
  %1464 = vmatpush.bf16.msra.mxu0 %v1135
  %1465 = vmatpush.bf16.msra.mxu0 %v1134
  %1466 = vmatpush.bf16.msra.mxu0 %v1133
  %1467 = vmatpush.bf16.msra.mxu0 %v1132
  %1468 = vmatpush.bf16.msra.mxu0 %v1131
  %1469 = vmatpush.bf16.msra.mxu0 %v1130
  %1470 = vmatmul.bf16.gmra.mxu0 %v454
  %v1471 = vpop.f32.mrf.mxu0
  %v1472 = vadd.f32 %v1453, %v1471
  %v1473 = vpop.f32.mrf.mxu0
  %v1474 = vadd.f32 %v1455, %v1473
  %1475 = vmatmul.bf16.gmra.mxu0 %v472
  %v1476 = vpop.f32.mrf.mxu0
  %v1477 = vadd.f32 %v1458, %v1476
  %v1478 = vpop.f32.mrf.mxu0
  %v1479 = vadd.f32 %v1460, %v1478
  %1480 = vdwg.mxu0
  %1481 = vmatpush.bf16.msra.mxu0 %v1145
  %1482 = vmatpush.bf16.msra.mxu0 %v1144
  %1483 = vmatpush.bf16.msra.mxu0 %v1143
  %1484 = vmatpush.bf16.msra.mxu0 %v1142
  %1485 = vmatpush.bf16.msra.mxu0 %v1141
  %1486 = vmatpush.bf16.msra.mxu0 %v1140
  %1487 = vmatpush.bf16.msra.mxu0 %v1139
  %1488 = vmatpush.bf16.msra.mxu0 %v1138
  %1489 = vmatmul.bf16.gmra.mxu0 %v455
  %v1490 = vpop.f32.mrf.mxu0
  %v1491 = vadd.f32 %v1472, %v1490
  %v1492 = vpop.f32.mrf.mxu0
  %v1493 = vadd.f32 %v1474, %v1492
  %1494 = vmatmul.bf16.gmra.mxu0 %v473
  %v1495 = vpop.f32.mrf.mxu0
  %v1496 = vadd.f32 %v1477, %v1495
  %v1497 = vpop.f32.mrf.mxu0
  %v1498 = vadd.f32 %v1479, %v1497
  %1499 = vdwg.mxu0
  %1500 = vmatpush.bf16.msra.mxu0 %v1153
  %1501 = vmatpush.bf16.msra.mxu0 %v1152
  %1502 = vmatpush.bf16.msra.mxu0 %v1151
  %1503 = vmatpush.bf16.msra.mxu0 %v1150
  %1504 = vmatpush.bf16.msra.mxu0 %v1149
  %1505 = vmatpush.bf16.msra.mxu0 %v1148
  %1506 = vmatpush.bf16.msra.mxu0 %v1147
  %1507 = vmatpush.bf16.msra.mxu0 %v1146
  %1508 = vmatmul.bf16.gmra.mxu0 %v456
  %v1509 = vpop.f32.mrf.mxu0
  %v1510 = vadd.f32 %v1491, %v1509
  %v1511 = vpop.f32.mrf.mxu0
  %v1512 = vadd.f32 %v1493, %v1511
  %1513 = vmatmul.bf16.gmra.mxu0 %v474
  %v1514 = vpop.f32.mrf.mxu0
  %v1515 = vadd.f32 %v1496, %v1514
  %v1516 = vpop.f32.mrf.mxu0
  %v1517 = vadd.f32 %v1498, %v1516
  %1518 = vdwg.mxu0
  %1519 = vmatpush.bf16.msra.mxu0 %v1161
  %1520 = vmatpush.bf16.msra.mxu0 %v1160
  %1521 = vmatpush.bf16.msra.mxu0 %v1159
  %1522 = vmatpush.bf16.msra.mxu0 %v1158
  %1523 = vmatpush.bf16.msra.mxu0 %v1157
  %1524 = vmatpush.bf16.msra.mxu0 %v1156
  %1525 = vmatpush.bf16.msra.mxu0 %v1155
  %1526 = vmatpush.bf16.msra.mxu0 %v1154
  %1527 = vmatmul.bf16.gmra.mxu0 %v457
  %v1528 = vpop.f32.mrf.mxu0
  %v1529 = vadd.f32 %v1510, %v1528
  %v1530 = vpop.f32.mrf.mxu0
  %v1531 = vadd.f32 %v1512, %v1530
  %1532 = vmatmul.bf16.gmra.mxu0 %v475
  %v1533 = vpop.f32.mrf.mxu0
  %v1534 = vadd.f32 %v1515, %v1533
  %v1535 = vpop.f32.mrf.mxu0
  %v1536 = vadd.f32 %v1517, %v1535
  %1537 = vdwg.mxu0
  %1538 = vmatpush.bf16.msra.mxu0 %v1169
  %1539 = vmatpush.bf16.msra.mxu0 %v1168
  %1540 = vmatpush.bf16.msra.mxu0 %v1167
  %1541 = vmatpush.bf16.msra.mxu0 %v1166
  %1542 = vmatpush.bf16.msra.mxu0 %v1165
  %1543 = vmatpush.bf16.msra.mxu0 %v1164
  %1544 = vmatpush.bf16.msra.mxu0 %v1163
  %1545 = vmatpush.bf16.msra.mxu0 %v1162
  %1546 = vmatmul.bf16.gmra.mxu0 %v458
  %v1547 = vpop.f32.mrf.mxu0
  %v1548 = vadd.f32 %v1529, %v1547
  %v1549 = vpop.f32.mrf.mxu0
  %v1550 = vadd.f32 %v1531, %v1549
  %1551 = vmatmul.bf16.gmra.mxu0 %v476
  %v1552 = vpop.f32.mrf.mxu0
  %v1553 = vadd.f32 %v1534, %v1552
  %v1554 = vpop.f32.mrf.mxu0
  %v1555 = vadd.f32 %v1536, %v1554
  %1556 = vdwg.mxu0
  %1557 = vmatpush.bf16.msra.mxu0 %v1177
  %1558 = vmatpush.bf16.msra.mxu0 %v1176
  %1559 = vmatpush.bf16.msra.mxu0 %v1175
  %1560 = vmatpush.bf16.msra.mxu0 %v1174
  %1561 = vmatpush.bf16.msra.mxu0 %v1173
  %1562 = vmatpush.bf16.msra.mxu0 %v1172
  %1563 = vmatpush.bf16.msra.mxu0 %v1171
  %1564 = vmatpush.bf16.msra.mxu0 %v1170
  %1565 = vmatmul.bf16.gmra.mxu0 %v459
  %v1566 = vpop.f32.mrf.mxu0
  %v1567 = vadd.f32 %v1548, %v1566
  %v1568 = vpop.f32.mrf.mxu0
  %v1569 = vadd.f32 %v1550, %v1568
  %1570 = vmatmul.bf16.gmra.mxu0 %v477
  %v1571 = vpop.f32.mrf.mxu0
  %v1572 = vadd.f32 %v1553, %v1571
  %v1573 = vpop.f32.mrf.mxu0
  %v1574 = vadd.f32 %v1555, %v1573
  %1575 = vdwg.mxu0
  %1576 = vmatpush.bf16.msra.mxu0 %v1185
  %1577 = vmatpush.bf16.msra.mxu0 %v1184
  %1578 = vmatpush.bf16.msra.mxu0 %v1183
  %1579 = vmatpush.bf16.msra.mxu0 %v1182
  %1580 = vmatpush.bf16.msra.mxu0 %v1181
  %1581 = vmatpush.bf16.msra.mxu0 %v1180
  %1582 = vmatpush.bf16.msra.mxu0 %v1179
  %1583 = vmatpush.bf16.msra.mxu0 %v1178
  %1584 = vmatmul.bf16.gmra.mxu0 %v460
  %v1585 = vpop.f32.mrf.mxu0
  %v1586 = vadd.f32 %v1567, %v1585
  %v1587 = vpop.f32.mrf.mxu0
  %v1588 = vadd.f32 %v1569, %v1587
  %1589 = vmatmul.bf16.gmra.mxu0 %v478
  %v1590 = vpop.f32.mrf.mxu0
  %v1591 = vadd.f32 %v1572, %v1590
  %v1592 = vpop.f32.mrf.mxu0
  %v1593 = vadd.f32 %v1574, %v1592
  %1594 = vdwg.mxu0
  %1595 = vmatpush.bf16.msra.mxu0 %v1193
  %1596 = vmatpush.bf16.msra.mxu0 %v1192
  %1597 = vmatpush.bf16.msra.mxu0 %v1191
  %1598 = vmatpush.bf16.msra.mxu0 %v1190
  %1599 = vmatpush.bf16.msra.mxu0 %v1189
  %1600 = vmatpush.bf16.msra.mxu0 %v1188
  %1601 = vmatpush.bf16.msra.mxu0 %v1187
  %1602 = vmatpush.bf16.msra.mxu0 %v1186
  %1603 = vmatmul.bf16.gmra.mxu0 %v461
  %v1604 = vpop.f32.mrf.mxu0
  %v1605 = vadd.f32 %v1586, %v1604
  %v1606 = vpop.f32.mrf.mxu0
  %v1607 = vadd.f32 %v1588, %v1606
  %1608 = vmatmul.bf16.gmra.mxu0 %v479
  %v1609 = vpop.f32.mrf.mxu0
  %v1610 = vadd.f32 %v1591, %v1609
  %v1611 = vpop.f32.mrf.mxu0
  %v1612 = vadd.f32 %v1593, %v1611
  %1613 = vdwg.mxu0
  %1614 = vmatpush.bf16.msra.mxu0 %v1201
  %1615 = vmatpush.bf16.msra.mxu0 %v1200
  %1616 = vmatpush.bf16.msra.mxu0 %v1199
  %1617 = vmatpush.bf16.msra.mxu0 %v1198
  %1618 = vmatpush.bf16.msra.mxu0 %v1197
  %1619 = vmatpush.bf16.msra.mxu0 %v1196
  %1620 = vmatpush.bf16.msra.mxu0 %v1195
  %1621 = vmatpush.bf16.msra.mxu0 %v1194
  %1622 = vmatmul.bf16.gmra.mxu0 %v462
  %v1623 = vpop.f32.mrf.mxu0
  %v1624 = vadd.f32 %v1605, %v1623
  %v1625 = vpop.f32.mrf.mxu0
  %v1626 = vadd.f32 %v1607, %v1625
  %1627 = vmatmul.bf16.gmra.mxu0 %v480
  %v1628 = vpop.f32.mrf.mxu0
  %v1629 = vadd.f32 %v1610, %v1628
  %v1630 = vpop.f32.mrf.mxu0
  %v1631 = vadd.f32 %v1612, %v1630
  %1632 = vdwg.mxu0
  %1633 = vmatpush.bf16.msra.mxu0 %v1209
  %1634 = vmatpush.bf16.msra.mxu0 %v1208
  %1635 = vmatpush.bf16.msra.mxu0 %v1207
  %1636 = vmatpush.bf16.msra.mxu0 %v1206
  %1637 = vmatpush.bf16.msra.mxu0 %v1205
  %1638 = vmatpush.bf16.msra.mxu0 %v1204
  %1639 = vmatpush.bf16.msra.mxu0 %v1203
  %1640 = vmatpush.bf16.msra.mxu0 %v1202
  %1641 = vmatmul.bf16.gmra.mxu0 %v463
  %v1642 = vpop.f32.mrf.mxu0
  %v1643 = vadd.f32 %v1624, %v1642
  %v1644 = vpop.f32.mrf.mxu0
  %v1645 = vadd.f32 %v1626, %v1644
  %1646 = vmatmul.bf16.gmra.mxu0 %v481
  %v1647 = vpop.f32.mrf.mxu0
  %v1648 = vadd.f32 %v1629, %v1647
  %v1649 = vpop.f32.mrf.mxu0
  %v1650 = vadd.f32 %v1631, %v1649
  %1651 = vdwg.mxu0
  %1652 = vmatpush.bf16.msra.mxu0 %v1217
  %1653 = vmatpush.bf16.msra.mxu0 %v1216
  %1654 = vmatpush.bf16.msra.mxu0 %v1215
  %1655 = vmatpush.bf16.msra.mxu0 %v1214
  %1656 = vmatpush.bf16.msra.mxu0 %v1213
  %1657 = vmatpush.bf16.msra.mxu0 %v1212
  %1658 = vmatpush.bf16.msra.mxu0 %v1211
  %1659 = vmatpush.bf16.msra.mxu0 %v1210
  %1660 = vmatmul.bf16.gmra.mxu0 %v464
  %v1661 = vpop.f32.mrf.mxu0
  %v1662 = vadd.f32 %v1643, %v1661
  %v1663 = vpop.f32.mrf.mxu0
  %v1664 = vadd.f32 %v1645, %v1663
  %1665 = vmatmul.bf16.gmra.mxu0 %v482
  %v1666 = vpop.f32.mrf.mxu0
  %v1667 = vadd.f32 %v1648, %v1666
  %v1668 = vpop.f32.mrf.mxu0
  %v1669 = vadd.f32 %v1650, %v1668
  %1670 = vdwg.mxu0
  %1671 = vmatpush.bf16.msra.mxu0 %v1225
  %1672 = vmatpush.bf16.msra.mxu0 %v1224
  %1673 = vmatpush.bf16.msra.mxu0 %v1223
  %1674 = vmatpush.bf16.msra.mxu0 %v1222
  %1675 = vmatpush.bf16.msra.mxu0 %v1221
  %1676 = vmatpush.bf16.msra.mxu0 %v1220
  %1677 = vmatpush.bf16.msra.mxu0 %v1219
  %1678 = vmatpush.bf16.msra.mxu0 %v1218
  %1679 = vmatmul.bf16.gmra.mxu0 %v465
  %v1680 = vpop.f32.mrf.mxu0
  %v1681 = vadd.f32 %v1662, %v1680
  %v1682 = vpop.f32.mrf.mxu0
  %v1683 = vadd.f32 %v1664, %v1682
  %1684 = vmatmul.bf16.gmra.mxu0 %v483
  %v1685 = vpop.f32.mrf.mxu0
  %v1686 = vadd.f32 %v1667, %v1685
  %v1687 = vpop.f32.mrf.mxu0
  %v1688 = vadd.f32 %v1669, %v1687
  %1689 = vdwg.mxu0
  %1690 = vmatpush.bf16.msra.mxu0 %v1233
  %1691 = vmatpush.bf16.msra.mxu0 %v1232
  %1692 = vmatpush.bf16.msra.mxu0 %v1231
  %1693 = vmatpush.bf16.msra.mxu0 %v1230
  %1694 = vmatpush.bf16.msra.mxu0 %v1229
  %1695 = vmatpush.bf16.msra.mxu0 %v1228
  %1696 = vmatpush.bf16.msra.mxu0 %v1227
  %1697 = vmatpush.bf16.msra.mxu0 %v1226
  %1698 = vmatmul.bf16.gmra.mxu0 %v466
  %v1699 = vpop.f32.mrf.mxu0
  %v1700 = vadd.f32 %v1681, %v1699
  %v1701 = vpop.f32.mrf.mxu0
  %v1702 = vadd.f32 %v1683, %v1701
  %1703 = vmatmul.bf16.gmra.mxu0 %v484
  %v1704 = vpop.f32.mrf.mxu0
  %v1705 = vadd.f32 %v1686, %v1704
  %v1706 = vpop.f32.mrf.mxu0
  %v1707 = vadd.f32 %v1688, %v1706
  %1708 = vdwg.mxu0
  %1709 = vmatpush.bf16.msra.mxu0 %v1241
  %1710 = vmatpush.bf16.msra.mxu0 %v1240
  %1711 = vmatpush.bf16.msra.mxu0 %v1239
  %1712 = vmatpush.bf16.msra.mxu0 %v1238
  %1713 = vmatpush.bf16.msra.mxu0 %v1237
  %1714 = vmatpush.bf16.msra.mxu0 %v1236
  %1715 = vmatpush.bf16.msra.mxu0 %v1235
  %1716 = vmatpush.bf16.msra.mxu0 %v1234
  %1717 = vmatmul.bf16.gmra.mxu0 %v467
  %v1718 = vpop.f32.mrf.mxu0
  %v1719 = vadd.f32 %v1700, %v1718
  %v1720 = vpop.f32.mrf.mxu0
  %v1721 = vadd.f32 %v1702, %v1720
  %1722 = vmatmul.bf16.gmra.mxu0 %v485
  %v1723 = vpop.f32.mrf.mxu0
  %v1724 = vadd.f32 %v1705, %v1723
  %v1725 = vpop.f32.mrf.mxu0
  %v1726 = vadd.f32 %v1707, %v1725
  %1727 = vdwg.mxu0
  %v1728 = vtanh.pop %v1719
  %v1729 = vtanh.pop %v1721
  %v1730 = vtanh.pop %v1724
  %v1731 = vtanh.pop %v1726
  %1732 = vst [vmem:[%s3] sm:$0xff] %v1728
  %1733 = vst [vmem:[%s3 + $0x8] sm:$0xff] %v1729
  %1734 = vst [vmem:[%s3 + $0x10] sm:$0xff] %v1730
  %1735 = vst [vmem:[%s3 + $0x18] sm:$0xff] %v1731
  // Predicated region
  $region14: #{_lambda_.63} parent=0 // pred_check
    _
  $region15: #{_lambda_.63} parent=0 // pred_check_branch
    %1737 = sbr.rel (0) target = $region17
  $region16: #{_lambda_.63} parent=0 // pred_region
    _
  $region17: #{_lambda_.63} parent=0 // pred_fallthru
    _
  // Predicated region
  $region18: #{_lambda_.63} parent=0 // pred_check
    _
  $region19: #{_lambda_.63} parent=0 // pred_check_branch
    %1739 = sbr.rel (0) target = $region21
  $region20: #{_lambda_.63} parent=0 // pred_region
    _
  $region21: #{_lambda_.63} parent=0 // pred_fallthru
    _

// kernel: _lambda_.44
$region0: #{_lambda_.44}
  #allocation0 [shape = 'u32[]', space=smem, size = 0x4, offset = 0x4, fixed_abs, tag = 'smem constant byte address 0x4 - core index']
  #allocation1 [shape = 'u32[72,128]{1,0:T(1,128)}', space=vmem, size = 0x9000, scoped, tag = 'internal scratch']
  %s0 = inlined_call_operand.vmem [shape: bf16[128,108], index: 0, kind: input, shape index: {}]
  %s1 = inlined_call_operand.vmem [shape: bf16[108,256], index: 1, kind: input, shape index: {}]
  %s2 = inlined_call_operand.vmem [shape: f32[1,256], index: 2, kind: input, shape index: {}]
  %s3 = inlined_call_operand.vmem [shape: f32[128,256], index: 3, kind: output, shape index: {}]
  %s4 = sld [smem:[#allocation0]]
  $region22: #{_lambda_.44} parent=0
    _
  %s6 = ssub.s32 1, %s4
  %s7 = scalar_select 0, %s6, %s4
  // Predicated region
  $region2: #{_lambda_.44} parent=0 // pred_check
    _
  $region3: #{_lambda_.44} parent=0 // pred_check_branch
    %9 = sbr.rel (0) target = $region5
  $region4: #{_lambda_.44} parent=0 // pred_region
    _
  $region5: #{_lambda_.44} parent=0 // pred_fallthru
    _
  // Predicated region
  $region6: #{_lambda_.44} parent=0 // pred_check
    _
  $region7: #{_lambda_.44} parent=0 // pred_check_branch
    %11 = sbr.rel (0) target = $region9
  $region8: #{_lambda_.44} parent=0 // pred_region
    _
  $region9: #{_lambda_.44} parent=0 // pred_fallthru
    _
  // Predicated region
  $region10: #{_lambda_.44} parent=0 // pred_check
    _
  $region11: #{_lambda_.44} parent=0 // pred_check_branch
    %13 = sbr.rel (0) target = $region13
  $region12: #{_lambda_.44} parent=0 // pred_region
    _
  $region13: #{_lambda_.44} parent=0 // pred_fallthru
    _
  %v15 = vld [vmem:[%s0] sm:$0xf]
  %v16 = vld [vmem:[%s0 + $0x4] sm:$0xf]
  %v17 = vld [vmem:[%s0 + $0x8] sm:$0xf]
  %v18 = vld [vmem:[%s0 + $0xc] sm:$0xf]
  %v19 = vld [vmem:[%s0 + $0x10] sm:$0xf]
  %v20 = vld [vmem:[%s0 + $0x14] sm:$0xf]
  %v21 = vld [vmem:[%s0 + $0x18] sm:$0xf]
  %v22 = vld [vmem:[%s0 + $0x1c] sm:$0xf]
  %v23 = vld [vmem:[%s0 + $0x20] sm:$0xf]
  %v24 = vld [vmem:[%s0 + $0x24] sm:$0xf]
  %v25 = vld [vmem:[%s0 + $0x28] sm:$0xf]
  %v26 = vld [vmem:[%s0 + $0x2c] sm:$0xf]
  %v27 = vld [vmem:[%s0 + $0x30] sm:$0xf]
  %v28 = vld [vmem:[%s0 + $0x34] sm:$0xf]
  %v29 = vld [vmem:[%s0 + $0x38] sm:$0xf]
  %v30 = vld [vmem:[%s0 + $0x3c] sm:$0xf]
  %v31 = vld [vmem:[%s1] sm:$0xff]
  %v32 = vld [vmem:[%s1 + $0x8] sm:$0xff]
  %v33 = vld [vmem:[%s1 + $0x10] sm:$0xff]
  %v34 = vld [vmem:[%s1 + $0x18] sm:$0xff]
  %v35 = vld [vmem:[%s1 + $0x20] sm:$0xff]
  %v36 = vld [vmem:[%s1 + $0x28] sm:$0xff]
  %v37 = vld [vmem:[%s1 + $0x30] sm:$0xff]
  %v38 = vld [vmem:[%s1 + $0x38] sm:$0xff]
  %v39 = vld [vmem:[%s1 + $0x40] sm:$0xff]
  %v40 = vld [vmem:[%s1 + $0x48] sm:$0xff]
  %v41 = vld [vmem:[%s1 + $0x50] sm:$0xff]
  %v42 = vld [vmem:[%s1 + $0x58] sm:$0xff]
  %v43 = vld [vmem:[%s1 + $0x60] sm:$0xff]
  %v44 = vld [vmem:[%s1 + $0x68] sm:$0x33]
  %v45 = vld [vmem:[%s2] sm:$0x3]
  %v47 = vperm.slane %v45, 0
  %v48 = vperm.slane %v45, 1
  %v67 = vunpack.c.l.b16 %v15
  %v68 = vunpack.c.l.b16 %v16
  %v69 = vunpack.c.l.b16 %v17
  %v70 = vunpack.c.l.b16 %v18
  %v71 = vunpack.c.l.b16 %v19
  %v72 = vunpack.c.l.b16 %v20
  %v73 = vunpack.c.l.b16 %v21
  %v74 = vunpack.c.l.b16 %v22
  %v75 = vunpack.c.l.b16 %v23
  %v76 = vunpack.c.l.b16 %v24
  %v77 = vunpack.c.l.b16 %v25
  %v78 = vunpack.c.l.b16 %v26
  %v79 = vunpack.c.l.b16 %v27
  %v80 = vunpack.c.l.b16 %v28
  %v81 = vunpack.c.l.b16 %v29
  %v82 = vunpack.c.l.b16 %v30
  %v83 = vpack.c.b16 %v68, %v67
  %v84 = vpack.c.b16 %v70, %v69
  %v85 = vpack.c.b16 %v72, %v71
  %v86 = vpack.c.b16 %v74, %v73
  %v87 = vpack.c.b16 %v76, %v75
  %v88 = vpack.c.b16 %v78, %v77
  %v89 = vpack.c.b16 %v80, %v79
  %v90 = vpack.c.b16 %v82, %v81
  %v105 = vunpack.c.l.b16 %v31
  %v106 = vunpack.c.h.b16 %v31
  %v107 = vunpack.c.l.b16 %v32
  %v108 = vunpack.c.h.b16 %v32
  %v109 = vunpack.c.l.b16 %v33
  %v110 = vunpack.c.h.b16 %v33
  %v111 = vunpack.c.l.b16 %v34
  %v112 = vunpack.c.h.b16 %v34
  %v113 = vunpack.c.l.b16 %v35
  %v114 = vunpack.c.h.b16 %v35
  %v115 = vunpack.c.l.b16 %v36
  %v116 = vunpack.c.h.b16 %v36
  %v117 = vunpack.c.l.b16 %v37
  %v118 = vunpack.c.h.b16 %v37
  %v119 = vunpack.c.l.b16 %v38
  %v120 = vunpack.c.h.b16 %v38
  %v121 = vunpack.c.l.b16 %v39
  %v122 = vunpack.c.h.b16 %v39
  %v123 = vunpack.c.l.b16 %v40
  %v124 = vunpack.c.h.b16 %v40
  %v125 = vunpack.c.l.b16 %v41
  %v126 = vunpack.c.h.b16 %v41
  %v127 = vunpack.c.l.b16 %v42
  %v128 = vunpack.c.h.b16 %v42
  %v129 = vunpack.c.l.b16 %v43
  %v130 = vunpack.c.h.b16 %v43
  %v131 = vunpack.c.l.b16 %v44
  %v132 = vunpack.c.h.b16 %v44
  %v133 = vpack.c.b16 %v107, %v105
  %v134 = vpack.c.b16 %v108, %v106
  %v135 = vpack.c.b16 %v111, %v109
  %v136 = vpack.c.b16 %v112, %v110
  %v137 = vpack.c.b16 %v115, %v113
  %v138 = vpack.c.b16 %v116, %v114
  %v139 = vpack.c.b16 %v119, %v117
  %v140 = vpack.c.b16 %v120, %v118
  %v141 = vpack.c.b16 %v123, %v121
  %v142 = vpack.c.b16 %v124, %v122
  %v143 = vpack.c.b16 %v127, %v125
  %v144 = vpack.c.b16 %v128, %v126
  %v145 = vpack.c.b16 %v131, %v129
  %v146 = vpack.c.b16 %v132, %v130
  %vm159 = vcmask 883712
  %v161 = vsel %vm159, %v83, 0
  %v164 = vsel %vm159, %v84, 0
  %v167 = vsel %vm159, %v85, 0
  %v170 = vsel %vm159, %v86, 0
  %v173 = vsel %vm159, %v87, 0
  %v176 = vsel %vm159, %v88, 0
  %v179 = vsel %vm159, %v89, 0
  %v182 = vsel %vm159, %v90, 0
  %vm184 = vcmask 1045504
  %v186 = vsel %vm184, %v145, 0
  %v189 = vsel %vm184, %v146, 0
  %191 = vmatpush.bf16.msra.mxu0 0
  %192 = vmatpush.bf16.msra.mxu0 %v186
  %193 = vmatpush.bf16.msra.mxu0 %v143
  %194 = vmatpush.bf16.msra.mxu0 %v141
  %195 = vmatpush.bf16.msra.mxu0 %v139
  %196 = vmatpush.bf16.msra.mxu0 %v137
  %197 = vmatpush.bf16.msra.mxu0 %v135
  %198 = vmatpush.bf16.msra.mxu0 %v133
  %199 = vmatmul.bf16.gmra.mxu0 %v161
  %v200 = vpop.f32.mrf.mxu0
  %v201 = vadd.f32 %v47, %v200
  %v202 = vpop.f32.mrf.mxu0
  %v203 = vadd.f32 %v47, %v202
  %204 = vmatmul.bf16.gmra.mxu0 %v164
  %v205 = vpop.f32.mrf.mxu0
  %v206 = vadd.f32 %v47, %v205
  %v207 = vpop.f32.mrf.mxu0
  %v208 = vadd.f32 %v47, %v207
  %209 = vmatmul.bf16.gmra.mxu0 %v167
  %v210 = vpop.f32.mrf.mxu0
  %v211 = vadd.f32 %v47, %v210
  %v212 = vpop.f32.mrf.mxu0
  %v213 = vadd.f32 %v47, %v212
  %214 = vmatmul.bf16.gmra.mxu0 %v170
  %v215 = vpop.f32.mrf.mxu0
  %v216 = vadd.f32 %v47, %v215
  %v217 = vpop.f32.mrf.mxu0
  %v218 = vadd.f32 %v47, %v217
  %219 = vmatmul.bf16.gmra.mxu0 %v173
  %v220 = vpop.f32.mrf.mxu0
  %v221 = vadd.f32 %v47, %v220
  %v222 = vpop.f32.mrf.mxu0
  %v223 = vadd.f32 %v47, %v222
  %224 = vmatmul.bf16.gmra.mxu0 %v176
  %v225 = vpop.f32.mrf.mxu0
  %v226 = vadd.f32 %v47, %v225
  %v227 = vpop.f32.mrf.mxu0
  %v228 = vadd.f32 %v47, %v227
  %229 = vmatmul.bf16.gmra.mxu0 %v179
  %v230 = vpop.f32.mrf.mxu0
  %v231 = vadd.f32 %v47, %v230
  %v232 = vpop.f32.mrf.mxu0
  %v233 = vadd.f32 %v47, %v232
  %234 = vmatmul.bf16.gmra.mxu0 %v182
  %v235 = vpop.f32.mrf.mxu0
  %v236 = vadd.f32 %v47, %v235
  %v237 = vpop.f32.mrf.mxu0
  %v238 = vadd.f32 %v47, %v237
  %239 = vdwg.mxu0
  %240 = vmatpush.bf16.msra.mxu0 0
  %241 = vmatpush.bf16.msra.mxu0 %v189
  %242 = vmatpush.bf16.msra.mxu0 %v144
  %243 = vmatpush.bf16.msra.mxu0 %v142
  %244 = vmatpush.bf16.msra.mxu0 %v140
  %245 = vmatpush.bf16.msra.mxu0 %v138
  %246 = vmatpush.bf16.msra.mxu0 %v136
  %247 = vmatpush.bf16.msra.mxu0 %v134
  %248 = vmatmul.bf16.gmra.mxu0 %v161
  %v249 = vpop.f32.mrf.mxu0
  %v250 = vadd.f32 %v48, %v249
  %v251 = vpop.f32.mrf.mxu0
  %v252 = vadd.f32 %v48, %v251
  %253 = vmatmul.bf16.gmra.mxu0 %v164
  %v254 = vpop.f32.mrf.mxu0
  %v255 = vadd.f32 %v48, %v254
  %v256 = vpop.f32.mrf.mxu0
  %v257 = vadd.f32 %v48, %v256
  %258 = vmatmul.bf16.gmra.mxu0 %v167
  %v259 = vpop.f32.mrf.mxu0
  %v260 = vadd.f32 %v48, %v259
  %v261 = vpop.f32.mrf.mxu0
  %v262 = vadd.f32 %v48, %v261
  %263 = vmatmul.bf16.gmra.mxu0 %v170
  %v264 = vpop.f32.mrf.mxu0
  %v265 = vadd.f32 %v48, %v264
  %v266 = vpop.f32.mrf.mxu0
  %v267 = vadd.f32 %v48, %v266
  %268 = vmatmul.bf16.gmra.mxu0 %v173
  %v269 = vpop.f32.mrf.mxu0
  %v270 = vadd.f32 %v48, %v269
  %v271 = vpop.f32.mrf.mxu0
  %v272 = vadd.f32 %v48, %v271
  %273 = vmatmul.bf16.gmra.mxu0 %v176
  %v274 = vpop.f32.mrf.mxu0
  %v275 = vadd.f32 %v48, %v274
  %v276 = vpop.f32.mrf.mxu0
  %v277 = vadd.f32 %v48, %v276
  %278 = vmatmul.bf16.gmra.mxu0 %v179
  %v279 = vpop.f32.mrf.mxu0
  %v280 = vadd.f32 %v48, %v279
  %v281 = vpop.f32.mrf.mxu0
  %v282 = vadd.f32 %v48, %v281
  %283 = vmatmul.bf16.gmra.mxu0 %v182
  %v284 = vpop.f32.mrf.mxu0
  %v285 = vadd.f32 %v48, %v284
  %v286 = vpop.f32.mrf.mxu0
  %v287 = vadd.f32 %v48, %v286
  %288 = vdwg.mxu0
  %v289 = vmax.f32 %v201, 0.0
  %v290 = vmax.f32 %v250, 0.0
  %v291 = vmax.f32 %v203, 0.0
  %v292 = vmax.f32 %v252, 0.0
  %v293 = vmax.f32 %v206, 0.0
  %v294 = vmax.f32 %v255, 0.0
  %v295 = vmax.f32 %v208, 0.0
  %v296 = vmax.f32 %v257, 0.0
  %v297 = vmax.f32 %v211, 0.0
  %v298 = vmax.f32 %v260, 0.0
  %v299 = vmax.f32 %v213, 0.0
  %v300 = vmax.f32 %v262, 0.0
  %v301 = vmax.f32 %v216, 0.0
  %v302 = vmax.f32 %v265, 0.0
  %v303 = vmax.f32 %v218, 0.0
  %v304 = vmax.f32 %v267, 0.0
  %v305 = vmax.f32 %v221, 0.0
  %v306 = vmax.f32 %v270, 0.0
  %v307 = vmax.f32 %v223, 0.0
  %v308 = vmax.f32 %v272, 0.0
  %v309 = vmax.f32 %v226, 0.0
  %v310 = vmax.f32 %v275, 0.0
  %v311 = vmax.f32 %v228, 0.0
  %v312 = vmax.f32 %v277, 0.0
  %v313 = vmax.f32 %v231, 0.0
  %v314 = vmax.f32 %v280, 0.0
  %v315 = vmax.f32 %v233, 0.0
  %v316 = vmax.f32 %v282, 0.0
  %v317 = vmax.f32 %v236, 0.0
  %v318 = vmax.f32 %v285, 0.0
  %v319 = vmax.f32 %v238, 0.0
  %v320 = vmax.f32 %v287, 0.0
  %321 = vst [vmem:[%s3] sm:$0xff] %v289
  %322 = vst [vmem:[%s3 + $0x8] sm:$0xff] %v290
  %323 = vst [vmem:[%s3 + $0x10] sm:$0xff] %v291
  %324 = vst [vmem:[%s3 + $0x18] sm:$0xff] %v292
  %325 = vst [vmem:[%s3 + $0x20] sm:$0xff] %v293
  %326 = vst [vmem:[%s3 + $0x28] sm:$0xff] %v294
  %327 = vst [vmem:[%s3 + $0x30] sm:$0xff] %v295
  %328 = vst [vmem:[%s3 + $0x38] sm:$0xff] %v296
  %329 = vst [vmem:[%s3 + $0x40] sm:$0xff] %v297
  %330 = vst [vmem:[%s3 + $0x48] sm:$0xff] %v298
  %331 = vst [vmem:[%s3 + $0x50] sm:$0xff] %v299
  %332 = vst [vmem:[%s3 + $0x58] sm:$0xff] %v300
  %333 = vst [vmem:[%s3 + $0x60] sm:$0xff] %v301
  %334 = vst [vmem:[%s3 + $0x68] sm:$0xff] %v302
  %335 = vst [vmem:[%s3 + $0x70] sm:$0xff] %v303
  %336 = vst [vmem:[%s3 + $0x78] sm:$0xff] %v304
  %337 = vst [vmem:[%s3 + $0x80] sm:$0xff] %v305
  %338 = vst [vmem:[%s3 + $0x88] sm:$0xff] %v306
  %339 = vst [vmem:[%s3 + $0x90] sm:$0xff] %v307
  %340 = vst [vmem:[%s3 + $0x98] sm:$0xff] %v308
  %341 = vst [vmem:[%s3 + $0xa0] sm:$0xff] %v309
  %342 = vst [vmem:[%s3 + $0xa8] sm:$0xff] %v310
  %343 = vst [vmem:[%s3 + $0xb0] sm:$0xff] %v311
  %344 = vst [vmem:[%s3 + $0xb8] sm:$0xff] %v312
  %345 = vst [vmem:[%s3 + $0xc0] sm:$0xff] %v313
  %346 = vst [vmem:[%s3 + $0xc8] sm:$0xff] %v314
  %347 = vst [vmem:[%s3 + $0xd0] sm:$0xff] %v315
  %348 = vst [vmem:[%s3 + $0xd8] sm:$0xff] %v316
  %349 = vst [vmem:[%s3 + $0xe0] sm:$0xff] %v317
  %350 = vst [vmem:[%s3 + $0xe8] sm:$0xff] %v318
  %351 = vst [vmem:[%s3 + $0xf0] sm:$0xff] %v319
  %352 = vst [vmem:[%s3 + $0xf8] sm:$0xff] %v320
  // Predicated region
  $region14: #{_lambda_.44} parent=0 // pred_check
    _
  $region15: #{_lambda_.44} parent=0 // pred_check_branch
    %354 = sbr.rel (0) target = $region17
  $region16: #{_lambda_.44} parent=0 // pred_region
    _
  $region17: #{_lambda_.44} parent=0 // pred_fallthru
    _
  // Predicated region
  $region18: #{_lambda_.44} parent=0 // pred_check
    _
  $region19: #{_lambda_.44} parent=0 // pred_check_branch
    %356 = sbr.rel (0) target = $region21
  $region20: #{_lambda_.44} parent=0 // pred_region
    _
  $region21: #{_lambda_.44} parent=0 // pred_fallthru
    _

// kernel: _lambda_.45
$region0: #{_lambda_.45}
  #allocation0 [shape = 'u32[]', space=smem, size = 0x4, offset = 0x4, fixed_abs, tag = 'smem constant byte address 0x4 - core index']
  #allocation1 [shape = 'u32[72,128]{1,0:T(1,128)}', space=vmem, size = 0x9000, scoped, tag = 'internal scratch']
  %s0 = inlined_call_operand.vmem [shape: bf16[128,256], index: 0, kind: input, shape index: {}]
  %s1 = inlined_call_operand.vmem [shape: bf16[256,256], index: 1, kind: input, shape index: {}]
  %s2 = inlined_call_operand.vmem [shape: f32[1,256], index: 2, kind: input, shape index: {}]
  %s3 = inlined_call_operand.vmem [shape: f32[128,256], index: 3, kind: output, shape index: {}]
  %s4 = sld [smem:[#allocation0]]
  $region22: #{_lambda_.45} parent=0
    _
  %s6 = ssub.s32 1, %s4
  %s7 = scalar_select 0, %s6, %s4
  // Predicated region
  $region2: #{_lambda_.45} parent=0 // pred_check
    _
  $region3: #{_lambda_.45} parent=0 // pred_check_branch
    %9 = sbr.rel (0) target = $region5
  $region4: #{_lambda_.45} parent=0 // pred_region
    _
  $region5: #{_lambda_.45} parent=0 // pred_fallthru
    _
  // Predicated region
  $region6: #{_lambda_.45} parent=0 // pred_check
    _
  $region7: #{_lambda_.45} parent=0 // pred_check_branch
    %11 = sbr.rel (0) target = $region9
  $region8: #{_lambda_.45} parent=0 // pred_region
    _
  $region9: #{_lambda_.45} parent=0 // pred_fallthru
    _
  // Predicated region
  $region10: #{_lambda_.45} parent=0 // pred_check
    _
  $region11: #{_lambda_.45} parent=0 // pred_check_branch
    %13 = sbr.rel (0) target = $region13
  $region12: #{_lambda_.45} parent=0 // pred_region
    _
  $region13: #{_lambda_.45} parent=0 // pred_fallthru
    _
  %v14 = vld [vmem:[%s0] sm:$0xff]
  %v15 = vld [vmem:[%s0 + $0x8] sm:$0xff]
  %v16 = vld [vmem:[%s0 + $0x10] sm:$0xff]
  %v17 = vld [vmem:[%s0 + $0x18] sm:$0xff]
  %v18 = vld [vmem:[%s0 + $0x20] sm:$0xff]
  %v19 = vld [vmem:[%s0 + $0x28] sm:$0xff]
  %v20 = vld [vmem:[%s0 + $0x30] sm:$0xff]
  %v21 = vld [vmem:[%s0 + $0x38] sm:$0xff]
  %v22 = vld [vmem:[%s0 + $0x40] sm:$0xff]
  %v23 = vld [vmem:[%s0 + $0x48] sm:$0xff]
  %v24 = vld [vmem:[%s0 + $0x50] sm:$0xff]
  %v25 = vld [vmem:[%s0 + $0x58] sm:$0xff]
  %v26 = vld [vmem:[%s0 + $0x60] sm:$0xff]
  %v27 = vld [vmem:[%s0 + $0x68] sm:$0xff]
  %v28 = vld [vmem:[%s0 + $0x70] sm:$0xff]
  %v29 = vld [vmem:[%s0 + $0x78] sm:$0xff]
  %v30 = vld [vmem:[%s1] sm:$0xff]
  %v31 = vld [vmem:[%s1 + $0x8] sm:$0xff]
  %v32 = vld [vmem:[%s1 + $0x10] sm:$0xff]
  %v33 = vld [vmem:[%s1 + $0x18] sm:$0xff]
  %v34 = vld [vmem:[%s1 + $0x20] sm:$0xff]
  %v35 = vld [vmem:[%s1 + $0x28] sm:$0xff]
  %v36 = vld [vmem:[%s1 + $0x30] sm:$0xff]
  %v37 = vld [vmem:[%s1 + $0x38] sm:$0xff]
  %v38 = vld [vmem:[%s1 + $0x40] sm:$0xff]
  %v39 = vld [vmem:[%s1 + $0x48] sm:$0xff]
  %v40 = vld [vmem:[%s1 + $0x50] sm:$0xff]
  %v41 = vld [vmem:[%s1 + $0x58] sm:$0xff]
  %v42 = vld [vmem:[%s1 + $0x60] sm:$0xff]
  %v43 = vld [vmem:[%s1 + $0x68] sm:$0xff]
  %v44 = vld [vmem:[%s1 + $0x70] sm:$0xff]
  %v45 = vld [vmem:[%s1 + $0x78] sm:$0xff]
  %v46 = vld [vmem:[%s1 + $0x80] sm:$0xff]
  %v47 = vld [vmem:[%s1 + $0x88] sm:$0xff]
  %v48 = vld [vmem:[%s1 + $0x90] sm:$0xff]
  %v49 = vld [vmem:[%s1 + $0x98] sm:$0xff]
  %v50 = vld [vmem:[%s1 + $0xa0] sm:$0xff]
  %v51 = vld [vmem:[%s1 + $0xa8] sm:$0xff]
  %v52 = vld [vmem:[%s1 + $0xb0] sm:$0xff]
  %v53 = vld [vmem:[%s1 + $0xb8] sm:$0xff]
  %v54 = vld [vmem:[%s1 + $0xc0] sm:$0xff]
  %v55 = vld [vmem:[%s1 + $0xc8] sm:$0xff]
  %v56 = vld [vmem:[%s1 + $0xd0] sm:$0xff]
  %v57 = vld [vmem:[%s1 + $0xd8] sm:$0xff]
  %v58 = vld [vmem:[%s1 + $0xe0] sm:$0xff]
  %v59 = vld [vmem:[%s1 + $0xe8] sm:$0xff]
  %v60 = vld [vmem:[%s1 + $0xf0] sm:$0xff]
  %v61 = vld [vmem:[%s1 + $0xf8] sm:$0xff]
  %v62 = vld [vmem:[%s2] sm:$0x3]
  %v64 = vperm.slane %v62, 0
  %v65 = vperm.slane %v62, 1
  %v84 = vunpack.c.l.b16 %v14
  %v85 = vunpack.c.h.b16 %v14
  %v86 = vunpack.c.l.b16 %v15
  %v87 = vunpack.c.h.b16 %v15
  %v88 = vunpack.c.l.b16 %v16
  %v89 = vunpack.c.h.b16 %v16
  %v90 = vunpack.c.l.b16 %v17
  %v91 = vunpack.c.h.b16 %v17
  %v92 = vunpack.c.l.b16 %v18
  %v93 = vunpack.c.h.b16 %v18
  %v94 = vunpack.c.l.b16 %v19
  %v95 = vunpack.c.h.b16 %v19
  %v96 = vunpack.c.l.b16 %v20
  %v97 = vunpack.c.h.b16 %v20
  %v98 = vunpack.c.l.b16 %v21
  %v99 = vunpack.c.h.b16 %v21
  %v100 = vunpack.c.l.b16 %v22
  %v101 = vunpack.c.h.b16 %v22
  %v102 = vunpack.c.l.b16 %v23
  %v103 = vunpack.c.h.b16 %v23
  %v104 = vunpack.c.l.b16 %v24
  %v105 = vunpack.c.h.b16 %v24
  %v106 = vunpack.c.l.b16 %v25
  %v107 = vunpack.c.h.b16 %v25
  %v108 = vunpack.c.l.b16 %v26
  %v109 = vunpack.c.h.b16 %v26
  %v110 = vunpack.c.l.b16 %v27
  %v111 = vunpack.c.h.b16 %v27
  %v112 = vunpack.c.l.b16 %v28
  %v113 = vunpack.c.h.b16 %v28
  %v114 = vunpack.c.l.b16 %v29
  %v115 = vunpack.c.h.b16 %v29
  %v116 = vpack.c.b16 %v86, %v84
  %v117 = vpack.c.b16 %v87, %v85
  %v118 = vpack.c.b16 %v90, %v88
  %v119 = vpack.c.b16 %v91, %v89
  %v120 = vpack.c.b16 %v94, %v92
  %v121 = vpack.c.b16 %v95, %v93
  %v122 = vpack.c.b16 %v98, %v96
  %v123 = vpack.c.b16 %v99, %v97
  %v124 = vpack.c.b16 %v102, %v100
  %v125 = vpack.c.b16 %v103, %v101
  %v126 = vpack.c.b16 %v106, %v104
  %v127 = vpack.c.b16 %v107, %v105
  %v128 = vpack.c.b16 %v110, %v108
  %v129 = vpack.c.b16 %v111, %v109
  %v130 = vpack.c.b16 %v114, %v112
  %v131 = vpack.c.b16 %v115, %v113
  %v180 = vunpack.c.l.b16 %v30
  %v181 = vunpack.c.h.b16 %v30
  %v182 = vunpack.c.l.b16 %v31
  %v183 = vunpack.c.h.b16 %v31
  %v184 = vunpack.c.l.b16 %v32
  %v185 = vunpack.c.h.b16 %v32
  %v186 = vunpack.c.l.b16 %v33
  %v187 = vunpack.c.h.b16 %v33
  %v188 = vunpack.c.l.b16 %v34
  %v189 = vunpack.c.h.b16 %v34
  %v190 = vunpack.c.l.b16 %v35
  %v191 = vunpack.c.h.b16 %v35
  %v192 = vunpack.c.l.b16 %v36
  %v193 = vunpack.c.h.b16 %v36
  %v194 = vunpack.c.l.b16 %v37
  %v195 = vunpack.c.h.b16 %v37
  %v196 = vunpack.c.l.b16 %v38
  %v197 = vunpack.c.h.b16 %v38
  %v198 = vunpack.c.l.b16 %v39
  %v199 = vunpack.c.h.b16 %v39
  %v200 = vunpack.c.l.b16 %v40
  %v201 = vunpack.c.h.b16 %v40
  %v202 = vunpack.c.l.b16 %v41
  %v203 = vunpack.c.h.b16 %v41
  %v204 = vunpack.c.l.b16 %v42
  %v205 = vunpack.c.h.b16 %v42
  %v206 = vunpack.c.l.b16 %v43
  %v207 = vunpack.c.h.b16 %v43
  %v208 = vunpack.c.l.b16 %v44
  %v209 = vunpack.c.h.b16 %v44
  %v210 = vunpack.c.l.b16 %v45
  %v211 = vunpack.c.h.b16 %v45
  %v212 = vunpack.c.l.b16 %v46
  %v213 = vunpack.c.h.b16 %v46
  %v214 = vunpack.c.l.b16 %v47
  %v215 = vunpack.c.h.b16 %v47
  %v216 = vunpack.c.l.b16 %v48
  %v217 = vunpack.c.h.b16 %v48
  %v218 = vunpack.c.l.b16 %v49
  %v219 = vunpack.c.h.b16 %v49
  %v220 = vunpack.c.l.b16 %v50
  %v221 = vunpack.c.h.b16 %v50
  %v222 = vunpack.c.l.b16 %v51
  %v223 = vunpack.c.h.b16 %v51
  %v224 = vunpack.c.l.b16 %v52
  %v225 = vunpack.c.h.b16 %v52
  %v226 = vunpack.c.l.b16 %v53
  %v227 = vunpack.c.h.b16 %v53
  %v228 = vunpack.c.l.b16 %v54
  %v229 = vunpack.c.h.b16 %v54
  %v230 = vunpack.c.l.b16 %v55
  %v231 = vunpack.c.h.b16 %v55
  %v232 = vunpack.c.l.b16 %v56
  %v233 = vunpack.c.h.b16 %v56
  %v234 = vunpack.c.l.b16 %v57
  %v235 = vunpack.c.h.b16 %v57
  %v236 = vunpack.c.l.b16 %v58
  %v237 = vunpack.c.h.b16 %v58
  %v238 = vunpack.c.l.b16 %v59
  %v239 = vunpack.c.h.b16 %v59
  %v240 = vunpack.c.l.b16 %v60
  %v241 = vunpack.c.h.b16 %v60
  %v242 = vunpack.c.l.b16 %v61
  %v243 = vunpack.c.h.b16 %v61
  %v244 = vpack.c.b16 %v182, %v180
  %v245 = vpack.c.b16 %v183, %v181
  %v246 = vpack.c.b16 %v186, %v184
  %v247 = vpack.c.b16 %v187, %v185
  %v248 = vpack.c.b16 %v190, %v188
  %v249 = vpack.c.b16 %v191, %v189
  %v250 = vpack.c.b16 %v194, %v192
  %v251 = vpack.c.b16 %v195, %v193
  %v252 = vpack.c.b16 %v198, %v196
  %v253 = vpack.c.b16 %v199, %v197
  %v254 = vpack.c.b16 %v202, %v200
  %v255 = vpack.c.b16 %v203, %v201
  %v256 = vpack.c.b16 %v206, %v204
  %v257 = vpack.c.b16 %v207, %v205
  %v258 = vpack.c.b16 %v210, %v208
  %v259 = vpack.c.b16 %v211, %v209
  %v260 = vpack.c.b16 %v214, %v212
  %v261 = vpack.c.b16 %v215, %v213
  %v262 = vpack.c.b16 %v218, %v216
  %v263 = vpack.c.b16 %v219, %v217
  %v264 = vpack.c.b16 %v222, %v220
  %v265 = vpack.c.b16 %v223, %v221
  %v266 = vpack.c.b16 %v226, %v224
  %v267 = vpack.c.b16 %v227, %v225
  %v268 = vpack.c.b16 %v230, %v228
  %v269 = vpack.c.b16 %v231, %v229
  %v270 = vpack.c.b16 %v234, %v232
  %v271 = vpack.c.b16 %v235, %v233
  %v272 = vpack.c.b16 %v238, %v236
  %v273 = vpack.c.b16 %v239, %v237
  %v274 = vpack.c.b16 %v242, %v240
  %v275 = vpack.c.b16 %v243, %v241
  %308 = vmatpush.bf16.msra.mxu0 %v258
  %309 = vmatpush.bf16.msra.mxu0 %v256
  %310 = vmatpush.bf16.msra.mxu0 %v254
  %311 = vmatpush.bf16.msra.mxu0 %v252
  %312 = vmatpush.bf16.msra.mxu0 %v250
  %313 = vmatpush.bf16.msra.mxu0 %v248
  %314 = vmatpush.bf16.msra.mxu0 %v246
  %315 = vmatpush.bf16.msra.mxu0 %v244
  %316 = vmatmul.bf16.gmra.mxu0 %v116
  %v317 = vpop.f32.mrf.mxu0
  %v318 = vadd.f32 %v64, %v317
  %v319 = vpop.f32.mrf.mxu0
  %v320 = vadd.f32 %v64, %v319
  %321 = vmatmul.bf16.gmra.mxu0 %v118
  %v322 = vpop.f32.mrf.mxu0
  %v323 = vadd.f32 %v64, %v322
  %v324 = vpop.f32.mrf.mxu0
  %v325 = vadd.f32 %v64, %v324
  %326 = vmatmul.bf16.gmra.mxu0 %v120
  %v327 = vpop.f32.mrf.mxu0
  %v328 = vadd.f32 %v64, %v327
  %v329 = vpop.f32.mrf.mxu0
  %v330 = vadd.f32 %v64, %v329
  %331 = vmatmul.bf16.gmra.mxu0 %v122
  %v332 = vpop.f32.mrf.mxu0
  %v333 = vadd.f32 %v64, %v332
  %v334 = vpop.f32.mrf.mxu0
  %v335 = vadd.f32 %v64, %v334
  %336 = vmatmul.bf16.gmra.mxu0 %v124
  %v337 = vpop.f32.mrf.mxu0
  %v338 = vadd.f32 %v64, %v337
  %v339 = vpop.f32.mrf.mxu0
  %v340 = vadd.f32 %v64, %v339
  %341 = vmatmul.bf16.gmra.mxu0 %v126
  %v342 = vpop.f32.mrf.mxu0
  %v343 = vadd.f32 %v64, %v342
  %v344 = vpop.f32.mrf.mxu0
  %v345 = vadd.f32 %v64, %v344
  %346 = vmatmul.bf16.gmra.mxu0 %v128
  %v347 = vpop.f32.mrf.mxu0
  %v348 = vadd.f32 %v64, %v347
  %v349 = vpop.f32.mrf.mxu0
  %v350 = vadd.f32 %v64, %v349
  %351 = vmatmul.bf16.gmra.mxu0 %v130
  %v352 = vpop.f32.mrf.mxu0
  %v353 = vadd.f32 %v64, %v352
  %v354 = vpop.f32.mrf.mxu0
  %v355 = vadd.f32 %v64, %v354
  %356 = vdwg.mxu0
  %357 = vmatpush.bf16.msra.mxu0 %v274
  %358 = vmatpush.bf16.msra.mxu0 %v272
  %359 = vmatpush.bf16.msra.mxu0 %v270
  %360 = vmatpush.bf16.msra.mxu0 %v268
  %361 = vmatpush.bf16.msra.mxu0 %v266
  %362 = vmatpush.bf16.msra.mxu0 %v264
  %363 = vmatpush.bf16.msra.mxu0 %v262
  %364 = vmatpush.bf16.msra.mxu0 %v260
  %365 = vmatmul.bf16.gmra.mxu0 %v117
  %v366 = vpop.f32.mrf.mxu0
  %v367 = vadd.f32 %v318, %v366
  %v368 = vpop.f32.mrf.mxu0
  %v369 = vadd.f32 %v320, %v368
  %370 = vmatmul.bf16.gmra.mxu0 %v119
  %v371 = vpop.f32.mrf.mxu0
  %v372 = vadd.f32 %v323, %v371
  %v373 = vpop.f32.mrf.mxu0
  %v374 = vadd.f32 %v325, %v373
  %375 = vmatmul.bf16.gmra.mxu0 %v121
  %v376 = vpop.f32.mrf.mxu0
  %v377 = vadd.f32 %v328, %v376
  %v378 = vpop.f32.mrf.mxu0
  %v379 = vadd.f32 %v330, %v378
  %380 = vmatmul.bf16.gmra.mxu0 %v123
  %v381 = vpop.f32.mrf.mxu0
  %v382 = vadd.f32 %v333, %v381
  %v383 = vpop.f32.mrf.mxu0
  %v384 = vadd.f32 %v335, %v383
  %385 = vmatmul.bf16.gmra.mxu0 %v125
  %v386 = vpop.f32.mrf.mxu0
  %v387 = vadd.f32 %v338, %v386
  %v388 = vpop.f32.mrf.mxu0
  %v389 = vadd.f32 %v340, %v388
  %390 = vmatmul.bf16.gmra.mxu0 %v127
  %v391 = vpop.f32.mrf.mxu0
  %v392 = vadd.f32 %v343, %v391
  %v393 = vpop.f32.mrf.mxu0
  %v394 = vadd.f32 %v345, %v393
  %395 = vmatmul.bf16.gmra.mxu0 %v129
  %v396 = vpop.f32.mrf.mxu0
  %v397 = vadd.f32 %v348, %v396
  %v398 = vpop.f32.mrf.mxu0
  %v399 = vadd.f32 %v350, %v398
  %400 = vmatmul.bf16.gmra.mxu0 %v131
  %v401 = vpop.f32.mrf.mxu0
  %v402 = vadd.f32 %v353, %v401
  %v403 = vpop.f32.mrf.mxu0
  %v404 = vadd.f32 %v355, %v403
  %405 = vdwg.mxu0
  %406 = vmatpush.bf16.msra.mxu0 %v259
  %407 = vmatpush.bf16.msra.mxu0 %v257
  %408 = vmatpush.bf16.msra.mxu0 %v255
  %409 = vmatpush.bf16.msra.mxu0 %v253
  %410 = vmatpush.bf16.msra.mxu0 %v251
  %411 = vmatpush.bf16.msra.mxu0 %v249
  %412 = vmatpush.bf16.msra.mxu0 %v247
  %413 = vmatpush.bf16.msra.mxu0 %v245
  %414 = vmatmul.bf16.gmra.mxu0 %v116
  %v415 = vpop.f32.mrf.mxu0
  %v416 = vadd.f32 %v65, %v415
  %v417 = vpop.f32.mrf.mxu0
  %v418 = vadd.f32 %v65, %v417
  %419 = vmatmul.bf16.gmra.mxu0 %v118
  %v420 = vpop.f32.mrf.mxu0
  %v421 = vadd.f32 %v65, %v420
  %v422 = vpop.f32.mrf.mxu0
  %v423 = vadd.f32 %v65, %v422
  %424 = vmatmul.bf16.gmra.mxu0 %v120
  %v425 = vpop.f32.mrf.mxu0
  %v426 = vadd.f32 %v65, %v425
  %v427 = vpop.f32.mrf.mxu0
  %v428 = vadd.f32 %v65, %v427
  %429 = vmatmul.bf16.gmra.mxu0 %v122
  %v430 = vpop.f32.mrf.mxu0
  %v431 = vadd.f32 %v65, %v430
  %v432 = vpop.f32.mrf.mxu0
  %v433 = vadd.f32 %v65, %v432
  %434 = vmatmul.bf16.gmra.mxu0 %v124
  %v435 = vpop.f32.mrf.mxu0
  %v436 = vadd.f32 %v65, %v435
  %v437 = vpop.f32.mrf.mxu0
  %v438 = vadd.f32 %v65, %v437
  %439 = vmatmul.bf16.gmra.mxu0 %v126
  %v440 = vpop.f32.mrf.mxu0
  %v441 = vadd.f32 %v65, %v440
  %v442 = vpop.f32.mrf.mxu0
  %v443 = vadd.f32 %v65, %v442
  %444 = vmatmul.bf16.gmra.mxu0 %v128
  %v445 = vpop.f32.mrf.mxu0
  %v446 = vadd.f32 %v65, %v445
  %v447 = vpop.f32.mrf.mxu0
  %v448 = vadd.f32 %v65, %v447
  %449 = vmatmul.bf16.gmra.mxu0 %v130
  %v450 = vpop.f32.mrf.mxu0
  %v451 = vadd.f32 %v65, %v450
  %v452 = vpop.f32.mrf.mxu0
  %v453 = vadd.f32 %v65, %v452
  %454 = vdwg.mxu0
  %455 = vmatpush.bf16.msra.mxu0 %v275
  %456 = vmatpush.bf16.msra.mxu0 %v273
  %457 = vmatpush.bf16.msra.mxu0 %v271
  %458 = vmatpush.bf16.msra.mxu0 %v269
  %459 = vmatpush.bf16.msra.mxu0 %v267
  %460 = vmatpush.bf16.msra.mxu0 %v265
  %461 = vmatpush.bf16.msra.mxu0 %v263
  %462 = vmatpush.bf16.msra.mxu0 %v261
  %463 = vmatmul.bf16.gmra.mxu0 %v117
  %v464 = vpop.f32.mrf.mxu0
  %v465 = vadd.f32 %v416, %v464
  %v466 = vpop.f32.mrf.mxu0
  %v467 = vadd.f32 %v418, %v466
  %468 = vmatmul.bf16.gmra.mxu0 %v119
  %v469 = vpop.f32.mrf.mxu0
  %v470 = vadd.f32 %v421, %v469
  %v471 = vpop.f32.mrf.mxu0
  %v472 = vadd.f32 %v423, %v471
  %473 = vmatmul.bf16.gmra.mxu0 %v121
  %v474 = vpop.f32.mrf.mxu0
  %v475 = vadd.f32 %v426, %v474
  %v476 = vpop.f32.mrf.mxu0
  %v477 = vadd.f32 %v428, %v476
  %478 = vmatmul.bf16.gmra.mxu0 %v123
  %v479 = vpop.f32.mrf.mxu0
  %v480 = vadd.f32 %v431, %v479
  %v481 = vpop.f32.mrf.mxu0
  %v482 = vadd.f32 %v433, %v481
  %483 = vmatmul.bf16.gmra.mxu0 %v125
  %v484 = vpop.f32.mrf.mxu0
  %v485 = vadd.f32 %v436, %v484
  %v486 = vpop.f32.mrf.mxu0
  %v487 = vadd.f32 %v438, %v486
  %488 = vmatmul.bf16.gmra.mxu0 %v127
  %v489 = vpop.f32.mrf.mxu0
  %v490 = vadd.f32 %v441, %v489
  %v491 = vpop.f32.mrf.mxu0
  %v492 = vadd.f32 %v443, %v491
  %493 = vmatmul.bf16.gmra.mxu0 %v129
  %v494 = vpop.f32.mrf.mxu0
  %v495 = vadd.f32 %v446, %v494
  %v496 = vpop.f32.mrf.mxu0
  %v497 = vadd.f32 %v448, %v496
  %498 = vmatmul.bf16.gmra.mxu0 %v131
  %v499 = vpop.f32.mrf.mxu0
  %v500 = vadd.f32 %v451, %v499
  %v501 = vpop.f32.mrf.mxu0
  %v502 = vadd.f32 %v453, %v501
  %503 = vdwg.mxu0
  %v504 = vmax.f32 %v367, 0.0
  %v505 = vmax.f32 %v465, 0.0
  %v506 = vmax.f32 %v369, 0.0
  %v507 = vmax.f32 %v467, 0.0
  %v508 = vmax.f32 %v372, 0.0
  %v509 = vmax.f32 %v470, 0.0
  %v510 = vmax.f32 %v374, 0.0
  %v511 = vmax.f32 %v472, 0.0
  %v512 = vmax.f32 %v377, 0.0
  %v513 = vmax.f32 %v475, 0.0
  %v514 = vmax.f32 %v379, 0.0
  %v515 = vmax.f32 %v477, 0.0
  %v516 = vmax.f32 %v382, 0.0
  %v517 = vmax.f32 %v480, 0.0
  %v518 = vmax.f32 %v384, 0.0
  %v519 = vmax.f32 %v482, 0.0
  %v520 = vmax.f32 %v387, 0.0
  %v521 = vmax.f32 %v485, 0.0
  %v522 = vmax.f32 %v389, 0.0
  %v523 = vmax.f32 %v487, 0.0
  %v524 = vmax.f32 %v392, 0.0
  %v525 = vmax.f32 %v490, 0.0
  %v526 = vmax.f32 %v394, 0.0
  %v527 = vmax.f32 %v492, 0.0
  %v528 = vmax.f32 %v397, 0.0
  %v529 = vmax.f32 %v495, 0.0
  %v530 = vmax.f32 %v399, 0.0
  %v531 = vmax.f32 %v497, 0.0
  %v532 = vmax.f32 %v402, 0.0
  %v533 = vmax.f32 %v500, 0.0
  %v534 = vmax.f32 %v404, 0.0
  %v535 = vmax.f32 %v502, 0.0
  %536 = vst [vmem:[%s3] sm:$0xff] %v504
  %537 = vst [vmem:[%s3 + $0x8] sm:$0xff] %v505
  %538 = vst [vmem:[%s3 + $0x10] sm:$0xff] %v506
  %539 = vst [vmem:[%s3 + $0x18] sm:$0xff] %v507
  %540 = vst [vmem:[%s3 + $0x20] sm:$0xff] %v508
  %541 = vst [vmem:[%s3 + $0x28] sm:$0xff] %v509
  %542 = vst [vmem:[%s3 + $0x30] sm:$0xff] %v510
  %543 = vst [vmem:[%s3 + $0x38] sm:$0xff] %v511
  %544 = vst [vmem:[%s3 + $0x40] sm:$0xff] %v512
  %545 = vst [vmem:[%s3 + $0x48] sm:$0xff] %v513
  %546 = vst [vmem:[%s3 + $0x50] sm:$0xff] %v514
  %547 = vst [vmem:[%s3 + $0x58] sm:$0xff] %v515
  %548 = vst [vmem:[%s3 + $0x60] sm:$0xff] %v516
  %549 = vst [vmem:[%s3 + $0x68] sm:$0xff] %v517
  %550 = vst [vmem:[%s3 + $0x70] sm:$0xff] %v518
  %551 = vst [vmem:[%s3 + $0x78] sm:$0xff] %v519
  %552 = vst [vmem:[%s3 + $0x80] sm:$0xff] %v520
  %553 = vst [vmem:[%s3 + $0x88] sm:$0xff] %v521
  %554 = vst [vmem:[%s3 + $0x90] sm:$0xff] %v522
  %555 = vst [vmem:[%s3 + $0x98] sm:$0xff] %v523
  %556 = vst [vmem:[%s3 + $0xa0] sm:$0xff] %v524
  %557 = vst [vmem:[%s3 + $0xa8] sm:$0xff] %v525
  %558 = vst [vmem:[%s3 + $0xb0] sm:$0xff] %v526
  %559 = vst [vmem:[%s3 + $0xb8] sm:$0xff] %v527
  %560 = vst [vmem:[%s3 + $0xc0] sm:$0xff] %v528
  %561 = vst [vmem:[%s3 + $0xc8] sm:$0xff] %v529
  %562 = vst [vmem:[%s3 + $0xd0] sm:$0xff] %v530
  %563 = vst [vmem:[%s3 + $0xd8] sm:$0xff] %v531
  %564 = vst [vmem:[%s3 + $0xe0] sm:$0xff] %v532
  %565 = vst [vmem:[%s3 + $0xe8] sm:$0xff] %v533
  %566 = vst [vmem:[%s3 + $0xf0] sm:$0xff] %v534
  %567 = vst [vmem:[%s3 + $0xf8] sm:$0xff] %v535
  // Predicated region
  $region14: #{_lambda_.45} parent=0 // pred_check
    _
  $region15: #{_lambda_.45} parent=0 // pred_check_branch
    %569 = sbr.rel (0) target = $region17
  $region16: #{_lambda_.45} parent=0 // pred_region
    _
  $region17: #{_lambda_.45} parent=0 // pred_fallthru
    _
  // Predicated region
  $region18: #{_lambda_.45} parent=0 // pred_check
    _
  $region19: #{_lambda_.45} parent=0 // pred_check_branch
    %571 = sbr.rel (0) target = $region21
  $region20: #{_lambda_.45} parent=0 // pred_region
    _
  $region21: #{_lambda_.45} parent=0 // pred_fallthru
    _

// kernel: _lambda_.47
$region0: #{_lambda_.47}
  #allocation0 [shape = 'u32[]', space=smem, size = 0x4, offset = 0x4, fixed_abs, tag = 'smem constant byte address 0x4 - core index']
  #allocation1 [shape = 'u32[72,128]{1,0:T(1,128)}', space=vmem, size = 0x9000, scoped, tag = 'internal scratch']
  %s0 = inlined_call_operand.vmem [shape: f32[2,384], index: 0, kind: input, shape index: {}]
  %s1 = inlined_call_operand.vmem [shape: f32[2,384], index: 1, kind: input, shape index: {}]
  %s2 = inlined_call_operand.vmem [shape: f32[2,384], index: 2, kind: input, shape index: {}]
  %s3 = inlined_call_operand.vmem [shape: f32[2,384], index: 3, kind: output, shape index: {0}]
  %s4 = inlined_call_operand.vmem [shape: f32[2,1], index: 4, kind: output, shape index: {1}]
  %5 = xla_tuple %s3, %s4
  %s6 = sld [smem:[#allocation0]]
  $region30: #{_lambda_.47} parent=0
    _
  %s8 = ssub.s32 1, %s6
  %s9 = scalar_select 0, %s8, %s6
  // Predicated region
  $region2: #{_lambda_.47} parent=0 // pred_check
    _
  $region3: #{_lambda_.47} parent=0 // pred_check_branch
    %11 = sbr.rel (0) target = $region5
  $region4: #{_lambda_.47} parent=0 // pred_region
    _
  $region5: #{_lambda_.47} parent=0 // pred_fallthru
    _
  // Predicated region
  $region6: #{_lambda_.47} parent=0 // pred_check
    _
  $region7: #{_lambda_.47} parent=0 // pred_check_branch
    %13 = sbr.rel (0) target = $region9
  $region8: #{_lambda_.47} parent=0 // pred_region
    _
  $region9: #{_lambda_.47} parent=0 // pred_fallthru
    _
  // Predicated region
  $region10: #{_lambda_.47} parent=0 // pred_check
    _
  $region11: #{_lambda_.47} parent=0 // pred_check_branch
    %15 = sbr.rel (0) target = $region13
  $region12: #{_lambda_.47} parent=0 // pred_region
    _
  $region13: #{_lambda_.47} parent=0 // pred_fallthru
    _
  %v16 = vld [vmem:[%s1] sm:$0x3f]
  %v17 = vadd.f32 %v16, 2.0
  %v18 = vsub.f32 0.0, %v17
  %v19 = vmul.f32 %v18, 1.442695
  %v20 = vpow.pop %v19
  %v21 = vadd.f32 %v20, 1.0
  %v22 = vrcp.pop %v21
  %v23 = vmul.f32 %v21, %v22
  %v24 = vsub.f32 1.0, %v23
  %v25 = vmul.f32 %v22, %v24
  %v26 = vadd.f32 %v22, %v25
  %vm27 = vweird.f32 %v21
  %vm28 = vweird.f32 %v22
  %vm29 = vmor %vm27, %vm28
  %v30 = vsel %vm29, %v22, %v26
  %v31 = vand.u32 2147483647, %v21
  %vm32 = vcmp.eq.f32.partialorder %v31, 8.507059e+37
  %v33 = vand.u32 %v21, 2147483648
  %v34 = vor.u32 1.1754944e-38, %v33
  %v35 = vsel %vm32, %v34, %v30
  %v36 = vmul.f32 1.0, %v35
  %v37 = vld [vmem:[%s0] sm:$0x3f]
  %v38 = vmul.f32 %v36, %v37
  %v39 = vld [vmem:[%s2] sm:$0x3f]
  %v40 = vadd.f32 %v38, %v39
  %41 = vst [vmem:[%s3] sm:$0x3f] %v40
  %v42 = vlog2.pop %v36
  %v43 = vmul.f32 %v42, 0.6931472
  %45 = vst [vmem:[#allocation1] ss:$4 sm:$0xff] %v43
  %v46 = vld.sshfl [vmem:[#allocation1] sm:$0xff pattern:$0x73625140]
  %v47 = vld.sshfl [vmem:[#allocation1 + $0x8] sm:$0xff pattern:$0x73625140]
  %v48 = vld.sshfl [vmem:[#allocation1 + $0x10] sm:$0xff pattern:$0x73625140]
  %vm52 = vcmask 1041408
  %v53 = vsel %vm52, %v46, 0.0
  %v54 = vsel %vm52, %v47, 0.0
  %v55 = vadd.f32 %v53, %v54
  %v56 = vsel %vm52, %v48, 0.0
  %v57 = vadd.f32 %v55, %v56
  %58 = vadd.xlane.f32.xlu0 %v57
  %v59 = vpop.xlane.xlu0 %58
  %vm60 = vcmask 1024
  %61 = vst.msk [vmem:[%s4] sm:$0x3] %vm60, %v59
  // Predicated region
  $region14: #{_lambda_.47} parent=0 // pred_check
    _
  $region15: #{_lambda_.47} parent=0 // pred_check_branch
    %63 = sbr.rel (0) target = $region17
  $region16: #{_lambda_.47} parent=0 // pred_region
    _
  $region17: #{_lambda_.47} parent=0 // pred_fallthru
    _
  // Predicated region
  $region18: #{_lambda_.47} parent=0 // pred_check
    _
  $region19: #{_lambda_.47} parent=0 // pred_check_branch
    %65 = sbr.rel (0) target = $region21
  $region20: #{_lambda_.47} parent=0 // pred_region
    _
  $region21: #{_lambda_.47} parent=0 // pred_fallthru
    _
  // Predicated region
  $region22: #{_lambda_.47} parent=0 // pred_check
    _
  $region23: #{_lambda_.47} parent=0 // pred_check_branch
    %67 = sbr.rel (0) target = $region25
  $region24: #{_lambda_.47} parent=0 // pred_region
    _
  $region25: #{_lambda_.47} parent=0 // pred_fallthru
    _
  // Predicated region
  $region26: #{_lambda_.47} parent=0 // pred_check
    _
  $region27: #{_lambda_.47} parent=0 // pred_check_branch
    %69 = sbr.rel (0) target = $region29
  $region28: #{_lambda_.47} parent=0 // pred_region
    _
  $region29: #{_lambda_.47} parent=0 // pred_fallthru
    _

// kernel: _lambda_.49
$region0: #{_lambda_.49}
  #allocation0 [shape = 'u32[]', space=smem, size = 0x4, offset = 0x4, fixed_abs, tag = 'smem constant byte address 0x4 - core index']
  #allocation1 [shape = 'u32[72,128]{1,0:T(1,128)}', space=vmem, size = 0x9000, scoped, tag = 'internal scratch']
  %s0 = inlined_call_operand.vmem [shape: f32[2,384], index: 0, kind: input, shape index: {}]
  %s1 = inlined_call_operand.vmem [shape: f32[2,384], index: 1, kind: input, shape index: {}]
  %s2 = inlined_call_operand.vmem [shape: f32[2,384], index: 2, kind: input, shape index: {}]
  %s3 = inlined_call_operand.vmem [shape: f32[2,1], index: 3, kind: output, shape index: {}]
  %s4 = sld [smem:[#allocation0]]
  $region22: #{_lambda_.49} parent=0
    _
  %s6 = ssub.s32 1, %s4
  %s7 = scalar_select 0, %s6, %s4
  // Predicated region
  $region2: #{_lambda_.49} parent=0 // pred_check
    _
  $region3: #{_lambda_.49} parent=0 // pred_check_branch
    %9 = sbr.rel (0) target = $region5
  $region4: #{_lambda_.49} parent=0 // pred_region
    _
  $region5: #{_lambda_.49} parent=0 // pred_fallthru
    _
  // Predicated region
  $region6: #{_lambda_.49} parent=0 // pred_check
    _
  $region7: #{_lambda_.49} parent=0 // pred_check_branch
    %11 = sbr.rel (0) target = $region9
  $region8: #{_lambda_.49} parent=0 // pred_region
    _
  $region9: #{_lambda_.49} parent=0 // pred_fallthru
    _
  // Predicated region
  $region10: #{_lambda_.49} parent=0 // pred_check
    _
  $region11: #{_lambda_.49} parent=0 // pred_check_branch
    %13 = sbr.rel (0) target = $region13
  $region12: #{_lambda_.49} parent=0 // pred_region
    _
  $region13: #{_lambda_.49} parent=0 // pred_fallthru
    _
  %v14 = vld [vmem:[%s2] sm:$0x3f]
  %v15 = vld [vmem:[%s0] sm:$0x3f]
  %v16 = vld [vmem:[%s1] sm:$0x3f]
  %v17 = vsub.f32 %v15, %v16
  %v18 = vmul.f32 %v14, 2.0
  %v19 = vmul.f32 %v17, %v17
  %v20 = vmul.f32 %v14, -2.0
  %v21 = vmul.f32 %v20, 1.442695
  %v22 = vpow.pop %v21
  %v23 = vmul.f32 %v19, %v22
  %v24 = vadd.f32 %v18, %v23
  %v25 = vadd.f32 %v24, 1.837877
  %v26 = vmul.f32 %v25, -0.5
  %28 = vst [vmem:[#allocation1] ss:$4 sm:$0xff] %v26
  %v29 = vld.sshfl [vmem:[#allocation1] sm:$0xff pattern:$0x73625140]
  %v30 = vld.sshfl [vmem:[#allocation1 + $0x8] sm:$0xff pattern:$0x73625140]
  %v31 = vld.sshfl [vmem:[#allocation1 + $0x10] sm:$0xff pattern:$0x73625140]
  %vm35 = vcmask 1041408
  %v36 = vsel %vm35, %v29, 0.0
  %v37 = vsel %vm35, %v30, 0.0
  %v38 = vadd.f32 %v36, %v37
  %v39 = vsel %vm35, %v31, 0.0
  %v40 = vadd.f32 %v38, %v39
  %41 = vadd.xlane.f32.xlu0 %v40
  %v42 = vpop.xlane.xlu0 %41
  %vm43 = vcmask 1024
  %44 = vst.msk [vmem:[%s3] sm:$0x3] %vm43, %v42
  // Predicated region
  $region14: #{_lambda_.49} parent=0 // pred_check
    _
  $region15: #{_lambda_.49} parent=0 // pred_check_branch
    %46 = sbr.rel (0) target = $region17
  $region16: #{_lambda_.49} parent=0 // pred_region
    _
  $region17: #{_lambda_.49} parent=0 // pred_fallthru
    _
  // Predicated region
  $region18: #{_lambda_.49} parent=0 // pred_check
    _
  $region19: #{_lambda_.49} parent=0 // pred_check_branch
    %48 = sbr.rel (0) target = $region21
  $region20: #{_lambda_.49} parent=0 // pred_region
    _
  $region21: #{_lambda_.49} parent=0 // pred_fallthru
    _

// kernel: _lambda_.46
$region0: #{_lambda_.46}
  #allocation0 [shape = 'u32[]', space=smem, size = 0x4, offset = 0x4, fixed_abs, tag = 'smem constant byte address 0x4 - core index']
  #allocation1 [shape = 'u32[72,128]{1,0:T(1,128)}', space=vmem, size = 0x9000, scoped, tag = 'internal scratch']
  %s0 = inlined_call_operand.vmem [shape: bf16[128,2304], index: 0, kind: input, shape index: {}]
  %s1 = inlined_call_operand.vmem [shape: bf16[2304,128], index: 1, kind: input, shape index: {}]
  %s2 = inlined_call_operand.vmem [shape: f32[1,128], index: 2, kind: input, shape index: {}]
  %s3 = inlined_call_operand.vmem [shape: f32[128,128], index: 3, kind: output, shape index: {}]
  %s4 = sld [smem:[#allocation0]]
  $region22: #{_lambda_.46} parent=0
    _
  %s6 = ssub.s32 1, %s4
  %s7 = scalar_select 0, %s6, %s4
  // Predicated region
  $region2: #{_lambda_.46} parent=0 // pred_check
    _
  $region3: #{_lambda_.46} parent=0 // pred_check_branch
    %9 = sbr.rel (0) target = $region5
  $region4: #{_lambda_.46} parent=0 // pred_region
    _
  $region5: #{_lambda_.46} parent=0 // pred_fallthru
    _
  // Predicated region
  $region6: #{_lambda_.46} parent=0 // pred_check
    _
  $region7: #{_lambda_.46} parent=0 // pred_check_branch
    %11 = sbr.rel (0) target = $region9
  $region8: #{_lambda_.46} parent=0 // pred_region
    _
  $region9: #{_lambda_.46} parent=0 // pred_fallthru
    _
  // Predicated region
  $region10: #{_lambda_.46} parent=0 // pred_check
    _
  $region11: #{_lambda_.46} parent=0 // pred_check_branch
    %13 = sbr.rel (0) target = $region13
  $region12: #{_lambda_.46} parent=0 // pred_region
    _
  $region13: #{_lambda_.46} parent=0 // pred_fallthru
    _
  %v14 = vld [vmem:[%s0] sm:$0xff]
  %v15 = vld [vmem:[%s0 + $0x8] sm:$0xff]
  %v16 = vld [vmem:[%s0 + $0x10] sm:$0xff]
  %v17 = vld [vmem:[%s0 + $0x18] sm:$0xff]
  %v18 = vld [vmem:[%s0 + $0x20] sm:$0xff]
  %v19 = vld [vmem:[%s0 + $0x28] sm:$0xff]
  %v20 = vld [vmem:[%s0 + $0x30] sm:$0xff]
  %v21 = vld [vmem:[%s0 + $0x38] sm:$0xff]
  %v22 = vld [vmem:[%s0 + $0x40] sm:$0xff]
  %v23 = vld [vmem:[%s0 + $0x48] sm:$0xff]
  %v24 = vld [vmem:[%s0 + $0x50] sm:$0xff]
  %v25 = vld [vmem:[%s0 + $0x58] sm:$0xff]
  %v26 = vld [vmem:[%s0 + $0x60] sm:$0xff]
  %v27 = vld [vmem:[%s0 + $0x68] sm:$0xff]
  %v28 = vld [vmem:[%s0 + $0x70] sm:$0xff]
  %v29 = vld [vmem:[%s0 + $0x78] sm:$0xff]
  %v30 = vld [vmem:[%s0 + $0x80] sm:$0xff]
  %v31 = vld [vmem:[%s0 + $0x88] sm:$0xff]
  %v32 = vld [vmem:[%s0 + $0x90] sm:$0xff]
  %v33 = vld [vmem:[%s0 + $0x98] sm:$0xff]
  %v34 = vld [vmem:[%s0 + $0xa0] sm:$0xff]
  %v35 = vld [vmem:[%s0 + $0xa8] sm:$0xff]
  %v36 = vld [vmem:[%s0 + $0xb0] sm:$0xff]
  %v37 = vld [vmem:[%s0 + $0xb8] sm:$0xff]
  %v38 = vld [vmem:[%s0 + $0xc0] sm:$0xff]
  %v39 = vld [vmem:[%s0 + $0xc8] sm:$0xff]
  %v40 = vld [vmem:[%s0 + $0xd0] sm:$0xff]
  %v41 = vld [vmem:[%s0 + $0xd8] sm:$0xff]
  %v42 = vld [vmem:[%s0 + $0xe0] sm:$0xff]
  %v43 = vld [vmem:[%s0 + $0xe8] sm:$0xff]
  %v44 = vld [vmem:[%s0 + $0xf0] sm:$0xff]
  %v45 = vld [vmem:[%s0 + $0xf8] sm:$0xff]
  %v46 = vld [vmem:[%s0 + $0x100] sm:$0xff]
  %v47 = vld [vmem:[%s0 + $0x108] sm:$0xff]
  %v48 = vld [vmem:[%s0 + $0x110] sm:$0xff]
  %v49 = vld [vmem:[%s0 + $0x118] sm:$0xff]
  %v50 = vld [vmem:[%s0 + $0x120] sm:$0xff]
  %v51 = vld [vmem:[%s0 + $0x128] sm:$0xff]
  %v52 = vld [vmem:[%s0 + $0x130] sm:$0xff]
  %v53 = vld [vmem:[%s0 + $0x138] sm:$0xff]
  %v54 = vld [vmem:[%s0 + $0x140] sm:$0xff]
  %v55 = vld [vmem:[%s0 + $0x148] sm:$0xff]
  %v56 = vld [vmem:[%s0 + $0x150] sm:$0xff]
  %v57 = vld [vmem:[%s0 + $0x158] sm:$0xff]
  %v58 = vld [vmem:[%s0 + $0x160] sm:$0xff]
  %v59 = vld [vmem:[%s0 + $0x168] sm:$0xff]
  %v60 = vld [vmem:[%s0 + $0x170] sm:$0xff]
  %v61 = vld [vmem:[%s0 + $0x178] sm:$0xff]
  %v62 = vld [vmem:[%s0 + $0x180] sm:$0xff]
  %v63 = vld [vmem:[%s0 + $0x188] sm:$0xff]
  %v64 = vld [vmem:[%s0 + $0x190] sm:$0xff]
  %v65 = vld [vmem:[%s0 + $0x198] sm:$0xff]
  %v66 = vld [vmem:[%s0 + $0x1a0] sm:$0xff]
  %v67 = vld [vmem:[%s0 + $0x1a8] sm:$0xff]
  %v68 = vld [vmem:[%s0 + $0x1b0] sm:$0xff]
  %v69 = vld [vmem:[%s0 + $0x1b8] sm:$0xff]
  %v70 = vld [vmem:[%s0 + $0x1c0] sm:$0xff]
  %v71 = vld [vmem:[%s0 + $0x1c8] sm:$0xff]
  %v72 = vld [vmem:[%s0 + $0x1d0] sm:$0xff]
  %v73 = vld [vmem:[%s0 + $0x1d8] sm:$0xff]
  %v74 = vld [vmem:[%s0 + $0x1e0] sm:$0xff]
  %v75 = vld [vmem:[%s0 + $0x1e8] sm:$0xff]
  %v76 = vld [vmem:[%s0 + $0x1f0] sm:$0xff]
  %v77 = vld [vmem:[%s0 + $0x1f8] sm:$0xff]
  %v78 = vld [vmem:[%s0 + $0x200] sm:$0xff]
  %v79 = vld [vmem:[%s0 + $0x208] sm:$0xff]
  %v80 = vld [vmem:[%s0 + $0x210] sm:$0xff]
  %v81 = vld [vmem:[%s0 + $0x218] sm:$0xff]
  %v82 = vld [vmem:[%s0 + $0x220] sm:$0xff]
  %v83 = vld [vmem:[%s0 + $0x228] sm:$0xff]
  %v84 = vld [vmem:[%s0 + $0x230] sm:$0xff]
  %v85 = vld [vmem:[%s0 + $0x238] sm:$0xff]
  %v86 = vld [vmem:[%s0 + $0x240] sm:$0xff]
  %v87 = vld [vmem:[%s0 + $0x248] sm:$0xff]
  %v88 = vld [vmem:[%s0 + $0x250] sm:$0xff]
  %v89 = vld [vmem:[%s0 + $0x258] sm:$0xff]
  %v90 = vld [vmem:[%s0 + $0x260] sm:$0xff]
  %v91 = vld [vmem:[%s0 + $0x268] sm:$0xff]
  %v92 = vld [vmem:[%s0 + $0x270] sm:$0xff]
  %v93 = vld [vmem:[%s0 + $0x278] sm:$0xff]
  %v94 = vld [vmem:[%s0 + $0x280] sm:$0xff]
  %v95 = vld [vmem:[%s0 + $0x288] sm:$0xff]
  %v96 = vld [vmem:[%s0 + $0x290] sm:$0xff]
  %v97 = vld [vmem:[%s0 + $0x298] sm:$0xff]
  %v98 = vld [vmem:[%s0 + $0x2a0] sm:$0xff]
  %v99 = vld [vmem:[%s0 + $0x2a8] sm:$0xff]
  %v100 = vld [vmem:[%s0 + $0x2b0] sm:$0xff]
  %v101 = vld [vmem:[%s0 + $0x2b8] sm:$0xff]
  %v102 = vld [vmem:[%s0 + $0x2c0] sm:$0xff]
  %v103 = vld [vmem:[%s0 + $0x2c8] sm:$0xff]
  %v104 = vld [vmem:[%s0 + $0x2d0] sm:$0xff]
  %v105 = vld [vmem:[%s0 + $0x2d8] sm:$0xff]
  %v106 = vld [vmem:[%s0 + $0x2e0] sm:$0xff]
  %v107 = vld [vmem:[%s0 + $0x2e8] sm:$0xff]
  %v108 = vld [vmem:[%s0 + $0x2f0] sm:$0xff]
  %v109 = vld [vmem:[%s0 + $0x2f8] sm:$0xff]
  %v110 = vld [vmem:[%s0 + $0x300] sm:$0xff]
  %v111 = vld [vmem:[%s0 + $0x308] sm:$0xff]
  %v112 = vld [vmem:[%s0 + $0x310] sm:$0xff]
  %v113 = vld [vmem:[%s0 + $0x318] sm:$0xff]
  %v114 = vld [vmem:[%s0 + $0x320] sm:$0xff]
  %v115 = vld [vmem:[%s0 + $0x328] sm:$0xff]
  %v116 = vld [vmem:[%s0 + $0x330] sm:$0xff]
  %v117 = vld [vmem:[%s0 + $0x338] sm:$0xff]
  %v118 = vld [vmem:[%s0 + $0x340] sm:$0xff]
  %v119 = vld [vmem:[%s0 + $0x348] sm:$0xff]
  %v120 = vld [vmem:[%s0 + $0x350] sm:$0xff]
  %v121 = vld [vmem:[%s0 + $0x358] sm:$0xff]
  %v122 = vld [vmem:[%s0 + $0x360] sm:$0xff]
  %v123 = vld [vmem:[%s0 + $0x368] sm:$0xff]
  %v124 = vld [vmem:[%s0 + $0x370] sm:$0xff]
  %v125 = vld [vmem:[%s0 + $0x378] sm:$0xff]
  %v126 = vld [vmem:[%s0 + $0x380] sm:$0xff]
  %v127 = vld [vmem:[%s0 + $0x388] sm:$0xff]
  %v128 = vld [vmem:[%s0 + $0x390] sm:$0xff]
  %v129 = vld [vmem:[%s0 + $0x398] sm:$0xff]
  %v130 = vld [vmem:[%s0 + $0x3a0] sm:$0xff]
  %v131 = vld [vmem:[%s0 + $0x3a8] sm:$0xff]
  %v132 = vld [vmem:[%s0 + $0x3b0] sm:$0xff]
  %v133 = vld [vmem:[%s0 + $0x3b8] sm:$0xff]
  %v134 = vld [vmem:[%s0 + $0x3c0] sm:$0xff]
  %v135 = vld [vmem:[%s0 + $0x3c8] sm:$0xff]
  %v136 = vld [vmem:[%s0 + $0x3d0] sm:$0xff]
  %v137 = vld [vmem:[%s0 + $0x3d8] sm:$0xff]
  %v138 = vld [vmem:[%s0 + $0x3e0] sm:$0xff]
  %v139 = vld [vmem:[%s0 + $0x3e8] sm:$0xff]
  %v140 = vld [vmem:[%s0 + $0x3f0] sm:$0xff]
  %v141 = vld [vmem:[%s0 + $0x3f8] sm:$0xff]
  %v142 = vld [vmem:[%s0 + $0x400] sm:$0xff]
  %v143 = vld [vmem:[%s0 + $0x408] sm:$0xff]
  %v144 = vld [vmem:[%s0 + $0x410] sm:$0xff]
  %v145 = vld [vmem:[%s0 + $0x418] sm:$0xff]
  %v146 = vld [vmem:[%s0 + $0x420] sm:$0xff]
  %v147 = vld [vmem:[%s0 + $0x428] sm:$0xff]
  %v148 = vld [vmem:[%s0 + $0x430] sm:$0xff]
  %v149 = vld [vmem:[%s0 + $0x438] sm:$0xff]
  %v150 = vld [vmem:[%s0 + $0x440] sm:$0xff]
  %v151 = vld [vmem:[%s0 + $0x448] sm:$0xff]
  %v152 = vld [vmem:[%s0 + $0x450] sm:$0xff]
  %v153 = vld [vmem:[%s0 + $0x458] sm:$0xff]
  %v154 = vld [vmem:[%s0 + $0x460] sm:$0xff]
  %v155 = vld [vmem:[%s0 + $0x468] sm:$0xff]
  %v156 = vld [vmem:[%s0 + $0x470] sm:$0xff]
  %v157 = vld [vmem:[%s0 + $0x478] sm:$0xff]
  %v158 = vld [vmem:[%s1] sm:$0xf]
  %v159 = vld [vmem:[%s1 + $0x4] sm:$0xf]
  %v160 = vld [vmem:[%s1 + $0x8] sm:$0xf]
  %v161 = vld [vmem:[%s1 + $0xc] sm:$0xf]
  %v162 = vld [vmem:[%s1 + $0x10] sm:$0xf]
  %v163 = vld [vmem:[%s1 + $0x14] sm:$0xf]
  %v164 = vld [vmem:[%s1 + $0x18] sm:$0xf]
  %v165 = vld [vmem:[%s1 + $0x1c] sm:$0xf]
  %v166 = vld [vmem:[%s1 + $0x20] sm:$0xf]
  %v167 = vld [vmem:[%s1 + $0x24] sm:$0xf]
  %v168 = vld [vmem:[%s1 + $0x28] sm:$0xf]
  %v169 = vld [vmem:[%s1 + $0x2c] sm:$0xf]
  %v170 = vld [vmem:[%s1 + $0x30] sm:$0xf]
  %v171 = vld [vmem:[%s1 + $0x34] sm:$0xf]
  %v172 = vld [vmem:[%s1 + $0x38] sm:$0xf]
  %v173 = vld [vmem:[%s1 + $0x3c] sm:$0xf]
  %v174 = vld [vmem:[%s1 + $0x40] sm:$0xf]
  %v175 = vld [vmem:[%s1 + $0x44] sm:$0xf]
  %v176 = vld [vmem:[%s1 + $0x48] sm:$0xf]
  %v177 = vld [vmem:[%s1 + $0x4c] sm:$0xf]
  %v178 = vld [vmem:[%s1 + $0x50] sm:$0xf]
  %v179 = vld [vmem:[%s1 + $0x54] sm:$0xf]
  %v180 = vld [vmem:[%s1 + $0x58] sm:$0xf]
  %v181 = vld [vmem:[%s1 + $0x5c] sm:$0xf]
  %v182 = vld [vmem:[%s1 + $0x60] sm:$0xf]
  %v183 = vld [vmem:[%s1 + $0x64] sm:$0xf]
  %v184 = vld [vmem:[%s1 + $0x68] sm:$0xf]
  %v185 = vld [vmem:[%s1 + $0x6c] sm:$0xf]
  %v186 = vld [vmem:[%s1 + $0x70] sm:$0xf]
  %v187 = vld [vmem:[%s1 + $0x74] sm:$0xf]
  %v188 = vld [vmem:[%s1 + $0x78] sm:$0xf]
  %v189 = vld [vmem:[%s1 + $0x7c] sm:$0xf]
  %v190 = vld [vmem:[%s1 + $0x80] sm:$0xf]
  %v191 = vld [vmem:[%s1 + $0x84] sm:$0xf]
  %v192 = vld [vmem:[%s1 + $0x88] sm:$0xf]
  %v193 = vld [vmem:[%s1 + $0x8c] sm:$0xf]
  %v194 = vld [vmem:[%s1 + $0x90] sm:$0xf]
  %v195 = vld [vmem:[%s1 + $0x94] sm:$0xf]
  %v196 = vld [vmem:[%s1 + $0x98] sm:$0xf]
  %v197 = vld [vmem:[%s1 + $0x9c] sm:$0xf]
  %v198 = vld [vmem:[%s1 + $0xa0] sm:$0xf]
  %v199 = vld [vmem:[%s1 + $0xa4] sm:$0xf]
  %v200 = vld [vmem:[%s1 + $0xa8] sm:$0xf]
  %v201 = vld [vmem:[%s1 + $0xac] sm:$0xf]
  %v202 = vld [vmem:[%s1 + $0xb0] sm:$0xf]
  %v203 = vld [vmem:[%s1 + $0xb4] sm:$0xf]
  %v204 = vld [vmem:[%s1 + $0xb8] sm:$0xf]
  %v205 = vld [vmem:[%s1 + $0xbc] sm:$0xf]
  %v206 = vld [vmem:[%s1 + $0xc0] sm:$0xf]
  %v207 = vld [vmem:[%s1 + $0xc4] sm:$0xf]
  %v208 = vld [vmem:[%s1 + $0xc8] sm:$0xf]
  %v209 = vld [vmem:[%s1 + $0xcc] sm:$0xf]
  %v210 = vld [vmem:[%s1 + $0xd0] sm:$0xf]
  %v211 = vld [vmem:[%s1 + $0xd4] sm:$0xf]
  %v212 = vld [vmem:[%s1 + $0xd8] sm:$0xf]
  %v213 = vld [vmem:[%s1 + $0xdc] sm:$0xf]
  %v214 = vld [vmem:[%s1 + $0xe0] sm:$0xf]
  %v215 = vld [vmem:[%s1 + $0xe4] sm:$0xf]
  %v216 = vld [vmem:[%s1 + $0xe8] sm:$0xf]
  %v217 = vld [vmem:[%s1 + $0xec] sm:$0xf]
  %v218 = vld [vmem:[%s1 + $0xf0] sm:$0xf]
  %v219 = vld [vmem:[%s1 + $0xf4] sm:$0xf]
  %v220 = vld [vmem:[%s1 + $0xf8] sm:$0xf]
  %v221 = vld [vmem:[%s1 + $0xfc] sm:$0xf]
  %v222 = vld [vmem:[%s1 + $0x100] sm:$0xf]
  %v223 = vld [vmem:[%s1 + $0x104] sm:$0xf]
  %v224 = vld [vmem:[%s1 + $0x108] sm:$0xf]
  %v225 = vld [vmem:[%s1 + $0x10c] sm:$0xf]
  %v226 = vld [vmem:[%s1 + $0x110] sm:$0xf]
  %v227 = vld [vmem:[%s1 + $0x114] sm:$0xf]
  %v228 = vld [vmem:[%s1 + $0x118] sm:$0xf]
  %v229 = vld [vmem:[%s1 + $0x11c] sm:$0xf]
  %v230 = vld [vmem:[%s1 + $0x120] sm:$0xf]
  %v231 = vld [vmem:[%s1 + $0x124] sm:$0xf]
  %v232 = vld [vmem:[%s1 + $0x128] sm:$0xf]
  %v233 = vld [vmem:[%s1 + $0x12c] sm:$0xf]
  %v234 = vld [vmem:[%s1 + $0x130] sm:$0xf]
  %v235 = vld [vmem:[%s1 + $0x134] sm:$0xf]
  %v236 = vld [vmem:[%s1 + $0x138] sm:$0xf]
  %v237 = vld [vmem:[%s1 + $0x13c] sm:$0xf]
  %v238 = vld [vmem:[%s1 + $0x140] sm:$0xf]
  %v239 = vld [vmem:[%s1 + $0x144] sm:$0xf]
  %v240 = vld [vmem:[%s1 + $0x148] sm:$0xf]
  %v241 = vld [vmem:[%s1 + $0x14c] sm:$0xf]
  %v242 = vld [vmem:[%s1 + $0x150] sm:$0xf]
  %v243 = vld [vmem:[%s1 + $0x154] sm:$0xf]
  %v244 = vld [vmem:[%s1 + $0x158] sm:$0xf]
  %v245 = vld [vmem:[%s1 + $0x15c] sm:$0xf]
  %v246 = vld [vmem:[%s1 + $0x160] sm:$0xf]
  %v247 = vld [vmem:[%s1 + $0x164] sm:$0xf]
  %v248 = vld [vmem:[%s1 + $0x168] sm:$0xf]
  %v249 = vld [vmem:[%s1 + $0x16c] sm:$0xf]
  %v250 = vld [vmem:[%s1 + $0x170] sm:$0xf]
  %v251 = vld [vmem:[%s1 + $0x174] sm:$0xf]
  %v252 = vld [vmem:[%s1 + $0x178] sm:$0xf]
  %v253 = vld [vmem:[%s1 + $0x17c] sm:$0xf]
  %v254 = vld [vmem:[%s1 + $0x180] sm:$0xf]
  %v255 = vld [vmem:[%s1 + $0x184] sm:$0xf]
  %v256 = vld [vmem:[%s1 + $0x188] sm:$0xf]
  %v257 = vld [vmem:[%s1 + $0x18c] sm:$0xf]
  %v258 = vld [vmem:[%s1 + $0x190] sm:$0xf]
  %v259 = vld [vmem:[%s1 + $0x194] sm:$0xf]
  %v260 = vld [vmem:[%s1 + $0x198] sm:$0xf]
  %v261 = vld [vmem:[%s1 + $0x19c] sm:$0xf]
  %v262 = vld [vmem:[%s1 + $0x1a0] sm:$0xf]
  %v263 = vld [vmem:[%s1 + $0x1a4] sm:$0xf]
  %v264 = vld [vmem:[%s1 + $0x1a8] sm:$0xf]
  %v265 = vld [vmem:[%s1 + $0x1ac] sm:$0xf]
  %v266 = vld [vmem:[%s1 + $0x1b0] sm:$0xf]
  %v267 = vld [vmem:[%s1 + $0x1b4] sm:$0xf]
  %v268 = vld [vmem:[%s1 + $0x1b8] sm:$0xf]
  %v269 = vld [vmem:[%s1 + $0x1bc] sm:$0xf]
  %v270 = vld [vmem:[%s1 + $0x1c0] sm:$0xf]
  %v271 = vld [vmem:[%s1 + $0x1c4] sm:$0xf]
  %v272 = vld [vmem:[%s1 + $0x1c8] sm:$0xf]
  %v273 = vld [vmem:[%s1 + $0x1cc] sm:$0xf]
  %v274 = vld [vmem:[%s1 + $0x1d0] sm:$0xf]
  %v275 = vld [vmem:[%s1 + $0x1d4] sm:$0xf]
  %v276 = vld [vmem:[%s1 + $0x1d8] sm:$0xf]
  %v277 = vld [vmem:[%s1 + $0x1dc] sm:$0xf]
  %v278 = vld [vmem:[%s1 + $0x1e0] sm:$0xf]
  %v279 = vld [vmem:[%s1 + $0x1e4] sm:$0xf]
  %v280 = vld [vmem:[%s1 + $0x1e8] sm:$0xf]
  %v281 = vld [vmem:[%s1 + $0x1ec] sm:$0xf]
  %v282 = vld [vmem:[%s1 + $0x1f0] sm:$0xf]
  %v283 = vld [vmem:[%s1 + $0x1f4] sm:$0xf]
  %v284 = vld [vmem:[%s1 + $0x1f8] sm:$0xf]
  %v285 = vld [vmem:[%s1 + $0x1fc] sm:$0xf]
  %v286 = vld [vmem:[%s1 + $0x200] sm:$0xf]
  %v287 = vld [vmem:[%s1 + $0x204] sm:$0xf]
  %v288 = vld [vmem:[%s1 + $0x208] sm:$0xf]
  %v289 = vld [vmem:[%s1 + $0x20c] sm:$0xf]
  %v290 = vld [vmem:[%s1 + $0x210] sm:$0xf]
  %v291 = vld [vmem:[%s1 + $0x214] sm:$0xf]
  %v292 = vld [vmem:[%s1 + $0x218] sm:$0xf]
  %v293 = vld [vmem:[%s1 + $0x21c] sm:$0xf]
  %v294 = vld [vmem:[%s1 + $0x220] sm:$0xf]
  %v295 = vld [vmem:[%s1 + $0x224] sm:$0xf]
  %v296 = vld [vmem:[%s1 + $0x228] sm:$0xf]
  %v297 = vld [vmem:[%s1 + $0x22c] sm:$0xf]
  %v298 = vld [vmem:[%s1 + $0x230] sm:$0xf]
  %v299 = vld [vmem:[%s1 + $0x234] sm:$0xf]
  %v300 = vld [vmem:[%s1 + $0x238] sm:$0xf]
  %v301 = vld [vmem:[%s1 + $0x23c] sm:$0xf]
  %v302 = vld [vmem:[%s1 + $0x240] sm:$0xf]
  %v303 = vld [vmem:[%s1 + $0x244] sm:$0xf]
  %v304 = vld [vmem:[%s1 + $0x248] sm:$0xf]
  %v305 = vld [vmem:[%s1 + $0x24c] sm:$0xf]
  %v306 = vld [vmem:[%s1 + $0x250] sm:$0xf]
  %v307 = vld [vmem:[%s1 + $0x254] sm:$0xf]
  %v308 = vld [vmem:[%s1 + $0x258] sm:$0xf]
  %v309 = vld [vmem:[%s1 + $0x25c] sm:$0xf]
  %v310 = vld [vmem:[%s1 + $0x260] sm:$0xf]
  %v311 = vld [vmem:[%s1 + $0x264] sm:$0xf]
  %v312 = vld [vmem:[%s1 + $0x268] sm:$0xf]
  %v313 = vld [vmem:[%s1 + $0x26c] sm:$0xf]
  %v314 = vld [vmem:[%s1 + $0x270] sm:$0xf]
  %v315 = vld [vmem:[%s1 + $0x274] sm:$0xf]
  %v316 = vld [vmem:[%s1 + $0x278] sm:$0xf]
  %v317 = vld [vmem:[%s1 + $0x27c] sm:$0xf]
  %v318 = vld [vmem:[%s1 + $0x280] sm:$0xf]
  %v319 = vld [vmem:[%s1 + $0x284] sm:$0xf]
  %v320 = vld [vmem:[%s1 + $0x288] sm:$0xf]
  %v321 = vld [vmem:[%s1 + $0x28c] sm:$0xf]
  %v322 = vld [vmem:[%s1 + $0x290] sm:$0xf]
  %v323 = vld [vmem:[%s1 + $0x294] sm:$0xf]
  %v324 = vld [vmem:[%s1 + $0x298] sm:$0xf]
  %v325 = vld [vmem:[%s1 + $0x29c] sm:$0xf]
  %v326 = vld [vmem:[%s1 + $0x2a0] sm:$0xf]
  %v327 = vld [vmem:[%s1 + $0x2a4] sm:$0xf]
  %v328 = vld [vmem:[%s1 + $0x2a8] sm:$0xf]
  %v329 = vld [vmem:[%s1 + $0x2ac] sm:$0xf]
  %v330 = vld [vmem:[%s1 + $0x2b0] sm:$0xf]
  %v331 = vld [vmem:[%s1 + $0x2b4] sm:$0xf]
  %v332 = vld [vmem:[%s1 + $0x2b8] sm:$0xf]
  %v333 = vld [vmem:[%s1 + $0x2bc] sm:$0xf]
  %v334 = vld [vmem:[%s1 + $0x2c0] sm:$0xf]
  %v335 = vld [vmem:[%s1 + $0x2c4] sm:$0xf]
  %v336 = vld [vmem:[%s1 + $0x2c8] sm:$0xf]
  %v337 = vld [vmem:[%s1 + $0x2cc] sm:$0xf]
  %v338 = vld [vmem:[%s1 + $0x2d0] sm:$0xf]
  %v339 = vld [vmem:[%s1 + $0x2d4] sm:$0xf]
  %v340 = vld [vmem:[%s1 + $0x2d8] sm:$0xf]
  %v341 = vld [vmem:[%s1 + $0x2dc] sm:$0xf]
  %v342 = vld [vmem:[%s1 + $0x2e0] sm:$0xf]
  %v343 = vld [vmem:[%s1 + $0x2e4] sm:$0xf]
  %v344 = vld [vmem:[%s1 + $0x2e8] sm:$0xf]
  %v345 = vld [vmem:[%s1 + $0x2ec] sm:$0xf]
  %v346 = vld [vmem:[%s1 + $0x2f0] sm:$0xf]
  %v347 = vld [vmem:[%s1 + $0x2f4] sm:$0xf]
  %v348 = vld [vmem:[%s1 + $0x2f8] sm:$0xf]
  %v349 = vld [vmem:[%s1 + $0x2fc] sm:$0xf]
  %v350 = vld [vmem:[%s1 + $0x300] sm:$0xf]
  %v351 = vld [vmem:[%s1 + $0x304] sm:$0xf]
  %v352 = vld [vmem:[%s1 + $0x308] sm:$0xf]
  %v353 = vld [vmem:[%s1 + $0x30c] sm:$0xf]
  %v354 = vld [vmem:[%s1 + $0x310] sm:$0xf]
  %v355 = vld [vmem:[%s1 + $0x314] sm:$0xf]
  %v356 = vld [vmem:[%s1 + $0x318] sm:$0xf]
  %v357 = vld [vmem:[%s1 + $0x31c] sm:$0xf]
  %v358 = vld [vmem:[%s1 + $0x320] sm:$0xf]
  %v359 = vld [vmem:[%s1 + $0x324] sm:$0xf]
  %v360 = vld [vmem:[%s1 + $0x328] sm:$0xf]
  %v361 = vld [vmem:[%s1 + $0x32c] sm:$0xf]
  %v362 = vld [vmem:[%s1 + $0x330] sm:$0xf]
  %v363 = vld [vmem:[%s1 + $0x334] sm:$0xf]
  %v364 = vld [vmem:[%s1 + $0x338] sm:$0xf]
  %v365 = vld [vmem:[%s1 + $0x33c] sm:$0xf]
  %v366 = vld [vmem:[%s1 + $0x340] sm:$0xf]
  %v367 = vld [vmem:[%s1 + $0x344] sm:$0xf]
  %v368 = vld [vmem:[%s1 + $0x348] sm:$0xf]
  %v369 = vld [vmem:[%s1 + $0x34c] sm:$0xf]
  %v370 = vld [vmem:[%s1 + $0x350] sm:$0xf]
  %v371 = vld [vmem:[%s1 + $0x354] sm:$0xf]
  %v372 = vld [vmem:[%s1 + $0x358] sm:$0xf]
  %v373 = vld [vmem:[%s1 + $0x35c] sm:$0xf]
  %v374 = vld [vmem:[%s1 + $0x360] sm:$0xf]
  %v375 = vld [vmem:[%s1 + $0x364] sm:$0xf]
  %v376 = vld [vmem:[%s1 + $0x368] sm:$0xf]
  %v377 = vld [vmem:[%s1 + $0x36c] sm:$0xf]
  %v378 = vld [vmem:[%s1 + $0x370] sm:$0xf]
  %v379 = vld [vmem:[%s1 + $0x374] sm:$0xf]
  %v380 = vld [vmem:[%s1 + $0x378] sm:$0xf]
  %v381 = vld [vmem:[%s1 + $0x37c] sm:$0xf]
  %v382 = vld [vmem:[%s1 + $0x380] sm:$0xf]
  %v383 = vld [vmem:[%s1 + $0x384] sm:$0xf]
  %v384 = vld [vmem:[%s1 + $0x388] sm:$0xf]
  %v385 = vld [vmem:[%s1 + $0x38c] sm:$0xf]
  %v386 = vld [vmem:[%s1 + $0x390] sm:$0xf]
  %v387 = vld [vmem:[%s1 + $0x394] sm:$0xf]
  %v388 = vld [vmem:[%s1 + $0x398] sm:$0xf]
  %v389 = vld [vmem:[%s1 + $0x39c] sm:$0xf]
  %v390 = vld [vmem:[%s1 + $0x3a0] sm:$0xf]
  %v391 = vld [vmem:[%s1 + $0x3a4] sm:$0xf]
  %v392 = vld [vmem:[%s1 + $0x3a8] sm:$0xf]
  %v393 = vld [vmem:[%s1 + $0x3ac] sm:$0xf]
  %v394 = vld [vmem:[%s1 + $0x3b0] sm:$0xf]
  %v395 = vld [vmem:[%s1 + $0x3b4] sm:$0xf]
  %v396 = vld [vmem:[%s1 + $0x3b8] sm:$0xf]
  %v397 = vld [vmem:[%s1 + $0x3bc] sm:$0xf]
  %v398 = vld [vmem:[%s1 + $0x3c0] sm:$0xf]
  %v399 = vld [vmem:[%s1 + $0x3c4] sm:$0xf]
  %v400 = vld [vmem:[%s1 + $0x3c8] sm:$0xf]
  %v401 = vld [vmem:[%s1 + $0x3cc] sm:$0xf]
  %v402 = vld [vmem:[%s1 + $0x3d0] sm:$0xf]
  %v403 = vld [vmem:[%s1 + $0x3d4] sm:$0xf]
  %v404 = vld [vmem:[%s1 + $0x3d8] sm:$0xf]
  %v405 = vld [vmem:[%s1 + $0x3dc] sm:$0xf]
  %v406 = vld [vmem:[%s1 + $0x3e0] sm:$0xf]
  %v407 = vld [vmem:[%s1 + $0x3e4] sm:$0xf]
  %v408 = vld [vmem:[%s1 + $0x3e8] sm:$0xf]
  %v409 = vld [vmem:[%s1 + $0x3ec] sm:$0xf]
  %v410 = vld [vmem:[%s1 + $0x3f0] sm:$0xf]
  %v411 = vld [vmem:[%s1 + $0x3f4] sm:$0xf]
  %v412 = vld [vmem:[%s1 + $0x3f8] sm:$0xf]
  %v413 = vld [vmem:[%s1 + $0x3fc] sm:$0xf]
  %v414 = vld [vmem:[%s1 + $0x400] sm:$0xf]
  %v415 = vld [vmem:[%s1 + $0x404] sm:$0xf]
  %v416 = vld [vmem:[%s1 + $0x408] sm:$0xf]
  %v417 = vld [vmem:[%s1 + $0x40c] sm:$0xf]
  %v418 = vld [vmem:[%s1 + $0x410] sm:$0xf]
  %v419 = vld [vmem:[%s1 + $0x414] sm:$0xf]
  %v420 = vld [vmem:[%s1 + $0x418] sm:$0xf]
  %v421 = vld [vmem:[%s1 + $0x41c] sm:$0xf]
  %v422 = vld [vmem:[%s1 + $0x420] sm:$0xf]
  %v423 = vld [vmem:[%s1 + $0x424] sm:$0xf]
  %v424 = vld [vmem:[%s1 + $0x428] sm:$0xf]
  %v425 = vld [vmem:[%s1 + $0x42c] sm:$0xf]
  %v426 = vld [vmem:[%s1 + $0x430] sm:$0xf]
  %v427 = vld [vmem:[%s1 + $0x434] sm:$0xf]
  %v428 = vld [vmem:[%s1 + $0x438] sm:$0xf]
  %v429 = vld [vmem:[%s1 + $0x43c] sm:$0xf]
  %v430 = vld [vmem:[%s1 + $0x440] sm:$0xf]
  %v431 = vld [vmem:[%s1 + $0x444] sm:$0xf]
  %v432 = vld [vmem:[%s1 + $0x448] sm:$0xf]
  %v433 = vld [vmem:[%s1 + $0x44c] sm:$0xf]
  %v434 = vld [vmem:[%s1 + $0x450] sm:$0xf]
  %v435 = vld [vmem:[%s1 + $0x454] sm:$0xf]
  %v436 = vld [vmem:[%s1 + $0x458] sm:$0xf]
  %v437 = vld [vmem:[%s1 + $0x45c] sm:$0xf]
  %v438 = vld [vmem:[%s1 + $0x460] sm:$0xf]
  %v439 = vld [vmem:[%s1 + $0x464] sm:$0xf]
  %v440 = vld [vmem:[%s1 + $0x468] sm:$0xf]
  %v441 = vld [vmem:[%s1 + $0x46c] sm:$0xf]
  %v442 = vld [vmem:[%s1 + $0x470] sm:$0xf]
  %v443 = vld [vmem:[%s1 + $0x474] sm:$0xf]
  %v444 = vld [vmem:[%s1 + $0x478] sm:$0xf]
  %v445 = vld [vmem:[%s1 + $0x47c] sm:$0xf]
  %v446 = vld [vmem:[%s2] sm:$0x1]
  %v448 = vperm.slane %v446, 0
  %v594 = vunpack.c.l.b16 %v14
  %v595 = vunpack.c.h.b16 %v14
  %v596 = vunpack.c.l.b16 %v15
  %v597 = vunpack.c.h.b16 %v15
  %v598 = vunpack.c.l.b16 %v16
  %v599 = vunpack.c.h.b16 %v16
  %v600 = vunpack.c.l.b16 %v17
  %v601 = vunpack.c.h.b16 %v17
  %v602 = vunpack.c.l.b16 %v18
  %v603 = vunpack.c.h.b16 %v18
  %v604 = vunpack.c.l.b16 %v19
  %v605 = vunpack.c.h.b16 %v19
  %v606 = vunpack.c.l.b16 %v20
  %v607 = vunpack.c.h.b16 %v20
  %v608 = vunpack.c.l.b16 %v21
  %v609 = vunpack.c.h.b16 %v21
  %v610 = vunpack.c.l.b16 %v22
  %v611 = vunpack.c.h.b16 %v22
  %v612 = vunpack.c.l.b16 %v23
  %v613 = vunpack.c.h.b16 %v23
  %v614 = vunpack.c.l.b16 %v24
  %v615 = vunpack.c.h.b16 %v24
  %v616 = vunpack.c.l.b16 %v25
  %v617 = vunpack.c.h.b16 %v25
  %v618 = vunpack.c.l.b16 %v26
  %v619 = vunpack.c.h.b16 %v26
  %v620 = vunpack.c.l.b16 %v27
  %v621 = vunpack.c.h.b16 %v27
  %v622 = vunpack.c.l.b16 %v28
  %v623 = vunpack.c.h.b16 %v28
  %v624 = vunpack.c.l.b16 %v29
  %v625 = vunpack.c.h.b16 %v29
  %v626 = vunpack.c.l.b16 %v30
  %v627 = vunpack.c.h.b16 %v30
  %v628 = vunpack.c.l.b16 %v31
  %v629 = vunpack.c.h.b16 %v31
  %v630 = vunpack.c.l.b16 %v32
  %v631 = vunpack.c.h.b16 %v32
  %v632 = vunpack.c.l.b16 %v33
  %v633 = vunpack.c.h.b16 %v33
  %v634 = vunpack.c.l.b16 %v34
  %v635 = vunpack.c.h.b16 %v34
  %v636 = vunpack.c.l.b16 %v35
  %v637 = vunpack.c.h.b16 %v35
  %v638 = vunpack.c.l.b16 %v36
  %v639 = vunpack.c.h.b16 %v36
  %v640 = vunpack.c.l.b16 %v37
  %v641 = vunpack.c.h.b16 %v37
  %v642 = vunpack.c.l.b16 %v38
  %v643 = vunpack.c.h.b16 %v38
  %v644 = vunpack.c.l.b16 %v39
  %v645 = vunpack.c.h.b16 %v39
  %v646 = vunpack.c.l.b16 %v40
  %v647 = vunpack.c.h.b16 %v40
  %v648 = vunpack.c.l.b16 %v41
  %v649 = vunpack.c.h.b16 %v41
  %v650 = vunpack.c.l.b16 %v42
  %v651 = vunpack.c.h.b16 %v42
  %v652 = vunpack.c.l.b16 %v43
  %v653 = vunpack.c.h.b16 %v43
  %v654 = vunpack.c.l.b16 %v44
  %v655 = vunpack.c.h.b16 %v44
  %v656 = vunpack.c.l.b16 %v45
  %v657 = vunpack.c.h.b16 %v45
  %v658 = vunpack.c.l.b16 %v46
  %v659 = vunpack.c.h.b16 %v46
  %v660 = vunpack.c.l.b16 %v47
  %v661 = vunpack.c.h.b16 %v47
  %v662 = vunpack.c.l.b16 %v48
  %v663 = vunpack.c.h.b16 %v48
  %v664 = vunpack.c.l.b16 %v49
  %v665 = vunpack.c.h.b16 %v49
  %v666 = vunpack.c.l.b16 %v50
  %v667 = vunpack.c.h.b16 %v50
  %v668 = vunpack.c.l.b16 %v51
  %v669 = vunpack.c.h.b16 %v51
  %v670 = vunpack.c.l.b16 %v52
  %v671 = vunpack.c.h.b16 %v52
  %v672 = vunpack.c.l.b16 %v53
  %v673 = vunpack.c.h.b16 %v53
  %v674 = vunpack.c.l.b16 %v54
  %v675 = vunpack.c.h.b16 %v54
  %v676 = vunpack.c.l.b16 %v55
  %v677 = vunpack.c.h.b16 %v55
  %v678 = vunpack.c.l.b16 %v56
  %v679 = vunpack.c.h.b16 %v56
  %v680 = vunpack.c.l.b16 %v57
  %v681 = vunpack.c.h.b16 %v57
  %v682 = vunpack.c.l.b16 %v58
  %v683 = vunpack.c.h.b16 %v58
  %v684 = vunpack.c.l.b16 %v59
  %v685 = vunpack.c.h.b16 %v59
  %v686 = vunpack.c.l.b16 %v60
  %v687 = vunpack.c.h.b16 %v60
  %v688 = vunpack.c.l.b16 %v61
  %v689 = vunpack.c.h.b16 %v61
  %v690 = vunpack.c.l.b16 %v62
  %v691 = vunpack.c.h.b16 %v62
  %v692 = vunpack.c.l.b16 %v63
  %v693 = vunpack.c.h.b16 %v63
  %v694 = vunpack.c.l.b16 %v64
  %v695 = vunpack.c.h.b16 %v64
  %v696 = vunpack.c.l.b16 %v65
  %v697 = vunpack.c.h.b16 %v65
  %v698 = vunpack.c.l.b16 %v66
  %v699 = vunpack.c.h.b16 %v66
  %v700 = vunpack.c.l.b16 %v67
  %v701 = vunpack.c.h.b16 %v67
  %v702 = vunpack.c.l.b16 %v68
  %v703 = vunpack.c.h.b16 %v68
  %v704 = vunpack.c.l.b16 %v69
  %v705 = vunpack.c.h.b16 %v69
  %v706 = vunpack.c.l.b16 %v70
  %v707 = vunpack.c.h.b16 %v70
  %v708 = vunpack.c.l.b16 %v71
  %v709 = vunpack.c.h.b16 %v71
  %v710 = vunpack.c.l.b16 %v72
  %v711 = vunpack.c.h.b16 %v72
  %v712 = vunpack.c.l.b16 %v73
  %v713 = vunpack.c.h.b16 %v73
  %v714 = vunpack.c.l.b16 %v74
  %v715 = vunpack.c.h.b16 %v74
  %v716 = vunpack.c.l.b16 %v75
  %v717 = vunpack.c.h.b16 %v75
  %v718 = vunpack.c.l.b16 %v76
  %v719 = vunpack.c.h.b16 %v76
  %v720 = vunpack.c.l.b16 %v77
  %v721 = vunpack.c.h.b16 %v77
  %v722 = vunpack.c.l.b16 %v78
  %v723 = vunpack.c.h.b16 %v78
  %v724 = vunpack.c.l.b16 %v79
  %v725 = vunpack.c.h.b16 %v79
  %v726 = vunpack.c.l.b16 %v80
  %v727 = vunpack.c.h.b16 %v80
  %v728 = vunpack.c.l.b16 %v81
  %v729 = vunpack.c.h.b16 %v81
  %v730 = vunpack.c.l.b16 %v82
  %v731 = vunpack.c.h.b16 %v82
  %v732 = vunpack.c.l.b16 %v83
  %v733 = vunpack.c.h.b16 %v83
  %v734 = vunpack.c.l.b16 %v84
  %v735 = vunpack.c.h.b16 %v84
  %v736 = vunpack.c.l.b16 %v85
  %v737 = vunpack.c.h.b16 %v85
  %v738 = vunpack.c.l.b16 %v86
  %v739 = vunpack.c.h.b16 %v86
  %v740 = vunpack.c.l.b16 %v87
  %v741 = vunpack.c.h.b16 %v87
  %v742 = vunpack.c.l.b16 %v88
  %v743 = vunpack.c.h.b16 %v88
  %v744 = vunpack.c.l.b16 %v89
  %v745 = vunpack.c.h.b16 %v89
  %v746 = vunpack.c.l.b16 %v90
  %v747 = vunpack.c.h.b16 %v90
  %v748 = vunpack.c.l.b16 %v91
  %v749 = vunpack.c.h.b16 %v91
  %v750 = vunpack.c.l.b16 %v92
  %v751 = vunpack.c.h.b16 %v92
  %v752 = vunpack.c.l.b16 %v93
  %v753 = vunpack.c.h.b16 %v93
  %v754 = vunpack.c.l.b16 %v94
  %v755 = vunpack.c.h.b16 %v94
  %v756 = vunpack.c.l.b16 %v95
  %v757 = vunpack.c.h.b16 %v95
  %v758 = vunpack.c.l.b16 %v96
  %v759 = vunpack.c.h.b16 %v96
  %v760 = vunpack.c.l.b16 %v97
  %v761 = vunpack.c.h.b16 %v97
  %v762 = vunpack.c.l.b16 %v98
  %v763 = vunpack.c.h.b16 %v98
  %v764 = vunpack.c.l.b16 %v99
  %v765 = vunpack.c.h.b16 %v99
  %v766 = vunpack.c.l.b16 %v100
  %v767 = vunpack.c.h.b16 %v100
  %v768 = vunpack.c.l.b16 %v101
  %v769 = vunpack.c.h.b16 %v101
  %v770 = vunpack.c.l.b16 %v102
  %v771 = vunpack.c.h.b16 %v102
  %v772 = vunpack.c.l.b16 %v103
  %v773 = vunpack.c.h.b16 %v103
  %v774 = vunpack.c.l.b16 %v104
  %v775 = vunpack.c.h.b16 %v104
  %v776 = vunpack.c.l.b16 %v105
  %v777 = vunpack.c.h.b16 %v105
  %v778 = vunpack.c.l.b16 %v106
  %v779 = vunpack.c.h.b16 %v106
  %v780 = vunpack.c.l.b16 %v107
  %v781 = vunpack.c.h.b16 %v107
  %v782 = vunpack.c.l.b16 %v108
  %v783 = vunpack.c.h.b16 %v108
  %v784 = vunpack.c.l.b16 %v109
  %v785 = vunpack.c.h.b16 %v109
  %v786 = vunpack.c.l.b16 %v110
  %v787 = vunpack.c.h.b16 %v110
  %v788 = vunpack.c.l.b16 %v111
  %v789 = vunpack.c.h.b16 %v111
  %v790 = vunpack.c.l.b16 %v112
  %v791 = vunpack.c.h.b16 %v112
  %v792 = vunpack.c.l.b16 %v113
  %v793 = vunpack.c.h.b16 %v113
  %v794 = vunpack.c.l.b16 %v114
  %v795 = vunpack.c.h.b16 %v114
  %v796 = vunpack.c.l.b16 %v115
  %v797 = vunpack.c.h.b16 %v115
  %v798 = vunpack.c.l.b16 %v116
  %v799 = vunpack.c.h.b16 %v116
  %v800 = vunpack.c.l.b16 %v117
  %v801 = vunpack.c.h.b16 %v117
  %v802 = vunpack.c.l.b16 %v118
  %v803 = vunpack.c.h.b16 %v118
  %v804 = vunpack.c.l.b16 %v119
  %v805 = vunpack.c.h.b16 %v119
  %v806 = vunpack.c.l.b16 %v120
  %v807 = vunpack.c.h.b16 %v120
  %v808 = vunpack.c.l.b16 %v121
  %v809 = vunpack.c.h.b16 %v121
  %v810 = vunpack.c.l.b16 %v122
  %v811 = vunpack.c.h.b16 %v122
  %v812 = vunpack.c.l.b16 %v123
  %v813 = vunpack.c.h.b16 %v123
  %v814 = vunpack.c.l.b16 %v124
  %v815 = vunpack.c.h.b16 %v124
  %v816 = vunpack.c.l.b16 %v125
  %v817 = vunpack.c.h.b16 %v125
  %v818 = vunpack.c.l.b16 %v126
  %v819 = vunpack.c.h.b16 %v126
  %v820 = vunpack.c.l.b16 %v127
  %v821 = vunpack.c.h.b16 %v127
  %v822 = vunpack.c.l.b16 %v128
  %v823 = vunpack.c.h.b16 %v128
  %v824 = vunpack.c.l.b16 %v129
  %v825 = vunpack.c.h.b16 %v129
  %v826 = vunpack.c.l.b16 %v130
  %v827 = vunpack.c.h.b16 %v130
  %v828 = vunpack.c.l.b16 %v131
  %v829 = vunpack.c.h.b16 %v131
  %v830 = vunpack.c.l.b16 %v132
  %v831 = vunpack.c.h.b16 %v132
  %v832 = vunpack.c.l.b16 %v133
  %v833 = vunpack.c.h.b16 %v133
  %v834 = vunpack.c.l.b16 %v134
  %v835 = vunpack.c.h.b16 %v134
  %v836 = vunpack.c.l.b16 %v135
  %v837 = vunpack.c.h.b16 %v135
  %v838 = vunpack.c.l.b16 %v136
  %v839 = vunpack.c.h.b16 %v136
  %v840 = vunpack.c.l.b16 %v137
  %v841 = vunpack.c.h.b16 %v137
  %v842 = vunpack.c.l.b16 %v138
  %v843 = vunpack.c.h.b16 %v138
  %v844 = vunpack.c.l.b16 %v139
  %v845 = vunpack.c.h.b16 %v139
  %v846 = vunpack.c.l.b16 %v140
  %v847 = vunpack.c.h.b16 %v140
  %v848 = vunpack.c.l.b16 %v141
  %v849 = vunpack.c.h.b16 %v141
  %v850 = vunpack.c.l.b16 %v142
  %v851 = vunpack.c.h.b16 %v142
  %v852 = vunpack.c.l.b16 %v143
  %v853 = vunpack.c.h.b16 %v143
  %v854 = vunpack.c.l.b16 %v144
  %v855 = vunpack.c.h.b16 %v144
  %v856 = vunpack.c.l.b16 %v145
  %v857 = vunpack.c.h.b16 %v145
  %v858 = vunpack.c.l.b16 %v146
  %v859 = vunpack.c.h.b16 %v146
  %v860 = vunpack.c.l.b16 %v147
  %v861 = vunpack.c.h.b16 %v147
  %v862 = vunpack.c.l.b16 %v148
  %v863 = vunpack.c.h.b16 %v148
  %v864 = vunpack.c.l.b16 %v149
  %v865 = vunpack.c.h.b16 %v149
  %v866 = vunpack.c.l.b16 %v150
  %v867 = vunpack.c.h.b16 %v150
  %v868 = vunpack.c.l.b16 %v151
  %v869 = vunpack.c.h.b16 %v151
  %v870 = vunpack.c.l.b16 %v152
  %v871 = vunpack.c.h.b16 %v152
  %v872 = vunpack.c.l.b16 %v153
  %v873 = vunpack.c.h.b16 %v153
  %v874 = vunpack.c.l.b16 %v154
  %v875 = vunpack.c.h.b16 %v154
  %v876 = vunpack.c.l.b16 %v155
  %v877 = vunpack.c.h.b16 %v155
  %v878 = vunpack.c.l.b16 %v156
  %v879 = vunpack.c.h.b16 %v156
  %v880 = vunpack.c.l.b16 %v157
  %v881 = vunpack.c.h.b16 %v157
  %v882 = vpack.c.b16 %v612, %v594
  %v883 = vpack.c.b16 %v613, %v595
  %v884 = vpack.c.b16 %v614, %v596
  %v885 = vpack.c.b16 %v615, %v597
  %v886 = vpack.c.b16 %v616, %v598
  %v887 = vpack.c.b16 %v617, %v599
  %v888 = vpack.c.b16 %v618, %v600
  %v889 = vpack.c.b16 %v619, %v601
  %v890 = vpack.c.b16 %v620, %v602
  %v891 = vpack.c.b16 %v621, %v603
  %v892 = vpack.c.b16 %v622, %v604
  %v893 = vpack.c.b16 %v623, %v605
  %v894 = vpack.c.b16 %v624, %v606
  %v895 = vpack.c.b16 %v625, %v607
  %v896 = vpack.c.b16 %v626, %v608
  %v897 = vpack.c.b16 %v627, %v609
  %v898 = vpack.c.b16 %v628, %v610
  %v899 = vpack.c.b16 %v629, %v611
  %v900 = vpack.c.b16 %v648, %v630
  %v901 = vpack.c.b16 %v649, %v631
  %v902 = vpack.c.b16 %v650, %v632
  %v903 = vpack.c.b16 %v651, %v633
  %v904 = vpack.c.b16 %v652, %v634
  %v905 = vpack.c.b16 %v653, %v635
  %v906 = vpack.c.b16 %v654, %v636
  %v907 = vpack.c.b16 %v655, %v637
  %v908 = vpack.c.b16 %v656, %v638
  %v909 = vpack.c.b16 %v657, %v639
  %v910 = vpack.c.b16 %v658, %v640
  %v911 = vpack.c.b16 %v659, %v641
  %v912 = vpack.c.b16 %v660, %v642
  %v913 = vpack.c.b16 %v661, %v643
  %v914 = vpack.c.b16 %v662, %v644
  %v915 = vpack.c.b16 %v663, %v645
  %v916 = vpack.c.b16 %v664, %v646
  %v917 = vpack.c.b16 %v665, %v647
  %v918 = vpack.c.b16 %v684, %v666
  %v919 = vpack.c.b16 %v685, %v667
  %v920 = vpack.c.b16 %v686, %v668
  %v921 = vpack.c.b16 %v687, %v669
  %v922 = vpack.c.b16 %v688, %v670
  %v923 = vpack.c.b16 %v689, %v671
  %v924 = vpack.c.b16 %v690, %v672
  %v925 = vpack.c.b16 %v691, %v673
  %v926 = vpack.c.b16 %v692, %v674
  %v927 = vpack.c.b16 %v693, %v675
  %v928 = vpack.c.b16 %v694, %v676
  %v929 = vpack.c.b16 %v695, %v677
  %v930 = vpack.c.b16 %v696, %v678
  %v931 = vpack.c.b16 %v697, %v679
  %v932 = vpack.c.b16 %v698, %v680
  %v933 = vpack.c.b16 %v699, %v681
  %v934 = vpack.c.b16 %v700, %v682
  %v935 = vpack.c.b16 %v701, %v683
  %v936 = vpack.c.b16 %v720, %v702
  %v937 = vpack.c.b16 %v721, %v703
  %v938 = vpack.c.b16 %v722, %v704
  %v939 = vpack.c.b16 %v723, %v705
  %v940 = vpack.c.b16 %v724, %v706
  %v941 = vpack.c.b16 %v725, %v707
  %v942 = vpack.c.b16 %v726, %v708
  %v943 = vpack.c.b16 %v727, %v709
  %v944 = vpack.c.b16 %v728, %v710
  %v945 = vpack.c.b16 %v729, %v711
  %v946 = vpack.c.b16 %v730, %v712
  %v947 = vpack.c.b16 %v731, %v713
  %v948 = vpack.c.b16 %v732, %v714
  %v949 = vpack.c.b16 %v733, %v715
  %v950 = vpack.c.b16 %v734, %v716
  %v951 = vpack.c.b16 %v735, %v717
  %v952 = vpack.c.b16 %v736, %v718
  %v953 = vpack.c.b16 %v737, %v719
  %v954 = vpack.c.b16 %v756, %v738
  %v955 = vpack.c.b16 %v757, %v739
  %v956 = vpack.c.b16 %v758, %v740
  %v957 = vpack.c.b16 %v759, %v741
  %v958 = vpack.c.b16 %v760, %v742
  %v959 = vpack.c.b16 %v761, %v743
  %v960 = vpack.c.b16 %v762, %v744
  %v961 = vpack.c.b16 %v763, %v745
  %v962 = vpack.c.b16 %v764, %v746
  %v963 = vpack.c.b16 %v765, %v747
  %v964 = vpack.c.b16 %v766, %v748
  %v965 = vpack.c.b16 %v767, %v749
  %v966 = vpack.c.b16 %v768, %v750
  %v967 = vpack.c.b16 %v769, %v751
  %v968 = vpack.c.b16 %v770, %v752
  %v969 = vpack.c.b16 %v771, %v753
  %v970 = vpack.c.b16 %v772, %v754
  %v971 = vpack.c.b16 %v773, %v755
  %v972 = vpack.c.b16 %v792, %v774
  %v973 = vpack.c.b16 %v793, %v775
  %v974 = vpack.c.b16 %v794, %v776
  %v975 = vpack.c.b16 %v795, %v777
  %v976 = vpack.c.b16 %v796, %v778
  %v977 = vpack.c.b16 %v797, %v779
  %v978 = vpack.c.b16 %v798, %v780
  %v979 = vpack.c.b16 %v799, %v781
  %v980 = vpack.c.b16 %v800, %v782
  %v981 = vpack.c.b16 %v801, %v783
  %v982 = vpack.c.b16 %v802, %v784
  %v983 = vpack.c.b16 %v803, %v785
  %v984 = vpack.c.b16 %v804, %v786
  %v985 = vpack.c.b16 %v805, %v787
  %v986 = vpack.c.b16 %v806, %v788
  %v987 = vpack.c.b16 %v807, %v789
  %v988 = vpack.c.b16 %v808, %v790
  %v989 = vpack.c.b16 %v809, %v791
  %v990 = vpack.c.b16 %v828, %v810
  %v991 = vpack.c.b16 %v829, %v811
  %v992 = vpack.c.b16 %v830, %v812
  %v993 = vpack.c.b16 %v831, %v813
  %v994 = vpack.c.b16 %v832, %v814
  %v995 = vpack.c.b16 %v833, %v815
  %v996 = vpack.c.b16 %v834, %v816
  %v997 = vpack.c.b16 %v835, %v817
  %v998 = vpack.c.b16 %v836, %v818
  %v999 = vpack.c.b16 %v837, %v819
  %v1000 = vpack.c.b16 %v838, %v820
  %v1001 = vpack.c.b16 %v839, %v821
  %v1002 = vpack.c.b16 %v840, %v822
  %v1003 = vpack.c.b16 %v841, %v823
  %v1004 = vpack.c.b16 %v842, %v824
  %v1005 = vpack.c.b16 %v843, %v825
  %v1006 = vpack.c.b16 %v844, %v826
  %v1007 = vpack.c.b16 %v845, %v827
  %v1008 = vpack.c.b16 %v864, %v846
  %v1009 = vpack.c.b16 %v865, %v847
  %v1010 = vpack.c.b16 %v866, %v848
  %v1011 = vpack.c.b16 %v867, %v849
  %v1012 = vpack.c.b16 %v868, %v850
  %v1013 = vpack.c.b16 %v869, %v851
  %v1014 = vpack.c.b16 %v870, %v852
  %v1015 = vpack.c.b16 %v871, %v853
  %v1016 = vpack.c.b16 %v872, %v854
  %v1017 = vpack.c.b16 %v873, %v855
  %v1018 = vpack.c.b16 %v874, %v856
  %v1019 = vpack.c.b16 %v875, %v857
  %v1020 = vpack.c.b16 %v876, %v858
  %v1021 = vpack.c.b16 %v877, %v859
  %v1022 = vpack.c.b16 %v878, %v860
  %v1023 = vpack.c.b16 %v879, %v861
  %v1024 = vpack.c.b16 %v880, %v862
  %v1025 = vpack.c.b16 %v881, %v863
  %v1458 = vunpack.c.l.b16 %v158
  %v1459 = vunpack.c.l.b16 %v159
  %v1460 = vunpack.c.l.b16 %v160
  %v1461 = vunpack.c.l.b16 %v161
  %v1462 = vunpack.c.l.b16 %v162
  %v1463 = vunpack.c.l.b16 %v163
  %v1464 = vunpack.c.l.b16 %v164
  %v1465 = vunpack.c.l.b16 %v165
  %v1466 = vunpack.c.l.b16 %v166
  %v1467 = vunpack.c.l.b16 %v167
  %v1468 = vunpack.c.l.b16 %v168
  %v1469 = vunpack.c.l.b16 %v169
  %v1470 = vunpack.c.l.b16 %v170
  %v1471 = vunpack.c.l.b16 %v171
  %v1472 = vunpack.c.l.b16 %v172
  %v1473 = vunpack.c.l.b16 %v173
  %v1474 = vunpack.c.l.b16 %v174
  %v1475 = vunpack.c.l.b16 %v175
  %v1476 = vunpack.c.l.b16 %v176
  %v1477 = vunpack.c.l.b16 %v177
  %v1478 = vunpack.c.l.b16 %v178
  %v1479 = vunpack.c.l.b16 %v179
  %v1480 = vunpack.c.l.b16 %v180
  %v1481 = vunpack.c.l.b16 %v181
  %v1482 = vunpack.c.l.b16 %v182
  %v1483 = vunpack.c.l.b16 %v183
  %v1484 = vunpack.c.l.b16 %v184
  %v1485 = vunpack.c.l.b16 %v185
  %v1486 = vunpack.c.l.b16 %v186
  %v1487 = vunpack.c.l.b16 %v187
  %v1488 = vunpack.c.l.b16 %v188
  %v1489 = vunpack.c.l.b16 %v189
  %v1490 = vunpack.c.l.b16 %v190
  %v1491 = vunpack.c.l.b16 %v191
  %v1492 = vunpack.c.l.b16 %v192
  %v1493 = vunpack.c.l.b16 %v193
  %v1494 = vunpack.c.l.b16 %v194
  %v1495 = vunpack.c.l.b16 %v195
  %v1496 = vunpack.c.l.b16 %v196
  %v1497 = vunpack.c.l.b16 %v197
  %v1498 = vunpack.c.l.b16 %v198
  %v1499 = vunpack.c.l.b16 %v199
  %v1500 = vunpack.c.l.b16 %v200
  %v1501 = vunpack.c.l.b16 %v201
  %v1502 = vunpack.c.l.b16 %v202
  %v1503 = vunpack.c.l.b16 %v203
  %v1504 = vunpack.c.l.b16 %v204
  %v1505 = vunpack.c.l.b16 %v205
  %v1506 = vunpack.c.l.b16 %v206
  %v1507 = vunpack.c.l.b16 %v207
  %v1508 = vunpack.c.l.b16 %v208
  %v1509 = vunpack.c.l.b16 %v209
  %v1510 = vunpack.c.l.b16 %v210
  %v1511 = vunpack.c.l.b16 %v211
  %v1512 = vunpack.c.l.b16 %v212
  %v1513 = vunpack.c.l.b16 %v213
  %v1514 = vunpack.c.l.b16 %v214
  %v1515 = vunpack.c.l.b16 %v215
  %v1516 = vunpack.c.l.b16 %v216
  %v1517 = vunpack.c.l.b16 %v217
  %v1518 = vunpack.c.l.b16 %v218
  %v1519 = vunpack.c.l.b16 %v219
  %v1520 = vunpack.c.l.b16 %v220
  %v1521 = vunpack.c.l.b16 %v221
  %v1522 = vunpack.c.l.b16 %v222
  %v1523 = vunpack.c.l.b16 %v223
  %v1524 = vunpack.c.l.b16 %v224
  %v1525 = vunpack.c.l.b16 %v225
  %v1526 = vunpack.c.l.b16 %v226
  %v1527 = vunpack.c.l.b16 %v227
  %v1528 = vunpack.c.l.b16 %v228
  %v1529 = vunpack.c.l.b16 %v229
  %v1530 = vunpack.c.l.b16 %v230
  %v1531 = vunpack.c.l.b16 %v231
  %v1532 = vunpack.c.l.b16 %v232
  %v1533 = vunpack.c.l.b16 %v233
  %v1534 = vunpack.c.l.b16 %v234
  %v1535 = vunpack.c.l.b16 %v235
  %v1536 = vunpack.c.l.b16 %v236
  %v1537 = vunpack.c.l.b16 %v237
  %v1538 = vunpack.c.l.b16 %v238
  %v1539 = vunpack.c.l.b16 %v239
  %v1540 = vunpack.c.l.b16 %v240
  %v1541 = vunpack.c.l.b16 %v241
  %v1542 = vunpack.c.l.b16 %v242
  %v1543 = vunpack.c.l.b16 %v243
  %v1544 = vunpack.c.l.b16 %v244
  %v1545 = vunpack.c.l.b16 %v245
  %v1546 = vunpack.c.l.b16 %v246
  %v1547 = vunpack.c.l.b16 %v247
  %v1548 = vunpack.c.l.b16 %v248
  %v1549 = vunpack.c.l.b16 %v249
  %v1550 = vunpack.c.l.b16 %v250
  %v1551 = vunpack.c.l.b16 %v251
  %v1552 = vunpack.c.l.b16 %v252
  %v1553 = vunpack.c.l.b16 %v253
  %v1554 = vunpack.c.l.b16 %v254
  %v1555 = vunpack.c.l.b16 %v255
  %v1556 = vunpack.c.l.b16 %v256
  %v1557 = vunpack.c.l.b16 %v257
  %v1558 = vunpack.c.l.b16 %v258
  %v1559 = vunpack.c.l.b16 %v259
  %v1560 = vunpack.c.l.b16 %v260
  %v1561 = vunpack.c.l.b16 %v261
  %v1562 = vunpack.c.l.b16 %v262
  %v1563 = vunpack.c.l.b16 %v263
  %v1564 = vunpack.c.l.b16 %v264
  %v1565 = vunpack.c.l.b16 %v265
  %v1566 = vunpack.c.l.b16 %v266
  %v1567 = vunpack.c.l.b16 %v267
  %v1568 = vunpack.c.l.b16 %v268
  %v1569 = vunpack.c.l.b16 %v269
  %v1570 = vunpack.c.l.b16 %v270
  %v1571 = vunpack.c.l.b16 %v271
  %v1572 = vunpack.c.l.b16 %v272
  %v1573 = vunpack.c.l.b16 %v273
  %v1574 = vunpack.c.l.b16 %v274
  %v1575 = vunpack.c.l.b16 %v275
  %v1576 = vunpack.c.l.b16 %v276
  %v1577 = vunpack.c.l.b16 %v277
  %v1578 = vunpack.c.l.b16 %v278
  %v1579 = vunpack.c.l.b16 %v279
  %v1580 = vunpack.c.l.b16 %v280
  %v1581 = vunpack.c.l.b16 %v281
  %v1582 = vunpack.c.l.b16 %v282
  %v1583 = vunpack.c.l.b16 %v283
  %v1584 = vunpack.c.l.b16 %v284
  %v1585 = vunpack.c.l.b16 %v285
  %v1586 = vunpack.c.l.b16 %v286
  %v1587 = vunpack.c.l.b16 %v287
  %v1588 = vunpack.c.l.b16 %v288
  %v1589 = vunpack.c.l.b16 %v289
  %v1590 = vunpack.c.l.b16 %v290
  %v1591 = vunpack.c.l.b16 %v291
  %v1592 = vunpack.c.l.b16 %v292
  %v1593 = vunpack.c.l.b16 %v293
  %v1594 = vunpack.c.l.b16 %v294
  %v1595 = vunpack.c.l.b16 %v295
  %v1596 = vunpack.c.l.b16 %v296
  %v1597 = vunpack.c.l.b16 %v297
  %v1598 = vunpack.c.l.b16 %v298
  %v1599 = vunpack.c.l.b16 %v299
  %v1600 = vunpack.c.l.b16 %v300
  %v1601 = vunpack.c.l.b16 %v301
  %v1602 = vunpack.c.l.b16 %v302
  %v1603 = vunpack.c.l.b16 %v303
  %v1604 = vunpack.c.l.b16 %v304
  %v1605 = vunpack.c.l.b16 %v305
  %v1606 = vunpack.c.l.b16 %v306
  %v1607 = vunpack.c.l.b16 %v307
  %v1608 = vunpack.c.l.b16 %v308
  %v1609 = vunpack.c.l.b16 %v309
  %v1610 = vunpack.c.l.b16 %v310
  %v1611 = vunpack.c.l.b16 %v311
  %v1612 = vunpack.c.l.b16 %v312
  %v1613 = vunpack.c.l.b16 %v313
  %v1614 = vunpack.c.l.b16 %v314
  %v1615 = vunpack.c.l.b16 %v315
  %v1616 = vunpack.c.l.b16 %v316
  %v1617 = vunpack.c.l.b16 %v317
  %v1618 = vunpack.c.l.b16 %v318
  %v1619 = vunpack.c.l.b16 %v319
  %v1620 = vunpack.c.l.b16 %v320
  %v1621 = vunpack.c.l.b16 %v321
  %v1622 = vunpack.c.l.b16 %v322
  %v1623 = vunpack.c.l.b16 %v323
  %v1624 = vunpack.c.l.b16 %v324
  %v1625 = vunpack.c.l.b16 %v325
  %v1626 = vunpack.c.l.b16 %v326
  %v1627 = vunpack.c.l.b16 %v327
  %v1628 = vunpack.c.l.b16 %v328
  %v1629 = vunpack.c.l.b16 %v329
  %v1630 = vunpack.c.l.b16 %v330
  %v1631 = vunpack.c.l.b16 %v331
  %v1632 = vunpack.c.l.b16 %v332
  %v1633 = vunpack.c.l.b16 %v333
  %v1634 = vunpack.c.l.b16 %v334
  %v1635 = vunpack.c.l.b16 %v335
  %v1636 = vunpack.c.l.b16 %v336
  %v1637 = vunpack.c.l.b16 %v337
  %v1638 = vunpack.c.l.b16 %v338
  %v1639 = vunpack.c.l.b16 %v339
  %v1640 = vunpack.c.l.b16 %v340
  %v1641 = vunpack.c.l.b16 %v341
  %v1642 = vunpack.c.l.b16 %v342
  %v1643 = vunpack.c.l.b16 %v343
  %v1644 = vunpack.c.l.b16 %v344
  %v1645 = vunpack.c.l.b16 %v345
  %v1646 = vunpack.c.l.b16 %v346
  %v1647 = vunpack.c.l.b16 %v347
  %v1648 = vunpack.c.l.b16 %v348
  %v1649 = vunpack.c.l.b16 %v349
  %v1650 = vunpack.c.l.b16 %v350
  %v1651 = vunpack.c.l.b16 %v351
  %v1652 = vunpack.c.l.b16 %v352
  %v1653 = vunpack.c.l.b16 %v353
  %v1654 = vunpack.c.l.b16 %v354
  %v1655 = vunpack.c.l.b16 %v355
  %v1656 = vunpack.c.l.b16 %v356
  %v1657 = vunpack.c.l.b16 %v357
  %v1658 = vunpack.c.l.b16 %v358
  %v1659 = vunpack.c.l.b16 %v359
  %v1660 = vunpack.c.l.b16 %v360
  %v1661 = vunpack.c.l.b16 %v361
  %v1662 = vunpack.c.l.b16 %v362
  %v1663 = vunpack.c.l.b16 %v363
  %v1664 = vunpack.c.l.b16 %v364
  %v1665 = vunpack.c.l.b16 %v365
  %v1666 = vunpack.c.l.b16 %v366
  %v1667 = vunpack.c.l.b16 %v367
  %v1668 = vunpack.c.l.b16 %v368
  %v1669 = vunpack.c.l.b16 %v369
  %v1670 = vunpack.c.l.b16 %v370
  %v1671 = vunpack.c.l.b16 %v371
  %v1672 = vunpack.c.l.b16 %v372
  %v1673 = vunpack.c.l.b16 %v373
  %v1674 = vunpack.c.l.b16 %v374
  %v1675 = vunpack.c.l.b16 %v375
  %v1676 = vunpack.c.l.b16 %v376
  %v1677 = vunpack.c.l.b16 %v377
  %v1678 = vunpack.c.l.b16 %v378
  %v1679 = vunpack.c.l.b16 %v379
  %v1680 = vunpack.c.l.b16 %v380
  %v1681 = vunpack.c.l.b16 %v381
  %v1682 = vunpack.c.l.b16 %v382
  %v1683 = vunpack.c.l.b16 %v383
  %v1684 = vunpack.c.l.b16 %v384
  %v1685 = vunpack.c.l.b16 %v385
  %v1686 = vunpack.c.l.b16 %v386
  %v1687 = vunpack.c.l.b16 %v387
  %v1688 = vunpack.c.l.b16 %v388
  %v1689 = vunpack.c.l.b16 %v389
  %v1690 = vunpack.c.l.b16 %v390
  %v1691 = vunpack.c.l.b16 %v391
  %v1692 = vunpack.c.l.b16 %v392
  %v1693 = vunpack.c.l.b16 %v393
  %v1694 = vunpack.c.l.b16 %v394
  %v1695 = vunpack.c.l.b16 %v395
  %v1696 = vunpack.c.l.b16 %v396
  %v1697 = vunpack.c.l.b16 %v397
  %v1698 = vunpack.c.l.b16 %v398
  %v1699 = vunpack.c.l.b16 %v399
  %v1700 = vunpack.c.l.b16 %v400
  %v1701 = vunpack.c.l.b16 %v401
  %v1702 = vunpack.c.l.b16 %v402
  %v1703 = vunpack.c.l.b16 %v403
  %v1704 = vunpack.c.l.b16 %v404
  %v1705 = vunpack.c.l.b16 %v405
  %v1706 = vunpack.c.l.b16 %v406
  %v1707 = vunpack.c.l.b16 %v407
  %v1708 = vunpack.c.l.b16 %v408
  %v1709 = vunpack.c.l.b16 %v409
  %v1710 = vunpack.c.l.b16 %v410
  %v1711 = vunpack.c.l.b16 %v411
  %v1712 = vunpack.c.l.b16 %v412
  %v1713 = vunpack.c.l.b16 %v413
  %v1714 = vunpack.c.l.b16 %v414
  %v1715 = vunpack.c.l.b16 %v415
  %v1716 = vunpack.c.l.b16 %v416
  %v1717 = vunpack.c.l.b16 %v417
  %v1718 = vunpack.c.l.b16 %v418
  %v1719 = vunpack.c.l.b16 %v419
  %v1720 = vunpack.c.l.b16 %v420
  %v1721 = vunpack.c.l.b16 %v421
  %v1722 = vunpack.c.l.b16 %v422
  %v1723 = vunpack.c.l.b16 %v423
  %v1724 = vunpack.c.l.b16 %v424
  %v1725 = vunpack.c.l.b16 %v425
  %v1726 = vunpack.c.l.b16 %v426
  %v1727 = vunpack.c.l.b16 %v427
  %v1728 = vunpack.c.l.b16 %v428
  %v1729 = vunpack.c.l.b16 %v429
  %v1730 = vunpack.c.l.b16 %v430
  %v1731 = vunpack.c.l.b16 %v431
  %v1732 = vunpack.c.l.b16 %v432
  %v1733 = vunpack.c.l.b16 %v433
  %v1734 = vunpack.c.l.b16 %v434
  %v1735 = vunpack.c.l.b16 %v435
  %v1736 = vunpack.c.l.b16 %v436
  %v1737 = vunpack.c.l.b16 %v437
  %v1738 = vunpack.c.l.b16 %v438
  %v1739 = vunpack.c.l.b16 %v439
  %v1740 = vunpack.c.l.b16 %v440
  %v1741 = vunpack.c.l.b16 %v441
  %v1742 = vunpack.c.l.b16 %v442
  %v1743 = vunpack.c.l.b16 %v443
  %v1744 = vunpack.c.l.b16 %v444
  %v1745 = vunpack.c.l.b16 %v445
  %v1746 = vpack.c.b16 %v1459, %v1458
  %v1747 = vpack.c.b16 %v1461, %v1460
  %v1748 = vpack.c.b16 %v1463, %v1462
  %v1749 = vpack.c.b16 %v1465, %v1464
  %v1750 = vpack.c.b16 %v1467, %v1466
  %v1751 = vpack.c.b16 %v1469, %v1468
  %v1752 = vpack.c.b16 %v1471, %v1470
  %v1753 = vpack.c.b16 %v1473, %v1472
  %v1754 = vpack.c.b16 %v1475, %v1474
  %v1755 = vpack.c.b16 %v1477, %v1476
  %v1756 = vpack.c.b16 %v1479, %v1478
  %v1757 = vpack.c.b16 %v1481, %v1480
  %v1758 = vpack.c.b16 %v1483, %v1482
  %v1759 = vpack.c.b16 %v1485, %v1484
  %v1760 = vpack.c.b16 %v1487, %v1486
  %v1761 = vpack.c.b16 %v1489, %v1488
  %v1762 = vpack.c.b16 %v1491, %v1490
  %v1763 = vpack.c.b16 %v1493, %v1492
  %v1764 = vpack.c.b16 %v1495, %v1494
  %v1765 = vpack.c.b16 %v1497, %v1496
  %v1766 = vpack.c.b16 %v1499, %v1498
  %v1767 = vpack.c.b16 %v1501, %v1500
  %v1768 = vpack.c.b16 %v1503, %v1502
  %v1769 = vpack.c.b16 %v1505, %v1504
  %v1770 = vpack.c.b16 %v1507, %v1506
  %v1771 = vpack.c.b16 %v1509, %v1508
  %v1772 = vpack.c.b16 %v1511, %v1510
  %v1773 = vpack.c.b16 %v1513, %v1512
  %v1774 = vpack.c.b16 %v1515, %v1514
  %v1775 = vpack.c.b16 %v1517, %v1516
  %v1776 = vpack.c.b16 %v1519, %v1518
  %v1777 = vpack.c.b16 %v1521, %v1520
  %v1778 = vpack.c.b16 %v1523, %v1522
  %v1779 = vpack.c.b16 %v1525, %v1524
  %v1780 = vpack.c.b16 %v1527, %v1526
  %v1781 = vpack.c.b16 %v1529, %v1528
  %v1782 = vpack.c.b16 %v1531, %v1530
  %v1783 = vpack.c.b16 %v1533, %v1532
  %v1784 = vpack.c.b16 %v1535, %v1534
  %v1785 = vpack.c.b16 %v1537, %v1536
  %v1786 = vpack.c.b16 %v1539, %v1538
  %v1787 = vpack.c.b16 %v1541, %v1540
  %v1788 = vpack.c.b16 %v1543, %v1542
  %v1789 = vpack.c.b16 %v1545, %v1544
  %v1790 = vpack.c.b16 %v1547, %v1546
  %v1791 = vpack.c.b16 %v1549, %v1548
  %v1792 = vpack.c.b16 %v1551, %v1550
  %v1793 = vpack.c.b16 %v1553, %v1552
  %v1794 = vpack.c.b16 %v1555, %v1554
  %v1795 = vpack.c.b16 %v1557, %v1556
  %v1796 = vpack.c.b16 %v1559, %v1558
  %v1797 = vpack.c.b16 %v1561, %v1560
  %v1798 = vpack.c.b16 %v1563, %v1562
  %v1799 = vpack.c.b16 %v1565, %v1564
  %v1800 = vpack.c.b16 %v1567, %v1566
  %v1801 = vpack.c.b16 %v1569, %v1568
  %v1802 = vpack.c.b16 %v1571, %v1570
  %v1803 = vpack.c.b16 %v1573, %v1572
  %v1804 = vpack.c.b16 %v1575, %v1574
  %v1805 = vpack.c.b16 %v1577, %v1576
  %v1806 = vpack.c.b16 %v1579, %v1578
  %v1807 = vpack.c.b16 %v1581, %v1580
  %v1808 = vpack.c.b16 %v1583, %v1582
  %v1809 = vpack.c.b16 %v1585, %v1584
  %v1810 = vpack.c.b16 %v1587, %v1586
  %v1811 = vpack.c.b16 %v1589, %v1588
  %v1812 = vpack.c.b16 %v1591, %v1590
  %v1813 = vpack.c.b16 %v1593, %v1592
  %v1814 = vpack.c.b16 %v1595, %v1594
  %v1815 = vpack.c.b16 %v1597, %v1596
  %v1816 = vpack.c.b16 %v1599, %v1598
  %v1817 = vpack.c.b16 %v1601, %v1600
  %v1818 = vpack.c.b16 %v1603, %v1602
  %v1819 = vpack.c.b16 %v1605, %v1604
  %v1820 = vpack.c.b16 %v1607, %v1606
  %v1821 = vpack.c.b16 %v1609, %v1608
  %v1822 = vpack.c.b16 %v1611, %v1610
  %v1823 = vpack.c.b16 %v1613, %v1612
  %v1824 = vpack.c.b16 %v1615, %v1614
  %v1825 = vpack.c.b16 %v1617, %v1616
  %v1826 = vpack.c.b16 %v1619, %v1618
  %v1827 = vpack.c.b16 %v1621, %v1620
  %v1828 = vpack.c.b16 %v1623, %v1622
  %v1829 = vpack.c.b16 %v1625, %v1624
  %v1830 = vpack.c.b16 %v1627, %v1626
  %v1831 = vpack.c.b16 %v1629, %v1628
  %v1832 = vpack.c.b16 %v1631, %v1630
  %v1833 = vpack.c.b16 %v1633, %v1632
  %v1834 = vpack.c.b16 %v1635, %v1634
  %v1835 = vpack.c.b16 %v1637, %v1636
  %v1836 = vpack.c.b16 %v1639, %v1638
  %v1837 = vpack.c.b16 %v1641, %v1640
  %v1838 = vpack.c.b16 %v1643, %v1642
  %v1839 = vpack.c.b16 %v1645, %v1644
  %v1840 = vpack.c.b16 %v1647, %v1646
  %v1841 = vpack.c.b16 %v1649, %v1648
  %v1842 = vpack.c.b16 %v1651, %v1650
  %v1843 = vpack.c.b16 %v1653, %v1652
  %v1844 = vpack.c.b16 %v1655, %v1654
  %v1845 = vpack.c.b16 %v1657, %v1656
  %v1846 = vpack.c.b16 %v1659, %v1658
  %v1847 = vpack.c.b16 %v1661, %v1660
  %v1848 = vpack.c.b16 %v1663, %v1662
  %v1849 = vpack.c.b16 %v1665, %v1664
  %v1850 = vpack.c.b16 %v1667, %v1666
  %v1851 = vpack.c.b16 %v1669, %v1668
  %v1852 = vpack.c.b16 %v1671, %v1670
  %v1853 = vpack.c.b16 %v1673, %v1672
  %v1854 = vpack.c.b16 %v1675, %v1674
  %v1855 = vpack.c.b16 %v1677, %v1676
  %v1856 = vpack.c.b16 %v1679, %v1678
  %v1857 = vpack.c.b16 %v1681, %v1680
  %v1858 = vpack.c.b16 %v1683, %v1682
  %v1859 = vpack.c.b16 %v1685, %v1684
  %v1860 = vpack.c.b16 %v1687, %v1686
  %v1861 = vpack.c.b16 %v1689, %v1688
  %v1862 = vpack.c.b16 %v1691, %v1690
  %v1863 = vpack.c.b16 %v1693, %v1692
  %v1864 = vpack.c.b16 %v1695, %v1694
  %v1865 = vpack.c.b16 %v1697, %v1696
  %v1866 = vpack.c.b16 %v1699, %v1698
  %v1867 = vpack.c.b16 %v1701, %v1700
  %v1868 = vpack.c.b16 %v1703, %v1702
  %v1869 = vpack.c.b16 %v1705, %v1704
  %v1870 = vpack.c.b16 %v1707, %v1706
  %v1871 = vpack.c.b16 %v1709, %v1708
  %v1872 = vpack.c.b16 %v1711, %v1710
  %v1873 = vpack.c.b16 %v1713, %v1712
  %v1874 = vpack.c.b16 %v1715, %v1714
  %v1875 = vpack.c.b16 %v1717, %v1716
  %v1876 = vpack.c.b16 %v1719, %v1718
  %v1877 = vpack.c.b16 %v1721, %v1720
  %v1878 = vpack.c.b16 %v1723, %v1722
  %v1879 = vpack.c.b16 %v1725, %v1724
  %v1880 = vpack.c.b16 %v1727, %v1726
  %v1881 = vpack.c.b16 %v1729, %v1728
  %v1882 = vpack.c.b16 %v1731, %v1730
  %v1883 = vpack.c.b16 %v1733, %v1732
  %v1884 = vpack.c.b16 %v1735, %v1734
  %v1885 = vpack.c.b16 %v1737, %v1736
  %v1886 = vpack.c.b16 %v1739, %v1738
  %v1887 = vpack.c.b16 %v1741, %v1740
  %v1888 = vpack.c.b16 %v1743, %v1742
  %v1889 = vpack.c.b16 %v1745, %v1744
  %2034 = vmatpush.bf16.msra.mxu0 %v1753
  %2035 = vmatpush.bf16.msra.mxu0 %v1752
  %2036 = vmatpush.bf16.msra.mxu0 %v1751
  %2037 = vmatpush.bf16.msra.mxu0 %v1750
  %2038 = vmatpush.bf16.msra.mxu0 %v1749
  %2039 = vmatpush.bf16.msra.mxu0 %v1748
  %2040 = vmatpush.bf16.msra.mxu0 %v1747
  %2041 = vmatpush.bf16.msra.mxu0 %v1746
  %2042 = vmatmul.bf16.gmra.mxu0 %v882
  %v2043 = vpop.f32.mrf.mxu0
  %v2044 = vadd.f32 %v448, %v2043
  %v2045 = vpop.f32.mrf.mxu0
  %v2046 = vadd.f32 %v448, %v2045
  %2047 = vmatmul.bf16.gmra.mxu0 %v900
  %v2048 = vpop.f32.mrf.mxu0
  %v2049 = vadd.f32 %v448, %v2048
  %v2050 = vpop.f32.mrf.mxu0
  %v2051 = vadd.f32 %v448, %v2050
  %2052 = vmatmul.bf16.gmra.mxu0 %v918
  %v2053 = vpop.f32.mrf.mxu0
  %v2054 = vadd.f32 %v448, %v2053
  %v2055 = vpop.f32.mrf.mxu0
  %v2056 = vadd.f32 %v448, %v2055
  %2057 = vmatmul.bf16.gmra.mxu0 %v936
  %v2058 = vpop.f32.mrf.mxu0
  %v2059 = vadd.f32 %v448, %v2058
  %v2060 = vpop.f32.mrf.mxu0
  %v2061 = vadd.f32 %v448, %v2060
  %2062 = vmatmul.bf16.gmra.mxu0 %v954
  %v2063 = vpop.f32.mrf.mxu0
  %v2064 = vadd.f32 %v448, %v2063
  %v2065 = vpop.f32.mrf.mxu0
  %v2066 = vadd.f32 %v448, %v2065
  %2067 = vmatmul.bf16.gmra.mxu0 %v972
  %v2068 = vpop.f32.mrf.mxu0
  %v2069 = vadd.f32 %v448, %v2068
  %v2070 = vpop.f32.mrf.mxu0
  %v2071 = vadd.f32 %v448, %v2070
  %2072 = vmatmul.bf16.gmra.mxu0 %v990
  %v2073 = vpop.f32.mrf.mxu0
  %v2074 = vadd.f32 %v448, %v2073
  %v2075 = vpop.f32.mrf.mxu0
  %v2076 = vadd.f32 %v448, %v2075
  %2077 = vmatmul.bf16.gmra.mxu0 %v1008
  %v2078 = vpop.f32.mrf.mxu0
  %v2079 = vadd.f32 %v448, %v2078
  %v2080 = vpop.f32.mrf.mxu0
  %v2081 = vadd.f32 %v448, %v2080
  %2082 = vdwg.mxu0
  %2083 = vmatpush.bf16.msra.mxu0 %v1761
  %2084 = vmatpush.bf16.msra.mxu0 %v1760
  %2085 = vmatpush.bf16.msra.mxu0 %v1759
  %2086 = vmatpush.bf16.msra.mxu0 %v1758
  %2087 = vmatpush.bf16.msra.mxu0 %v1757
  %2088 = vmatpush.bf16.msra.mxu0 %v1756
  %2089 = vmatpush.bf16.msra.mxu0 %v1755
  %2090 = vmatpush.bf16.msra.mxu0 %v1754
  %2091 = vmatmul.bf16.gmra.mxu0 %v883
  %v2092 = vpop.f32.mrf.mxu0
  %v2093 = vadd.f32 %v2044, %v2092
  %v2094 = vpop.f32.mrf.mxu0
  %v2095 = vadd.f32 %v2046, %v2094
  %2096 = vmatmul.bf16.gmra.mxu0 %v901
  %v2097 = vpop.f32.mrf.mxu0
  %v2098 = vadd.f32 %v2049, %v2097
  %v2099 = vpop.f32.mrf.mxu0
  %v2100 = vadd.f32 %v2051, %v2099
  %2101 = vmatmul.bf16.gmra.mxu0 %v919
  %v2102 = vpop.f32.mrf.mxu0
  %v2103 = vadd.f32 %v2054, %v2102
  %v2104 = vpop.f32.mrf.mxu0
  %v2105 = vadd.f32 %v2056, %v2104
  %2106 = vmatmul.bf16.gmra.mxu0 %v937
  %v2107 = vpop.f32.mrf.mxu0
  %v2108 = vadd.f32 %v2059, %v2107
  %v2109 = vpop.f32.mrf.mxu0
  %v2110 = vadd.f32 %v2061, %v2109
  %2111 = vmatmul.bf16.gmra.mxu0 %v955
  %v2112 = vpop.f32.mrf.mxu0
  %v2113 = vadd.f32 %v2064, %v2112
  %v2114 = vpop.f32.mrf.mxu0
  %v2115 = vadd.f32 %v2066, %v2114
  %2116 = vmatmul.bf16.gmra.mxu0 %v973
  %v2117 = vpop.f32.mrf.mxu0
  %v2118 = vadd.f32 %v2069, %v2117
  %v2119 = vpop.f32.mrf.mxu0
  %v2120 = vadd.f32 %v2071, %v2119
  %2121 = vmatmul.bf16.gmra.mxu0 %v991
  %v2122 = vpop.f32.mrf.mxu0
  %v2123 = vadd.f32 %v2074, %v2122
  %v2124 = vpop.f32.mrf.mxu0
  %v2125 = vadd.f32 %v2076, %v2124
  %2126 = vmatmul.bf16.gmra.mxu0 %v1009
  %v2127 = vpop.f32.mrf.mxu0
  %v2128 = vadd.f32 %v2079, %v2127
  %v2129 = vpop.f32.mrf.mxu0
  %v2130 = vadd.f32 %v2081, %v2129
  %2131 = vdwg.mxu0
  %2132 = vmatpush.bf16.msra.mxu0 %v1769
  %2133 = vmatpush.bf16.msra.mxu0 %v1768
  %2134 = vmatpush.bf16.msra.mxu0 %v1767
  %2135 = vmatpush.bf16.msra.mxu0 %v1766
  %2136 = vmatpush.bf16.msra.mxu0 %v1765
  %2137 = vmatpush.bf16.msra.mxu0 %v1764
  %2138 = vmatpush.bf16.msra.mxu0 %v1763
  %2139 = vmatpush.bf16.msra.mxu0 %v1762
  %2140 = vmatmul.bf16.gmra.mxu0 %v884
  %v2141 = vpop.f32.mrf.mxu0
  %v2142 = vadd.f32 %v2093, %v2141
  %v2143 = vpop.f32.mrf.mxu0
  %v2144 = vadd.f32 %v2095, %v2143
  %2145 = vmatmul.bf16.gmra.mxu0 %v902
  %v2146 = vpop.f32.mrf.mxu0
  %v2147 = vadd.f32 %v2098, %v2146
  %v2148 = vpop.f32.mrf.mxu0
  %v2149 = vadd.f32 %v2100, %v2148
  %2150 = vmatmul.bf16.gmra.mxu0 %v920
  %v2151 = vpop.f32.mrf.mxu0
  %v2152 = vadd.f32 %v2103, %v2151
  %v2153 = vpop.f32.mrf.mxu0
  %v2154 = vadd.f32 %v2105, %v2153
  %2155 = vmatmul.bf16.gmra.mxu0 %v938
  %v2156 = vpop.f32.mrf.mxu0
  %v2157 = vadd.f32 %v2108, %v2156
  %v2158 = vpop.f32.mrf.mxu0
  %v2159 = vadd.f32 %v2110, %v2158
  %2160 = vmatmul.bf16.gmra.mxu0 %v956
  %v2161 = vpop.f32.mrf.mxu0
  %v2162 = vadd.f32 %v2113, %v2161
  %v2163 = vpop.f32.mrf.mxu0
  %v2164 = vadd.f32 %v2115, %v2163
  %2165 = vmatmul.bf16.gmra.mxu0 %v974
  %v2166 = vpop.f32.mrf.mxu0
  %v2167 = vadd.f32 %v2118, %v2166
  %v2168 = vpop.f32.mrf.mxu0
  %v2169 = vadd.f32 %v2120, %v2168
  %2170 = vmatmul.bf16.gmra.mxu0 %v992
  %v2171 = vpop.f32.mrf.mxu0
  %v2172 = vadd.f32 %v2123, %v2171
  %v2173 = vpop.f32.mrf.mxu0
  %v2174 = vadd.f32 %v2125, %v2173
  %2175 = vmatmul.bf16.gmra.mxu0 %v1010
  %v2176 = vpop.f32.mrf.mxu0
  %v2177 = vadd.f32 %v2128, %v2176
  %v2178 = vpop.f32.mrf.mxu0
  %v2179 = vadd.f32 %v2130, %v2178
  %2180 = vdwg.mxu0
  %2181 = vmatpush.bf16.msra.mxu0 %v1777
  %2182 = vmatpush.bf16.msra.mxu0 %v1776
  %2183 = vmatpush.bf16.msra.mxu0 %v1775
  %2184 = vmatpush.bf16.msra.mxu0 %v1774
  %2185 = vmatpush.bf16.msra.mxu0 %v1773
  %2186 = vmatpush.bf16.msra.mxu0 %v1772
  %2187 = vmatpush.bf16.msra.mxu0 %v1771
  %2188 = vmatpush.bf16.msra.mxu0 %v1770
  %2189 = vmatmul.bf16.gmra.mxu0 %v885
  %v2190 = vpop.f32.mrf.mxu0
  %v2191 = vadd.f32 %v2142, %v2190
  %v2192 = vpop.f32.mrf.mxu0
  %v2193 = vadd.f32 %v2144, %v2192
  %2194 = vmatmul.bf16.gmra.mxu0 %v903
  %v2195 = vpop.f32.mrf.mxu0
  %v2196 = vadd.f32 %v2147, %v2195
  %v2197 = vpop.f32.mrf.mxu0
  %v2198 = vadd.f32 %v2149, %v2197
  %2199 = vmatmul.bf16.gmra.mxu0 %v921
  %v2200 = vpop.f32.mrf.mxu0
  %v2201 = vadd.f32 %v2152, %v2200
  %v2202 = vpop.f32.mrf.mxu0
  %v2203 = vadd.f32 %v2154, %v2202
  %2204 = vmatmul.bf16.gmra.mxu0 %v939
  %v2205 = vpop.f32.mrf.mxu0
  %v2206 = vadd.f32 %v2157, %v2205
  %v2207 = vpop.f32.mrf.mxu0
  %v2208 = vadd.f32 %v2159, %v2207
  %2209 = vmatmul.bf16.gmra.mxu0 %v957
  %v2210 = vpop.f32.mrf.mxu0
  %v2211 = vadd.f32 %v2162, %v2210
  %v2212 = vpop.f32.mrf.mxu0
  %v2213 = vadd.f32 %v2164, %v2212
  %2214 = vmatmul.bf16.gmra.mxu0 %v975
  %v2215 = vpop.f32.mrf.mxu0
  %v2216 = vadd.f32 %v2167, %v2215
  %v2217 = vpop.f32.mrf.mxu0
  %v2218 = vadd.f32 %v2169, %v2217
  %2219 = vmatmul.bf16.gmra.mxu0 %v993
  %v2220 = vpop.f32.mrf.mxu0
  %v2221 = vadd.f32 %v2172, %v2220
  %v2222 = vpop.f32.mrf.mxu0
  %v2223 = vadd.f32 %v2174, %v2222
  %2224 = vmatmul.bf16.gmra.mxu0 %v1011
  %v2225 = vpop.f32.mrf.mxu0
  %v2226 = vadd.f32 %v2177, %v2225
  %v2227 = vpop.f32.mrf.mxu0
  %v2228 = vadd.f32 %v2179, %v2227
  %2229 = vdwg.mxu0
  %2230 = vmatpush.bf16.msra.mxu0 %v1785
  %2231 = vmatpush.bf16.msra.mxu0 %v1784
  %2232 = vmatpush.bf16.msra.mxu0 %v1783
  %2233 = vmatpush.bf16.msra.mxu0 %v1782
  %2234 = vmatpush.bf16.msra.mxu0 %v1781
  %2235 = vmatpush.bf16.msra.mxu0 %v1780
  %2236 = vmatpush.bf16.msra.mxu0 %v1779
  %2237 = vmatpush.bf16.msra.mxu0 %v1778
  %2238 = vmatmul.bf16.gmra.mxu0 %v886
  %v2239 = vpop.f32.mrf.mxu0
  %v2240 = vadd.f32 %v2191, %v2239
  %v2241 = vpop.f32.mrf.mxu0
  %v2242 = vadd.f32 %v2193, %v2241
  %2243 = vmatmul.bf16.gmra.mxu0 %v904
  %v2244 = vpop.f32.mrf.mxu0
  %v2245 = vadd.f32 %v2196, %v2244
  %v2246 = vpop.f32.mrf.mxu0
  %v2247 = vadd.f32 %v2198, %v2246
  %2248 = vmatmul.bf16.gmra.mxu0 %v922
  %v2249 = vpop.f32.mrf.mxu0
  %v2250 = vadd.f32 %v2201, %v2249
  %v2251 = vpop.f32.mrf.mxu0
  %v2252 = vadd.f32 %v2203, %v2251
  %2253 = vmatmul.bf16.gmra.mxu0 %v940
  %v2254 = vpop.f32.mrf.mxu0
  %v2255 = vadd.f32 %v2206, %v2254
  %v2256 = vpop.f32.mrf.mxu0
  %v2257 = vadd.f32 %v2208, %v2256
  %2258 = vmatmul.bf16.gmra.mxu0 %v958
  %v2259 = vpop.f32.mrf.mxu0
  %v2260 = vadd.f32 %v2211, %v2259
  %v2261 = vpop.f32.mrf.mxu0
  %v2262 = vadd.f32 %v2213, %v2261
  %2263 = vmatmul.bf16.gmra.mxu0 %v976
  %v2264 = vpop.f32.mrf.mxu0
  %v2265 = vadd.f32 %v2216, %v2264
  %v2266 = vpop.f32.mrf.mxu0
  %v2267 = vadd.f32 %v2218, %v2266
  %2268 = vmatmul.bf16.gmra.mxu0 %v994
  %v2269 = vpop.f32.mrf.mxu0
  %v2270 = vadd.f32 %v2221, %v2269
  %v2271 = vpop.f32.mrf.mxu0
  %v2272 = vadd.f32 %v2223, %v2271
  %2273 = vmatmul.bf16.gmra.mxu0 %v1012
  %v2274 = vpop.f32.mrf.mxu0
  %v2275 = vadd.f32 %v2226, %v2274
  %v2276 = vpop.f32.mrf.mxu0
  %v2277 = vadd.f32 %v2228, %v2276
  %2278 = vdwg.mxu0
  %2279 = vmatpush.bf16.msra.mxu0 %v1793
  %2280 = vmatpush.bf16.msra.mxu0 %v1792
  %2281 = vmatpush.bf16.msra.mxu0 %v1791
  %2282 = vmatpush.bf16.msra.mxu0 %v1790
  %2283 = vmatpush.bf16.msra.mxu0 %v1789
  %2284 = vmatpush.bf16.msra.mxu0 %v1788
  %2285 = vmatpush.bf16.msra.mxu0 %v1787
  %2286 = vmatpush.bf16.msra.mxu0 %v1786
  %2287 = vmatmul.bf16.gmra.mxu0 %v887
  %v2288 = vpop.f32.mrf.mxu0
  %v2289 = vadd.f32 %v2240, %v2288
  %v2290 = vpop.f32.mrf.mxu0
  %v2291 = vadd.f32 %v2242, %v2290
  %2292 = vmatmul.bf16.gmra.mxu0 %v905
  %v2293 = vpop.f32.mrf.mxu0
  %v2294 = vadd.f32 %v2245, %v2293
  %v2295 = vpop.f32.mrf.mxu0
  %v2296 = vadd.f32 %v2247, %v2295
  %2297 = vmatmul.bf16.gmra.mxu0 %v923
  %v2298 = vpop.f32.mrf.mxu0
  %v2299 = vadd.f32 %v2250, %v2298
  %v2300 = vpop.f32.mrf.mxu0
  %v2301 = vadd.f32 %v2252, %v2300
  %2302 = vmatmul.bf16.gmra.mxu0 %v941
  %v2303 = vpop.f32.mrf.mxu0
  %v2304 = vadd.f32 %v2255, %v2303
  %v2305 = vpop.f32.mrf.mxu0
  %v2306 = vadd.f32 %v2257, %v2305
  %2307 = vmatmul.bf16.gmra.mxu0 %v959
  %v2308 = vpop.f32.mrf.mxu0
  %v2309 = vadd.f32 %v2260, %v2308
  %v2310 = vpop.f32.mrf.mxu0
  %v2311 = vadd.f32 %v2262, %v2310
  %2312 = vmatmul.bf16.gmra.mxu0 %v977
  %v2313 = vpop.f32.mrf.mxu0
  %v2314 = vadd.f32 %v2265, %v2313
  %v2315 = vpop.f32.mrf.mxu0
  %v2316 = vadd.f32 %v2267, %v2315
  %2317 = vmatmul.bf16.gmra.mxu0 %v995
  %v2318 = vpop.f32.mrf.mxu0
  %v2319 = vadd.f32 %v2270, %v2318
  %v2320 = vpop.f32.mrf.mxu0
  %v2321 = vadd.f32 %v2272, %v2320
  %2322 = vmatmul.bf16.gmra.mxu0 %v1013
  %v2323 = vpop.f32.mrf.mxu0
  %v2324 = vadd.f32 %v2275, %v2323
  %v2325 = vpop.f32.mrf.mxu0
  %v2326 = vadd.f32 %v2277, %v2325
  %2327 = vdwg.mxu0
  %2328 = vmatpush.bf16.msra.mxu0 %v1801
  %2329 = vmatpush.bf16.msra.mxu0 %v1800
  %2330 = vmatpush.bf16.msra.mxu0 %v1799
  %2331 = vmatpush.bf16.msra.mxu0 %v1798
  %2332 = vmatpush.bf16.msra.mxu0 %v1797
  %2333 = vmatpush.bf16.msra.mxu0 %v1796
  %2334 = vmatpush.bf16.msra.mxu0 %v1795
  %2335 = vmatpush.bf16.msra.mxu0 %v1794
  %2336 = vmatmul.bf16.gmra.mxu0 %v888
  %v2337 = vpop.f32.mrf.mxu0
  %v2338 = vadd.f32 %v2289, %v2337
  %v2339 = vpop.f32.mrf.mxu0
  %v2340 = vadd.f32 %v2291, %v2339
  %2341 = vmatmul.bf16.gmra.mxu0 %v906
  %v2342 = vpop.f32.mrf.mxu0
  %v2343 = vadd.f32 %v2294, %v2342
  %v2344 = vpop.f32.mrf.mxu0
  %v2345 = vadd.f32 %v2296, %v2344
  %2346 = vmatmul.bf16.gmra.mxu0 %v924
  %v2347 = vpop.f32.mrf.mxu0
  %v2348 = vadd.f32 %v2299, %v2347
  %v2349 = vpop.f32.mrf.mxu0
  %v2350 = vadd.f32 %v2301, %v2349
  %2351 = vmatmul.bf16.gmra.mxu0 %v942
  %v2352 = vpop.f32.mrf.mxu0
  %v2353 = vadd.f32 %v2304, %v2352
  %v2354 = vpop.f32.mrf.mxu0
  %v2355 = vadd.f32 %v2306, %v2354
  %2356 = vmatmul.bf16.gmra.mxu0 %v960
  %v2357 = vpop.f32.mrf.mxu0
  %v2358 = vadd.f32 %v2309, %v2357
  %v2359 = vpop.f32.mrf.mxu0
  %v2360 = vadd.f32 %v2311, %v2359
  %2361 = vmatmul.bf16.gmra.mxu0 %v978
  %v2362 = vpop.f32.mrf.mxu0
  %v2363 = vadd.f32 %v2314, %v2362
  %v2364 = vpop.f32.mrf.mxu0
  %v2365 = vadd.f32 %v2316, %v2364
  %2366 = vmatmul.bf16.gmra.mxu0 %v996
  %v2367 = vpop.f32.mrf.mxu0
  %v2368 = vadd.f32 %v2319, %v2367
  %v2369 = vpop.f32.mrf.mxu0
  %v2370 = vadd.f32 %v2321, %v2369
  %2371 = vmatmul.bf16.gmra.mxu0 %v1014
  %v2372 = vpop.f32.mrf.mxu0
  %v2373 = vadd.f32 %v2324, %v2372
  %v2374 = vpop.f32.mrf.mxu0
  %v2375 = vadd.f32 %v2326, %v2374
  %2376 = vdwg.mxu0
  %2377 = vmatpush.bf16.msra.mxu0 %v1809
  %2378 = vmatpush.bf16.msra.mxu0 %v1808
  %2379 = vmatpush.bf16.msra.mxu0 %v1807
  %2380 = vmatpush.bf16.msra.mxu0 %v1806
  %2381 = vmatpush.bf16.msra.mxu0 %v1805
  %2382 = vmatpush.bf16.msra.mxu0 %v1804
  %2383 = vmatpush.bf16.msra.mxu0 %v1803
  %2384 = vmatpush.bf16.msra.mxu0 %v1802
  %2385 = vmatmul.bf16.gmra.mxu0 %v889
  %v2386 = vpop.f32.mrf.mxu0
  %v2387 = vadd.f32 %v2338, %v2386
  %v2388 = vpop.f32.mrf.mxu0
  %v2389 = vadd.f32 %v2340, %v2388
  %2390 = vmatmul.bf16.gmra.mxu0 %v907
  %v2391 = vpop.f32.mrf.mxu0
  %v2392 = vadd.f32 %v2343, %v2391
  %v2393 = vpop.f32.mrf.mxu0
  %v2394 = vadd.f32 %v2345, %v2393
  %2395 = vmatmul.bf16.gmra.mxu0 %v925
  %v2396 = vpop.f32.mrf.mxu0
  %v2397 = vadd.f32 %v2348, %v2396
  %v2398 = vpop.f32.mrf.mxu0
  %v2399 = vadd.f32 %v2350, %v2398
  %2400 = vmatmul.bf16.gmra.mxu0 %v943
  %v2401 = vpop.f32.mrf.mxu0
  %v2402 = vadd.f32 %v2353, %v2401
  %v2403 = vpop.f32.mrf.mxu0
  %v2404 = vadd.f32 %v2355, %v2403
  %2405 = vmatmul.bf16.gmra.mxu0 %v961
  %v2406 = vpop.f32.mrf.mxu0
  %v2407 = vadd.f32 %v2358, %v2406
  %v2408 = vpop.f32.mrf.mxu0
  %v2409 = vadd.f32 %v2360, %v2408
  %2410 = vmatmul.bf16.gmra.mxu0 %v979
  %v2411 = vpop.f32.mrf.mxu0
  %v2412 = vadd.f32 %v2363, %v2411
  %v2413 = vpop.f32.mrf.mxu0
  %v2414 = vadd.f32 %v2365, %v2413
  %2415 = vmatmul.bf16.gmra.mxu0 %v997
  %v2416 = vpop.f32.mrf.mxu0
  %v2417 = vadd.f32 %v2368, %v2416
  %v2418 = vpop.f32.mrf.mxu0
  %v2419 = vadd.f32 %v2370, %v2418
  %2420 = vmatmul.bf16.gmra.mxu0 %v1015
  %v2421 = vpop.f32.mrf.mxu0
  %v2422 = vadd.f32 %v2373, %v2421
  %v2423 = vpop.f32.mrf.mxu0
  %v2424 = vadd.f32 %v2375, %v2423
  %2425 = vdwg.mxu0
  %2426 = vmatpush.bf16.msra.mxu0 %v1817
  %2427 = vmatpush.bf16.msra.mxu0 %v1816
  %2428 = vmatpush.bf16.msra.mxu0 %v1815
  %2429 = vmatpush.bf16.msra.mxu0 %v1814
  %2430 = vmatpush.bf16.msra.mxu0 %v1813
  %2431 = vmatpush.bf16.msra.mxu0 %v1812
  %2432 = vmatpush.bf16.msra.mxu0 %v1811
  %2433 = vmatpush.bf16.msra.mxu0 %v1810
  %2434 = vmatmul.bf16.gmra.mxu0 %v890
  %v2435 = vpop.f32.mrf.mxu0
  %v2436 = vadd.f32 %v2387, %v2435
  %v2437 = vpop.f32.mrf.mxu0
  %v2438 = vadd.f32 %v2389, %v2437
  %2439 = vmatmul.bf16.gmra.mxu0 %v908
  %v2440 = vpop.f32.mrf.mxu0
  %v2441 = vadd.f32 %v2392, %v2440
  %v2442 = vpop.f32.mrf.mxu0
  %v2443 = vadd.f32 %v2394, %v2442
  %2444 = vmatmul.bf16.gmra.mxu0 %v926
  %v2445 = vpop.f32.mrf.mxu0
  %v2446 = vadd.f32 %v2397, %v2445
  %v2447 = vpop.f32.mrf.mxu0
  %v2448 = vadd.f32 %v2399, %v2447
  %2449 = vmatmul.bf16.gmra.mxu0 %v944
  %v2450 = vpop.f32.mrf.mxu0
  %v2451 = vadd.f32 %v2402, %v2450
  %v2452 = vpop.f32.mrf.mxu0
  %v2453 = vadd.f32 %v2404, %v2452
  %2454 = vmatmul.bf16.gmra.mxu0 %v962
  %v2455 = vpop.f32.mrf.mxu0
  %v2456 = vadd.f32 %v2407, %v2455
  %v2457 = vpop.f32.mrf.mxu0
  %v2458 = vadd.f32 %v2409, %v2457
  %2459 = vmatmul.bf16.gmra.mxu0 %v980
  %v2460 = vpop.f32.mrf.mxu0
  %v2461 = vadd.f32 %v2412, %v2460
  %v2462 = vpop.f32.mrf.mxu0
  %v2463 = vadd.f32 %v2414, %v2462
  %2464 = vmatmul.bf16.gmra.mxu0 %v998
  %v2465 = vpop.f32.mrf.mxu0
  %v2466 = vadd.f32 %v2417, %v2465
  %v2467 = vpop.f32.mrf.mxu0
  %v2468 = vadd.f32 %v2419, %v2467
  %2469 = vmatmul.bf16.gmra.mxu0 %v1016
  %v2470 = vpop.f32.mrf.mxu0
  %v2471 = vadd.f32 %v2422, %v2470
  %v2472 = vpop.f32.mrf.mxu0
  %v2473 = vadd.f32 %v2424, %v2472
  %2474 = vdwg.mxu0
  %2475 = vmatpush.bf16.msra.mxu0 %v1825
  %2476 = vmatpush.bf16.msra.mxu0 %v1824
  %2477 = vmatpush.bf16.msra.mxu0 %v1823
  %2478 = vmatpush.bf16.msra.mxu0 %v1822
  %2479 = vmatpush.bf16.msra.mxu0 %v1821
  %2480 = vmatpush.bf16.msra.mxu0 %v1820
  %2481 = vmatpush.bf16.msra.mxu0 %v1819
  %2482 = vmatpush.bf16.msra.mxu0 %v1818
  %2483 = vmatmul.bf16.gmra.mxu0 %v891
  %v2484 = vpop.f32.mrf.mxu0
  %v2485 = vadd.f32 %v2436, %v2484
  %v2486 = vpop.f32.mrf.mxu0
  %v2487 = vadd.f32 %v2438, %v2486
  %2488 = vmatmul.bf16.gmra.mxu0 %v909
  %v2489 = vpop.f32.mrf.mxu0
  %v2490 = vadd.f32 %v2441, %v2489
  %v2491 = vpop.f32.mrf.mxu0
  %v2492 = vadd.f32 %v2443, %v2491
  %2493 = vmatmul.bf16.gmra.mxu0 %v927
  %v2494 = vpop.f32.mrf.mxu0
  %v2495 = vadd.f32 %v2446, %v2494
  %v2496 = vpop.f32.mrf.mxu0
  %v2497 = vadd.f32 %v2448, %v2496
  %2498 = vmatmul.bf16.gmra.mxu0 %v945
  %v2499 = vpop.f32.mrf.mxu0
  %v2500 = vadd.f32 %v2451, %v2499
  %v2501 = vpop.f32.mrf.mxu0
  %v2502 = vadd.f32 %v2453, %v2501
  %2503 = vmatmul.bf16.gmra.mxu0 %v963
  %v2504 = vpop.f32.mrf.mxu0
  %v2505 = vadd.f32 %v2456, %v2504
  %v2506 = vpop.f32.mrf.mxu0
  %v2507 = vadd.f32 %v2458, %v2506
  %2508 = vmatmul.bf16.gmra.mxu0 %v981
  %v2509 = vpop.f32.mrf.mxu0
  %v2510 = vadd.f32 %v2461, %v2509
  %v2511 = vpop.f32.mrf.mxu0
  %v2512 = vadd.f32 %v2463, %v2511
  %2513 = vmatmul.bf16.gmra.mxu0 %v999
  %v2514 = vpop.f32.mrf.mxu0
  %v2515 = vadd.f32 %v2466, %v2514
  %v2516 = vpop.f32.mrf.mxu0
  %v2517 = vadd.f32 %v2468, %v2516
  %2518 = vmatmul.bf16.gmra.mxu0 %v1017
  %v2519 = vpop.f32.mrf.mxu0
  %v2520 = vadd.f32 %v2471, %v2519
  %v2521 = vpop.f32.mrf.mxu0
  %v2522 = vadd.f32 %v2473, %v2521
  %2523 = vdwg.mxu0
  %2524 = vmatpush.bf16.msra.mxu0 %v1833
  %2525 = vmatpush.bf16.msra.mxu0 %v1832
  %2526 = vmatpush.bf16.msra.mxu0 %v1831
  %2527 = vmatpush.bf16.msra.mxu0 %v1830
  %2528 = vmatpush.bf16.msra.mxu0 %v1829
  %2529 = vmatpush.bf16.msra.mxu0 %v1828
  %2530 = vmatpush.bf16.msra.mxu0 %v1827
  %2531 = vmatpush.bf16.msra.mxu0 %v1826
  %2532 = vmatmul.bf16.gmra.mxu0 %v892
  %v2533 = vpop.f32.mrf.mxu0
  %v2534 = vadd.f32 %v2485, %v2533
  %v2535 = vpop.f32.mrf.mxu0
  %v2536 = vadd.f32 %v2487, %v2535
  %2537 = vmatmul.bf16.gmra.mxu0 %v910
  %v2538 = vpop.f32.mrf.mxu0
  %v2539 = vadd.f32 %v2490, %v2538
  %v2540 = vpop.f32.mrf.mxu0
  %v2541 = vadd.f32 %v2492, %v2540
  %2542 = vmatmul.bf16.gmra.mxu0 %v928
  %v2543 = vpop.f32.mrf.mxu0
  %v2544 = vadd.f32 %v2495, %v2543
  %v2545 = vpop.f32.mrf.mxu0
  %v2546 = vadd.f32 %v2497, %v2545
  %2547 = vmatmul.bf16.gmra.mxu0 %v946
  %v2548 = vpop.f32.mrf.mxu0
  %v2549 = vadd.f32 %v2500, %v2548
  %v2550 = vpop.f32.mrf.mxu0
  %v2551 = vadd.f32 %v2502, %v2550
  %2552 = vmatmul.bf16.gmra.mxu0 %v964
  %v2553 = vpop.f32.mrf.mxu0
  %v2554 = vadd.f32 %v2505, %v2553
  %v2555 = vpop.f32.mrf.mxu0
  %v2556 = vadd.f32 %v2507, %v2555
  %2557 = vmatmul.bf16.gmra.mxu0 %v982
  %v2558 = vpop.f32.mrf.mxu0
  %v2559 = vadd.f32 %v2510, %v2558
  %v2560 = vpop.f32.mrf.mxu0
  %v2561 = vadd.f32 %v2512, %v2560
  %2562 = vmatmul.bf16.gmra.mxu0 %v1000
  %v2563 = vpop.f32.mrf.mxu0
  %v2564 = vadd.f32 %v2515, %v2563
  %v2565 = vpop.f32.mrf.mxu0
  %v2566 = vadd.f32 %v2517, %v2565
  %2567 = vmatmul.bf16.gmra.mxu0 %v1018
  %v2568 = vpop.f32.mrf.mxu0
  %v2569 = vadd.f32 %v2520, %v2568
  %v2570 = vpop.f32.mrf.mxu0
  %v2571 = vadd.f32 %v2522, %v2570
  %2572 = vdwg.mxu0
  %2573 = vmatpush.bf16.msra.mxu0 %v1841
  %2574 = vmatpush.bf16.msra.mxu0 %v1840
  %2575 = vmatpush.bf16.msra.mxu0 %v1839
  %2576 = vmatpush.bf16.msra.mxu0 %v1838
  %2577 = vmatpush.bf16.msra.mxu0 %v1837
  %2578 = vmatpush.bf16.msra.mxu0 %v1836
  %2579 = vmatpush.bf16.msra.mxu0 %v1835
  %2580 = vmatpush.bf16.msra.mxu0 %v1834
  %2581 = vmatmul.bf16.gmra.mxu0 %v893
  %v2582 = vpop.f32.mrf.mxu0
  %v2583 = vadd.f32 %v2534, %v2582
  %v2584 = vpop.f32.mrf.mxu0
  %v2585 = vadd.f32 %v2536, %v2584
  %2586 = vmatmul.bf16.gmra.mxu0 %v911
  %v2587 = vpop.f32.mrf.mxu0
  %v2588 = vadd.f32 %v2539, %v2587
  %v2589 = vpop.f32.mrf.mxu0
  %v2590 = vadd.f32 %v2541, %v2589
  %2591 = vmatmul.bf16.gmra.mxu0 %v929
  %v2592 = vpop.f32.mrf.mxu0
  %v2593 = vadd.f32 %v2544, %v2592
  %v2594 = vpop.f32.mrf.mxu0
  %v2595 = vadd.f32 %v2546, %v2594
  %2596 = vmatmul.bf16.gmra.mxu0 %v947
  %v2597 = vpop.f32.mrf.mxu0
  %v2598 = vadd.f32 %v2549, %v2597
  %v2599 = vpop.f32.mrf.mxu0
  %v2600 = vadd.f32 %v2551, %v2599
  %2601 = vmatmul.bf16.gmra.mxu0 %v965
  %v2602 = vpop.f32.mrf.mxu0
  %v2603 = vadd.f32 %v2554, %v2602
  %v2604 = vpop.f32.mrf.mxu0
  %v2605 = vadd.f32 %v2556, %v2604
  %2606 = vmatmul.bf16.gmra.mxu0 %v983
  %v2607 = vpop.f32.mrf.mxu0
  %v2608 = vadd.f32 %v2559, %v2607
  %v2609 = vpop.f32.mrf.mxu0
  %v2610 = vadd.f32 %v2561, %v2609
  %2611 = vmatmul.bf16.gmra.mxu0 %v1001
  %v2612 = vpop.f32.mrf.mxu0
  %v2613 = vadd.f32 %v2564, %v2612
  %v2614 = vpop.f32.mrf.mxu0
  %v2615 = vadd.f32 %v2566, %v2614
  %2616 = vmatmul.bf16.gmra.mxu0 %v1019
  %v2617 = vpop.f32.mrf.mxu0
  %v2618 = vadd.f32 %v2569, %v2617
  %v2619 = vpop.f32.mrf.mxu0
  %v2620 = vadd.f32 %v2571, %v2619
  %2621 = vdwg.mxu0
  %2622 = vmatpush.bf16.msra.mxu0 %v1849
  %2623 = vmatpush.bf16.msra.mxu0 %v1848
  %2624 = vmatpush.bf16.msra.mxu0 %v1847
  %2625 = vmatpush.bf16.msra.mxu0 %v1846
  %2626 = vmatpush.bf16.msra.mxu0 %v1845
  %2627 = vmatpush.bf16.msra.mxu0 %v1844
  %2628 = vmatpush.bf16.msra.mxu0 %v1843
  %2629 = vmatpush.bf16.msra.mxu0 %v1842
  %2630 = vmatmul.bf16.gmra.mxu0 %v894
  %v2631 = vpop.f32.mrf.mxu0
  %v2632 = vadd.f32 %v2583, %v2631
  %v2633 = vpop.f32.mrf.mxu0
  %v2634 = vadd.f32 %v2585, %v2633
  %2635 = vmatmul.bf16.gmra.mxu0 %v912
  %v2636 = vpop.f32.mrf.mxu0
  %v2637 = vadd.f32 %v2588, %v2636
  %v2638 = vpop.f32.mrf.mxu0
  %v2639 = vadd.f32 %v2590, %v2638
  %2640 = vmatmul.bf16.gmra.mxu0 %v930
  %v2641 = vpop.f32.mrf.mxu0
  %v2642 = vadd.f32 %v2593, %v2641
  %v2643 = vpop.f32.mrf.mxu0
  %v2644 = vadd.f32 %v2595, %v2643
  %2645 = vmatmul.bf16.gmra.mxu0 %v948
  %v2646 = vpop.f32.mrf.mxu0
  %v2647 = vadd.f32 %v2598, %v2646
  %v2648 = vpop.f32.mrf.mxu0
  %v2649 = vadd.f32 %v2600, %v2648
  %2650 = vmatmul.bf16.gmra.mxu0 %v966
  %v2651 = vpop.f32.mrf.mxu0
  %v2652 = vadd.f32 %v2603, %v2651
  %v2653 = vpop.f32.mrf.mxu0
  %v2654 = vadd.f32 %v2605, %v2653
  %2655 = vmatmul.bf16.gmra.mxu0 %v984
  %v2656 = vpop.f32.mrf.mxu0
  %v2657 = vadd.f32 %v2608, %v2656
  %v2658 = vpop.f32.mrf.mxu0
  %v2659 = vadd.f32 %v2610, %v2658
  %2660 = vmatmul.bf16.gmra.mxu0 %v1002
  %v2661 = vpop.f32.mrf.mxu0
  %v2662 = vadd.f32 %v2613, %v2661
  %v2663 = vpop.f32.mrf.mxu0
  %v2664 = vadd.f32 %v2615, %v2663
  %2665 = vmatmul.bf16.gmra.mxu0 %v1020
  %v2666 = vpop.f32.mrf.mxu0
  %v2667 = vadd.f32 %v2618, %v2666
  %v2668 = vpop.f32.mrf.mxu0
  %v2669 = vadd.f32 %v2620, %v2668
  %2670 = vdwg.mxu0
  %2671 = vmatpush.bf16.msra.mxu0 %v1857
  %2672 = vmatpush.bf16.msra.mxu0 %v1856
  %2673 = vmatpush.bf16.msra.mxu0 %v1855
  %2674 = vmatpush.bf16.msra.mxu0 %v1854
  %2675 = vmatpush.bf16.msra.mxu0 %v1853
  %2676 = vmatpush.bf16.msra.mxu0 %v1852
  %2677 = vmatpush.bf16.msra.mxu0 %v1851
  %2678 = vmatpush.bf16.msra.mxu0 %v1850
  %2679 = vmatmul.bf16.gmra.mxu0 %v895
  %v2680 = vpop.f32.mrf.mxu0
  %v2681 = vadd.f32 %v2632, %v2680
  %v2682 = vpop.f32.mrf.mxu0
  %v2683 = vadd.f32 %v2634, %v2682
  %2684 = vmatmul.bf16.gmra.mxu0 %v913
  %v2685 = vpop.f32.mrf.mxu0
  %v2686 = vadd.f32 %v2637, %v2685
  %v2687 = vpop.f32.mrf.mxu0
  %v2688 = vadd.f32 %v2639, %v2687
  %2689 = vmatmul.bf16.gmra.mxu0 %v931
  %v2690 = vpop.f32.mrf.mxu0
  %v2691 = vadd.f32 %v2642, %v2690
  %v2692 = vpop.f32.mrf.mxu0
  %v2693 = vadd.f32 %v2644, %v2692
  %2694 = vmatmul.bf16.gmra.mxu0 %v949
  %v2695 = vpop.f32.mrf.mxu0
  %v2696 = vadd.f32 %v2647, %v2695
  %v2697 = vpop.f32.mrf.mxu0
  %v2698 = vadd.f32 %v2649, %v2697
  %2699 = vmatmul.bf16.gmra.mxu0 %v967
  %v2700 = vpop.f32.mrf.mxu0
  %v2701 = vadd.f32 %v2652, %v2700
  %v2702 = vpop.f32.mrf.mxu0
  %v2703 = vadd.f32 %v2654, %v2702
  %2704 = vmatmul.bf16.gmra.mxu0 %v985
  %v2705 = vpop.f32.mrf.mxu0
  %v2706 = vadd.f32 %v2657, %v2705
  %v2707 = vpop.f32.mrf.mxu0
  %v2708 = vadd.f32 %v2659, %v2707
  %2709 = vmatmul.bf16.gmra.mxu0 %v1003
  %v2710 = vpop.f32.mrf.mxu0
  %v2711 = vadd.f32 %v2662, %v2710
  %v2712 = vpop.f32.mrf.mxu0
  %v2713 = vadd.f32 %v2664, %v2712
  %2714 = vmatmul.bf16.gmra.mxu0 %v1021
  %v2715 = vpop.f32.mrf.mxu0
  %v2716 = vadd.f32 %v2667, %v2715
  %v2717 = vpop.f32.mrf.mxu0
  %v2718 = vadd.f32 %v2669, %v2717
  %2719 = vdwg.mxu0
  %2720 = vmatpush.bf16.msra.mxu0 %v1865
  %2721 = vmatpush.bf16.msra.mxu0 %v1864
  %2722 = vmatpush.bf16.msra.mxu0 %v1863
  %2723 = vmatpush.bf16.msra.mxu0 %v1862
  %2724 = vmatpush.bf16.msra.mxu0 %v1861
  %2725 = vmatpush.bf16.msra.mxu0 %v1860
  %2726 = vmatpush.bf16.msra.mxu0 %v1859
  %2727 = vmatpush.bf16.msra.mxu0 %v1858
  %2728 = vmatmul.bf16.gmra.mxu0 %v896
  %v2729 = vpop.f32.mrf.mxu0
  %v2730 = vadd.f32 %v2681, %v2729
  %v2731 = vpop.f32.mrf.mxu0
  %v2732 = vadd.f32 %v2683, %v2731
  %2733 = vmatmul.bf16.gmra.mxu0 %v914
  %v2734 = vpop.f32.mrf.mxu0
  %v2735 = vadd.f32 %v2686, %v2734
  %v2736 = vpop.f32.mrf.mxu0
  %v2737 = vadd.f32 %v2688, %v2736
  %2738 = vmatmul.bf16.gmra.mxu0 %v932
  %v2739 = vpop.f32.mrf.mxu0
  %v2740 = vadd.f32 %v2691, %v2739
  %v2741 = vpop.f32.mrf.mxu0
  %v2742 = vadd.f32 %v2693, %v2741
  %2743 = vmatmul.bf16.gmra.mxu0 %v950
  %v2744 = vpop.f32.mrf.mxu0
  %v2745 = vadd.f32 %v2696, %v2744
  %v2746 = vpop.f32.mrf.mxu0
  %v2747 = vadd.f32 %v2698, %v2746
  %2748 = vmatmul.bf16.gmra.mxu0 %v968
  %v2749 = vpop.f32.mrf.mxu0
  %v2750 = vadd.f32 %v2701, %v2749
  %v2751 = vpop.f32.mrf.mxu0
  %v2752 = vadd.f32 %v2703, %v2751
  %2753 = vmatmul.bf16.gmra.mxu0 %v986
  %v2754 = vpop.f32.mrf.mxu0
  %v2755 = vadd.f32 %v2706, %v2754
  %v2756 = vpop.f32.mrf.mxu0
  %v2757 = vadd.f32 %v2708, %v2756
  %2758 = vmatmul.bf16.gmra.mxu0 %v1004
  %v2759 = vpop.f32.mrf.mxu0
  %v2760 = vadd.f32 %v2711, %v2759
  %v2761 = vpop.f32.mrf.mxu0
  %v2762 = vadd.f32 %v2713, %v2761
  %2763 = vmatmul.bf16.gmra.mxu0 %v1022
  %v2764 = vpop.f32.mrf.mxu0
  %v2765 = vadd.f32 %v2716, %v2764
  %v2766 = vpop.f32.mrf.mxu0
  %v2767 = vadd.f32 %v2718, %v2766
  %2768 = vdwg.mxu0
  %2769 = vmatpush.bf16.msra.mxu0 %v1873
  %2770 = vmatpush.bf16.msra.mxu0 %v1872
  %2771 = vmatpush.bf16.msra.mxu0 %v1871
  %2772 = vmatpush.bf16.msra.mxu0 %v1870
  %2773 = vmatpush.bf16.msra.mxu0 %v1869
  %2774 = vmatpush.bf16.msra.mxu0 %v1868
  %2775 = vmatpush.bf16.msra.mxu0 %v1867
  %2776 = vmatpush.bf16.msra.mxu0 %v1866
  %2777 = vmatmul.bf16.gmra.mxu0 %v897
  %v2778 = vpop.f32.mrf.mxu0
  %v2779 = vadd.f32 %v2730, %v2778
  %v2780 = vpop.f32.mrf.mxu0
  %v2781 = vadd.f32 %v2732, %v2780
  %2782 = vmatmul.bf16.gmra.mxu0 %v915
  %v2783 = vpop.f32.mrf.mxu0
  %v2784 = vadd.f32 %v2735, %v2783
  %v2785 = vpop.f32.mrf.mxu0
  %v2786 = vadd.f32 %v2737, %v2785
  %2787 = vmatmul.bf16.gmra.mxu0 %v933
  %v2788 = vpop.f32.mrf.mxu0
  %v2789 = vadd.f32 %v2740, %v2788
  %v2790 = vpop.f32.mrf.mxu0
  %v2791 = vadd.f32 %v2742, %v2790
  %2792 = vmatmul.bf16.gmra.mxu0 %v951
  %v2793 = vpop.f32.mrf.mxu0
  %v2794 = vadd.f32 %v2745, %v2793
  %v2795 = vpop.f32.mrf.mxu0
  %v2796 = vadd.f32 %v2747, %v2795
  %2797 = vmatmul.bf16.gmra.mxu0 %v969
  %v2798 = vpop.f32.mrf.mxu0
  %v2799 = vadd.f32 %v2750, %v2798
  %v2800 = vpop.f32.mrf.mxu0
  %v2801 = vadd.f32 %v2752, %v2800
  %2802 = vmatmul.bf16.gmra.mxu0 %v987
  %v2803 = vpop.f32.mrf.mxu0
  %v2804 = vadd.f32 %v2755, %v2803
  %v2805 = vpop.f32.mrf.mxu0
  %v2806 = vadd.f32 %v2757, %v2805
  %2807 = vmatmul.bf16.gmra.mxu0 %v1005
  %v2808 = vpop.f32.mrf.mxu0
  %v2809 = vadd.f32 %v2760, %v2808
  %v2810 = vpop.f32.mrf.mxu0
  %v2811 = vadd.f32 %v2762, %v2810
  %2812 = vmatmul.bf16.gmra.mxu0 %v1023
  %v2813 = vpop.f32.mrf.mxu0
  %v2814 = vadd.f32 %v2765, %v2813
  %v2815 = vpop.f32.mrf.mxu0
  %v2816 = vadd.f32 %v2767, %v2815
  %2817 = vdwg.mxu0
  %2818 = vmatpush.bf16.msra.mxu0 %v1881
  %2819 = vmatpush.bf16.msra.mxu0 %v1880
  %2820 = vmatpush.bf16.msra.mxu0 %v1879
  %2821 = vmatpush.bf16.msra.mxu0 %v1878
  %2822 = vmatpush.bf16.msra.mxu0 %v1877
  %2823 = vmatpush.bf16.msra.mxu0 %v1876
  %2824 = vmatpush.bf16.msra.mxu0 %v1875
  %2825 = vmatpush.bf16.msra.mxu0 %v1874
  %2826 = vmatmul.bf16.gmra.mxu0 %v898
  %v2827 = vpop.f32.mrf.mxu0
  %v2828 = vadd.f32 %v2779, %v2827
  %v2829 = vpop.f32.mrf.mxu0
  %v2830 = vadd.f32 %v2781, %v2829
  %2831 = vmatmul.bf16.gmra.mxu0 %v916
  %v2832 = vpop.f32.mrf.mxu0
  %v2833 = vadd.f32 %v2784, %v2832
  %v2834 = vpop.f32.mrf.mxu0
  %v2835 = vadd.f32 %v2786, %v2834
  %2836 = vmatmul.bf16.gmra.mxu0 %v934
  %v2837 = vpop.f32.mrf.mxu0
  %v2838 = vadd.f32 %v2789, %v2837
  %v2839 = vpop.f32.mrf.mxu0
  %v2840 = vadd.f32 %v2791, %v2839
  %2841 = vmatmul.bf16.gmra.mxu0 %v952
  %v2842 = vpop.f32.mrf.mxu0
  %v2843 = vadd.f32 %v2794, %v2842
  %v2844 = vpop.f32.mrf.mxu0
  %v2845 = vadd.f32 %v2796, %v2844
  %2846 = vmatmul.bf16.gmra.mxu0 %v970
  %v2847 = vpop.f32.mrf.mxu0
  %v2848 = vadd.f32 %v2799, %v2847
  %v2849 = vpop.f32.mrf.mxu0
  %v2850 = vadd.f32 %v2801, %v2849
  %2851 = vmatmul.bf16.gmra.mxu0 %v988
  %v2852 = vpop.f32.mrf.mxu0
  %v2853 = vadd.f32 %v2804, %v2852
  %v2854 = vpop.f32.mrf.mxu0
  %v2855 = vadd.f32 %v2806, %v2854
  %2856 = vmatmul.bf16.gmra.mxu0 %v1006
  %v2857 = vpop.f32.mrf.mxu0
  %v2858 = vadd.f32 %v2809, %v2857
  %v2859 = vpop.f32.mrf.mxu0
  %v2860 = vadd.f32 %v2811, %v2859
  %2861 = vmatmul.bf16.gmra.mxu0 %v1024
  %v2862 = vpop.f32.mrf.mxu0
  %v2863 = vadd.f32 %v2814, %v2862
  %v2864 = vpop.f32.mrf.mxu0
  %v2865 = vadd.f32 %v2816, %v2864
  %2866 = vdwg.mxu0
  %2867 = vmatpush.bf16.msra.mxu0 %v1889
  %2868 = vmatpush.bf16.msra.mxu0 %v1888
  %2869 = vmatpush.bf16.msra.mxu0 %v1887
  %2870 = vmatpush.bf16.msra.mxu0 %v1886
  %2871 = vmatpush.bf16.msra.mxu0 %v1885
  %2872 = vmatpush.bf16.msra.mxu0 %v1884
  %2873 = vmatpush.bf16.msra.mxu0 %v1883
  %2874 = vmatpush.bf16.msra.mxu0 %v1882
  %2875 = vmatmul.bf16.gmra.mxu0 %v899
  %v2876 = vpop.f32.mrf.mxu0
  %v2877 = vadd.f32 %v2828, %v2876
  %v2878 = vpop.f32.mrf.mxu0
  %v2879 = vadd.f32 %v2830, %v2878
  %2880 = vmatmul.bf16.gmra.mxu0 %v917
  %v2881 = vpop.f32.mrf.mxu0
  %v2882 = vadd.f32 %v2833, %v2881
  %v2883 = vpop.f32.mrf.mxu0
  %v2884 = vadd.f32 %v2835, %v2883
  %2885 = vmatmul.bf16.gmra.mxu0 %v935
  %v2886 = vpop.f32.mrf.mxu0
  %v2887 = vadd.f32 %v2838, %v2886
  %v2888 = vpop.f32.mrf.mxu0
  %v2889 = vadd.f32 %v2840, %v2888
  %2890 = vmatmul.bf16.gmra.mxu0 %v953
  %v2891 = vpop.f32.mrf.mxu0
  %v2892 = vadd.f32 %v2843, %v2891
  %v2893 = vpop.f32.mrf.mxu0
  %v2894 = vadd.f32 %v2845, %v2893
  %2895 = vmatmul.bf16.gmra.mxu0 %v971
  %v2896 = vpop.f32.mrf.mxu0
  %v2897 = vadd.f32 %v2848, %v2896
  %v2898 = vpop.f32.mrf.mxu0
  %v2899 = vadd.f32 %v2850, %v2898
  %2900 = vmatmul.bf16.gmra.mxu0 %v989
  %v2901 = vpop.f32.mrf.mxu0
  %v2902 = vadd.f32 %v2853, %v2901
  %v2903 = vpop.f32.mrf.mxu0
  %v2904 = vadd.f32 %v2855, %v2903
  %2905 = vmatmul.bf16.gmra.mxu0 %v1007
  %v2906 = vpop.f32.mrf.mxu0
  %v2907 = vadd.f32 %v2858, %v2906
  %v2908 = vpop.f32.mrf.mxu0
  %v2909 = vadd.f32 %v2860, %v2908
  %2910 = vmatmul.bf16.gmra.mxu0 %v1025
  %v2911 = vpop.f32.mrf.mxu0
  %v2912 = vadd.f32 %v2863, %v2911
  %v2913 = vpop.f32.mrf.mxu0
  %v2914 = vadd.f32 %v2865, %v2913
  %2915 = vdwg.mxu0
  %v2916 = vtanh.pop %v2877
  %v2917 = vtanh.pop %v2879
  %v2918 = vtanh.pop %v2882
  %v2919 = vtanh.pop %v2884
  %v2920 = vtanh.pop %v2887
  %v2921 = vtanh.pop %v2889
  %v2922 = vtanh.pop %v2892
  %v2923 = vtanh.pop %v2894
  %v2924 = vtanh.pop %v2897
  %v2925 = vtanh.pop %v2899
  %v2926 = vtanh.pop %v2902
  %v2927 = vtanh.pop %v2904
  %v2928 = vtanh.pop %v2907
  %v2929 = vtanh.pop %v2909
  %v2930 = vtanh.pop %v2912
  %v2931 = vtanh.pop %v2914
  %2932 = vst [vmem:[%s3] sm:$0xff] %v2916
  %2933 = vst [vmem:[%s3 + $0x8] sm:$0xff] %v2917
  %2934 = vst [vmem:[%s3 + $0x10] sm:$0xff] %v2918
  %2935 = vst [vmem:[%s3 + $0x18] sm:$0xff] %v2919
  %2936 = vst [vmem:[%s3 + $0x20] sm:$0xff] %v2920
  %2937 = vst [vmem:[%s3 + $0x28] sm:$0xff] %v2921
  %2938 = vst [vmem:[%s3 + $0x30] sm:$0xff] %v2922
  %2939 = vst [vmem:[%s3 + $0x38] sm:$0xff] %v2923
  %2940 = vst [vmem:[%s3 + $0x40] sm:$0xff] %v2924
  %2941 = vst [vmem:[%s3 + $0x48] sm:$0xff] %v2925
  %2942 = vst [vmem:[%s3 + $0x50] sm:$0xff] %v2926
  %2943 = vst [vmem:[%s3 + $0x58] sm:$0xff] %v2927
  %2944 = vst [vmem:[%s3 + $0x60] sm:$0xff] %v2928
  %2945 = vst [vmem:[%s3 + $0x68] sm:$0xff] %v2929
  %2946 = vst [vmem:[%s3 + $0x70] sm:$0xff] %v2930
  %2947 = vst [vmem:[%s3 + $0x78] sm:$0xff] %v2931
  // Predicated region
  $region14: #{_lambda_.46} parent=0 // pred_check
    _
  $region15: #{_lambda_.46} parent=0 // pred_check_branch
    %2949 = sbr.rel (0) target = $region17
  $region16: #{_lambda_.46} parent=0 // pred_region
    _
  $region17: #{_lambda_.46} parent=0 // pred_fallthru
    _
  // Predicated region
  $region18: #{_lambda_.46} parent=0 // pred_check
    _
  $region19: #{_lambda_.46} parent=0 // pred_check_branch
    %2951 = sbr.rel (0) target = $region21
  $region20: #{_lambda_.46} parent=0 // pred_region
    _
  $region21: #{_lambda_.46} parent=0 // pred_fallthru
    _

</llo_original>
